<compile_context>
chip_gen: v7x
topology: tpu7x:2x2x1
jax: 0.10.0
libtpu: 0.0.40
codegen_flags: <defaults>
</compile_context>

<pallas_src>
import functools

import jax
import jax.numpy as jnp
from jax import lax
from jax.experimental import pallas as pl
from jax.experimental.pallas import tpu as pltpu


def _rdb_kernel(*refs, C, G0, G, H, W, compute_dtype):
    # refs: x_ref, wproj0_ref,
    #       [w3_0, b_0, wproj_0, ..., w3_{C-1}, b_{C-1}, wproj_{C-1}],
    #       out_ref, feat_ref, col_ref
    x_ref = refs[0]
    wp0_ref = refs[1]
    layer_refs = refs[2:2 + 3 * C]
    out_ref = refs[2 + 3 * C]
    feat_ref = refs[3 + 3 * C]     # (H+2, W+2, Cfeat) padded dense features
    col_ref = refs[4 + 3 * C]      # (H, W, 9*Cfeat)   per-layer im2col slab

    f32 = jnp.float32
    cdt = compute_dtype
    Cfeat = G0 + (C - 1) * G       # channels ever read by a 3x3 conv

    # ---- zero ONLY the 1-pixel border (implicit padding=1); interior is always
    # ---- written before it is read, so no full-scratch memset.
    feat_ref[0:1, :, :] = jnp.zeros((1, W + 2, Cfeat), cdt)
    feat_ref[H + 1:H + 2, :, :] = jnp.zeros((1, W + 2, Cfeat), cdt)
    feat_ref[1:H + 1, 0:1, :] = jnp.zeros((H, 1, Cfeat), cdt)
    feat_ref[1:H + 1, W + 1:W + 2, :] = jnp.zeros((H, 1, Cfeat), cdt)

    # ---- seed the dense feature map and the fused 1x1 projection accumulator.
    x_f32 = x_ref[0].astype(f32)                    # residual kept in f32
    x_c = x_ref[0].astype(cdt)                      # compute-dtype copy for the MXU
    feat_ref[1:H + 1, 1:W + 1, 0:G0] = x_c

    # proj accumulates conv_1x1(dense_features) incrementally, in f32.
    proj = lax.dot_general(
        x_c, wp0_ref[...],
        dimension_numbers=(((2,), (0,)), ((), ())),
        preferred_element_type=f32)                 # (H, W, G0)

    cur = G0
    for i in range(C):                              # C is small & static -> unrolled
        w3_ref = layer_refs[3 * i]                  # (9*cur, G)   compute dtype
        b_ref = layer_refs[3 * i + 1]               # (1, G)       f32
        wp_ref = layer_refs[3 * i + 2]              # (G, G0)      compute dtype
        K = 9 * cur

        # Build the im2col slab once per layer:
        #   col[h, w, (3*dy+dx)*cur + c] = feat_padded[h+dy, w+dx, c]
        # The (dy, dx, c) ordering matches w3.reshape(9*cur, G) in the wrapper.
        for dy in range(3):
            for dx in range(3):
                t = 3 * dy + dx
                col_ref[:, :, t * cur:(t + 1) * cur] = \
                    feat_ref[dy:dy + H, dx:dx + W, 0:cur]

        # Single large-K MXU matmul for the whole 3x3 conv of this layer.
        acc = lax.dot_general(
            col_ref[:, :, 0:K], w3_ref[...],
            dimension_numbers=(((2,), (0,)), ((), ())),
            preferred_element_type=f32)             # (H, W, G), f32 accumulation
        acc = jnp.maximum(acc + b_ref[...], 0.0)    # bias + ReLU (f32 VPU)

        # Fused 1x1 projection of the newly produced channels.
        acc_c = acc.astype(cdt)
        proj = proj + lax.dot_general(
            acc_c, wp_ref[...],
            dimension_numbers=(((2,), (0,)), ((), ())),
            preferred_element_type=f32)

        # Dense concat: only needed if a later conv layer will read these channels.
        if i < C - 1:
            feat_ref[1:H + 1, 1:W + 1, cur:cur + G] = acc_c
        cur += G

    out_ref[0] = (proj + x_f32).astype(out_ref.dtype)


def rdb_forward(x_nchw, params, *, C, G0, G, compute_dtype=jnp.bfloat16):
    N, Cc, H, W = x_nchw.shape
    assert Cc == G0
    x = jnp.transpose(x_nchw, (0, 2, 3, 1))          # NCHW -> NHWC
    Cfeat = G0 + (C - 1) * G                          # channels ever read by a conv

    w1x1 = params["w1x1"]                             # (G0 + C*G, G0)

    operands = [x, w1x1[:G0].astype(compute_dtype)]
    in_specs = [
        pl.BlockSpec((1, H, W, G0), lambda n: (n, 0, 0, 0)),
        pl.BlockSpec((G0, G0), lambda n: (0, 0)),
    ]
    cin = G0
    for i in range(C):
        w3, b = params["dense"][i]                    # (3, 3, cin, G), (G,)
        # (dy, dx, c) -> flat K index (dy*3+dx)*cin + c, matching the im2col layout.
        w3r = w3.reshape(9 * cin, G).astype(compute_dtype)
        wp = w1x1[G0 + i * G: G0 + (i + 1) * G].astype(compute_dtype)
        operands += [w3r, b.reshape(1, G).astype(jnp.float32), wp]
        in_specs += [
            pl.BlockSpec((9 * cin, G), lambda n: (0, 0)),
            pl.BlockSpec((1, G), lambda n: (0, 0)),
            pl.BlockSpec((G, G0), lambda n: (0, 0)),
        ]
        cin += G

    kernel = functools.partial(_rdb_kernel, C=C, G0=G0, G=G, H=H, W=W,
                               compute_dtype=compute_dtype)

    # TODO(synk): for full-size RDN inputs add a row-block grid dim with a 1-row
    # halo (and a lane-dense output slab) so the scratch fits v7x's 64 MiB VMEM.
    out = pl.pallas_call(
        kernel,
        out_shape=jax.ShapeDtypeStruct((N, H, W, G0), x.dtype),
        grid_spec=pltpu.PrefetchScalarGridSpec(
            num_scalar_prefetch=0,
            grid=(N,),
            in_specs=in_specs,
            out_specs=pl.BlockSpec((1, H, W, G0), lambda n: (n, 0, 0, 0)),
            scratch_shapes=[
                pltpu.VMEM((H + 2, W + 2, Cfeat), compute_dtype),  # padded features
                pltpu.VMEM((H, W, 9 * Cfeat), compute_dtype),      # im2col slab
            ],
        ),
        compiler_params=pltpu.CompilerParams(
            dimension_semantics=("parallel",),        # images are independent
            vmem_limit_bytes=64 * 1024 * 1024,
        ),
    )(*operands)
    return jnp.transpose(out, (0, 3, 1, 2))           # NHWC -> NCHW


def rdb_reference_nhwc(x_nhwc, params, *, C, G0, G):
    """Pure-JAX reference of the PyTorch forward (NHWC, f32)."""
    feat = x_nhwc.astype(jnp.float32)
    for i in range(C):
        w3, b = params["dense"][i]
        out = lax.conv_general_dilated(
            feat, w3, window_strides=(1, 1), padding="SAME",
            dimension_numbers=("NHWC", "HWIO", "NHWC"))
        out = jnp.maximum(out + b, 0.0)
        feat = jnp.concatenate([feat, out], axis=-1)
    proj = jnp.einsum("nhwc,cd->nhwd", feat, params["w1x1"])
    return proj + x_nhwc.astype(jnp.float32)


if __name__ == "__main__":
    # Small shapes: RDB(G0=8, C=3, G=8) on x of shape (2, 8, 16, 16) (NCHW).
    N, G0, C, G, H, W = 2, 8, 3, 8, 16, 16

    key = jax.random.PRNGKey(0)
    keys = jax.random.split(key, 2 * C + 2)

    params = {"dense": [], "w1x1": None}
    cin = G0
    for i in range(C):
        w3 = 0.1 * jax.random.normal(keys[2 * i], (3, 3, cin, G), jnp.float32)
        b = 0.1 * jax.random.normal(keys[2 * i + 1], (G,), jnp.float32)
        params["dense"].append((w3, b))
        cin += G
    params["w1x1"] = 0.1 * jax.random.normal(keys[2 * C], (cin, G0), jnp.float32)

    x_nchw = jax.random.normal(keys[2 * C + 1], (N, G0, H, W), jnp.float32)

    ref = rdb_reference_nhwc(jnp.transpose(x_nchw, (0, 2, 3, 1)), params,
                             C=C, G0=G0, G=G)
    ref = jnp.transpose(ref, (0, 3, 1, 2))

    # Structural check with f32 compute dtype (tight tolerance).
    out_f32 = jax.block_until_ready(
        rdb_forward(x_nchw, params, C=C, G0=G0, G=G, compute_dtype=jnp.float32))
    err32 = float(jnp.max(jnp.abs(out_f32 - ref)))
    assert jnp.allclose(out_f32, ref, atol=2e-3, rtol=2e-3), f"f32 max abs err {err32}"

    # Default fast path: bf16 feature/weight storage, f32 accumulation
    # (looser tolerance per the expected bf16 rounding).
    out_bf16 = jax.block_until_ready(
        rdb_forward(x_nchw, params, C=C, G0=G0, G=G, compute_dtype=jnp.bfloat16))
    err16 = float(jnp.max(jnp.abs(out_bf16 - ref)))
    assert jnp.allclose(out_bf16, ref, atol=1e-1, rtol=1e-1), f"bf16 max abs err {err16}"

    print("KERNEL_OK")
</pallas_src>

<mosaic_0001>
module attributes {stable_mosaic.version = 11 : i64} {
  func.func @_rdb_kernel(%arg0: i32, %arg1: memref<1x16x16x8xf32, #tpu.memory_space<vmem>>, %arg2: memref<8x8xf32, #tpu.memory_space<vmem>>, %arg3: memref<72x8xf32, #tpu.memory_space<vmem>>, %arg4: memref<1x8xf32, #tpu.memory_space<vmem>>, %arg5: memref<8x8xf32, #tpu.memory_space<vmem>>, %arg6: memref<144x8xf32, #tpu.memory_space<vmem>>, %arg7: memref<1x8xf32, #tpu.memory_space<vmem>>, %arg8: memref<8x8xf32, #tpu.memory_space<vmem>>, %arg9: memref<216x8xf32, #tpu.memory_space<vmem>>, %arg10: memref<1x8xf32, #tpu.memory_space<vmem>>, %arg11: memref<8x8xf32, #tpu.memory_space<vmem>>, %arg12: memref<1x16x16x8xf32, #tpu.memory_space<vmem>>, %arg13: memref<18x18x24xf32, #tpu.memory_space<vmem>>, %arg14: memref<16x16x216xf32, #tpu.memory_space<vmem>>) attributes {dimension_semantics = [#tpu.dimension_semantics<parallel>], iteration_bounds = array<i64: 2>, scalar_prefetch = 0 : i64, scratch_operands = 2 : i64, tpu.core_type = #tpu.core_type<tc>, window_params = [{transform_indices = @transform_0, window_bounds = array<i64: 1, 16, 16, 8>}, {pipeline_mode = #tpu.pipeline_mode<synchronous>, transform_indices = @transform_1, window_bounds = array<i64: 8, 8>}, {pipeline_mode = #tpu.pipeline_mode<synchronous>, transform_indices = @transform_2, window_bounds = array<i64: 72, 8>}, {pipeline_mode = #tpu.pipeline_mode<synchronous>, transform_indices = @transform_3, window_bounds = array<i64: 1, 8>}, {pipeline_mode = #tpu.pipeline_mode<synchronous>, transform_indices = @transform_4, window_bounds = array<i64: 8, 8>}, {pipeline_mode = #tpu.pipeline_mode<synchronous>, transform_indices = @transform_5, window_bounds = array<i64: 144, 8>}, {pipeline_mode = #tpu.pipeline_mode<synchronous>, transform_indices = @transform_6, window_bounds = array<i64: 1, 8>}, {pipeline_mode = #tpu.pipeline_mode<synchronous>, transform_indices = @transform_7, window_bounds = array<i64: 8, 8>}, {pipeline_mode = #tpu.pipeline_mode<synchronous>, transform_indices = @transform_8, window_bounds = array<i64: 216, 8>}, {pipeline_mode = #tpu.pipeline_mode<synchronous>, transform_indices = @transform_9, window_bounds = array<i64: 1, 8>}, {pipeline_mode = #tpu.pipeline_mode<synchronous>, transform_indices = @transform_10, window_bounds = array<i64: 8, 8>}, {transform_indices = @transform_11, window_bounds = array<i64: 1, 16, 16, 8>}]} {
    %cst = arith.constant 0.000000e+00 : f32
    %0 = vector.broadcast %cst : f32 to vector<1x18x24xf32>
    %c0 = arith.constant 0 : index
    %c0_0 = arith.constant 0 : index
    %c0_1 = arith.constant 0 : index
    %1 = vector.load %arg13[%c0, %c0_0, %c0_1] : memref<18x18x24xf32, #tpu.memory_space<vmem>>, vector<1x18x24xf32>
    tpu.vector_store %arg13[%c0, %c0_0, %c0_1], %0 {strides = array<i32>} : memref<18x18x24xf32, #tpu.memory_space<vmem>>, vector<1x18x24xf32>,
    %cst_2 = arith.constant 0.000000e+00 : f32
    %2 = vector.broadcast %cst_2 : f32 to vector<1x18x24xf32>
    %c17 = arith.constant 17 : index
    %c0_3 = arith.constant 0 : index
    %c0_4 = arith.constant 0 : index
    %3 = vector.load %arg13[%c17, %c0_3, %c0_4] : memref<18x18x24xf32, #tpu.memory_space<vmem>>, vector<1x18x24xf32>
    tpu.vector_store %arg13[%c17, %c0_3, %c0_4], %2 {strides = array<i32>} : memref<18x18x24xf32, #tpu.memory_space<vmem>>, vector<1x18x24xf32>,
    %cst_5 = arith.constant 0.000000e+00 : f32
    %4 = vector.broadcast %cst_5 : f32 to vector<16x1x24xf32>
    %c1 = arith.constant 1 : index
    %c0_6 = arith.constant 0 : index
    %c0_7 = arith.constant 0 : index
    %5 = vector.load %arg13[%c1, %c0_6, %c0_7] : memref<18x18x24xf32, #tpu.memory_space<vmem>>, vector<16x1x24xf32>
    tpu.vector_store %arg13[%c1, %c0_6, %c0_7], %4 {strides = array<i32>} : memref<18x18x24xf32, #tpu.memory_space<vmem>>, vector<16x1x24xf32>,
    %cst_8 = arith.constant 0.000000e+00 : f32
    %6 = vector.broadcast %cst_8 : f32 to vector<16x1x24xf32>
    %c1_9 = arith.constant 1 : index
    %c17_10 = arith.constant 17 : index
    %c0_11 = arith.constant 0 : index
    %7 = vector.load %arg13[%c1_9, %c17_10, %c0_11] : memref<18x18x24xf32, #tpu.memory_space<vmem>>, vector<16x1x24xf32>
    tpu.vector_store %arg13[%c1_9, %c17_10, %c0_11], %6 {strides = array<i32>} : memref<18x18x24xf32, #tpu.memory_space<vmem>>, vector<16x1x24xf32>,
    %c0_12 = arith.constant 0 : index
    %c0_13 = arith.constant 0 : index
    %c0_14 = arith.constant 0 : index
    %c0_15 = arith.constant 0 : index
    %8 = vector.load %arg1[%c0_12, %c0_13, %c0_14, %c0_15] : memref<1x16x16x8xf32, #tpu.memory_space<vmem>>, vector<1x16x16x8xf32>
    %9 = vector.shape_cast %8 : vector<1x16x16x8xf32> to vector<16x16x8xf32>
    %c0_16 = arith.constant 0 : index
    %c0_17 = arith.constant 0 : index
    %c0_18 = arith.constant 0 : index
    %c0_19 = arith.constant 0 : index
    %10 = vector.load %arg1[%c0_16, %c0_17, %c0_18, %c0_19] : memref<1x16x16x8xf32, #tpu.memory_space<vmem>>, vector<1x16x16x8xf32>
    %11 = vector.shape_cast %10 : vector<1x16x16x8xf32> to vector<16x16x8xf32>
    %c1_20 = arith.constant 1 : index
    %c1_21 = arith.constant 1 : index
    %c0_22 = arith.constant 0 : index
    %12 = vector.load %arg13[%c1_20, %c1_21, %c0_22] : memref<18x18x24xf32, #tpu.memory_space<vmem>>, vector<16x16x8xf32>
    tpu.vector_store %arg13[%c1_20, %c1_21, %c0_22], %11 {strides = array<i32>} : memref<18x18x24xf32, #tpu.memory_space<vmem>>, vector<16x16x8xf32>,
    %c0_23 = arith.constant 0 : index
    %c0_24 = arith.constant 0 : index
    %13 = vector.load %arg2[%c0_23, %c0_24] : memref<8x8xf32, #tpu.memory_space<vmem>>, vector<8x8xf32>
    %cst_25 = arith.constant dense<0.000000e+00> : vector<16x16x8xf32>
    %14 = tpu.matmul %11, %13, %cst_25 {dimension_numbers = #tpu.dot_dimension_numbers<[2], [0], [0, 1], [1], [0, 0, 0, 1, 1, 1], [], []>} : vector<16x16x8xf32>, vector<8x8xf32>, vector<16x16x8xf32> -> vector<16x16x8xf32>
    %c0_26 = arith.constant 0 : index
    %c0_27 = arith.constant 0 : index
    %c0_28 = arith.constant 0 : index
    %15 = vector.load %arg13[%c0_26, %c0_27, %c0_28] : memref<18x18x24xf32, #tpu.memory_space<vmem>>, vector<16x16x8xf32>
    %c0_29 = arith.constant 0 : index
    %c0_30 = arith.constant 0 : index
    %c0_31 = arith.constant 0 : index
    %16 = vector.load %arg14[%c0_29, %c0_30, %c0_31] : memref<16x16x216xf32, #tpu.memory_space<vmem>>, vector<16x16x8xf32>
    tpu.vector_store %arg14[%c0_29, %c0_30, %c0_31], %15 {strides = array<i32>} : memref<16x16x216xf32, #tpu.memory_space<vmem>>, vector<16x16x8xf32>,
    %c0_32 = arith.constant 0 : index
    %c1_33 = arith.constant 1 : index
    %c0_34 = arith.constant 0 : index
    %17 = vector.load %arg13[%c0_32, %c1_33, %c0_34] : memref<18x18x24xf32, #tpu.memory_space<vmem>>, vector<16x16x8xf32>
    %c0_35 = arith.constant 0 : index
    %c0_36 = arith.constant 0 : index
    %c8 = arith.constant 8 : index
    %18 = vector.load %arg14[%c0_35, %c0_36, %c8] : memref<16x16x216xf32, #tpu.memory_space<vmem>>, vector<16x16x8xf32>
    tpu.vector_store %arg14[%c0_35, %c0_36, %c8], %17 {strides = array<i32>} : memref<16x16x216xf32, #tpu.memory_space<vmem>>, vector<16x16x8xf32>,
    %c0_37 = arith.constant 0 : index
    %c2 = arith.constant 2 : index
    %c0_38 = arith.constant 0 : index
    %19 = vector.load %arg13[%c0_37, %c2, %c0_38] : memref<18x18x24xf32, #tpu.memory_space<vmem>>, vector<16x16x8xf32>
    %c0_39 = arith.constant 0 : index
    %c0_40 = arith.constant 0 : index
    %c16 = arith.constant 16 : index
    %20 = vector.load %arg14[%c0_39, %c0_40, %c16] : memref<16x16x216xf32, #tpu.memory_space<vmem>>, vector<16x16x8xf32>
    tpu.vector_store %arg14[%c0_39, %c0_40, %c16], %19 {strides = array<i32>} : memref<16x16x216xf32, #tpu.memory_space<vmem>>, vector<16x16x8xf32>,
    %c1_41 = arith.constant 1 : index
    %c0_42 = arith.constant 0 : index
    %c0_43 = arith.constant 0 : index
    %21 = vector.load %arg13[%c1_41, %c0_42, %c0_43] : memref<18x18x24xf32, #tpu.memory_space<vmem>>, vector<16x16x8xf32>
    %c0_44 = arith.constant 0 : index
    %c0_45 = arith.constant 0 : index
    %c24 = arith.constant 24 : index
    %22 = vector.load %arg14[%c0_44, %c0_45, %c24] : memref<16x16x216xf32, #tpu.memory_space<vmem>>, vector<16x16x8xf32>
    tpu.vector_store %arg14[%c0_44, %c0_45, %c24], %21 {strides = array<i32>} : memref<16x16x216xf32, #tpu.memory_space<vmem>>, vector<16x16x8xf32>,
    %c1_46 = arith.constant 1 : index
    %c1_47 = arith.constant 1 : index
    %c0_48 = arith.constant 0 : index
    %23 = vector.load %arg13[%c1_46, %c1_47, %c0_48] : memref<18x18x24xf32, #tpu.memory_space<vmem>>, vector<16x16x8xf32>
    %c0_49 = arith.constant 0 : index
    %c0_50 = arith.constant 0 : index
    %c32 = arith.constant 32 : index
    %24 = vector.load %arg14[%c0_49, %c0_50, %c32] : memref<16x16x216xf32, #tpu.memory_space<vmem>>, vector<16x16x8xf32>
    tpu.vector_store %arg14[%c0_49, %c0_50, %c32], %23 {strides = array<i32>} : memref<16x16x216xf32, #tpu.memory_space<vmem>>, vector<16x16x8xf32>,
    %c1_51 = arith.constant 1 : index
    %c2_52 = arith.constant 2 : index
    %c0_53 = arith.constant 0 : index
    %25 = vector.load %arg13[%c1_51, %c2_52, %c0_53] : memref<18x18x24xf32, #tpu.memory_space<vmem>>, vector<16x16x8xf32>
    %c0_54 = arith.constant 0 : index
    %c0_55 = arith.constant 0 : index
    %c40 = arith.constant 40 : index
    %26 = vector.load %arg14[%c0_54, %c0_55, %c40] : memref<16x16x216xf32, #tpu.memory_space<vmem>>, vector<16x16x8xf32>
    tpu.vector_store %arg14[%c0_54, %c0_55, %c40], %25 {strides = array<i32>} : memref<16x16x216xf32, #tpu.memory_space<vmem>>, vector<16x16x8xf32>,
    %c2_56 = arith.constant 2 : index
    %c0_57 = arith.constant 0 : index
    %c0_58 = arith.constant 0 : index
    %27 = vector.load %arg13[%c2_56, %c0_57, %c0_58] : memref<18x18x24xf32, #tpu.memory_space<vmem>>, vector<16x16x8xf32>
    %c0_59 = arith.constant 0 : index
    %c0_60 = arith.constant 0 : index
    %c48 = arith.constant 48 : index
    %28 = vector.load %arg14[%c0_59, %c0_60, %c48] : memref<16x16x216xf32, #tpu.memory_space<vmem>>, vector<16x16x8xf32>
    tpu.vector_store %arg14[%c0_59, %c0_60, %c48], %27 {strides = array<i32>} : memref<16x16x216xf32, #tpu.memory_space<vmem>>, vector<16x16x8xf32>,
    %c2_61 = arith.constant 2 : index
    %c1_62 = arith.constant 1 : index
    %c0_63 = arith.constant 0 : index
    %29 = vector.load %arg13[%c2_61, %c1_62, %c0_63] : memref<18x18x24xf32, #tpu.memory_space<vmem>>, vector<16x16x8xf32>
    %c0_64 = arith.constant 0 : index
    %c0_65 = arith.constant 0 : index
    %c56 = arith.constant 56 : index
    %30 = vector.load %arg14[%c0_64, %c0_65, %c56] : memref<16x16x216xf32, #tpu.memory_space<vmem>>, vector<16x16x8xf32>
    tpu.vector_store %arg14[%c0_64, %c0_65, %c56], %29 {strides = array<i32>} : memref<16x16x216xf32, #tpu.memory_space<vmem>>, vector<16x16x8xf32>,
    %c2_66 = arith.constant 2 : index
    %c2_67 = arith.constant 2 : index
    %c0_68 = arith.constant 0 : index
    %31 = vector.load %arg13[%c2_66, %c2_67, %c0_68] : memref<18x18x24xf32, #tpu.memory_space<vmem>>, vector<16x16x8xf32>
    %c0_69 = arith.constant 0 : index
    %c0_70 = arith.constant 0 : index
    %c64 = arith.constant 64 : index
    %32 = vector.load %arg14[%c0_69, %c0_70, %c64] : memref<16x16x216xf32, #tpu.memory_space<vmem>>, vector<16x16x8xf32>
    tpu.vector_store %arg14[%c0_69, %c0_70, %c64], %31 {strides = array<i32>} : memref<16x16x216xf32, #tpu.memory_space<vmem>>, vector<16x16x8xf32>,
    %c0_71 = arith.constant 0 : index
    %c0_72 = arith.constant 0 : index
    %c0_73 = arith.constant 0 : index
    %33 = vector.load %arg14[%c0_71, %c0_72, %c0_73] : memref<16x16x216xf32, #tpu.memory_space<vmem>>, vector<16x16x72xf32>
    %c0_74 = arith.constant 0 : index
    %c0_75 = arith.constant 0 : index
    %34 = vector.load %arg3[%c0_74, %c0_75] : memref<72x8xf32, #tpu.memory_space<vmem>>, vector<72x8xf32>
    %cst_76 = arith.constant dense<0.000000e+00> : vector<16x16x8xf32>
    %35 = tpu.matmul %33, %34, %cst_76 {dimension_numbers = #tpu.dot_dimension_numbers<[2], [0], [0, 1], [1], [0, 0, 0, 1, 1, 1], [], []>} : vector<16x16x72xf32>, vector<72x8xf32>, vector<16x16x8xf32> -> vector<16x16x8xf32>
    %c0_77 = arith.constant 0 : index
    %c0_78 = arith.constant 0 : index
    %36 = vector.load %arg4[%c0_77, %c0_78] : memref<1x8xf32, #tpu.memory_space<vmem>>, vector<1x8xf32>
    %37 = vector.shape_cast %36 : vector<1x8xf32> to vector<1x1x8xf32>
    %38 = vector.broadcast %37 : vector<1x1x8xf32> to vector<16x16x8xf32>
    %39 = arith.addf %35, %38 : vector<16x16x8xf32>
    %cst_79 = arith.constant 0.000000e+00 : f32
    %40 = vector.broadcast %cst_79 : f32 to vector<16x16x8xf32>
    %41 = arith.maximumf %39, %40 : vector<16x16x8xf32>
    %c0_80 = arith.constant 0 : index
    %c0_81 = arith.constant 0 : index
    %42 = vector.load %arg5[%c0_80, %c0_81] : memref<8x8xf32, #tpu.memory_space<vmem>>, vector<8x8xf32>
    %cst_82 = arith.constant dense<0.000000e+00> : vector<16x16x8xf32>
    %43 = tpu.matmul %41, %42, %cst_82 {dimension_numbers = #tpu.dot_dimension_numbers<[2], [0], [0, 1], [1], [0, 0, 0, 1, 1, 1], [], []>} : vector<16x16x8xf32>, vector<8x8xf32>, vector<16x16x8xf32> -> vector<16x16x8xf32>
    %44 = arith.addf %14, %43 : vector<16x16x8xf32>
    %c1_83 = arith.constant 1 : index
    %c1_84 = arith.constant 1 : index
    %c8_85 = arith.constant 8 : index
    %45 = vector.load %arg13[%c1_83, %c1_84, %c8_85] : memref<18x18x24xf32, #tpu.memory_space<vmem>>, vector<16x16x8xf32>
    tpu.vector_store %arg13[%c1_83, %c1_84, %c8_85], %41 {strides = array<i32>} : memref<18x18x24xf32, #tpu.memory_space<vmem>>, vector<16x16x8xf32>,
    %c0_86 = arith.constant 0 : index
    %c0_87 = arith.constant 0 : index
    %c0_88 = arith.constant 0 : index
    %46 = vector.load %arg13[%c0_86, %c0_87, %c0_88] : memref<18x18x24xf32, #tpu.memory_space<vmem>>, vector<16x16x16xf32>
    %c0_89 = arith.constant 0 : index
    %c0_90 = arith.constant 0 : index
    %c0_91 = arith.constant 0 : index
    %47 = vector.load %arg14[%c0_89, %c0_90, %c0_91] : memref<16x16x216xf32, #tpu.memory_space<vmem>>, vector<16x16x16xf32>
    tpu.vector_store %arg14[%c0_89, %c0_90, %c0_91], %46 {strides = array<i32>} : memref<16x16x216xf32, #tpu.memory_space<vmem>>, vector<16x16x16xf32>,
    %c0_92 = arith.constant 0 : index
    %c1_93 = arith.constant 1 : index
    %c0_94 = arith.constant 0 : index
    %48 = vector.load %arg13[%c0_92, %c1_93, %c0_94] : memref<18x18x24xf32, #tpu.memory_space<vmem>>, vector<16x16x16xf32>
    %c0_95 = arith.constant 0 : index
    %c0_96 = arith.constant 0 : index
    %c16_97 = arith.constant 16 : index
    %49 = vector.load %arg14[%c0_95, %c0_96, %c16_97] : memref<16x16x216xf32, #tpu.memory_space<vmem>>, vector<16x16x16xf32>
    tpu.vector_store %arg14[%c0_95, %c0_96, %c16_97], %48 {strides = array<i32>} : memref<16x16x216xf32, #tpu.memory_space<vmem>>, vector<16x16x16xf32>,
    %c0_98 = arith.constant 0 : index
    %c2_99 = arith.constant 2 : index
    %c0_100 = arith.constant 0 : index
    %50 = vector.load %arg13[%c0_98, %c2_99, %c0_100] : memref<18x18x24xf32, #tpu.memory_space<vmem>>, vector<16x16x16xf32>
    %c0_101 = arith.constant 0 : index
    %c0_102 = arith.constant 0 : index
    %c32_103 = arith.constant 32 : index
    %51 = vector.load %arg14[%c0_101, %c0_102, %c32_103] : memref<16x16x216xf32, #tpu.memory_space<vmem>>, vector<16x16x16xf32>
    tpu.vector_store %arg14[%c0_101, %c0_102, %c32_103], %50 {strides = array<i32>} : memref<16x16x216xf32, #tpu.memory_space<vmem>>, vector<16x16x16xf32>,
    %c1_104 = arith.constant 1 : index
    %c0_105 = arith.constant 0 : index
    %c0_106 = arith.constant 0 : index
    %52 = vector.load %arg13[%c1_104, %c0_105, %c0_106] : memref<18x18x24xf32, #tpu.memory_space<vmem>>, vector<16x16x16xf32>
    %c0_107 = arith.constant 0 : index
    %c0_108 = arith.constant 0 : index
    %c48_109 = arith.constant 48 : index
    %53 = vector.load %arg14[%c0_107, %c0_108, %c48_109] : memref<16x16x216xf32, #tpu.memory_space<vmem>>, vector<16x16x16xf32>
    tpu.vector_store %arg14[%c0_107, %c0_108, %c48_109], %52 {strides = array<i32>} : memref<16x16x216xf32, #tpu.memory_space<vmem>>, vector<16x16x16xf32>,
    %c1_110 = arith.constant 1 : index
    %c1_111 = arith.constant 1 : index
    %c0_112 = arith.constant 0 : index
    %54 = vector.load %arg13[%c1_110, %c1_111, %c0_112] : memref<18x18x24xf32, #tpu.memory_space<vmem>>, vector<16x16x16xf32>
    %c0_113 = arith.constant 0 : index
    %c0_114 = arith.constant 0 : index
    %c64_115 = arith.constant 64 : index
    %55 = vector.load %arg14[%c0_113, %c0_114, %c64_115] : memref<16x16x216xf32, #tpu.memory_space<vmem>>, vector<16x16x16xf32>
    tpu.vector_store %arg14[%c0_113, %c0_114, %c64_115], %54 {strides = array<i32>} : memref<16x16x216xf32, #tpu.memory_space<vmem>>, vector<16x16x16xf32>,
    %c1_116 = arith.constant 1 : index
    %c2_117 = arith.constant 2 : index
    %c0_118 = arith.constant 0 : index
    %56 = vector.load %arg13[%c1_116, %c2_117, %c0_118] : memref<18x18x24xf32, #tpu.memory_space<vmem>>, vector<16x16x16xf32>
    %c0_119 = arith.constant 0 : index
    %c0_120 = arith.constant 0 : index
    %c80 = arith.constant 80 : index
    %57 = vector.load %arg14[%c0_119, %c0_120, %c80] : memref<16x16x216xf32, #tpu.memory_space<vmem>>, vector<16x16x16xf32>
    tpu.vector_store %arg14[%c0_119, %c0_120, %c80], %56 {strides = array<i32>} : memref<16x16x216xf32, #tpu.memory_space<vmem>>, vector<16x16x16xf32>,
    %c2_121 = arith.constant 2 : index
    %c0_122 = arith.constant 0 : index
    %c0_123 = arith.constant 0 : index
    %58 = vector.load %arg13[%c2_121, %c0_122, %c0_123] : memref<18x18x24xf32, #tpu.memory_space<vmem>>, vector<16x16x16xf32>
    %c0_124 = arith.constant 0 : index
    %c0_125 = arith.constant 0 : index
    %c96 = arith.constant 96 : index
    %59 = vector.load %arg14[%c0_124, %c0_125, %c96] : memref<16x16x216xf32, #tpu.memory_space<vmem>>, vector<16x16x16xf32>
    tpu.vector_store %arg14[%c0_124, %c0_125, %c96], %58 {strides = array<i32>} : memref<16x16x216xf32, #tpu.memory_space<vmem>>, vector<16x16x16xf32>,
    %c2_126 = arith.constant 2 : index
    %c1_127 = arith.constant 1 : index
    %c0_128 = arith.constant 0 : index
    %60 = vector.load %arg13[%c2_126, %c1_127, %c0_128] : memref<18x18x24xf32, #tpu.memory_space<vmem>>, vector<16x16x16xf32>
    %c0_129 = arith.constant 0 : index
    %c0_130 = arith.constant 0 : index
    %c112 = arith.constant 112 : index
    %61 = vector.load %arg14[%c0_129, %c0_130, %c112] : memref<16x16x216xf32, #tpu.memory_space<vmem>>, vector<16x16x16xf32>
    tpu.vector_store %arg14[%c0_129, %c0_130, %c112], %60 {strides = array<i32>} : memref<16x16x216xf32, #tpu.memory_space<vmem>>, vector<16x16x16xf32>,
    %c2_131 = arith.constant 2 : index
    %c2_132 = arith.constant 2 : index
    %c0_133 = arith.constant 0 : index
    %62 = vector.load %arg13[%c2_131, %c2_132, %c0_133] : memref<18x18x24xf32, #tpu.memory_space<vmem>>, vector<16x16x16xf32>
    %c0_134 = arith.constant 0 : index
    %c0_135 = arith.constant 0 : index
    %c128 = arith.constant 128 : index
    %63 = vector.load %arg14[%c0_134, %c0_135, %c128] : memref<16x16x216xf32, #tpu.memory_space<vmem>>, vector<16x16x16xf32>
    tpu.vector_store %arg14[%c0_134, %c0_135, %c128], %62 {strides = array<i32>} : memref<16x16x216xf32, #tpu.memory_space<vmem>>, vector<16x16x16xf32>,
    %c0_136 = arith.constant 0 : index
    %c0_137 = arith.constant 0 : index
    %c0_138 = arith.constant 0 : index
    %64 = vector.load %arg14[%c0_136, %c0_137, %c0_138] : memref<16x16x216xf32, #tpu.memory_space<vmem>>, vector<16x16x144xf32>
    %c0_139 = arith.constant 0 : index
    %c0_140 = arith.constant 0 : index
    %65 = vector.load %arg6[%c0_139, %c0_140] : memref<144x8xf32, #tpu.memory_space<vmem>>, vector<144x8xf32>
    %cst_141 = arith.constant dense<0.000000e+00> : vector<16x16x8xf32>
    %66 = tpu.matmul %64, %65, %cst_141 {dimension_numbers = #tpu.dot_dimension_numbers<[2], [0], [0, 1], [1], [0, 0, 0, 1, 1, 1], [], []>} : vector<16x16x144xf32>, vector<144x8xf32>, vector<16x16x8xf32> -> vector<16x16x8xf32>
    %c0_142 = arith.constant 0 : index
    %c0_143 = arith.constant 0 : index
    %67 = vector.load %arg7[%c0_142, %c0_143] : memref<1x8xf32, #tpu.memory_space<vmem>>, vector<1x8xf32>
    %68 = vector.shape_cast %67 : vector<1x8xf32> to vector<1x1x8xf32>
    %69 = vector.broadcast %68 : vector<1x1x8xf32> to vector<16x16x8xf32>
    %70 = arith.addf %66, %69 : vector<16x16x8xf32>
    %cst_144 = arith.constant 0.000000e+00 : f32
    %71 = vector.broadcast %cst_144 : f32 to vector<16x16x8xf32>
    %72 = arith.maximumf %70, %71 : vector<16x16x8xf32>
    %c0_145 = arith.constant 0 : index
    %c0_146 = arith.constant 0 : index
    %73 = vector.load %arg8[%c0_145, %c0_146] : memref<8x8xf32, #tpu.memory_space<vmem>>, vector<8x8xf32>
    %cst_147 = arith.constant dense<0.000000e+00> : vector<16x16x8xf32>
    %74 = tpu.matmul %72, %73, %cst_147 {dimension_numbers = #tpu.dot_dimension_numbers<[2], [0], [0, 1], [1], [0, 0, 0, 1, 1, 1], [], []>} : vector<16x16x8xf32>, vector<8x8xf32>, vector<16x16x8xf32> -> vector<16x16x8xf32>
    %75 = arith.addf %44, %74 : vector<16x16x8xf32>
    %c1_148 = arith.constant 1 : index
    %c1_149 = arith.constant 1 : index
    %c16_150 = arith.constant 16 : index
    %76 = vector.load %arg13[%c1_148, %c1_149, %c16_150] : memref<18x18x24xf32, #tpu.memory_space<vmem>>, vector<16x16x8xf32>
    tpu.vector_store %arg13[%c1_148, %c1_149, %c16_150], %72 {strides = array<i32>} : memref<18x18x24xf32, #tpu.memory_space<vmem>>, vector<16x16x8xf32>,
    %c0_151 = arith.constant 0 : index
    %c0_152 = arith.constant 0 : index
    %c0_153 = arith.constant 0 : index
    %77 = vector.load %arg13[%c0_151, %c0_152, %c0_153] : memref<18x18x24xf32, #tpu.memory_space<vmem>>, vector<16x16x24xf32>
    %c0_154 = arith.constant 0 : index
    %c0_155 = arith.constant 0 : index
    %c0_156 = arith.constant 0 : index
    %78 = vector.load %arg14[%c0_154, %c0_155, %c0_156] : memref<16x16x216xf32, #tpu.memory_space<vmem>>, vector<16x16x24xf32>
    tpu.vector_store %arg14[%c0_154, %c0_155, %c0_156], %77 {strides = array<i32>} : memref<16x16x216xf32, #tpu.memory_space<vmem>>, vector<16x16x24xf32>,
    %c0_157 = arith.constant 0 : index
    %c1_158 = arith.constant 1 : index
    %c0_159 = arith.constant 0 : index
    %79 = vector.load %arg13[%c0_157, %c1_158, %c0_159] : memref<18x18x24xf32, #tpu.memory_space<vmem>>, vector<16x16x24xf32>
    %c0_160 = arith.constant 0 : index
    %c0_161 = arith.constant 0 : index
    %c24_162 = arith.constant 24 : index
    %80 = vector.load %arg14[%c0_160, %c0_161, %c24_162] : memref<16x16x216xf32, #tpu.memory_space<vmem>>, vector<16x16x24xf32>
    tpu.vector_store %arg14[%c0_160, %c0_161, %c24_162], %79 {strides = array<i32>} : memref<16x16x216xf32, #tpu.memory_space<vmem>>, vector<16x16x24xf32>,
    %c0_163 = arith.constant 0 : index
    %c2_164 = arith.constant 2 : index
    %c0_165 = arith.constant 0 : index
    %81 = vector.load %arg13[%c0_163, %c2_164, %c0_165] : memref<18x18x24xf32, #tpu.memory_space<vmem>>, vector<16x16x24xf32>
    %c0_166 = arith.constant 0 : index
    %c0_167 = arith.constant 0 : index
    %c48_168 = arith.constant 48 : index
    %82 = vector.load %arg14[%c0_166, %c0_167, %c48_168] : memref<16x16x216xf32, #tpu.memory_space<vmem>>, vector<16x16x24xf32>
    tpu.vector_store %arg14[%c0_166, %c0_167, %c48_168], %81 {strides = array<i32>} : memref<16x16x216xf32, #tpu.memory_space<vmem>>, vector<16x16x24xf32>,
    %c1_169 = arith.constant 1 : index
    %c0_170 = arith.constant 0 : index
    %c0_171 = arith.constant 0 : index
    %83 = vector.load %arg13[%c1_169, %c0_170, %c0_171] : memref<18x18x24xf32, #tpu.memory_space<vmem>>, vector<16x16x24xf32>
    %c0_172 = arith.constant 0 : index
    %c0_173 = arith.constant 0 : index
    %c72 = arith.constant 72 : index
    %84 = vector.load %arg14[%c0_172, %c0_173, %c72] : memref<16x16x216xf32, #tpu.memory_space<vmem>>, vector<16x16x24xf32>
    tpu.vector_store %arg14[%c0_172, %c0_173, %c72], %83 {strides = array<i32>} : memref<16x16x216xf32, #tpu.memory_space<vmem>>, vector<16x16x24xf32>,
    %c1_174 = arith.constant 1 : index
    %c1_175 = arith.constant 1 : index
    %c0_176 = arith.constant 0 : index
    %85 = vector.load %arg13[%c1_174, %c1_175, %c0_176] : memref<18x18x24xf32, #tpu.memory_space<vmem>>, vector<16x16x24xf32>
    %c0_177 = arith.constant 0 : index
    %c0_178 = arith.constant 0 : index
    %c96_179 = arith.constant 96 : index
    %86 = vector.load %arg14[%c0_177, %c0_178, %c96_179] : memref<16x16x216xf32, #tpu.memory_space<vmem>>, vector<16x16x24xf32>
    tpu.vector_store %arg14[%c0_177, %c0_178, %c96_179], %85 {strides = array<i32>} : memref<16x16x216xf32, #tpu.memory_space<vmem>>, vector<16x16x24xf32>,
    %c1_180 = arith.constant 1 : index
    %c2_181 = arith.constant 2 : index
    %c0_182 = arith.constant 0 : index
    %87 = vector.load %arg13[%c1_180, %c2_181, %c0_182] : memref<18x18x24xf32, #tpu.memory_space<vmem>>, vector<16x16x24xf32>
    %c0_183 = arith.constant 0 : index
    %c0_184 = arith.constant 0 : index
    %c120 = arith.constant 120 : index
    %88 = vector.load %arg14[%c0_183, %c0_184, %c120] : memref<16x16x216xf32, #tpu.memory_space<vmem>>, vector<16x16x24xf32>
    tpu.vector_store %arg14[%c0_183, %c0_184, %c120], %87 {strides = array<i32>} : memref<16x16x216xf32, #tpu.memory_space<vmem>>, vector<16x16x24xf32>,
    %c2_185 = arith.constant 2 : index
    %c0_186 = arith.constant 0 : index
    %c0_187 = arith.constant 0 : index
    %89 = vector.load %arg13[%c2_185, %c0_186, %c0_187] : memref<18x18x24xf32, #tpu.memory_space<vmem>>, vector<16x16x24xf32>
    %c0_188 = arith.constant 0 : index
    %c0_189 = arith.constant 0 : index
    %c144 = arith.constant 144 : index
    %90 = vector.load %arg14[%c0_188, %c0_189, %c144] : memref<16x16x216xf32, #tpu.memory_space<vmem>>, vector<16x16x24xf32>
    tpu.vector_store %arg14[%c0_188, %c0_189, %c144], %89 {strides = array<i32>} : memref<16x16x216xf32, #tpu.memory_space<vmem>>, vector<16x16x24xf32>,
    %c2_190 = arith.constant 2 : index
    %c1_191 = arith.constant 1 : index
    %c0_192 = arith.constant 0 : index
    %91 = vector.load %arg13[%c2_190, %c1_191, %c0_192] : memref<18x18x24xf32, #tpu.memory_space<vmem>>, vector<16x16x24xf32>
    %c0_193 = arith.constant 0 : index
    %c0_194 = arith.constant 0 : index
    %c168 = arith.constant 168 : index
    %92 = vector.load %arg14[%c0_193, %c0_194, %c168] : memref<16x16x216xf32, #tpu.memory_space<vmem>>, vector<16x16x24xf32>
    tpu.vector_store %arg14[%c0_193, %c0_194, %c168], %91 {strides = array<i32>} : memref<16x16x216xf32, #tpu.memory_space<vmem>>, vector<16x16x24xf32>,
    %c2_195 = arith.constant 2 : index
    %c2_196 = arith.constant 2 : index
    %c0_197 = arith.constant 0 : index
    %93 = vector.load %arg13[%c2_195, %c2_196, %c0_197] : memref<18x18x24xf32, #tpu.memory_space<vmem>>, vector<16x16x24xf32>
    %c0_198 = arith.constant 0 : index
    %c0_199 = arith.constant 0 : index
    %c192 = arith.constant 192 : index
    %94 = vector.load %arg14[%c0_198, %c0_199, %c192] : memref<16x16x216xf32, #tpu.memory_space<vmem>>, vector<16x16x24xf32>
    tpu.vector_store %arg14[%c0_198, %c0_199, %c192], %93 {strides = array<i32>} : memref<16x16x216xf32, #tpu.memory_space<vmem>>, vector<16x16x24xf32>,
    %c0_200 = arith.constant 0 : index
    %c0_201 = arith.constant 0 : index
    %c0_202 = arith.constant 0 : index
    %95 = vector.load %arg14[%c0_200, %c0_201, %c0_202] : memref<16x16x216xf32, #tpu.memory_space<vmem>>, vector<16x16x216xf32>
    %c0_203 = arith.constant 0 : index
    %c0_204 = arith.constant 0 : index
    %96 = vector.load %arg9[%c0_203, %c0_204] : memref<216x8xf32, #tpu.memory_space<vmem>>, vector<216x8xf32>
    %cst_205 = arith.constant dense<0.000000e+00> : vector<16x16x8xf32>
    %97 = tpu.matmul %95, %96, %cst_205 {dimension_numbers = #tpu.dot_dimension_numbers<[2], [0], [0, 1], [1], [0, 0, 0, 1, 1, 1], [], []>} : vector<16x16x216xf32>, vector<216x8xf32>, vector<16x16x8xf32> -> vector<16x16x8xf32>
    %c0_206 = arith.constant 0 : index
    %c0_207 = arith.constant 0 : index
    %98 = vector.load %arg10[%c0_206, %c0_207] : memref<1x8xf32, #tpu.memory_space<vmem>>, vector<1x8xf32>
    %99 = vector.shape_cast %98 : vector<1x8xf32> to vector<1x1x8xf32>
    %100 = vector.broadcast %99 : vector<1x1x8xf32> to vector<16x16x8xf32>
    %101 = arith.addf %97, %100 : vector<16x16x8xf32>
    %cst_208 = arith.constant 0.000000e+00 : f32
    %102 = vector.broadcast %cst_208 : f32 to vector<16x16x8xf32>
    %103 = arith.maximumf %101, %102 : vector<16x16x8xf32>
    %c0_209 = arith.constant 0 : index
    %c0_210 = arith.constant 0 : index
    %104 = vector.load %arg11[%c0_209, %c0_210] : memref<8x8xf32, #tpu.memory_space<vmem>>, vector<8x8xf32>
    %cst_211 = arith.constant dense<0.000000e+00> : vector<16x16x8xf32>
    %105 = tpu.matmul %103, %104, %cst_211 {dimension_numbers = #tpu.dot_dimension_numbers<[2], [0], [0, 1], [1], [0, 0, 0, 1, 1, 1], [], []>} : vector<16x16x8xf32>, vector<8x8xf32>, vector<16x16x8xf32> -> vector<16x16x8xf32>
    %106 = arith.addf %75, %105 : vector<16x16x8xf32>
    %107 = arith.addf %106, %9 : vector<16x16x8xf32>
    %c0_212 = arith.constant 0 : index
    %c0_213 = arith.constant 0 : index
    %c0_214 = arith.constant 0 : index
    %c0_215 = arith.constant 0 : index
    %108 = vector.load %arg12[%c0_212, %c0_213, %c0_214, %c0_215] : memref<1x16x16x8xf32, #tpu.memory_space<vmem>>, vector<1x16x16x8xf32>
    %109 = vector.shape_cast %108 : vector<1x16x16x8xf32> to vector<16x16x8xf32>
    %110 = vector.shape_cast %107 : vector<16x16x8xf32> to vector<1x16x16x8xf32>
    tpu.vector_store %arg12[%c0_212, %c0_213, %c0_214, %c0_215], %110 {strides = array<i32>} : memref<1x16x16x8xf32, #tpu.memory_space<vmem>>, vector<1x16x16x8xf32>,
    return
  }
  func.func @transform_0(%arg0: i32) -> (i32, i32, i32, i32) {
    %c0_i32 = arith.constant 0 : i32
    %c0_i32_0 = arith.constant 0 : i32
    %c0_i32_1 = arith.constant 0 : i32
    %c0_i32_2 = arith.constant 0 : i32
    return %arg0, %c0_i32, %c0_i32_0, %c0_i32_1 : i32, i32, i32, i32
  }
  func.func @transform_1(%arg0: i32) -> (i32, i32) {
    %c0_i32 = arith.constant 0 : i32
    %c0_i32_0 = arith.constant 0 : i32
    %c0_i32_1 = arith.constant 0 : i32
    return %c0_i32, %c0_i32_0 : i32, i32
  }
  func.func @transform_2(%arg0: i32) -> (i32, i32) {
    %c0_i32 = arith.constant 0 : i32
    %c0_i32_0 = arith.constant 0 : i32
    %c0_i32_1 = arith.constant 0 : i32
    return %c0_i32, %c0_i32_0 : i32, i32
  }
  func.func @transform_3(%arg0: i32) -> (i32, i32) {
    %c0_i32 = arith.constant 0 : i32
    %c0_i32_0 = arith.constant 0 : i32
    %c0_i32_1 = arith.constant 0 : i32
    return %c0_i32, %c0_i32_0 : i32, i32
  }
  func.func @transform_4(%arg0: i32) -> (i32, i32) {
    %c0_i32 = arith.constant 0 : i32
    %c0_i32_0 = arith.constant 0 : i32
    %c0_i32_1 = arith.constant 0 : i32
    return %c0_i32, %c0_i32_0 : i32, i32
  }
  func.func @transform_5(%arg0: i32) -> (i32, i32) {
    %c0_i32 = arith.constant 0 : i32
    %c0_i32_0 = arith.constant 0 : i32
    %c0_i32_1 = arith.constant 0 : i32
    return %c0_i32, %c0_i32_0 : i32, i32
  }
  func.func @transform_6(%arg0: i32) -> (i32, i32) {
    %c0_i32 = arith.constant 0 : i32
    %c0_i32_0 = arith.constant 0 : i32
    %c0_i32_1 = arith.constant 0 : i32
    return %c0_i32, %c0_i32_0 : i32, i32
  }
  func.func @transform_7(%arg0: i32) -> (i32, i32) {
    %c0_i32 = arith.constant 0 : i32
    %c0_i32_0 = arith.constant 0 : i32
    %c0_i32_1 = arith.constant 0 : i32
    return %c0_i32, %c0_i32_0 : i32, i32
  }
  func.func @transform_8(%arg0: i32) -> (i32, i32) {
    %c0_i32 = arith.constant 0 : i32
    %c0_i32_0 = arith.constant 0 : i32
    %c0_i32_1 = arith.constant 0 : i32
    return %c0_i32, %c0_i32_0 : i32, i32
  }
  func.func @transform_9(%arg0: i32) -> (i32, i32) {
    %c0_i32 = arith.constant 0 : i32
    %c0_i32_0 = arith.constant 0 : i32
    %c0_i32_1 = arith.constant 0 : i32
    return %c0_i32, %c0_i32_0 : i32, i32
  }
  func.func @transform_10(%arg0: i32) -> (i32, i32) {
    %c0_i32 = arith.constant 0 : i32
    %c0_i32_0 = arith.constant 0 : i32
    %c0_i32_1 = arith.constant 0 : i32
    return %c0_i32, %c0_i32_0 : i32, i32
  }
  func.func @transform_11(%arg0: i32) -> (i32, i32, i32, i32) {
    %c0_i32 = arith.constant 0 : i32
    %c0_i32_0 = arith.constant 0 : i32
    %c0_i32_1 = arith.constant 0 : i32
    %c0_i32_2 = arith.constant 0 : i32
    return %arg0, %c0_i32, %c0_i32_0, %c0_i32_1 : i32, i32, i32, i32
  }
}

</mosaic_0001>

<llo_original>
// kernel: tpu_custom_call.1
$region0: #{tpu_custom_call.1}
  #allocation0 [shape = 'u32[]', space=smem, size = 0x4, offset = 0x4, fixed_abs, tag = 'smem constant byte address 0x4 - core index']
  #allocation1 [shape = 'u32[144,128]{1,0:T(1,128)}', space=vmem, size = 0x12000, scoped, tag = 'internal scratch']
  #allocation2 [shape = 'f32[18,18,24]{2,1,0:T(8,128)}', space=vmem, size = 0x36000, scoped, tag = 'scratch operand']
  #allocation3 [shape = 'f32[16,16,216]{2,1,0:T(8,128)}', space=vmem, size = 0x40000, scoped, tag = 'scratch operand']
  %s0 = inlined_call_operand.hbm [shape: f32[2,16,16,8], index: 0, kind: input, shape index: {}]
  %s1 = inlined_call_operand.hbm [shape: f32[8,8], index: 1, kind: input, shape index: {}]
  %s2 = inlined_call_operand.hbm [shape: f32[72,8], index: 2, kind: input, shape index: {}]
  %s3 = inlined_call_operand.hbm [shape: f32[1,8], index: 3, kind: input, shape index: {}]
  %s4 = inlined_call_operand.hbm [shape: f32[8,8], index: 4, kind: input, shape index: {}]
  %s5 = inlined_call_operand.hbm [shape: f32[144,8], index: 5, kind: input, shape index: {}]
  %s6 = inlined_call_operand.hbm [shape: f32[1,8], index: 6, kind: input, shape index: {}]
  %s7 = inlined_call_operand.hbm [shape: f32[8,8], index: 7, kind: input, shape index: {}]
  %s8 = inlined_call_operand.hbm [shape: f32[216,8], index: 8, kind: input, shape index: {}]
  %s9 = inlined_call_operand.hbm [shape: f32[1,8], index: 9, kind: input, shape index: {}]
  %s10 = inlined_call_operand.hbm [shape: f32[8,8], index: 10, kind: input, shape index: {}]
  %s11 = inlined_call_operand.hbm [shape: f32[2,16,16,8], index: 11, kind: output, shape index: {}]
  %s12 = sld [smem:[#allocation0]]
  $region121: #{tpu_custom_call.1} parent=0
    _
  %s14 = ssub.s32 1, %s12
  %s15 = scalar_select 0, %s14, %s12
  $region1: #{tpu_custom_call.1} parent=0
    #allocation4 [shape = 'u8[262144]{0}', space=vmem, size = 0x40000, scoped, tag = 'input window, operand 0']
    #allocation5 [shape = 's32[2]{0}', space=sflag, size = 0x8, scoped, tag = 'scoped memory for tpu_custom_call.1']
    #allocation6 [shape = 's32[2]{0}', space=sflag, size = 0x8, scoped, tag = 'scoped memory for tpu_custom_call.1']
    #allocation7 [shape = 'u8[4096]{0}', space=vmem, size = 0x1000, scoped, tag = 'input window, operand 1, single buffered']
    #allocation8 [shape = 's32[1]{0}', space=sflag, size = 0x4, scoped, tag = 'scoped memory for tpu_custom_call.1']
    #allocation9 [shape = 'u8[36864]{0}', space=vmem, size = 0x9000, scoped, tag = 'input window, operand 2, single buffered']
    #allocation10 [shape = 'u8[512]{0}', space=vmem, size = 0x400, scoped, tag = 'input window, operand 3, single buffered']
    #allocation11 [shape = 's32[1]{0}', space=sflag, size = 0x4, scoped, tag = 'scoped memory for tpu_custom_call.1']
    #allocation12 [shape = 'u8[4096]{0}', space=vmem, size = 0x1000, scoped, tag = 'input window, operand 4, single buffered']
    #allocation13 [shape = 'u8[73728]{0}', space=vmem, size = 0x12000, scoped, tag = 'input window, operand 5, single buffered']
    #allocation14 [shape = 's32[1]{0}', space=sflag, size = 0x4, scoped, tag = 'scoped memory for tpu_custom_call.1']
    #allocation15 [shape = 'u8[512]{0}', space=vmem, size = 0x400, scoped, tag = 'input window, operand 6, single buffered']
    #allocation16 [shape = 'u8[4096]{0}', space=vmem, size = 0x1000, scoped, tag = 'input window, operand 7, single buffered']
    #allocation17 [shape = 's32[1]{0}', space=sflag, size = 0x4, scoped, tag = 'scoped memory for tpu_custom_call.1']
    #allocation18 [shape = 'u8[110592]{0}', space=vmem, size = 0x1b000, scoped, tag = 'input window, operand 8, single buffered']
    #allocation19 [shape = 'u8[512]{0}', space=vmem, size = 0x400, scoped, tag = 'input window, operand 9, single buffered']
    #allocation20 [shape = 's32[1]{0}', space=sflag, size = 0x4, scoped, tag = 'scoped memory for tpu_custom_call.1']
    #allocation21 [shape = 'u8[4096]{0}', space=vmem, size = 0x1000, scoped, tag = 'input window, operand 10, single buffered']
    #allocation22 [shape = 'u8[262144]{0}', space=vmem, size = 0x40000, scoped, tag = 'output window, operand 0']
    %16 = vsyncpa [#allocation5], 0
    %s17 = scalar_lea.sflag [#allocation5], 1
    %18 = vsyncpa %s17, 0
    %19 = vsyncpa [#allocation8], 0
    %20 = vsyncpa [#allocation11], 0
    %21 = vsyncpa [#allocation14], 0
    %22 = vsyncpa [#allocation17], 0
    %23 = vsyncpa [#allocation20], 0
    %24 = vsyncpa [#allocation6], 0
    %s25 = scalar_lea.sflag [#allocation6], 1
    %26 = vsyncpa %s25, 0
    loop: start=0, step=1, limit=4
    $region2: #{tpu_custom_call.1} parent=1 // loop_pre_header
      _
    $region3: #{tpu_custom_call.1} parent=1 // loop_header
      %s28 = sphi 0, %s32
      %p29 = scmp.ge.s32.totalorder %s28, 4
      %s38 = sphi 0, %s40
      %s41 = sphi 0, %s38
      %s42 = sphi 0, %s41
      %s58 = sphi 0, %s42
      %s62 = sphi 0, %s62
      %s64 = sphi 0, %s62
      %s65 = sphi 0, %s64
      %s79 = sphi 0, %s65
      %s83 = sphi 0, %s83
      %s85 = sphi 0, %s83
      %s86 = sphi 0, %s85
      %s100 = sphi 0, %s86
      %s104 = sphi 0, %s104
      %s106 = sphi 0, %s104
      %s107 = sphi 0, %s106
      %s121 = sphi 0, %s107
      %s125 = sphi 0, %s125
      %s127 = sphi 0, %s125
      %s128 = sphi 0, %s127
      %s142 = sphi 0, %s128
      %s146 = sphi 0, %s146
      %s148 = sphi 0, %s146
      %s149 = sphi 0, %s148
      %s163 = sphi 0, %s149
      %s167 = sphi 0, %s167
      %s169 = sphi 0, %s167
      %s170 = sphi 0, %s169
      %s184 = sphi 0, %s170
      %s188 = sphi 0, %s188
      %s190 = sphi 0, %s188
      %s191 = sphi 0, %s190
      %s205 = sphi 0, %s191
      %s209 = sphi 0, %s209
      %s211 = sphi 0, %s209
      %s212 = sphi 0, %s211
      %s226 = sphi 0, %s212
      %s230 = sphi 0, %s230
      %s232 = sphi 0, %s230
      %s233 = sphi 0, %s232
      %s247 = sphi 0, %s233
      %s251 = sphi 0, %s251
      %s253 = sphi 0, %s251
      %s254 = sphi 0, %s253
      %s268 = sphi 0, %s254
      %s274 = sphi 0, %s276
      %s277 = sphi 0, %s274
      %s278 = sphi 0, %s277
      %s294 = sphi 0, %s278
    $region4: #{tpu_custom_call.1} parent=1 // loop_header_branch
      %31 = sbr.rel (%p29) target = $region8
    $region5: #{tpu_custom_call.1} parent=1 // loop_body
      %s33 = ssub.s32 %s28, 1
      %s34 = ssub.s32 %s28, 2
      %s35 = sadd.s32 %s28, 1
      %s36 = ssub.s32 %s28, %s35
      %p37 = scmp.eq.s32.totalorder %s36, 0
      %s39 = sadd.s32 %s38, 1
      %s40 = scalar_select %p37, %s38, %s39
      %p43 = pneg %p37
      %p44 = scmp.eq.s32.totalorder %s28, 1
      %p45 = por %p43, %p44
      %p46 = scmp.ne.s32.totalorder %s38, %s41
      %p47 = scmp.eq.s32.totalorder %s28, 0
      %p48 = por %p46, %p47
      %p49 = scmp.ne.s32.totalorder %s38, %s41
      %p50 = scmp.eq.s32.totalorder %s33, 1
      %p51 = por %p49, %p50
      %p52 = scmp.ne.s32.totalorder %s41, %s42
      %p53 = scmp.eq.s32.totalorder %s33, 0
      %p54 = por %p52, %p53
      %p55 = scmp.ne.s32.totalorder %s41, %s42
      %p56 = scmp.eq.s32.totalorder %s34, 1
      %p57 = por %p55, %p56
      %p59 = scmp.ne.s32.totalorder %s42, %s58
      %p60 = scmp.eq.s32.totalorder %s34, 0
      %p61 = por %p59, %p60
      %s63 = sadd.s32 %s62, 1
      %p66 = scmp.eq.s32.totalorder %s28, 1
      %p67 = scmp.ne.s32.totalorder %s62, %s64
      %p68 = scmp.eq.s32.totalorder %s28, 0
      %p69 = por %p67, %p68
      %p70 = scmp.ne.s32.totalorder %s62, %s64
      %p71 = scmp.eq.s32.totalorder %s33, 1
      %p72 = por %p70, %p71
      %p73 = scmp.ne.s32.totalorder %s64, %s65
      %p74 = scmp.eq.s32.totalorder %s33, 0
      %p75 = por %p73, %p74
      %p76 = scmp.ne.s32.totalorder %s64, %s65
      %p77 = scmp.eq.s32.totalorder %s34, 1
      %p78 = por %p76, %p77
      %p80 = scmp.ne.s32.totalorder %s65, %s79
      %p81 = scmp.eq.s32.totalorder %s34, 0
      %p82 = por %p80, %p81
      %s84 = sadd.s32 %s83, 1
      %p87 = scmp.eq.s32.totalorder %s28, 1
      %p88 = scmp.ne.s32.totalorder %s83, %s85
      %p89 = scmp.eq.s32.totalorder %s28, 0
      %p90 = por %p88, %p89
      %p91 = scmp.ne.s32.totalorder %s83, %s85
      %p92 = scmp.eq.s32.totalorder %s33, 1
      %p93 = por %p91, %p92
      %p94 = scmp.ne.s32.totalorder %s85, %s86
      %p95 = scmp.eq.s32.totalorder %s33, 0
      %p96 = por %p94, %p95
      %p97 = scmp.ne.s32.totalorder %s85, %s86
      %p98 = scmp.eq.s32.totalorder %s34, 1
      %p99 = por %p97, %p98
      %p101 = scmp.ne.s32.totalorder %s86, %s100
      %p102 = scmp.eq.s32.totalorder %s34, 0
      %p103 = por %p101, %p102
      %s105 = sadd.s32 %s104, 1
      %p108 = scmp.eq.s32.totalorder %s28, 1
      %p109 = scmp.ne.s32.totalorder %s104, %s106
      %p110 = scmp.eq.s32.totalorder %s28, 0
      %p111 = por %p109, %p110
      %p112 = scmp.ne.s32.totalorder %s104, %s106
      %p113 = scmp.eq.s32.totalorder %s33, 1
      %p114 = por %p112, %p113
      %p115 = scmp.ne.s32.totalorder %s106, %s107
      %p116 = scmp.eq.s32.totalorder %s33, 0
      %p117 = por %p115, %p116
      %p118 = scmp.ne.s32.totalorder %s106, %s107
      %p119 = scmp.eq.s32.totalorder %s34, 1
      %p120 = por %p118, %p119
      %p122 = scmp.ne.s32.totalorder %s107, %s121
      %p123 = scmp.eq.s32.totalorder %s34, 0
      %p124 = por %p122, %p123
      %s126 = sadd.s32 %s125, 1
      %p129 = scmp.eq.s32.totalorder %s28, 1
      %p130 = scmp.ne.s32.totalorder %s125, %s127
      %p131 = scmp.eq.s32.totalorder %s28, 0
      %p132 = por %p130, %p131
      %p133 = scmp.ne.s32.totalorder %s125, %s127
      %p134 = scmp.eq.s32.totalorder %s33, 1
      %p135 = por %p133, %p134
      %p136 = scmp.ne.s32.totalorder %s127, %s128
      %p137 = scmp.eq.s32.totalorder %s33, 0
      %p138 = por %p136, %p137
      %p139 = scmp.ne.s32.totalorder %s127, %s128
      %p140 = scmp.eq.s32.totalorder %s34, 1
      %p141 = por %p139, %p140
      %p143 = scmp.ne.s32.totalorder %s128, %s142
      %p144 = scmp.eq.s32.totalorder %s34, 0
      %p145 = por %p143, %p144
      %s147 = sadd.s32 %s146, 1
      %p150 = scmp.eq.s32.totalorder %s28, 1
      %p151 = scmp.ne.s32.totalorder %s146, %s148
      %p152 = scmp.eq.s32.totalorder %s28, 0
      %p153 = por %p151, %p152
      %p154 = scmp.ne.s32.totalorder %s146, %s148
      %p155 = scmp.eq.s32.totalorder %s33, 1
      %p156 = por %p154, %p155
      %p157 = scmp.ne.s32.totalorder %s148, %s149
      %p158 = scmp.eq.s32.totalorder %s33, 0
      %p159 = por %p157, %p158
      %p160 = scmp.ne.s32.totalorder %s148, %s149
      %p161 = scmp.eq.s32.totalorder %s34, 1
      %p162 = por %p160, %p161
      %p164 = scmp.ne.s32.totalorder %s149, %s163
      %p165 = scmp.eq.s32.totalorder %s34, 0
      %p166 = por %p164, %p165
      %s168 = sadd.s32 %s167, 1
      %p171 = scmp.eq.s32.totalorder %s28, 1
      %p172 = scmp.ne.s32.totalorder %s167, %s169
      %p173 = scmp.eq.s32.totalorder %s28, 0
      %p174 = por %p172, %p173
      %p175 = scmp.ne.s32.totalorder %s167, %s169
      %p176 = scmp.eq.s32.totalorder %s33, 1
      %p177 = por %p175, %p176
      %p178 = scmp.ne.s32.totalorder %s169, %s170
      %p179 = scmp.eq.s32.totalorder %s33, 0
      %p180 = por %p178, %p179
      %p181 = scmp.ne.s32.totalorder %s169, %s170
      %p182 = scmp.eq.s32.totalorder %s34, 1
      %p183 = por %p181, %p182
      %p185 = scmp.ne.s32.totalorder %s170, %s184
      %p186 = scmp.eq.s32.totalorder %s34, 0
      %p187 = por %p185, %p186
      %s189 = sadd.s32 %s188, 1
      %p192 = scmp.eq.s32.totalorder %s28, 1
      %p193 = scmp.ne.s32.totalorder %s188, %s190
      %p194 = scmp.eq.s32.totalorder %s28, 0
      %p195 = por %p193, %p194
      %p196 = scmp.ne.s32.totalorder %s188, %s190
      %p197 = scmp.eq.s32.totalorder %s33, 1
      %p198 = por %p196, %p197
      %p199 = scmp.ne.s32.totalorder %s190, %s191
      %p200 = scmp.eq.s32.totalorder %s33, 0
      %p201 = por %p199, %p200
      %p202 = scmp.ne.s32.totalorder %s190, %s191
      %p203 = scmp.eq.s32.totalorder %s34, 1
      %p204 = por %p202, %p203
      %p206 = scmp.ne.s32.totalorder %s191, %s205
      %p207 = scmp.eq.s32.totalorder %s34, 0
      %p208 = por %p206, %p207
      %s210 = sadd.s32 %s209, 1
      %p213 = scmp.eq.s32.totalorder %s28, 1
      %p214 = scmp.ne.s32.totalorder %s209, %s211
      %p215 = scmp.eq.s32.totalorder %s28, 0
      %p216 = por %p214, %p215
      %p217 = scmp.ne.s32.totalorder %s209, %s211
      %p218 = scmp.eq.s32.totalorder %s33, 1
      %p219 = por %p217, %p218
      %p220 = scmp.ne.s32.totalorder %s211, %s212
      %p221 = scmp.eq.s32.totalorder %s33, 0
      %p222 = por %p220, %p221
      %p223 = scmp.ne.s32.totalorder %s211, %s212
      %p224 = scmp.eq.s32.totalorder %s34, 1
      %p225 = por %p223, %p224
      %p227 = scmp.ne.s32.totalorder %s212, %s226
      %p228 = scmp.eq.s32.totalorder %s34, 0
      %p229 = por %p227, %p228
      %s231 = sadd.s32 %s230, 1
      %p234 = scmp.eq.s32.totalorder %s28, 1
      %p235 = scmp.ne.s32.totalorder %s230, %s232
      %p236 = scmp.eq.s32.totalorder %s28, 0
      %p237 = por %p235, %p236
      %p238 = scmp.ne.s32.totalorder %s230, %s232
      %p239 = scmp.eq.s32.totalorder %s33, 1
      %p240 = por %p238, %p239
      %p241 = scmp.ne.s32.totalorder %s232, %s233
      %p242 = scmp.eq.s32.totalorder %s33, 0
      %p243 = por %p241, %p242
      %p244 = scmp.ne.s32.totalorder %s232, %s233
      %p245 = scmp.eq.s32.totalorder %s34, 1
      %p246 = por %p244, %p245
      %p248 = scmp.ne.s32.totalorder %s233, %s247
      %p249 = scmp.eq.s32.totalorder %s34, 0
      %p250 = por %p248, %p249
      %s252 = sadd.s32 %s251, 1
      %p255 = scmp.eq.s32.totalorder %s28, 1
      %p256 = scmp.ne.s32.totalorder %s251, %s253
      %p257 = scmp.eq.s32.totalorder %s28, 0
      %p258 = por %p256, %p257
      %p259 = scmp.ne.s32.totalorder %s251, %s253
      %p260 = scmp.eq.s32.totalorder %s33, 1
      %p261 = por %p259, %p260
      %p262 = scmp.ne.s32.totalorder %s253, %s254
      %p263 = scmp.eq.s32.totalorder %s33, 0
      %p264 = por %p262, %p263
      %p265 = scmp.ne.s32.totalorder %s253, %s254
      %p266 = scmp.eq.s32.totalorder %s34, 1
      %p267 = por %p265, %p266
      %p269 = scmp.ne.s32.totalorder %s254, %s268
      %p270 = scmp.eq.s32.totalorder %s34, 0
      %p271 = por %p269, %p270
      %s272 = ssub.s32 %s28, %s35
      %p273 = scmp.eq.s32.totalorder %s272, 0
      %s275 = sadd.s32 %s274, 1
      %s276 = scalar_select %p273, %s274, %s275
      %p279 = pneg %p273
      %p280 = scmp.eq.s32.totalorder %s28, 1
      %p281 = por %p279, %p280
      %p282 = scmp.ne.s32.totalorder %s274, %s277
      %p283 = scmp.eq.s32.totalorder %s28, 0
      %p284 = por %p282, %p283
      %p285 = scmp.ne.s32.totalorder %s274, %s277
      %p286 = scmp.eq.s32.totalorder %s33, 1
      %p287 = por %p285, %p286
      %p288 = scmp.ne.s32.totalorder %s277, %s278
      %p289 = scmp.eq.s32.totalorder %s33, 0
      %p290 = por %p288, %p289
      %p291 = scmp.ne.s32.totalorder %s277, %s278
      %p292 = scmp.eq.s32.totalorder %s34, 1
      %p293 = por %p291, %p292
      %p295 = scmp.ne.s32.totalorder %s278, %s294
      %p296 = scmp.eq.s32.totalorder %s34, 0
      %p297 = por %p295, %p296
      %p298 = scmp.le.s32.totalorder 1, %s28
      %p299 = scmp.lt.s32.totalorder %s28, 3
      %p300 = pnand %p298, %p299
      %p301 = pneg %p300
      // Predicated region
      $region9: #{tpu_custom_call.1} parent=5 // pred_check
        _
      $region10: #{tpu_custom_call.1} parent=5 // pred_check_branch
        %303 = sbr.rel (%p300) target = $region12
      $region11: #{tpu_custom_call.1} parent=5 // pred_region
        %s304 = ssub.s32 %s28, 1
        // Predicated region
        $region13: #{tpu_custom_call.1} parent=11 // pred_check
          %p305 = pneg %p75
        $region14: #{tpu_custom_call.1} parent=11 // pred_check_branch
          %307 = sbr.rel (%p305) target = $region16
        $region15: #{tpu_custom_call.1} parent=11 // pred_region
          %s309 = ssub.s32 128, 128
          %310 = vsyncadd [#allocation8], %s309
          %s312 = sshll.u32 [#allocation7], 4
          %s313 = int_to_ptr.vmem [resolvable:$true] %s312
          %315 = dma.hbm_to_vmem [thread:$0]  %s1, 128, %s313, [#allocation8]
        $region16: #{tpu_custom_call.1} parent=11 // pred_fallthru
          _
        // Predicated region
        $region17: #{tpu_custom_call.1} parent=11 // pred_check
          %p316 = pneg %p96
        $region18: #{tpu_custom_call.1} parent=11 // pred_check_branch
          %318 = sbr.rel (%p316) target = $region20
        $region19: #{tpu_custom_call.1} parent=11 // pred_region
          %s320 = ssub.s32 1152, 1152
          %321 = vsyncadd [#allocation8], %s320
          %s322 = sshll.u32 [#allocation9], 4
          %s323 = int_to_ptr.vmem [resolvable:$true] %s322
          %328 = dma.hbm_to_vmem [thread:$0]  %s2, 1152, %s323, [#allocation8], 128, 128, 8
        $region20: #{tpu_custom_call.1} parent=11 // pred_fallthru
          _
        // Predicated region
        $region21: #{tpu_custom_call.1} parent=11 // pred_check
          %p329 = pneg %p117
        $region22: #{tpu_custom_call.1} parent=11 // pred_check_branch
          %331 = sbr.rel (%p329) target = $region24
        $region23: #{tpu_custom_call.1} parent=11 // pred_region
          %s333 = ssub.s32 16, 16
          %334 = vsyncadd [#allocation11], %s333
          %s336 = sshll.u32 [#allocation10], 4
          %s337 = int_to_ptr.vmem [resolvable:$true] %s336
          %339 = dma.hbm_to_vmem [thread:$0]  %s3, 16, %s337, [#allocation11]
        $region24: #{tpu_custom_call.1} parent=11 // pred_fallthru
          _
        // Predicated region
        $region25: #{tpu_custom_call.1} parent=11 // pred_check
          %p340 = pneg %p138
        $region26: #{tpu_custom_call.1} parent=11 // pred_check_branch
          %342 = sbr.rel (%p340) target = $region28
        $region27: #{tpu_custom_call.1} parent=11 // pred_region
          %s344 = ssub.s32 128, 128
          %345 = vsyncadd [#allocation11], %s344
          %s347 = sshll.u32 [#allocation12], 4
          %s348 = int_to_ptr.vmem [resolvable:$true] %s347
          %350 = dma.hbm_to_vmem [thread:$0]  %s4, 128, %s348, [#allocation11]
        $region28: #{tpu_custom_call.1} parent=11 // pred_fallthru
          _
        // Predicated region
        $region29: #{tpu_custom_call.1} parent=11 // pred_check
          %p351 = pneg %p159
        $region30: #{tpu_custom_call.1} parent=11 // pred_check_branch
          %353 = sbr.rel (%p351) target = $region32
        $region31: #{tpu_custom_call.1} parent=11 // pred_region
          %s355 = ssub.s32 2304, 2304
          %356 = vsyncadd [#allocation14], %s355
          %s357 = sshll.u32 [#allocation13], 4
          %s358 = int_to_ptr.vmem [resolvable:$true] %s357
          %363 = dma.hbm_to_vmem [thread:$0]  %s5, 2304, %s358, [#allocation14], 128, 128, 8
        $region32: #{tpu_custom_call.1} parent=11 // pred_fallthru
          _
        // Predicated region
        $region33: #{tpu_custom_call.1} parent=11 // pred_check
          %p364 = pneg %p180
        $region34: #{tpu_custom_call.1} parent=11 // pred_check_branch
          %366 = sbr.rel (%p364) target = $region36
        $region35: #{tpu_custom_call.1} parent=11 // pred_region
          %s368 = ssub.s32 16, 16
          %369 = vsyncadd [#allocation14], %s368
          %s371 = sshll.u32 [#allocation15], 4
          %s372 = int_to_ptr.vmem [resolvable:$true] %s371
          %374 = dma.hbm_to_vmem [thread:$0]  %s6, 16, %s372, [#allocation14]
        $region36: #{tpu_custom_call.1} parent=11 // pred_fallthru
          _
        // Predicated region
        $region37: #{tpu_custom_call.1} parent=11 // pred_check
          %p375 = pneg %p201
        $region38: #{tpu_custom_call.1} parent=11 // pred_check_branch
          %377 = sbr.rel (%p375) target = $region40
        $region39: #{tpu_custom_call.1} parent=11 // pred_region
          %s379 = ssub.s32 128, 128
          %380 = vsyncadd [#allocation17], %s379
          %s382 = sshll.u32 [#allocation16], 4
          %s383 = int_to_ptr.vmem [resolvable:$true] %s382
          %385 = dma.hbm_to_vmem [thread:$0]  %s7, 128, %s383, [#allocation17]
        $region40: #{tpu_custom_call.1} parent=11 // pred_fallthru
          _
        // Predicated region
        $region41: #{tpu_custom_call.1} parent=11 // pred_check
          %p386 = pneg %p222
        $region42: #{tpu_custom_call.1} parent=11 // pred_check_branch
          %388 = sbr.rel (%p386) target = $region44
        $region43: #{tpu_custom_call.1} parent=11 // pred_region
          %s390 = ssub.s32 3456, 3456
          %391 = vsyncadd [#allocation17], %s390
          %s392 = sshll.u32 [#allocation18], 4
          %s393 = int_to_ptr.vmem [resolvable:$true] %s392
          %398 = dma.hbm_to_vmem [thread:$0]  %s8, 3456, %s393, [#allocation17], 128, 128, 8
        $region44: #{tpu_custom_call.1} parent=11 // pred_fallthru
          _
        // Predicated region
        $region45: #{tpu_custom_call.1} parent=11 // pred_check
          %p399 = pneg %p243
        $region46: #{tpu_custom_call.1} parent=11 // pred_check_branch
          %401 = sbr.rel (%p399) target = $region48
        $region47: #{tpu_custom_call.1} parent=11 // pred_region
          %s403 = ssub.s32 16, 16
          %404 = vsyncadd [#allocation20], %s403
          %s406 = sshll.u32 [#allocation19], 4
          %s407 = int_to_ptr.vmem [resolvable:$true] %s406
          %409 = dma.hbm_to_vmem [thread:$0]  %s9, 16, %s407, [#allocation20]
        $region48: #{tpu_custom_call.1} parent=11 // pred_fallthru
          _
        // Predicated region
        $region49: #{tpu_custom_call.1} parent=11 // pred_check
          %p410 = pneg %p264
        $region50: #{tpu_custom_call.1} parent=11 // pred_check_branch
          %412 = sbr.rel (%p410) target = $region52
        $region51: #{tpu_custom_call.1} parent=11 // pred_region
          %s414 = ssub.s32 128, 128
          %415 = vsyncadd [#allocation20], %s414
          %s417 = sshll.u32 [#allocation21], 4
          %s418 = int_to_ptr.vmem [resolvable:$true] %s417
          %420 = dma.hbm_to_vmem [thread:$0]  %s10, 128, %s418, [#allocation20]
        $region52: #{tpu_custom_call.1} parent=11 // pred_fallthru
          _
      $region12: #{tpu_custom_call.1} parent=5 // pred_fallthru
        _
      %p421 = scmp.lt.s32.totalorder %s28, 2
      // Predicated region
      $region53: #{tpu_custom_call.1} parent=5 // pred_check
        %p422 = pneg %p421
      $region54: #{tpu_custom_call.1} parent=5 // pred_check_branch
        %424 = sbr.rel (%p422) target = $region56
      $region55: #{tpu_custom_call.1} parent=5 // pred_region
        // Predicated region
        $region57: #{tpu_custom_call.1} parent=55 // pred_check
          %p425 = pneg %p48
        $region58: #{tpu_custom_call.1} parent=55 // pred_check_branch
          %427 = sbr.rel (%p425) target = $region60
        $region59: #{tpu_custom_call.1} parent=55 // pred_region
          %s428 = sand.u32 %s38, 1
          %s429 = scalar_lea.sflag [#allocation5], %s428
          %s430 = sand.u32 %s38, 1
          %s431 = smul.addr %s430, 256
          %s432 = scalar_lea.vmem [#allocation4], %s431
          %s434 = ssub.s32 4096, 4096
          %435 = vsyncadd %s429, %s434
          %s436 = smul.addr %s28, 32
          %s437 = smul.addr %s436, 128
          %s438 = scalar_lea.hbm %s0, %s437
          %s439 = sshll.u32 %s432, 4
          %s440 = int_to_ptr.vmem [resolvable:$true] %s439
          %445 = dma.hbm_to_vmem [thread:$0]  %s438, 4096, %s440, %s429, 128, 128, 8
        $region60: #{tpu_custom_call.1} parent=55 // pred_fallthru
          _
      $region56: #{tpu_custom_call.1} parent=5 // pred_fallthru
        _
      %p446 = scmp.le.s32.totalorder 1, %s28
      %p447 = scmp.lt.s32.totalorder %s28, 3
      %p448 = pnand %p446, %p447
      %p449 = pneg %p448
      // Predicated region
      $region61: #{tpu_custom_call.1} parent=5 // pred_check
        _
      $region62: #{tpu_custom_call.1} parent=5 // pred_check_branch
        %451 = sbr.rel (%p448) target = $region64
      $region63: #{tpu_custom_call.1} parent=5 // pred_region
        %s452 = ssub.s32 %s28, 1
        %s453 = sand.u32 %s41, 1
        %s454 = scalar_lea.sflag [#allocation5], %s453
        %s455 = sand.u32 %s41, 1
        %s456 = smul.addr %s455, 256
        %s457 = scalar_lea.vmem [#allocation4], %s456
        // Predicated region
        $region65: #{tpu_custom_call.1} parent=63 // pred_check
          %p458 = pneg %p54
        $region66: #{tpu_custom_call.1} parent=63 // pred_check_branch
          %460 = sbr.rel (%p458) target = $region68
        $region67: #{tpu_custom_call.1} parent=63 // pred_region
          %461 = dma.done %s454, 4096
        $region68: #{tpu_custom_call.1} parent=63 // pred_fallthru
          _
        // Predicated region
        $region69: #{tpu_custom_call.1} parent=63 // pred_check
          %p462 = pneg %p75
        $region70: #{tpu_custom_call.1} parent=63 // pred_check_branch
          %464 = sbr.rel (%p462) target = $region72
        $region71: #{tpu_custom_call.1} parent=63 // pred_region
          %465 = dma.done [#allocation8], 128
        $region72: #{tpu_custom_call.1} parent=63 // pred_fallthru
          _
        // Predicated region
        $region73: #{tpu_custom_call.1} parent=63 // pred_check
          %p466 = pneg %p96
        $region74: #{tpu_custom_call.1} parent=63 // pred_check_branch
          %468 = sbr.rel (%p466) target = $region76
        $region75: #{tpu_custom_call.1} parent=63 // pred_region
          %469 = dma.done [#allocation8], 1152
        $region76: #{tpu_custom_call.1} parent=63 // pred_fallthru
          _
        // Predicated region
        $region77: #{tpu_custom_call.1} parent=63 // pred_check
          %p470 = pneg %p117
        $region78: #{tpu_custom_call.1} parent=63 // pred_check_branch
          %472 = sbr.rel (%p470) target = $region80
        $region79: #{tpu_custom_call.1} parent=63 // pred_region
          %473 = dma.done [#allocation11], 16
        $region80: #{tpu_custom_call.1} parent=63 // pred_fallthru
          _
        // Predicated region
        $region81: #{tpu_custom_call.1} parent=63 // pred_check
          %p474 = pneg %p138
        $region82: #{tpu_custom_call.1} parent=63 // pred_check_branch
          %476 = sbr.rel (%p474) target = $region84
        $region83: #{tpu_custom_call.1} parent=63 // pred_region
          %477 = dma.done [#allocation11], 128
        $region84: #{tpu_custom_call.1} parent=63 // pred_fallthru
          _
        // Predicated region
        $region85: #{tpu_custom_call.1} parent=63 // pred_check
          %p478 = pneg %p159
        $region86: #{tpu_custom_call.1} parent=63 // pred_check_branch
          %480 = sbr.rel (%p478) target = $region88
        $region87: #{tpu_custom_call.1} parent=63 // pred_region
          %481 = dma.done [#allocation14], 2304
        $region88: #{tpu_custom_call.1} parent=63 // pred_fallthru
          _
        // Predicated region
        $region89: #{tpu_custom_call.1} parent=63 // pred_check
          %p482 = pneg %p180
        $region90: #{tpu_custom_call.1} parent=63 // pred_check_branch
          %484 = sbr.rel (%p482) target = $region92
        $region91: #{tpu_custom_call.1} parent=63 // pred_region
          %485 = dma.done [#allocation14], 16
        $region92: #{tpu_custom_call.1} parent=63 // pred_fallthru
          _
        // Predicated region
        $region93: #{tpu_custom_call.1} parent=63 // pred_check
          %p486 = pneg %p201
        $region94: #{tpu_custom_call.1} parent=63 // pred_check_branch
          %488 = sbr.rel (%p486) target = $region96
        $region95: #{tpu_custom_call.1} parent=63 // pred_region
          %489 = dma.done [#allocation17], 128
        $region96: #{tpu_custom_call.1} parent=63 // pred_fallthru
          _
        // Predicated region
        $region97: #{tpu_custom_call.1} parent=63 // pred_check
          %p490 = pneg %p222
        $region98: #{tpu_custom_call.1} parent=63 // pred_check_branch
          %492 = sbr.rel (%p490) target = $region100
        $region99: #{tpu_custom_call.1} parent=63 // pred_region
          %493 = dma.done [#allocation17], 3456
        $region100: #{tpu_custom_call.1} parent=63 // pred_fallthru
          _
        // Predicated region
        $region101: #{tpu_custom_call.1} parent=63 // pred_check
          %p494 = pneg %p243
        $region102: #{tpu_custom_call.1} parent=63 // pred_check_branch
          %496 = sbr.rel (%p494) target = $region104
        $region103: #{tpu_custom_call.1} parent=63 // pred_region
          %497 = dma.done [#allocation20], 16
        $region104: #{tpu_custom_call.1} parent=63 // pred_fallthru
          _
        // Predicated region
        $region105: #{tpu_custom_call.1} parent=63 // pred_check
          %p498 = pneg %p264
        $region106: #{tpu_custom_call.1} parent=63 // pred_check_branch
          %500 = sbr.rel (%p498) target = $region108
        $region107: #{tpu_custom_call.1} parent=63 // pred_region
          %501 = dma.done [#allocation20], 128
        $region108: #{tpu_custom_call.1} parent=63 // pred_fallthru
          _
        %s502 = sand.u32 %s41, 1
        %s503 = scalar_lea.sflag [#allocation5], %s502
        %s504 = sand.u32 %s41, 1
        %s505 = smul.addr %s504, 256
        %s506 = scalar_lea.vmem [#allocation4], %s505
        %p507 = pneg %p54
        %p508 = pneg %p51
        %p509 = pneg %p75
        %p510 = pneg %p72
        %p511 = pneg %p96
        %p512 = pneg %p93
        %p513 = pneg %p117
        %p514 = pneg %p114
        %p515 = pneg %p138
        %p516 = pneg %p135
        %p517 = pneg %p159
        %p518 = pneg %p156
        %p519 = pneg %p180
        %p520 = pneg %p177
        %p521 = pneg %p201
        %p522 = pneg %p198
        %p523 = pneg %p222
        %p524 = pneg %p219
        %p525 = pneg %p243
        %p526 = pneg %p240
        %p527 = pneg %p264
        %p528 = pneg %p261
        %p529 = pneg %p290
        %p530 = pneg %p287
        %s531 = sand.u32 %s277, 1
        %s532 = scalar_lea.sflag [#allocation6], %s531
        %s533 = sand.u32 %s277, 1
        %s534 = smul.addr %s533, 256
        %s535 = scalar_lea.vmem [#allocation22], %s534
        %vm536 = vcmask 195584
        %537 = vst.msk [vmem:[#allocation2] sm:$0xff] %vm536, 0.0
        %538 = vst.msk [vmem:[#allocation2 + $0x8] sm:$0xff] %vm536, 0.0
        %vm539 = vcmask 189440
        %540 = vst.msk [vmem:[#allocation2 + $0x10] sm:$0x3] %vm539, 0.0
        %s541 = scalar_lea.vmem [#allocation2], 408
        %542 = vst.msk [vmem:[%s541] sm:$0xff] %vm536, 0.0
        %543 = vst.msk [vmem:[%s541 + $0x8] sm:$0xff] %vm536, 0.0
        %544 = vst.msk [vmem:[%s541 + $0x10] sm:$0x3] %vm539, 0.0
        %s545 = scalar_lea.vmem [#allocation2], 24
        %vm546 = vcmask 188416
        %547 = vst.msk [vmem:[%s545] sm:$0x1] %vm546, 0.0
        %548 = vst.msk [vmem:[%s545 + $0x18] sm:$0x1] %vm546, 0.0
        %549 = vst.msk [vmem:[%s545 + $0x30] sm:$0x1] %vm546, 0.0
        %550 = vst.msk [vmem:[%s545 + $0x48] sm:$0x1] %vm546, 0.0
        %551 = vst.msk [vmem:[%s545 + $0x60] sm:$0x1] %vm546, 0.0
        %552 = vst.msk [vmem:[%s545 + $0x78] sm:$0x1] %vm546, 0.0
        %553 = vst.msk [vmem:[%s545 + $0x90] sm:$0x1] %vm546, 0.0
        %554 = vst.msk [vmem:[%s545 + $0xa8] sm:$0x1] %vm546, 0.0
        %555 = vst.msk [vmem:[%s545 + $0xc0] sm:$0x1] %vm546, 0.0
        %556 = vst.msk [vmem:[%s545 + $0xd8] sm:$0x1] %vm546, 0.0
        %557 = vst.msk [vmem:[%s545 + $0xf0] sm:$0x1] %vm546, 0.0
        %558 = vst.msk [vmem:[%s545 + $0x108] sm:$0x1] %vm546, 0.0
        %559 = vst.msk [vmem:[%s545 + $0x120] sm:$0x1] %vm546, 0.0
        %560 = vst.msk [vmem:[%s545 + $0x138] sm:$0x1] %vm546, 0.0
        %561 = vst.msk [vmem:[%s545 + $0x150] sm:$0x1] %vm546, 0.0
        %562 = vst.msk [vmem:[%s545 + $0x168] sm:$0x1] %vm546, 0.0
        %563 = vst.msk [vmem:[%s545 + $0x11] sm:$0x1] %vm546, 0.0
        %564 = vst.msk [vmem:[%s545 + $0x29] sm:$0x1] %vm546, 0.0
        %565 = vst.msk [vmem:[%s545 + $0x41] sm:$0x1] %vm546, 0.0
        %566 = vst.msk [vmem:[%s545 + $0x59] sm:$0x1] %vm546, 0.0
        %567 = vst.msk [vmem:[%s545 + $0x71] sm:$0x1] %vm546, 0.0
        %568 = vst.msk [vmem:[%s545 + $0x89] sm:$0x1] %vm546, 0.0
        %569 = vst.msk [vmem:[%s545 + $0xa1] sm:$0x1] %vm546, 0.0
        %570 = vst.msk [vmem:[%s545 + $0xb9] sm:$0x1] %vm546, 0.0
        %571 = vst.msk [vmem:[%s545 + $0xd1] sm:$0x1] %vm546, 0.0
        %572 = vst.msk [vmem:[%s545 + $0xe9] sm:$0x1] %vm546, 0.0
        %573 = vst.msk [vmem:[%s545 + $0x101] sm:$0x1] %vm546, 0.0
        %574 = vst.msk [vmem:[%s545 + $0x119] sm:$0x1] %vm546, 0.0
        %575 = vst.msk [vmem:[%s545 + $0x131] sm:$0x1] %vm546, 0.0
        %576 = vst.msk [vmem:[%s545 + $0x149] sm:$0x1] %vm546, 0.0
        %577 = vst.msk [vmem:[%s545 + $0x161] sm:$0x1] %vm546, 0.0
        %578 = vst.msk [vmem:[%s545 + $0x179] sm:$0x1] %vm546, 0.0
        %v579 = vld [vmem:[%s457] sm:$0xff]
        %v580 = vld [vmem:[%s457 + $0x8] sm:$0xff]
        %v581 = vld [vmem:[%s457 + $0x10] sm:$0xff]
        %v582 = vld [vmem:[%s457 + $0x18] sm:$0xff]
        %v583 = vld [vmem:[%s457 + $0x20] sm:$0xff]
        %v584 = vld [vmem:[%s457 + $0x28] sm:$0xff]
        %v585 = vld [vmem:[%s457 + $0x30] sm:$0xff]
        %v586 = vld [vmem:[%s457 + $0x38] sm:$0xff]
        %v587 = vld [vmem:[%s457 + $0x40] sm:$0xff]
        %v588 = vld [vmem:[%s457 + $0x48] sm:$0xff]
        %v589 = vld [vmem:[%s457 + $0x50] sm:$0xff]
        %v590 = vld [vmem:[%s457 + $0x58] sm:$0xff]
        %v591 = vld [vmem:[%s457 + $0x60] sm:$0xff]
        %v592 = vld [vmem:[%s457 + $0x68] sm:$0xff]
        %v593 = vld [vmem:[%s457 + $0x70] sm:$0xff]
        %v594 = vld [vmem:[%s457 + $0x78] sm:$0xff]
        %v595 = vld [vmem:[%s457 + $0x80] sm:$0xff]
        %v596 = vld [vmem:[%s457 + $0x88] sm:$0xff]
        %v597 = vld [vmem:[%s457 + $0x90] sm:$0xff]
        %v598 = vld [vmem:[%s457 + $0x98] sm:$0xff]
        %v599 = vld [vmem:[%s457 + $0xa0] sm:$0xff]
        %v600 = vld [vmem:[%s457 + $0xa8] sm:$0xff]
        %v601 = vld [vmem:[%s457 + $0xb0] sm:$0xff]
        %v602 = vld [vmem:[%s457 + $0xb8] sm:$0xff]
        %v603 = vld [vmem:[%s457 + $0xc0] sm:$0xff]
        %v604 = vld [vmem:[%s457 + $0xc8] sm:$0xff]
        %v605 = vld [vmem:[%s457 + $0xd0] sm:$0xff]
        %v606 = vld [vmem:[%s457 + $0xd8] sm:$0xff]
        %v607 = vld [vmem:[%s457 + $0xe0] sm:$0xff]
        %v608 = vld [vmem:[%s457 + $0xe8] sm:$0xff]
        %v609 = vld [vmem:[%s457 + $0xf0] sm:$0xff]
        %v610 = vld [vmem:[%s457 + $0xf8] sm:$0xff]
        %vm611 = vcmask 64512
        %612 = vst.msk [vmem:[%s545 + $0x1] sm:$0xff] %vm611, %v579
        %613 = vst.msk [vmem:[%s545 + $0x9] sm:$0xff] %vm611, %v580
        %614 = vst.msk [vmem:[%s545 + $0x19] sm:$0xff] %vm611, %v581
        %615 = vst.msk [vmem:[%s545 + $0x21] sm:$0xff] %vm611, %v582
        %616 = vst.msk [vmem:[%s545 + $0x31] sm:$0xff] %vm611, %v583
        %617 = vst.msk [vmem:[%s545 + $0x39] sm:$0xff] %vm611, %v584
        %618 = vst.msk [vmem:[%s545 + $0x49] sm:$0xff] %vm611, %v585
        %619 = vst.msk [vmem:[%s545 + $0x51] sm:$0xff] %vm611, %v586
        %620 = vst.msk [vmem:[%s545 + $0x61] sm:$0xff] %vm611, %v587
        %621 = vst.msk [vmem:[%s545 + $0x69] sm:$0xff] %vm611, %v588
        %622 = vst.msk [vmem:[%s545 + $0x79] sm:$0xff] %vm611, %v589
        %623 = vst.msk [vmem:[%s545 + $0x81] sm:$0xff] %vm611, %v590
        %624 = vst.msk [vmem:[%s545 + $0x91] sm:$0xff] %vm611, %v591
        %625 = vst.msk [vmem:[%s545 + $0x99] sm:$0xff] %vm611, %v592
        %626 = vst.msk [vmem:[%s545 + $0xa9] sm:$0xff] %vm611, %v593
        %627 = vst.msk [vmem:[%s545 + $0xb1] sm:$0xff] %vm611, %v594
        %628 = vst.msk [vmem:[%s545 + $0xc1] sm:$0xff] %vm611, %v595
        %629 = vst.msk [vmem:[%s545 + $0xc9] sm:$0xff] %vm611, %v596
        %630 = vst.msk [vmem:[%s545 + $0xd9] sm:$0xff] %vm611, %v597
        %631 = vst.msk [vmem:[%s545 + $0xe1] sm:$0xff] %vm611, %v598
        %632 = vst.msk [vmem:[%s545 + $0xf1] sm:$0xff] %vm611, %v599
        %633 = vst.msk [vmem:[%s545 + $0xf9] sm:$0xff] %vm611, %v600
        %634 = vst.msk [vmem:[%s545 + $0x109] sm:$0xff] %vm611, %v601
        %635 = vst.msk [vmem:[%s545 + $0x111] sm:$0xff] %vm611, %v602
        %636 = vst.msk [vmem:[%s545 + $0x121] sm:$0xff] %vm611, %v603
        %637 = vst.msk [vmem:[%s545 + $0x129] sm:$0xff] %vm611, %v604
        %638 = vst.msk [vmem:[%s545 + $0x139] sm:$0xff] %vm611, %v605
        %639 = vst.msk [vmem:[%s545 + $0x141] sm:$0xff] %vm611, %v606
        %640 = vst.msk [vmem:[%s545 + $0x151] sm:$0xff] %vm611, %v607
        %641 = vst.msk [vmem:[%s545 + $0x159] sm:$0xff] %vm611, %v608
        %642 = vst.msk [vmem:[%s545 + $0x169] sm:$0xff] %vm611, %v609
        %643 = vst.msk [vmem:[%s545 + $0x171] sm:$0xff] %vm611, %v610
        %v644 = vld [vmem:[#allocation7] sm:$0xff]
        %v645 = vld [vmem:[#allocation2] sm:$0xff]
        %v646 = vld [vmem:[#allocation2 + $0x8] sm:$0xff]
        %v647 = vld [vmem:[#allocation2 + $0x18] sm:$0xff]
        %v648 = vld [vmem:[#allocation2 + $0x20] sm:$0xff]
        %v649 = vld [vmem:[#allocation2 + $0x30] sm:$0xff]
        %v650 = vld [vmem:[#allocation2 + $0x38] sm:$0xff]
        %v651 = vld [vmem:[#allocation2 + $0x48] sm:$0xff]
        %v652 = vld [vmem:[#allocation2 + $0x50] sm:$0xff]
        %v653 = vld [vmem:[#allocation2 + $0x60] sm:$0xff]
        %v654 = vld [vmem:[#allocation2 + $0x68] sm:$0xff]
        %v655 = vld [vmem:[#allocation2 + $0x78] sm:$0xff]
        %v656 = vld [vmem:[#allocation2 + $0x80] sm:$0xff]
        %v657 = vld [vmem:[#allocation2 + $0x90] sm:$0xff]
        %v658 = vld [vmem:[#allocation2 + $0x98] sm:$0xff]
        %v659 = vld [vmem:[#allocation2 + $0xa8] sm:$0xff]
        %v660 = vld [vmem:[#allocation2 + $0xb0] sm:$0xff]
        %v661 = vld [vmem:[#allocation2 + $0xc0] sm:$0xff]
        %v662 = vld [vmem:[#allocation2 + $0xc8] sm:$0xff]
        %v663 = vld [vmem:[#allocation2 + $0xd8] sm:$0xff]
        %v664 = vld [vmem:[#allocation2 + $0xe0] sm:$0xff]
        %v665 = vld [vmem:[#allocation2 + $0xf0] sm:$0xff]
        %v666 = vld [vmem:[#allocation2 + $0xf8] sm:$0xff]
        %v667 = vld [vmem:[#allocation2 + $0x108] sm:$0xff]
        %v668 = vld [vmem:[#allocation2 + $0x110] sm:$0xff]
        %v669 = vld [vmem:[#allocation2 + $0x120] sm:$0xff]
        %v670 = vld [vmem:[#allocation2 + $0x128] sm:$0xff]
        %v671 = vld [vmem:[#allocation2 + $0x138] sm:$0xff]
        %v672 = vld [vmem:[#allocation2 + $0x140] sm:$0xff]
        %v673 = vld [vmem:[#allocation2 + $0x150] sm:$0xff]
        %v674 = vld [vmem:[#allocation2 + $0x158] sm:$0xff]
        %v675 = vld [vmem:[#allocation2 + $0x168] sm:$0xff]
        %v676 = vld [vmem:[#allocation2 + $0x170] sm:$0xff]
        %677 = vst.msk [vmem:[#allocation3] sm:$0xff] %vm611, %v645
        %678 = vst.msk [vmem:[#allocation3 + $0x10] sm:$0xff] %vm611, %v646
        %679 = vst.msk [vmem:[#allocation3 + $0x20] sm:$0xff] %vm611, %v647
        %680 = vst.msk [vmem:[#allocation3 + $0x30] sm:$0xff] %vm611, %v648
        %681 = vst.msk [vmem:[#allocation3 + $0x40] sm:$0xff] %vm611, %v649
        %682 = vst.msk [vmem:[#allocation3 + $0x50] sm:$0xff] %vm611, %v650
        %683 = vst.msk [vmem:[#allocation3 + $0x60] sm:$0xff] %vm611, %v651
        %684 = vst.msk [vmem:[#allocation3 + $0x70] sm:$0xff] %vm611, %v652
        %685 = vst.msk [vmem:[#allocation3 + $0x80] sm:$0xff] %vm611, %v653
        %686 = vst.msk [vmem:[#allocation3 + $0x90] sm:$0xff] %vm611, %v654
        %687 = vst.msk [vmem:[#allocation3 + $0xa0] sm:$0xff] %vm611, %v655
        %688 = vst.msk [vmem:[#allocation3 + $0xb0] sm:$0xff] %vm611, %v656
        %689 = vst.msk [vmem:[#allocation3 + $0xc0] sm:$0xff] %vm611, %v657
        %690 = vst.msk [vmem:[#allocation3 + $0xd0] sm:$0xff] %vm611, %v658
        %691 = vst.msk [vmem:[#allocation3 + $0xe0] sm:$0xff] %vm611, %v659
        %692 = vst.msk [vmem:[#allocation3 + $0xf0] sm:$0xff] %vm611, %v660
        %693 = vst.msk [vmem:[#allocation3 + $0x100] sm:$0xff] %vm611, %v661
        %694 = vst.msk [vmem:[#allocation3 + $0x110] sm:$0xff] %vm611, %v662
        %695 = vst.msk [vmem:[#allocation3 + $0x120] sm:$0xff] %vm611, %v663
        %696 = vst.msk [vmem:[#allocation3 + $0x130] sm:$0xff] %vm611, %v664
        %697 = vst.msk [vmem:[#allocation3 + $0x140] sm:$0xff] %vm611, %v665
        %698 = vst.msk [vmem:[#allocation3 + $0x150] sm:$0xff] %vm611, %v666
        %699 = vst.msk [vmem:[#allocation3 + $0x160] sm:$0xff] %vm611, %v667
        %700 = vst.msk [vmem:[#allocation3 + $0x170] sm:$0xff] %vm611, %v668
        %701 = vst.msk [vmem:[#allocation3 + $0x180] sm:$0xff] %vm611, %v669
        %702 = vst.msk [vmem:[#allocation3 + $0x190] sm:$0xff] %vm611, %v670
        %703 = vst.msk [vmem:[#allocation3 + $0x1a0] sm:$0xff] %vm611, %v671
        %704 = vst.msk [vmem:[#allocation3 + $0x1b0] sm:$0xff] %vm611, %v672
        %705 = vst.msk [vmem:[#allocation3 + $0x1c0] sm:$0xff] %vm611, %v673
        %706 = vst.msk [vmem:[#allocation3 + $0x1d0] sm:$0xff] %vm611, %v674
        %707 = vst.msk [vmem:[#allocation3 + $0x1e0] sm:$0xff] %vm611, %v675
        %708 = vst.msk [vmem:[#allocation3 + $0x1f0] sm:$0xff] %vm611, %v676
        %v709 = vld [vmem:[#allocation2 + $0x1] sm:$0xff]
        %v710 = vld [vmem:[#allocation2 + $0x9] sm:$0xff]
        %v711 = vld [vmem:[#allocation2 + $0x19] sm:$0xff]
        %v712 = vld [vmem:[#allocation2 + $0x21] sm:$0xff]
        %v713 = vld [vmem:[#allocation2 + $0x31] sm:$0xff]
        %v714 = vld [vmem:[#allocation2 + $0x39] sm:$0xff]
        %v715 = vld [vmem:[#allocation2 + $0x49] sm:$0xff]
        %v716 = vld [vmem:[#allocation2 + $0x51] sm:$0xff]
        %v717 = vld [vmem:[#allocation2 + $0x61] sm:$0xff]
        %v718 = vld [vmem:[#allocation2 + $0x69] sm:$0xff]
        %v719 = vld [vmem:[#allocation2 + $0x79] sm:$0xff]
        %v720 = vld [vmem:[#allocation2 + $0x81] sm:$0xff]
        %v721 = vld [vmem:[#allocation2 + $0x91] sm:$0xff]
        %v722 = vld [vmem:[#allocation2 + $0x99] sm:$0xff]
        %v723 = vld [vmem:[#allocation2 + $0xa9] sm:$0xff]
        %v724 = vld [vmem:[#allocation2 + $0xb1] sm:$0xff]
        %v725 = vld [vmem:[#allocation2 + $0xc1] sm:$0xff]
        %v726 = vld [vmem:[#allocation2 + $0xc9] sm:$0xff]
        %v727 = vld [vmem:[#allocation2 + $0xd9] sm:$0xff]
        %v728 = vld [vmem:[#allocation2 + $0xe1] sm:$0xff]
        %v729 = vld [vmem:[#allocation2 + $0xf1] sm:$0xff]
        %v730 = vld [vmem:[#allocation2 + $0xf9] sm:$0xff]
        %v731 = vld [vmem:[#allocation2 + $0x109] sm:$0xff]
        %v732 = vld [vmem:[#allocation2 + $0x111] sm:$0xff]
        %v733 = vld [vmem:[#allocation2 + $0x121] sm:$0xff]
        %v734 = vld [vmem:[#allocation2 + $0x129] sm:$0xff]
        %v735 = vld [vmem:[#allocation2 + $0x139] sm:$0xff]
        %v736 = vld [vmem:[#allocation2 + $0x141] sm:$0xff]
        %v737 = vld [vmem:[#allocation2 + $0x151] sm:$0xff]
        %v738 = vld [vmem:[#allocation2 + $0x159] sm:$0xff]
        %v739 = vld [vmem:[#allocation2 + $0x169] sm:$0xff]
        %v740 = vld [vmem:[#allocation2 + $0x171] sm:$0xff]
        %773 = vrot.lane.b32.xlu0 %v709, 8
        %v774 = vpop.permute.xlu0 %773
        %775 = vrot.lane.b32.xlu0 %v710, 8
        %v776 = vpop.permute.xlu0 %775
        %777 = vrot.lane.b32.xlu0 %v711, 8
        %v778 = vpop.permute.xlu0 %777
        %779 = vrot.lane.b32.xlu0 %v712, 8
        %v780 = vpop.permute.xlu0 %779
        %781 = vrot.lane.b32.xlu0 %v713, 8
        %v782 = vpop.permute.xlu0 %781
        %783 = vrot.lane.b32.xlu0 %v714, 8
        %v784 = vpop.permute.xlu0 %783
        %785 = vrot.lane.b32.xlu0 %v715, 8
        %v786 = vpop.permute.xlu0 %785
        %787 = vrot.lane.b32.xlu0 %v716, 8
        %v788 = vpop.permute.xlu0 %787
        %789 = vrot.lane.b32.xlu0 %v717, 8
        %v790 = vpop.permute.xlu0 %789
        %791 = vrot.lane.b32.xlu0 %v718, 8
        %v792 = vpop.permute.xlu0 %791
        %793 = vrot.lane.b32.xlu0 %v719, 8
        %v794 = vpop.permute.xlu0 %793
        %795 = vrot.lane.b32.xlu0 %v720, 8
        %v796 = vpop.permute.xlu0 %795
        %797 = vrot.lane.b32.xlu0 %v721, 8
        %v798 = vpop.permute.xlu0 %797
        %799 = vrot.lane.b32.xlu0 %v722, 8
        %v800 = vpop.permute.xlu0 %799
        %801 = vrot.lane.b32.xlu0 %v723, 8
        %v802 = vpop.permute.xlu0 %801
        %803 = vrot.lane.b32.xlu0 %v724, 8
        %v804 = vpop.permute.xlu0 %803
        %805 = vrot.lane.b32.xlu0 %v725, 8
        %v806 = vpop.permute.xlu0 %805
        %807 = vrot.lane.b32.xlu0 %v726, 8
        %v808 = vpop.permute.xlu0 %807
        %809 = vrot.lane.b32.xlu0 %v727, 8
        %v810 = vpop.permute.xlu0 %809
        %811 = vrot.lane.b32.xlu0 %v728, 8
        %v812 = vpop.permute.xlu0 %811
        %813 = vrot.lane.b32.xlu0 %v729, 8
        %v814 = vpop.permute.xlu0 %813
        %815 = vrot.lane.b32.xlu0 %v730, 8
        %v816 = vpop.permute.xlu0 %815
        %817 = vrot.lane.b32.xlu0 %v731, 8
        %v818 = vpop.permute.xlu0 %817
        %819 = vrot.lane.b32.xlu0 %v732, 8
        %v820 = vpop.permute.xlu0 %819
        %821 = vrot.lane.b32.xlu0 %v733, 8
        %v822 = vpop.permute.xlu0 %821
        %823 = vrot.lane.b32.xlu0 %v734, 8
        %v824 = vpop.permute.xlu0 %823
        %825 = vrot.lane.b32.xlu0 %v735, 8
        %v826 = vpop.permute.xlu0 %825
        %827 = vrot.lane.b32.xlu0 %v736, 8
        %v828 = vpop.permute.xlu0 %827
        %829 = vrot.lane.b32.xlu0 %v737, 8
        %v830 = vpop.permute.xlu0 %829
        %831 = vrot.lane.b32.xlu0 %v738, 8
        %v832 = vpop.permute.xlu0 %831
        %833 = vrot.lane.b32.xlu0 %v739, 8
        %v834 = vpop.permute.xlu0 %833
        %835 = vrot.lane.b32.xlu0 %v740, 8
        %v836 = vpop.permute.xlu0 %835
        %vm869 = vcmask 130112
        %870 = vst.msk [vmem:[#allocation3] sm:$0xff] %vm869, %v774
        %871 = vst.msk [vmem:[#allocation3 + $0x10] sm:$0xff] %vm869, %v776
        %872 = vst.msk [vmem:[#allocation3 + $0x20] sm:$0xff] %vm869, %v778
        %873 = vst.msk [vmem:[#allocation3 + $0x30] sm:$0xff] %vm869, %v780
        %874 = vst.msk [vmem:[#allocation3 + $0x40] sm:$0xff] %vm869, %v782
        %875 = vst.msk [vmem:[#allocation3 + $0x50] sm:$0xff] %vm869, %v784
        %876 = vst.msk [vmem:[#allocation3 + $0x60] sm:$0xff] %vm869, %v786
        %877 = vst.msk [vmem:[#allocation3 + $0x70] sm:$0xff] %vm869, %v788
        %878 = vst.msk [vmem:[#allocation3 + $0x80] sm:$0xff] %vm869, %v790
        %879 = vst.msk [vmem:[#allocation3 + $0x90] sm:$0xff] %vm869, %v792
        %880 = vst.msk [vmem:[#allocation3 + $0xa0] sm:$0xff] %vm869, %v794
        %881 = vst.msk [vmem:[#allocation3 + $0xb0] sm:$0xff] %vm869, %v796
        %882 = vst.msk [vmem:[#allocation3 + $0xc0] sm:$0xff] %vm869, %v798
        %883 = vst.msk [vmem:[#allocation3 + $0xd0] sm:$0xff] %vm869, %v800
        %884 = vst.msk [vmem:[#allocation3 + $0xe0] sm:$0xff] %vm869, %v802
        %885 = vst.msk [vmem:[#allocation3 + $0xf0] sm:$0xff] %vm869, %v804
        %886 = vst.msk [vmem:[#allocation3 + $0x100] sm:$0xff] %vm869, %v806
        %887 = vst.msk [vmem:[#allocation3 + $0x110] sm:$0xff] %vm869, %v808
        %888 = vst.msk [vmem:[#allocation3 + $0x120] sm:$0xff] %vm869, %v810
        %889 = vst.msk [vmem:[#allocation3 + $0x130] sm:$0xff] %vm869, %v812
        %890 = vst.msk [vmem:[#allocation3 + $0x140] sm:$0xff] %vm869, %v814
        %891 = vst.msk [vmem:[#allocation3 + $0x150] sm:$0xff] %vm869, %v816
        %892 = vst.msk [vmem:[#allocation3 + $0x160] sm:$0xff] %vm869, %v818
        %893 = vst.msk [vmem:[#allocation3 + $0x170] sm:$0xff] %vm869, %v820
        %894 = vst.msk [vmem:[#allocation3 + $0x180] sm:$0xff] %vm869, %v822
        %895 = vst.msk [vmem:[#allocation3 + $0x190] sm:$0xff] %vm869, %v824
        %896 = vst.msk [vmem:[#allocation3 + $0x1a0] sm:$0xff] %vm869, %v826
        %897 = vst.msk [vmem:[#allocation3 + $0x1b0] sm:$0xff] %vm869, %v828
        %898 = vst.msk [vmem:[#allocation3 + $0x1c0] sm:$0xff] %vm869, %v830
        %899 = vst.msk [vmem:[#allocation3 + $0x1d0] sm:$0xff] %vm869, %v832
        %900 = vst.msk [vmem:[#allocation3 + $0x1e0] sm:$0xff] %vm869, %v834
        %901 = vst.msk [vmem:[#allocation3 + $0x1f0] sm:$0xff] %vm869, %v836
        %v902 = vld [vmem:[#allocation2 + $0x2] sm:$0xff]
        %v903 = vld [vmem:[#allocation2 + $0xa] sm:$0xff]
        %v904 = vld [vmem:[#allocation2 + $0x1a] sm:$0xff]
        %v905 = vld [vmem:[#allocation2 + $0x22] sm:$0xff]
        %v906 = vld [vmem:[#allocation2 + $0x32] sm:$0xff]
        %v907 = vld [vmem:[#allocation2 + $0x3a] sm:$0xff]
        %v908 = vld [vmem:[#allocation2 + $0x4a] sm:$0xff]
        %v909 = vld [vmem:[#allocation2 + $0x52] sm:$0xff]
        %v910 = vld [vmem:[#allocation2 + $0x62] sm:$0xff]
        %v911 = vld [vmem:[#allocation2 + $0x6a] sm:$0xff]
        %v912 = vld [vmem:[#allocation2 + $0x7a] sm:$0xff]
        %v913 = vld [vmem:[#allocation2 + $0x82] sm:$0xff]
        %v914 = vld [vmem:[#allocation2 + $0x92] sm:$0xff]
        %v915 = vld [vmem:[#allocation2 + $0x9a] sm:$0xff]
        %v916 = vld [vmem:[#allocation2 + $0xaa] sm:$0xff]
        %v917 = vld [vmem:[#allocation2 + $0xb2] sm:$0xff]
        %v918 = vld [vmem:[#allocation2 + $0xc2] sm:$0xff]
        %v919 = vld [vmem:[#allocation2 + $0xca] sm:$0xff]
        %v920 = vld [vmem:[#allocation2 + $0xda] sm:$0xff]
        %v921 = vld [vmem:[#allocation2 + $0xe2] sm:$0xff]
        %v922 = vld [vmem:[#allocation2 + $0xf2] sm:$0xff]
        %v923 = vld [vmem:[#allocation2 + $0xfa] sm:$0xff]
        %v924 = vld [vmem:[#allocation2 + $0x10a] sm:$0xff]
        %v925 = vld [vmem:[#allocation2 + $0x112] sm:$0xff]
        %v926 = vld [vmem:[#allocation2 + $0x122] sm:$0xff]
        %v927 = vld [vmem:[#allocation2 + $0x12a] sm:$0xff]
        %v928 = vld [vmem:[#allocation2 + $0x13a] sm:$0xff]
        %v929 = vld [vmem:[#allocation2 + $0x142] sm:$0xff]
        %v930 = vld [vmem:[#allocation2 + $0x152] sm:$0xff]
        %v931 = vld [vmem:[#allocation2 + $0x15a] sm:$0xff]
        %v932 = vld [vmem:[#allocation2 + $0x16a] sm:$0xff]
        %v933 = vld [vmem:[#allocation2 + $0x172] sm:$0xff]
        %966 = vrot.lane.b32.xlu0 %v902, 16
        %v967 = vpop.permute.xlu0 %966
        %968 = vrot.lane.b32.xlu0 %v903, 16
        %v969 = vpop.permute.xlu0 %968
        %970 = vrot.lane.b32.xlu0 %v904, 16
        %v971 = vpop.permute.xlu0 %970
        %972 = vrot.lane.b32.xlu0 %v905, 16
        %v973 = vpop.permute.xlu0 %972
        %974 = vrot.lane.b32.xlu0 %v906, 16
        %v975 = vpop.permute.xlu0 %974
        %976 = vrot.lane.b32.xlu0 %v907, 16
        %v977 = vpop.permute.xlu0 %976
        %978 = vrot.lane.b32.xlu0 %v908, 16
        %v979 = vpop.permute.xlu0 %978
        %980 = vrot.lane.b32.xlu0 %v909, 16
        %v981 = vpop.permute.xlu0 %980
        %982 = vrot.lane.b32.xlu0 %v910, 16
        %v983 = vpop.permute.xlu0 %982
        %984 = vrot.lane.b32.xlu0 %v911, 16
        %v985 = vpop.permute.xlu0 %984
        %986 = vrot.lane.b32.xlu0 %v912, 16
        %v987 = vpop.permute.xlu0 %986
        %988 = vrot.lane.b32.xlu0 %v913, 16
        %v989 = vpop.permute.xlu0 %988
        %990 = vrot.lane.b32.xlu0 %v914, 16
        %v991 = vpop.permute.xlu0 %990
        %992 = vrot.lane.b32.xlu0 %v915, 16
        %v993 = vpop.permute.xlu0 %992
        %994 = vrot.lane.b32.xlu0 %v916, 16
        %v995 = vpop.permute.xlu0 %994
        %996 = vrot.lane.b32.xlu0 %v917, 16
        %v997 = vpop.permute.xlu0 %996
        %998 = vrot.lane.b32.xlu0 %v918, 16
        %v999 = vpop.permute.xlu0 %998
        %1000 = vrot.lane.b32.xlu0 %v919, 16
        %v1001 = vpop.permute.xlu0 %1000
        %1002 = vrot.lane.b32.xlu0 %v920, 16
        %v1003 = vpop.permute.xlu0 %1002
        %1004 = vrot.lane.b32.xlu0 %v921, 16
        %v1005 = vpop.permute.xlu0 %1004
        %1006 = vrot.lane.b32.xlu0 %v922, 16
        %v1007 = vpop.permute.xlu0 %1006
        %1008 = vrot.lane.b32.xlu0 %v923, 16
        %v1009 = vpop.permute.xlu0 %1008
        %1010 = vrot.lane.b32.xlu0 %v924, 16
        %v1011 = vpop.permute.xlu0 %1010
        %1012 = vrot.lane.b32.xlu0 %v925, 16
        %v1013 = vpop.permute.xlu0 %1012
        %1014 = vrot.lane.b32.xlu0 %v926, 16
        %v1015 = vpop.permute.xlu0 %1014
        %1016 = vrot.lane.b32.xlu0 %v927, 16
        %v1017 = vpop.permute.xlu0 %1016
        %1018 = vrot.lane.b32.xlu0 %v928, 16
        %v1019 = vpop.permute.xlu0 %1018
        %1020 = vrot.lane.b32.xlu0 %v929, 16
        %v1021 = vpop.permute.xlu0 %1020
        %1022 = vrot.lane.b32.xlu0 %v930, 16
        %v1023 = vpop.permute.xlu0 %1022
        %1024 = vrot.lane.b32.xlu0 %v931, 16
        %v1025 = vpop.permute.xlu0 %1024
        %1026 = vrot.lane.b32.xlu0 %v932, 16
        %v1027 = vpop.permute.xlu0 %1026
        %1028 = vrot.lane.b32.xlu0 %v933, 16
        %v1029 = vpop.permute.xlu0 %1028
        %vm1062 = vcmask 195712
        %1063 = vst.msk [vmem:[#allocation3] sm:$0xff] %vm1062, %v967
        %1064 = vst.msk [vmem:[#allocation3 + $0x10] sm:$0xff] %vm1062, %v969
        %1065 = vst.msk [vmem:[#allocation3 + $0x20] sm:$0xff] %vm1062, %v971
        %1066 = vst.msk [vmem:[#allocation3 + $0x30] sm:$0xff] %vm1062, %v973
        %1067 = vst.msk [vmem:[#allocation3 + $0x40] sm:$0xff] %vm1062, %v975
        %1068 = vst.msk [vmem:[#allocation3 + $0x50] sm:$0xff] %vm1062, %v977
        %1069 = vst.msk [vmem:[#allocation3 + $0x60] sm:$0xff] %vm1062, %v979
        %1070 = vst.msk [vmem:[#allocation3 + $0x70] sm:$0xff] %vm1062, %v981
        %1071 = vst.msk [vmem:[#allocation3 + $0x80] sm:$0xff] %vm1062, %v983
        %1072 = vst.msk [vmem:[#allocation3 + $0x90] sm:$0xff] %vm1062, %v985
        %1073 = vst.msk [vmem:[#allocation3 + $0xa0] sm:$0xff] %vm1062, %v987
        %1074 = vst.msk [vmem:[#allocation3 + $0xb0] sm:$0xff] %vm1062, %v989
        %1075 = vst.msk [vmem:[#allocation3 + $0xc0] sm:$0xff] %vm1062, %v991
        %1076 = vst.msk [vmem:[#allocation3 + $0xd0] sm:$0xff] %vm1062, %v993
        %1077 = vst.msk [vmem:[#allocation3 + $0xe0] sm:$0xff] %vm1062, %v995
        %1078 = vst.msk [vmem:[#allocation3 + $0xf0] sm:$0xff] %vm1062, %v997
        %1079 = vst.msk [vmem:[#allocation3 + $0x100] sm:$0xff] %vm1062, %v999
        %1080 = vst.msk [vmem:[#allocation3 + $0x110] sm:$0xff] %vm1062, %v1001
        %1081 = vst.msk [vmem:[#allocation3 + $0x120] sm:$0xff] %vm1062, %v1003
        %1082 = vst.msk [vmem:[#allocation3 + $0x130] sm:$0xff] %vm1062, %v1005
        %1083 = vst.msk [vmem:[#allocation3 + $0x140] sm:$0xff] %vm1062, %v1007
        %1084 = vst.msk [vmem:[#allocation3 + $0x150] sm:$0xff] %vm1062, %v1009
        %1085 = vst.msk [vmem:[#allocation3 + $0x160] sm:$0xff] %vm1062, %v1011
        %1086 = vst.msk [vmem:[#allocation3 + $0x170] sm:$0xff] %vm1062, %v1013
        %1087 = vst.msk [vmem:[#allocation3 + $0x180] sm:$0xff] %vm1062, %v1015
        %1088 = vst.msk [vmem:[#allocation3 + $0x190] sm:$0xff] %vm1062, %v1017
        %1089 = vst.msk [vmem:[#allocation3 + $0x1a0] sm:$0xff] %vm1062, %v1019
        %1090 = vst.msk [vmem:[#allocation3 + $0x1b0] sm:$0xff] %vm1062, %v1021
        %1091 = vst.msk [vmem:[#allocation3 + $0x1c0] sm:$0xff] %vm1062, %v1023
        %1092 = vst.msk [vmem:[#allocation3 + $0x1d0] sm:$0xff] %vm1062, %v1025
        %1093 = vst.msk [vmem:[#allocation3 + $0x1e0] sm:$0xff] %vm1062, %v1027
        %1094 = vst.msk [vmem:[#allocation3 + $0x1f0] sm:$0xff] %vm1062, %v1029
        %v1095 = vld [vmem:[%s545] sm:$0xff]
        %v1096 = vld [vmem:[%s545 + $0x8] sm:$0xff]
        %v1097 = vld [vmem:[%s545 + $0x18] sm:$0xff]
        %v1098 = vld [vmem:[%s545 + $0x20] sm:$0xff]
        %v1099 = vld [vmem:[%s545 + $0x30] sm:$0xff]
        %v1100 = vld [vmem:[%s545 + $0x38] sm:$0xff]
        %v1101 = vld [vmem:[%s545 + $0x48] sm:$0xff]
        %v1102 = vld [vmem:[%s545 + $0x50] sm:$0xff]
        %v1103 = vld [vmem:[%s545 + $0x60] sm:$0xff]
        %v1104 = vld [vmem:[%s545 + $0x68] sm:$0xff]
        %v1105 = vld [vmem:[%s545 + $0x78] sm:$0xff]
        %v1106 = vld [vmem:[%s545 + $0x80] sm:$0xff]
        %v1107 = vld [vmem:[%s545 + $0x90] sm:$0xff]
        %v1108 = vld [vmem:[%s545 + $0x98] sm:$0xff]
        %v1109 = vld [vmem:[%s545 + $0xa8] sm:$0xff]
        %v1110 = vld [vmem:[%s545 + $0xb0] sm:$0xff]
        %v1111 = vld [vmem:[%s545 + $0xc0] sm:$0xff]
        %v1112 = vld [vmem:[%s545 + $0xc8] sm:$0xff]
        %v1113 = vld [vmem:[%s545 + $0xd8] sm:$0xff]
        %v1114 = vld [vmem:[%s545 + $0xe0] sm:$0xff]
        %v1115 = vld [vmem:[%s545 + $0xf0] sm:$0xff]
        %v1116 = vld [vmem:[%s545 + $0xf8] sm:$0xff]
        %v1117 = vld [vmem:[%s545 + $0x108] sm:$0xff]
        %v1118 = vld [vmem:[%s545 + $0x110] sm:$0xff]
        %v1119 = vld [vmem:[%s545 + $0x120] sm:$0xff]
        %v1120 = vld [vmem:[%s545 + $0x128] sm:$0xff]
        %v1121 = vld [vmem:[%s545 + $0x138] sm:$0xff]
        %v1122 = vld [vmem:[%s545 + $0x140] sm:$0xff]
        %v1123 = vld [vmem:[%s545 + $0x150] sm:$0xff]
        %v1124 = vld [vmem:[%s545 + $0x158] sm:$0xff]
        %v1125 = vld [vmem:[%s545 + $0x168] sm:$0xff]
        %v1126 = vld [vmem:[%s545 + $0x170] sm:$0xff]
        %1159 = vrot.lane.b32.xlu0 %v1095, 24
        %v1160 = vpop.permute.xlu0 %1159
        %1161 = vrot.lane.b32.xlu0 %v1096, 24
        %v1162 = vpop.permute.xlu0 %1161
        %1163 = vrot.lane.b32.xlu0 %v1097, 24
        %v1164 = vpop.permute.xlu0 %1163
        %1165 = vrot.lane.b32.xlu0 %v1098, 24
        %v1166 = vpop.permute.xlu0 %1165
        %1167 = vrot.lane.b32.xlu0 %v1099, 24
        %v1168 = vpop.permute.xlu0 %1167
        %1169 = vrot.lane.b32.xlu0 %v1100, 24
        %v1170 = vpop.permute.xlu0 %1169
        %1171 = vrot.lane.b32.xlu0 %v1101, 24
        %v1172 = vpop.permute.xlu0 %1171
        %1173 = vrot.lane.b32.xlu0 %v1102, 24
        %v1174 = vpop.permute.xlu0 %1173
        %1175 = vrot.lane.b32.xlu0 %v1103, 24
        %v1176 = vpop.permute.xlu0 %1175
        %1177 = vrot.lane.b32.xlu0 %v1104, 24
        %v1178 = vpop.permute.xlu0 %1177
        %1179 = vrot.lane.b32.xlu0 %v1105, 24
        %v1180 = vpop.permute.xlu0 %1179
        %1181 = vrot.lane.b32.xlu0 %v1106, 24
        %v1182 = vpop.permute.xlu0 %1181
        %1183 = vrot.lane.b32.xlu0 %v1107, 24
        %v1184 = vpop.permute.xlu0 %1183
        %1185 = vrot.lane.b32.xlu0 %v1108, 24
        %v1186 = vpop.permute.xlu0 %1185
        %1187 = vrot.lane.b32.xlu0 %v1109, 24
        %v1188 = vpop.permute.xlu0 %1187
        %1189 = vrot.lane.b32.xlu0 %v1110, 24
        %v1190 = vpop.permute.xlu0 %1189
        %1191 = vrot.lane.b32.xlu0 %v1111, 24
        %v1192 = vpop.permute.xlu0 %1191
        %1193 = vrot.lane.b32.xlu0 %v1112, 24
        %v1194 = vpop.permute.xlu0 %1193
        %1195 = vrot.lane.b32.xlu0 %v1113, 24
        %v1196 = vpop.permute.xlu0 %1195
        %1197 = vrot.lane.b32.xlu0 %v1114, 24
        %v1198 = vpop.permute.xlu0 %1197
        %1199 = vrot.lane.b32.xlu0 %v1115, 24
        %v1200 = vpop.permute.xlu0 %1199
        %1201 = vrot.lane.b32.xlu0 %v1116, 24
        %v1202 = vpop.permute.xlu0 %1201
        %1203 = vrot.lane.b32.xlu0 %v1117, 24
        %v1204 = vpop.permute.xlu0 %1203
        %1205 = vrot.lane.b32.xlu0 %v1118, 24
        %v1206 = vpop.permute.xlu0 %1205
        %1207 = vrot.lane.b32.xlu0 %v1119, 24
        %v1208 = vpop.permute.xlu0 %1207
        %1209 = vrot.lane.b32.xlu0 %v1120, 24
        %v1210 = vpop.permute.xlu0 %1209
        %1211 = vrot.lane.b32.xlu0 %v1121, 24
        %v1212 = vpop.permute.xlu0 %1211
        %1213 = vrot.lane.b32.xlu0 %v1122, 24
        %v1214 = vpop.permute.xlu0 %1213
        %1215 = vrot.lane.b32.xlu0 %v1123, 24
        %v1216 = vpop.permute.xlu0 %1215
        %1217 = vrot.lane.b32.xlu0 %v1124, 24
        %v1218 = vpop.permute.xlu0 %1217
        %1219 = vrot.lane.b32.xlu0 %v1125, 24
        %v1220 = vpop.permute.xlu0 %1219
        %1221 = vrot.lane.b32.xlu0 %v1126, 24
        %v1222 = vpop.permute.xlu0 %1221
        %vm1255 = vcmask 261312
        %1256 = vst.msk [vmem:[#allocation3] sm:$0xff] %vm1255, %v1160
        %1257 = vst.msk [vmem:[#allocation3 + $0x10] sm:$0xff] %vm1255, %v1162
        %1258 = vst.msk [vmem:[#allocation3 + $0x20] sm:$0xff] %vm1255, %v1164
        %1259 = vst.msk [vmem:[#allocation3 + $0x30] sm:$0xff] %vm1255, %v1166
        %1260 = vst.msk [vmem:[#allocation3 + $0x40] sm:$0xff] %vm1255, %v1168
        %1261 = vst.msk [vmem:[#allocation3 + $0x50] sm:$0xff] %vm1255, %v1170
        %1262 = vst.msk [vmem:[#allocation3 + $0x60] sm:$0xff] %vm1255, %v1172
        %1263 = vst.msk [vmem:[#allocation3 + $0x70] sm:$0xff] %vm1255, %v1174
        %1264 = vst.msk [vmem:[#allocation3 + $0x80] sm:$0xff] %vm1255, %v1176
        %1265 = vst.msk [vmem:[#allocation3 + $0x90] sm:$0xff] %vm1255, %v1178
        %1266 = vst.msk [vmem:[#allocation3 + $0xa0] sm:$0xff] %vm1255, %v1180
        %1267 = vst.msk [vmem:[#allocation3 + $0xb0] sm:$0xff] %vm1255, %v1182
        %1268 = vst.msk [vmem:[#allocation3 + $0xc0] sm:$0xff] %vm1255, %v1184
        %1269 = vst.msk [vmem:[#allocation3 + $0xd0] sm:$0xff] %vm1255, %v1186
        %1270 = vst.msk [vmem:[#allocation3 + $0xe0] sm:$0xff] %vm1255, %v1188
        %1271 = vst.msk [vmem:[#allocation3 + $0xf0] sm:$0xff] %vm1255, %v1190
        %1272 = vst.msk [vmem:[#allocation3 + $0x100] sm:$0xff] %vm1255, %v1192
        %1273 = vst.msk [vmem:[#allocation3 + $0x110] sm:$0xff] %vm1255, %v1194
        %1274 = vst.msk [vmem:[#allocation3 + $0x120] sm:$0xff] %vm1255, %v1196
        %1275 = vst.msk [vmem:[#allocation3 + $0x130] sm:$0xff] %vm1255, %v1198
        %1276 = vst.msk [vmem:[#allocation3 + $0x140] sm:$0xff] %vm1255, %v1200
        %1277 = vst.msk [vmem:[#allocation3 + $0x150] sm:$0xff] %vm1255, %v1202
        %1278 = vst.msk [vmem:[#allocation3 + $0x160] sm:$0xff] %vm1255, %v1204
        %1279 = vst.msk [vmem:[#allocation3 + $0x170] sm:$0xff] %vm1255, %v1206
        %1280 = vst.msk [vmem:[#allocation3 + $0x180] sm:$0xff] %vm1255, %v1208
        %1281 = vst.msk [vmem:[#allocation3 + $0x190] sm:$0xff] %vm1255, %v1210
        %1282 = vst.msk [vmem:[#allocation3 + $0x1a0] sm:$0xff] %vm1255, %v1212
        %1283 = vst.msk [vmem:[#allocation3 + $0x1b0] sm:$0xff] %vm1255, %v1214
        %1284 = vst.msk [vmem:[#allocation3 + $0x1c0] sm:$0xff] %vm1255, %v1216
        %1285 = vst.msk [vmem:[#allocation3 + $0x1d0] sm:$0xff] %vm1255, %v1218
        %1286 = vst.msk [vmem:[#allocation3 + $0x1e0] sm:$0xff] %vm1255, %v1220
        %1287 = vst.msk [vmem:[#allocation3 + $0x1f0] sm:$0xff] %vm1255, %v1222
        %v1288 = vld [vmem:[%s545 + $0x1] sm:$0xff]
        %v1289 = vld [vmem:[%s545 + $0x9] sm:$0xff]
        %v1290 = vld [vmem:[%s545 + $0x19] sm:$0xff]
        %v1291 = vld [vmem:[%s545 + $0x21] sm:$0xff]
        %v1292 = vld [vmem:[%s545 + $0x31] sm:$0xff]
        %v1293 = vld [vmem:[%s545 + $0x39] sm:$0xff]
        %v1294 = vld [vmem:[%s545 + $0x49] sm:$0xff]
        %v1295 = vld [vmem:[%s545 + $0x51] sm:$0xff]
        %v1296 = vld [vmem:[%s545 + $0x61] sm:$0xff]
        %v1297 = vld [vmem:[%s545 + $0x69] sm:$0xff]
        %v1298 = vld [vmem:[%s545 + $0x79] sm:$0xff]
        %v1299 = vld [vmem:[%s545 + $0x81] sm:$0xff]
        %v1300 = vld [vmem:[%s545 + $0x91] sm:$0xff]
        %v1301 = vld [vmem:[%s545 + $0x99] sm:$0xff]
        %v1302 = vld [vmem:[%s545 + $0xa9] sm:$0xff]
        %v1303 = vld [vmem:[%s545 + $0xb1] sm:$0xff]
        %v1304 = vld [vmem:[%s545 + $0xc1] sm:$0xff]
        %v1305 = vld [vmem:[%s545 + $0xc9] sm:$0xff]
        %v1306 = vld [vmem:[%s545 + $0xd9] sm:$0xff]
        %v1307 = vld [vmem:[%s545 + $0xe1] sm:$0xff]
        %v1308 = vld [vmem:[%s545 + $0xf1] sm:$0xff]
        %v1309 = vld [vmem:[%s545 + $0xf9] sm:$0xff]
        %v1310 = vld [vmem:[%s545 + $0x109] sm:$0xff]
        %v1311 = vld [vmem:[%s545 + $0x111] sm:$0xff]
        %v1312 = vld [vmem:[%s545 + $0x121] sm:$0xff]
        %v1313 = vld [vmem:[%s545 + $0x129] sm:$0xff]
        %v1314 = vld [vmem:[%s545 + $0x139] sm:$0xff]
        %v1315 = vld [vmem:[%s545 + $0x141] sm:$0xff]
        %v1316 = vld [vmem:[%s545 + $0x151] sm:$0xff]
        %v1317 = vld [vmem:[%s545 + $0x159] sm:$0xff]
        %v1318 = vld [vmem:[%s545 + $0x169] sm:$0xff]
        %v1319 = vld [vmem:[%s545 + $0x171] sm:$0xff]
        %1352 = vrot.lane.b32.xlu0 %v1288, 32
        %v1353 = vpop.permute.xlu0 %1352
        %1354 = vrot.lane.b32.xlu0 %v1289, 32
        %v1355 = vpop.permute.xlu0 %1354
        %1356 = vrot.lane.b32.xlu0 %v1290, 32
        %v1357 = vpop.permute.xlu0 %1356
        %1358 = vrot.lane.b32.xlu0 %v1291, 32
        %v1359 = vpop.permute.xlu0 %1358
        %1360 = vrot.lane.b32.xlu0 %v1292, 32
        %v1361 = vpop.permute.xlu0 %1360
        %1362 = vrot.lane.b32.xlu0 %v1293, 32
        %v1363 = vpop.permute.xlu0 %1362
        %1364 = vrot.lane.b32.xlu0 %v1294, 32
        %v1365 = vpop.permute.xlu0 %1364
        %1366 = vrot.lane.b32.xlu0 %v1295, 32
        %v1367 = vpop.permute.xlu0 %1366
        %1368 = vrot.lane.b32.xlu0 %v1296, 32
        %v1369 = vpop.permute.xlu0 %1368
        %1370 = vrot.lane.b32.xlu0 %v1297, 32
        %v1371 = vpop.permute.xlu0 %1370
        %1372 = vrot.lane.b32.xlu0 %v1298, 32
        %v1373 = vpop.permute.xlu0 %1372
        %1374 = vrot.lane.b32.xlu0 %v1299, 32
        %v1375 = vpop.permute.xlu0 %1374
        %1376 = vrot.lane.b32.xlu0 %v1300, 32
        %v1377 = vpop.permute.xlu0 %1376
        %1378 = vrot.lane.b32.xlu0 %v1301, 32
        %v1379 = vpop.permute.xlu0 %1378
        %1380 = vrot.lane.b32.xlu0 %v1302, 32
        %v1381 = vpop.permute.xlu0 %1380
        %1382 = vrot.lane.b32.xlu0 %v1303, 32
        %v1383 = vpop.permute.xlu0 %1382
        %1384 = vrot.lane.b32.xlu0 %v1304, 32
        %v1385 = vpop.permute.xlu0 %1384
        %1386 = vrot.lane.b32.xlu0 %v1305, 32
        %v1387 = vpop.permute.xlu0 %1386
        %1388 = vrot.lane.b32.xlu0 %v1306, 32
        %v1389 = vpop.permute.xlu0 %1388
        %1390 = vrot.lane.b32.xlu0 %v1307, 32
        %v1391 = vpop.permute.xlu0 %1390
        %1392 = vrot.lane.b32.xlu0 %v1308, 32
        %v1393 = vpop.permute.xlu0 %1392
        %1394 = vrot.lane.b32.xlu0 %v1309, 32
        %v1395 = vpop.permute.xlu0 %1394
        %1396 = vrot.lane.b32.xlu0 %v1310, 32
        %v1397 = vpop.permute.xlu0 %1396
        %1398 = vrot.lane.b32.xlu0 %v1311, 32
        %v1399 = vpop.permute.xlu0 %1398
        %1400 = vrot.lane.b32.xlu0 %v1312, 32
        %v1401 = vpop.permute.xlu0 %1400
        %1402 = vrot.lane.b32.xlu0 %v1313, 32
        %v1403 = vpop.permute.xlu0 %1402
        %1404 = vrot.lane.b32.xlu0 %v1314, 32
        %v1405 = vpop.permute.xlu0 %1404
        %1406 = vrot.lane.b32.xlu0 %v1315, 32
        %v1407 = vpop.permute.xlu0 %1406
        %1408 = vrot.lane.b32.xlu0 %v1316, 32
        %v1409 = vpop.permute.xlu0 %1408
        %1410 = vrot.lane.b32.xlu0 %v1317, 32
        %v1411 = vpop.permute.xlu0 %1410
        %1412 = vrot.lane.b32.xlu0 %v1318, 32
        %v1413 = vpop.permute.xlu0 %1412
        %1414 = vrot.lane.b32.xlu0 %v1319, 32
        %v1415 = vpop.permute.xlu0 %1414
        %vm1448 = vcmask 326912
        %1449 = vst.msk [vmem:[#allocation3] sm:$0xff] %vm1448, %v1353
        %1450 = vst.msk [vmem:[#allocation3 + $0x10] sm:$0xff] %vm1448, %v1355
        %1451 = vst.msk [vmem:[#allocation3 + $0x20] sm:$0xff] %vm1448, %v1357
        %1452 = vst.msk [vmem:[#allocation3 + $0x30] sm:$0xff] %vm1448, %v1359
        %1453 = vst.msk [vmem:[#allocation3 + $0x40] sm:$0xff] %vm1448, %v1361
        %1454 = vst.msk [vmem:[#allocation3 + $0x50] sm:$0xff] %vm1448, %v1363
        %1455 = vst.msk [vmem:[#allocation3 + $0x60] sm:$0xff] %vm1448, %v1365
        %1456 = vst.msk [vmem:[#allocation3 + $0x70] sm:$0xff] %vm1448, %v1367
        %1457 = vst.msk [vmem:[#allocation3 + $0x80] sm:$0xff] %vm1448, %v1369
        %1458 = vst.msk [vmem:[#allocation3 + $0x90] sm:$0xff] %vm1448, %v1371
        %1459 = vst.msk [vmem:[#allocation3 + $0xa0] sm:$0xff] %vm1448, %v1373
        %1460 = vst.msk [vmem:[#allocation3 + $0xb0] sm:$0xff] %vm1448, %v1375
        %1461 = vst.msk [vmem:[#allocation3 + $0xc0] sm:$0xff] %vm1448, %v1377
        %1462 = vst.msk [vmem:[#allocation3 + $0xd0] sm:$0xff] %vm1448, %v1379
        %1463 = vst.msk [vmem:[#allocation3 + $0xe0] sm:$0xff] %vm1448, %v1381
        %1464 = vst.msk [vmem:[#allocation3 + $0xf0] sm:$0xff] %vm1448, %v1383
        %1465 = vst.msk [vmem:[#allocation3 + $0x100] sm:$0xff] %vm1448, %v1385
        %1466 = vst.msk [vmem:[#allocation3 + $0x110] sm:$0xff] %vm1448, %v1387
        %1467 = vst.msk [vmem:[#allocation3 + $0x120] sm:$0xff] %vm1448, %v1389
        %1468 = vst.msk [vmem:[#allocation3 + $0x130] sm:$0xff] %vm1448, %v1391
        %1469 = vst.msk [vmem:[#allocation3 + $0x140] sm:$0xff] %vm1448, %v1393
        %1470 = vst.msk [vmem:[#allocation3 + $0x150] sm:$0xff] %vm1448, %v1395
        %1471 = vst.msk [vmem:[#allocation3 + $0x160] sm:$0xff] %vm1448, %v1397
        %1472 = vst.msk [vmem:[#allocation3 + $0x170] sm:$0xff] %vm1448, %v1399
        %1473 = vst.msk [vmem:[#allocation3 + $0x180] sm:$0xff] %vm1448, %v1401
        %1474 = vst.msk [vmem:[#allocation3 + $0x190] sm:$0xff] %vm1448, %v1403
        %1475 = vst.msk [vmem:[#allocation3 + $0x1a0] sm:$0xff] %vm1448, %v1405
        %1476 = vst.msk [vmem:[#allocation3 + $0x1b0] sm:$0xff] %vm1448, %v1407
        %1477 = vst.msk [vmem:[#allocation3 + $0x1c0] sm:$0xff] %vm1448, %v1409
        %1478 = vst.msk [vmem:[#allocation3 + $0x1d0] sm:$0xff] %vm1448, %v1411
        %1479 = vst.msk [vmem:[#allocation3 + $0x1e0] sm:$0xff] %vm1448, %v1413
        %1480 = vst.msk [vmem:[#allocation3 + $0x1f0] sm:$0xff] %vm1448, %v1415
        %v1481 = vld [vmem:[%s545 + $0x2] sm:$0xff]
        %v1482 = vld [vmem:[%s545 + $0xa] sm:$0xff]
        %v1483 = vld [vmem:[%s545 + $0x1a] sm:$0xff]
        %v1484 = vld [vmem:[%s545 + $0x22] sm:$0xff]
        %v1485 = vld [vmem:[%s545 + $0x32] sm:$0xff]
        %v1486 = vld [vmem:[%s545 + $0x3a] sm:$0xff]
        %v1487 = vld [vmem:[%s545 + $0x4a] sm:$0xff]
        %v1488 = vld [vmem:[%s545 + $0x52] sm:$0xff]
        %v1489 = vld [vmem:[%s545 + $0x62] sm:$0xff]
        %v1490 = vld [vmem:[%s545 + $0x6a] sm:$0xff]
        %v1491 = vld [vmem:[%s545 + $0x7a] sm:$0xff]
        %v1492 = vld [vmem:[%s545 + $0x82] sm:$0xff]
        %v1493 = vld [vmem:[%s545 + $0x92] sm:$0xff]
        %v1494 = vld [vmem:[%s545 + $0x9a] sm:$0xff]
        %v1495 = vld [vmem:[%s545 + $0xaa] sm:$0xff]
        %v1496 = vld [vmem:[%s545 + $0xb2] sm:$0xff]
        %v1497 = vld [vmem:[%s545 + $0xc2] sm:$0xff]
        %v1498 = vld [vmem:[%s545 + $0xca] sm:$0xff]
        %v1499 = vld [vmem:[%s545 + $0xda] sm:$0xff]
        %v1500 = vld [vmem:[%s545 + $0xe2] sm:$0xff]
        %v1501 = vld [vmem:[%s545 + $0xf2] sm:$0xff]
        %v1502 = vld [vmem:[%s545 + $0xfa] sm:$0xff]
        %v1503 = vld [vmem:[%s545 + $0x10a] sm:$0xff]
        %v1504 = vld [vmem:[%s545 + $0x112] sm:$0xff]
        %v1505 = vld [vmem:[%s545 + $0x122] sm:$0xff]
        %v1506 = vld [vmem:[%s545 + $0x12a] sm:$0xff]
        %v1507 = vld [vmem:[%s545 + $0x13a] sm:$0xff]
        %v1508 = vld [vmem:[%s545 + $0x142] sm:$0xff]
        %v1509 = vld [vmem:[%s545 + $0x152] sm:$0xff]
        %v1510 = vld [vmem:[%s545 + $0x15a] sm:$0xff]
        %v1511 = vld [vmem:[%s545 + $0x16a] sm:$0xff]
        %v1512 = vld [vmem:[%s545 + $0x172] sm:$0xff]
        %1545 = vrot.lane.b32.xlu0 %v1481, 40
        %v1546 = vpop.permute.xlu0 %1545
        %1547 = vrot.lane.b32.xlu0 %v1482, 40
        %v1548 = vpop.permute.xlu0 %1547
        %1549 = vrot.lane.b32.xlu0 %v1483, 40
        %v1550 = vpop.permute.xlu0 %1549
        %1551 = vrot.lane.b32.xlu0 %v1484, 40
        %v1552 = vpop.permute.xlu0 %1551
        %1553 = vrot.lane.b32.xlu0 %v1485, 40
        %v1554 = vpop.permute.xlu0 %1553
        %1555 = vrot.lane.b32.xlu0 %v1486, 40
        %v1556 = vpop.permute.xlu0 %1555
        %1557 = vrot.lane.b32.xlu0 %v1487, 40
        %v1558 = vpop.permute.xlu0 %1557
        %1559 = vrot.lane.b32.xlu0 %v1488, 40
        %v1560 = vpop.permute.xlu0 %1559
        %1561 = vrot.lane.b32.xlu0 %v1489, 40
        %v1562 = vpop.permute.xlu0 %1561
        %1563 = vrot.lane.b32.xlu0 %v1490, 40
        %v1564 = vpop.permute.xlu0 %1563
        %1565 = vrot.lane.b32.xlu0 %v1491, 40
        %v1566 = vpop.permute.xlu0 %1565
        %1567 = vrot.lane.b32.xlu0 %v1492, 40
        %v1568 = vpop.permute.xlu0 %1567
        %1569 = vrot.lane.b32.xlu0 %v1493, 40
        %v1570 = vpop.permute.xlu0 %1569
        %1571 = vrot.lane.b32.xlu0 %v1494, 40
        %v1572 = vpop.permute.xlu0 %1571
        %1573 = vrot.lane.b32.xlu0 %v1495, 40
        %v1574 = vpop.permute.xlu0 %1573
        %1575 = vrot.lane.b32.xlu0 %v1496, 40
        %v1576 = vpop.permute.xlu0 %1575
        %1577 = vrot.lane.b32.xlu0 %v1497, 40
        %v1578 = vpop.permute.xlu0 %1577
        %1579 = vrot.lane.b32.xlu0 %v1498, 40
        %v1580 = vpop.permute.xlu0 %1579
        %1581 = vrot.lane.b32.xlu0 %v1499, 40
        %v1582 = vpop.permute.xlu0 %1581
        %1583 = vrot.lane.b32.xlu0 %v1500, 40
        %v1584 = vpop.permute.xlu0 %1583
        %1585 = vrot.lane.b32.xlu0 %v1501, 40
        %v1586 = vpop.permute.xlu0 %1585
        %1587 = vrot.lane.b32.xlu0 %v1502, 40
        %v1588 = vpop.permute.xlu0 %1587
        %1589 = vrot.lane.b32.xlu0 %v1503, 40
        %v1590 = vpop.permute.xlu0 %1589
        %1591 = vrot.lane.b32.xlu0 %v1504, 40
        %v1592 = vpop.permute.xlu0 %1591
        %1593 = vrot.lane.b32.xlu0 %v1505, 40
        %v1594 = vpop.permute.xlu0 %1593
        %1595 = vrot.lane.b32.xlu0 %v1506, 40
        %v1596 = vpop.permute.xlu0 %1595
        %1597 = vrot.lane.b32.xlu0 %v1507, 40
        %v1598 = vpop.permute.xlu0 %1597
        %1599 = vrot.lane.b32.xlu0 %v1508, 40
        %v1600 = vpop.permute.xlu0 %1599
        %1601 = vrot.lane.b32.xlu0 %v1509, 40
        %v1602 = vpop.permute.xlu0 %1601
        %1603 = vrot.lane.b32.xlu0 %v1510, 40
        %v1604 = vpop.permute.xlu0 %1603
        %1605 = vrot.lane.b32.xlu0 %v1511, 40
        %v1606 = vpop.permute.xlu0 %1605
        %1607 = vrot.lane.b32.xlu0 %v1512, 40
        %v1608 = vpop.permute.xlu0 %1607
        %vm1641 = vcmask 392512
        %1642 = vst.msk [vmem:[#allocation3] sm:$0xff] %vm1641, %v1546
        %1643 = vst.msk [vmem:[#allocation3 + $0x10] sm:$0xff] %vm1641, %v1548
        %1644 = vst.msk [vmem:[#allocation3 + $0x20] sm:$0xff] %vm1641, %v1550
        %1645 = vst.msk [vmem:[#allocation3 + $0x30] sm:$0xff] %vm1641, %v1552
        %1646 = vst.msk [vmem:[#allocation3 + $0x40] sm:$0xff] %vm1641, %v1554
        %1647 = vst.msk [vmem:[#allocation3 + $0x50] sm:$0xff] %vm1641, %v1556
        %1648 = vst.msk [vmem:[#allocation3 + $0x60] sm:$0xff] %vm1641, %v1558
        %1649 = vst.msk [vmem:[#allocation3 + $0x70] sm:$0xff] %vm1641, %v1560
        %1650 = vst.msk [vmem:[#allocation3 + $0x80] sm:$0xff] %vm1641, %v1562
        %1651 = vst.msk [vmem:[#allocation3 + $0x90] sm:$0xff] %vm1641, %v1564
        %1652 = vst.msk [vmem:[#allocation3 + $0xa0] sm:$0xff] %vm1641, %v1566
        %1653 = vst.msk [vmem:[#allocation3 + $0xb0] sm:$0xff] %vm1641, %v1568
        %1654 = vst.msk [vmem:[#allocation3 + $0xc0] sm:$0xff] %vm1641, %v1570
        %1655 = vst.msk [vmem:[#allocation3 + $0xd0] sm:$0xff] %vm1641, %v1572
        %1656 = vst.msk [vmem:[#allocation3 + $0xe0] sm:$0xff] %vm1641, %v1574
        %1657 = vst.msk [vmem:[#allocation3 + $0xf0] sm:$0xff] %vm1641, %v1576
        %1658 = vst.msk [vmem:[#allocation3 + $0x100] sm:$0xff] %vm1641, %v1578
        %1659 = vst.msk [vmem:[#allocation3 + $0x110] sm:$0xff] %vm1641, %v1580
        %1660 = vst.msk [vmem:[#allocation3 + $0x120] sm:$0xff] %vm1641, %v1582
        %1661 = vst.msk [vmem:[#allocation3 + $0x130] sm:$0xff] %vm1641, %v1584
        %1662 = vst.msk [vmem:[#allocation3 + $0x140] sm:$0xff] %vm1641, %v1586
        %1663 = vst.msk [vmem:[#allocation3 + $0x150] sm:$0xff] %vm1641, %v1588
        %1664 = vst.msk [vmem:[#allocation3 + $0x160] sm:$0xff] %vm1641, %v1590
        %1665 = vst.msk [vmem:[#allocation3 + $0x170] sm:$0xff] %vm1641, %v1592
        %1666 = vst.msk [vmem:[#allocation3 + $0x180] sm:$0xff] %vm1641, %v1594
        %1667 = vst.msk [vmem:[#allocation3 + $0x190] sm:$0xff] %vm1641, %v1596
        %1668 = vst.msk [vmem:[#allocation3 + $0x1a0] sm:$0xff] %vm1641, %v1598
        %1669 = vst.msk [vmem:[#allocation3 + $0x1b0] sm:$0xff] %vm1641, %v1600
        %1670 = vst.msk [vmem:[#allocation3 + $0x1c0] sm:$0xff] %vm1641, %v1602
        %1671 = vst.msk [vmem:[#allocation3 + $0x1d0] sm:$0xff] %vm1641, %v1604
        %1672 = vst.msk [vmem:[#allocation3 + $0x1e0] sm:$0xff] %vm1641, %v1606
        %1673 = vst.msk [vmem:[#allocation3 + $0x1f0] sm:$0xff] %vm1641, %v1608
        %s1674 = scalar_lea.vmem [#allocation2], 48
        %v1675 = vld [vmem:[%s1674] sm:$0xff]
        %v1676 = vld [vmem:[%s1674 + $0x8] sm:$0xff]
        %v1677 = vld [vmem:[%s1674 + $0x18] sm:$0xff]
        %v1678 = vld [vmem:[%s1674 + $0x20] sm:$0xff]
        %v1679 = vld [vmem:[%s1674 + $0x30] sm:$0xff]
        %v1680 = vld [vmem:[%s1674 + $0x38] sm:$0xff]
        %v1681 = vld [vmem:[%s1674 + $0x48] sm:$0xff]
        %v1682 = vld [vmem:[%s1674 + $0x50] sm:$0xff]
        %v1683 = vld [vmem:[%s1674 + $0x60] sm:$0xff]
        %v1684 = vld [vmem:[%s1674 + $0x68] sm:$0xff]
        %v1685 = vld [vmem:[%s1674 + $0x78] sm:$0xff]
        %v1686 = vld [vmem:[%s1674 + $0x80] sm:$0xff]
        %v1687 = vld [vmem:[%s1674 + $0x90] sm:$0xff]
        %v1688 = vld [vmem:[%s1674 + $0x98] sm:$0xff]
        %v1689 = vld [vmem:[%s1674 + $0xa8] sm:$0xff]
        %v1690 = vld [vmem:[%s1674 + $0xb0] sm:$0xff]
        %v1691 = vld [vmem:[%s1674 + $0xc0] sm:$0xff]
        %v1692 = vld [vmem:[%s1674 + $0xc8] sm:$0xff]
        %v1693 = vld [vmem:[%s1674 + $0xd8] sm:$0xff]
        %v1694 = vld [vmem:[%s1674 + $0xe0] sm:$0xff]
        %v1695 = vld [vmem:[%s1674 + $0xf0] sm:$0xff]
        %v1696 = vld [vmem:[%s1674 + $0xf8] sm:$0xff]
        %v1697 = vld [vmem:[%s1674 + $0x108] sm:$0xff]
        %v1698 = vld [vmem:[%s1674 + $0x110] sm:$0xff]
        %v1699 = vld [vmem:[%s1674 + $0x120] sm:$0xff]
        %v1700 = vld [vmem:[%s1674 + $0x128] sm:$0xff]
        %v1701 = vld [vmem:[%s1674 + $0x138] sm:$0xff]
        %v1702 = vld [vmem:[%s1674 + $0x140] sm:$0xff]
        %v1703 = vld [vmem:[%s1674 + $0x150] sm:$0xff]
        %v1704 = vld [vmem:[%s1674 + $0x158] sm:$0xff]
        %v1705 = vld [vmem:[%s1674 + $0x168] sm:$0xff]
        %v1706 = vld [vmem:[%s1674 + $0x170] sm:$0xff]
        %1739 = vrot.lane.b32.xlu0 %v1675, 48
        %v1740 = vpop.permute.xlu0 %1739
        %1741 = vrot.lane.b32.xlu0 %v1676, 48
        %v1742 = vpop.permute.xlu0 %1741
        %1743 = vrot.lane.b32.xlu0 %v1677, 48
        %v1744 = vpop.permute.xlu0 %1743
        %1745 = vrot.lane.b32.xlu0 %v1678, 48
        %v1746 = vpop.permute.xlu0 %1745
        %1747 = vrot.lane.b32.xlu0 %v1679, 48
        %v1748 = vpop.permute.xlu0 %1747
        %1749 = vrot.lane.b32.xlu0 %v1680, 48
        %v1750 = vpop.permute.xlu0 %1749
        %1751 = vrot.lane.b32.xlu0 %v1681, 48
        %v1752 = vpop.permute.xlu0 %1751
        %1753 = vrot.lane.b32.xlu0 %v1682, 48
        %v1754 = vpop.permute.xlu0 %1753
        %1755 = vrot.lane.b32.xlu0 %v1683, 48
        %v1756 = vpop.permute.xlu0 %1755
        %1757 = vrot.lane.b32.xlu0 %v1684, 48
        %v1758 = vpop.permute.xlu0 %1757
        %1759 = vrot.lane.b32.xlu0 %v1685, 48
        %v1760 = vpop.permute.xlu0 %1759
        %1761 = vrot.lane.b32.xlu0 %v1686, 48
        %v1762 = vpop.permute.xlu0 %1761
        %1763 = vrot.lane.b32.xlu0 %v1687, 48
        %v1764 = vpop.permute.xlu0 %1763
        %1765 = vrot.lane.b32.xlu0 %v1688, 48
        %v1766 = vpop.permute.xlu0 %1765
        %1767 = vrot.lane.b32.xlu0 %v1689, 48
        %v1768 = vpop.permute.xlu0 %1767
        %1769 = vrot.lane.b32.xlu0 %v1690, 48
        %v1770 = vpop.permute.xlu0 %1769
        %1771 = vrot.lane.b32.xlu0 %v1691, 48
        %v1772 = vpop.permute.xlu0 %1771
        %1773 = vrot.lane.b32.xlu0 %v1692, 48
        %v1774 = vpop.permute.xlu0 %1773
        %1775 = vrot.lane.b32.xlu0 %v1693, 48
        %v1776 = vpop.permute.xlu0 %1775
        %1777 = vrot.lane.b32.xlu0 %v1694, 48
        %v1778 = vpop.permute.xlu0 %1777
        %1779 = vrot.lane.b32.xlu0 %v1695, 48
        %v1780 = vpop.permute.xlu0 %1779
        %1781 = vrot.lane.b32.xlu0 %v1696, 48
        %v1782 = vpop.permute.xlu0 %1781
        %1783 = vrot.lane.b32.xlu0 %v1697, 48
        %v1784 = vpop.permute.xlu0 %1783
        %1785 = vrot.lane.b32.xlu0 %v1698, 48
        %v1786 = vpop.permute.xlu0 %1785
        %1787 = vrot.lane.b32.xlu0 %v1699, 48
        %v1788 = vpop.permute.xlu0 %1787
        %1789 = vrot.lane.b32.xlu0 %v1700, 48
        %v1790 = vpop.permute.xlu0 %1789
        %1791 = vrot.lane.b32.xlu0 %v1701, 48
        %v1792 = vpop.permute.xlu0 %1791
        %1793 = vrot.lane.b32.xlu0 %v1702, 48
        %v1794 = vpop.permute.xlu0 %1793
        %1795 = vrot.lane.b32.xlu0 %v1703, 48
        %v1796 = vpop.permute.xlu0 %1795
        %1797 = vrot.lane.b32.xlu0 %v1704, 48
        %v1798 = vpop.permute.xlu0 %1797
        %1799 = vrot.lane.b32.xlu0 %v1705, 48
        %v1800 = vpop.permute.xlu0 %1799
        %1801 = vrot.lane.b32.xlu0 %v1706, 48
        %v1802 = vpop.permute.xlu0 %1801
        %vm1835 = vcmask 458112
        %1836 = vst.msk [vmem:[#allocation3] sm:$0xff] %vm1835, %v1740
        %1837 = vst.msk [vmem:[#allocation3 + $0x10] sm:$0xff] %vm1835, %v1742
        %1838 = vst.msk [vmem:[#allocation3 + $0x20] sm:$0xff] %vm1835, %v1744
        %1839 = vst.msk [vmem:[#allocation3 + $0x30] sm:$0xff] %vm1835, %v1746
        %1840 = vst.msk [vmem:[#allocation3 + $0x40] sm:$0xff] %vm1835, %v1748
        %1841 = vst.msk [vmem:[#allocation3 + $0x50] sm:$0xff] %vm1835, %v1750
        %1842 = vst.msk [vmem:[#allocation3 + $0x60] sm:$0xff] %vm1835, %v1752
        %1843 = vst.msk [vmem:[#allocation3 + $0x70] sm:$0xff] %vm1835, %v1754
        %1844 = vst.msk [vmem:[#allocation3 + $0x80] sm:$0xff] %vm1835, %v1756
        %1845 = vst.msk [vmem:[#allocation3 + $0x90] sm:$0xff] %vm1835, %v1758
        %1846 = vst.msk [vmem:[#allocation3 + $0xa0] sm:$0xff] %vm1835, %v1760
        %1847 = vst.msk [vmem:[#allocation3 + $0xb0] sm:$0xff] %vm1835, %v1762
        %1848 = vst.msk [vmem:[#allocation3 + $0xc0] sm:$0xff] %vm1835, %v1764
        %1849 = vst.msk [vmem:[#allocation3 + $0xd0] sm:$0xff] %vm1835, %v1766
        %1850 = vst.msk [vmem:[#allocation3 + $0xe0] sm:$0xff] %vm1835, %v1768
        %1851 = vst.msk [vmem:[#allocation3 + $0xf0] sm:$0xff] %vm1835, %v1770
        %1852 = vst.msk [vmem:[#allocation3 + $0x100] sm:$0xff] %vm1835, %v1772
        %1853 = vst.msk [vmem:[#allocation3 + $0x110] sm:$0xff] %vm1835, %v1774
        %1854 = vst.msk [vmem:[#allocation3 + $0x120] sm:$0xff] %vm1835, %v1776
        %1855 = vst.msk [vmem:[#allocation3 + $0x130] sm:$0xff] %vm1835, %v1778
        %1856 = vst.msk [vmem:[#allocation3 + $0x140] sm:$0xff] %vm1835, %v1780
        %1857 = vst.msk [vmem:[#allocation3 + $0x150] sm:$0xff] %vm1835, %v1782
        %1858 = vst.msk [vmem:[#allocation3 + $0x160] sm:$0xff] %vm1835, %v1784
        %1859 = vst.msk [vmem:[#allocation3 + $0x170] sm:$0xff] %vm1835, %v1786
        %1860 = vst.msk [vmem:[#allocation3 + $0x180] sm:$0xff] %vm1835, %v1788
        %1861 = vst.msk [vmem:[#allocation3 + $0x190] sm:$0xff] %vm1835, %v1790
        %1862 = vst.msk [vmem:[#allocation3 + $0x1a0] sm:$0xff] %vm1835, %v1792
        %1863 = vst.msk [vmem:[#allocation3 + $0x1b0] sm:$0xff] %vm1835, %v1794
        %1864 = vst.msk [vmem:[#allocation3 + $0x1c0] sm:$0xff] %vm1835, %v1796
        %1865 = vst.msk [vmem:[#allocation3 + $0x1d0] sm:$0xff] %vm1835, %v1798
        %1866 = vst.msk [vmem:[#allocation3 + $0x1e0] sm:$0xff] %vm1835, %v1800
        %1867 = vst.msk [vmem:[#allocation3 + $0x1f0] sm:$0xff] %vm1835, %v1802
        %v1868 = vld [vmem:[%s1674 + $0x1] sm:$0xff]
        %v1869 = vld [vmem:[%s1674 + $0x9] sm:$0xff]
        %v1870 = vld [vmem:[%s1674 + $0x19] sm:$0xff]
        %v1871 = vld [vmem:[%s1674 + $0x21] sm:$0xff]
        %v1872 = vld [vmem:[%s1674 + $0x31] sm:$0xff]
        %v1873 = vld [vmem:[%s1674 + $0x39] sm:$0xff]
        %v1874 = vld [vmem:[%s1674 + $0x49] sm:$0xff]
        %v1875 = vld [vmem:[%s1674 + $0x51] sm:$0xff]
        %v1876 = vld [vmem:[%s1674 + $0x61] sm:$0xff]
        %v1877 = vld [vmem:[%s1674 + $0x69] sm:$0xff]
        %v1878 = vld [vmem:[%s1674 + $0x79] sm:$0xff]
        %v1879 = vld [vmem:[%s1674 + $0x81] sm:$0xff]
        %v1880 = vld [vmem:[%s1674 + $0x91] sm:$0xff]
        %v1881 = vld [vmem:[%s1674 + $0x99] sm:$0xff]
        %v1882 = vld [vmem:[%s1674 + $0xa9] sm:$0xff]
        %v1883 = vld [vmem:[%s1674 + $0xb1] sm:$0xff]
        %v1884 = vld [vmem:[%s1674 + $0xc1] sm:$0xff]
        %v1885 = vld [vmem:[%s1674 + $0xc9] sm:$0xff]
        %v1886 = vld [vmem:[%s1674 + $0xd9] sm:$0xff]
        %v1887 = vld [vmem:[%s1674 + $0xe1] sm:$0xff]
        %v1888 = vld [vmem:[%s1674 + $0xf1] sm:$0xff]
        %v1889 = vld [vmem:[%s1674 + $0xf9] sm:$0xff]
        %v1890 = vld [vmem:[%s1674 + $0x109] sm:$0xff]
        %v1891 = vld [vmem:[%s1674 + $0x111] sm:$0xff]
        %v1892 = vld [vmem:[%s1674 + $0x121] sm:$0xff]
        %v1893 = vld [vmem:[%s1674 + $0x129] sm:$0xff]
        %v1894 = vld [vmem:[%s1674 + $0x139] sm:$0xff]
        %v1895 = vld [vmem:[%s1674 + $0x141] sm:$0xff]
        %v1896 = vld [vmem:[%s1674 + $0x151] sm:$0xff]
        %v1897 = vld [vmem:[%s1674 + $0x159] sm:$0xff]
        %v1898 = vld [vmem:[%s1674 + $0x169] sm:$0xff]
        %v1899 = vld [vmem:[%s1674 + $0x171] sm:$0xff]
        %1932 = vrot.lane.b32.xlu0 %v1868, 56
        %v1933 = vpop.permute.xlu0 %1932
        %1934 = vrot.lane.b32.xlu0 %v1869, 56
        %v1935 = vpop.permute.xlu0 %1934
        %1936 = vrot.lane.b32.xlu0 %v1870, 56
        %v1937 = vpop.permute.xlu0 %1936
        %1938 = vrot.lane.b32.xlu0 %v1871, 56
        %v1939 = vpop.permute.xlu0 %1938
        %1940 = vrot.lane.b32.xlu0 %v1872, 56
        %v1941 = vpop.permute.xlu0 %1940
        %1942 = vrot.lane.b32.xlu0 %v1873, 56
        %v1943 = vpop.permute.xlu0 %1942
        %1944 = vrot.lane.b32.xlu0 %v1874, 56
        %v1945 = vpop.permute.xlu0 %1944
        %1946 = vrot.lane.b32.xlu0 %v1875, 56
        %v1947 = vpop.permute.xlu0 %1946
        %1948 = vrot.lane.b32.xlu0 %v1876, 56
        %v1949 = vpop.permute.xlu0 %1948
        %1950 = vrot.lane.b32.xlu0 %v1877, 56
        %v1951 = vpop.permute.xlu0 %1950
        %1952 = vrot.lane.b32.xlu0 %v1878, 56
        %v1953 = vpop.permute.xlu0 %1952
        %1954 = vrot.lane.b32.xlu0 %v1879, 56
        %v1955 = vpop.permute.xlu0 %1954
        %1956 = vrot.lane.b32.xlu0 %v1880, 56
        %v1957 = vpop.permute.xlu0 %1956
        %1958 = vrot.lane.b32.xlu0 %v1881, 56
        %v1959 = vpop.permute.xlu0 %1958
        %1960 = vrot.lane.b32.xlu0 %v1882, 56
        %v1961 = vpop.permute.xlu0 %1960
        %1962 = vrot.lane.b32.xlu0 %v1883, 56
        %v1963 = vpop.permute.xlu0 %1962
        %1964 = vrot.lane.b32.xlu0 %v1884, 56
        %v1965 = vpop.permute.xlu0 %1964
        %1966 = vrot.lane.b32.xlu0 %v1885, 56
        %v1967 = vpop.permute.xlu0 %1966
        %1968 = vrot.lane.b32.xlu0 %v1886, 56
        %v1969 = vpop.permute.xlu0 %1968
        %1970 = vrot.lane.b32.xlu0 %v1887, 56
        %v1971 = vpop.permute.xlu0 %1970
        %1972 = vrot.lane.b32.xlu0 %v1888, 56
        %v1973 = vpop.permute.xlu0 %1972
        %1974 = vrot.lane.b32.xlu0 %v1889, 56
        %v1975 = vpop.permute.xlu0 %1974
        %1976 = vrot.lane.b32.xlu0 %v1890, 56
        %v1977 = vpop.permute.xlu0 %1976
        %1978 = vrot.lane.b32.xlu0 %v1891, 56
        %v1979 = vpop.permute.xlu0 %1978
        %1980 = vrot.lane.b32.xlu0 %v1892, 56
        %v1981 = vpop.permute.xlu0 %1980
        %1982 = vrot.lane.b32.xlu0 %v1893, 56
        %v1983 = vpop.permute.xlu0 %1982
        %1984 = vrot.lane.b32.xlu0 %v1894, 56
        %v1985 = vpop.permute.xlu0 %1984
        %1986 = vrot.lane.b32.xlu0 %v1895, 56
        %v1987 = vpop.permute.xlu0 %1986
        %1988 = vrot.lane.b32.xlu0 %v1896, 56
        %v1989 = vpop.permute.xlu0 %1988
        %1990 = vrot.lane.b32.xlu0 %v1897, 56
        %v1991 = vpop.permute.xlu0 %1990
        %1992 = vrot.lane.b32.xlu0 %v1898, 56
        %v1993 = vpop.permute.xlu0 %1992
        %1994 = vrot.lane.b32.xlu0 %v1899, 56
        %v1995 = vpop.permute.xlu0 %1994
        %vm2028 = vcmask 523712
        %2029 = vst.msk [vmem:[#allocation3] sm:$0xff] %vm2028, %v1933
        %2030 = vst.msk [vmem:[#allocation3 + $0x10] sm:$0xff] %vm2028, %v1935
        %2031 = vst.msk [vmem:[#allocation3 + $0x20] sm:$0xff] %vm2028, %v1937
        %2032 = vst.msk [vmem:[#allocation3 + $0x30] sm:$0xff] %vm2028, %v1939
        %2033 = vst.msk [vmem:[#allocation3 + $0x40] sm:$0xff] %vm2028, %v1941
        %2034 = vst.msk [vmem:[#allocation3 + $0x50] sm:$0xff] %vm2028, %v1943
        %2035 = vst.msk [vmem:[#allocation3 + $0x60] sm:$0xff] %vm2028, %v1945
        %2036 = vst.msk [vmem:[#allocation3 + $0x70] sm:$0xff] %vm2028, %v1947
        %2037 = vst.msk [vmem:[#allocation3 + $0x80] sm:$0xff] %vm2028, %v1949
        %2038 = vst.msk [vmem:[#allocation3 + $0x90] sm:$0xff] %vm2028, %v1951
        %2039 = vst.msk [vmem:[#allocation3 + $0xa0] sm:$0xff] %vm2028, %v1953
        %2040 = vst.msk [vmem:[#allocation3 + $0xb0] sm:$0xff] %vm2028, %v1955
        %2041 = vst.msk [vmem:[#allocation3 + $0xc0] sm:$0xff] %vm2028, %v1957
        %2042 = vst.msk [vmem:[#allocation3 + $0xd0] sm:$0xff] %vm2028, %v1959
        %2043 = vst.msk [vmem:[#allocation3 + $0xe0] sm:$0xff] %vm2028, %v1961
        %2044 = vst.msk [vmem:[#allocation3 + $0xf0] sm:$0xff] %vm2028, %v1963
        %2045 = vst.msk [vmem:[#allocation3 + $0x100] sm:$0xff] %vm2028, %v1965
        %2046 = vst.msk [vmem:[#allocation3 + $0x110] sm:$0xff] %vm2028, %v1967
        %2047 = vst.msk [vmem:[#allocation3 + $0x120] sm:$0xff] %vm2028, %v1969
        %2048 = vst.msk [vmem:[#allocation3 + $0x130] sm:$0xff] %vm2028, %v1971
        %2049 = vst.msk [vmem:[#allocation3 + $0x140] sm:$0xff] %vm2028, %v1973
        %2050 = vst.msk [vmem:[#allocation3 + $0x150] sm:$0xff] %vm2028, %v1975
        %2051 = vst.msk [vmem:[#allocation3 + $0x160] sm:$0xff] %vm2028, %v1977
        %2052 = vst.msk [vmem:[#allocation3 + $0x170] sm:$0xff] %vm2028, %v1979
        %2053 = vst.msk [vmem:[#allocation3 + $0x180] sm:$0xff] %vm2028, %v1981
        %2054 = vst.msk [vmem:[#allocation3 + $0x190] sm:$0xff] %vm2028, %v1983
        %2055 = vst.msk [vmem:[#allocation3 + $0x1a0] sm:$0xff] %vm2028, %v1985
        %2056 = vst.msk [vmem:[#allocation3 + $0x1b0] sm:$0xff] %vm2028, %v1987
        %2057 = vst.msk [vmem:[#allocation3 + $0x1c0] sm:$0xff] %vm2028, %v1989
        %2058 = vst.msk [vmem:[#allocation3 + $0x1d0] sm:$0xff] %vm2028, %v1991
        %2059 = vst.msk [vmem:[#allocation3 + $0x1e0] sm:$0xff] %vm2028, %v1993
        %2060 = vst.msk [vmem:[#allocation3 + $0x1f0] sm:$0xff] %vm2028, %v1995
        %v2061 = vld [vmem:[%s1674 + $0x2] sm:$0xff]
        %v2062 = vld [vmem:[%s1674 + $0xa] sm:$0xff]
        %v2063 = vld [vmem:[%s1674 + $0x1a] sm:$0xff]
        %v2064 = vld [vmem:[%s1674 + $0x22] sm:$0xff]
        %v2065 = vld [vmem:[%s1674 + $0x32] sm:$0xff]
        %v2066 = vld [vmem:[%s1674 + $0x3a] sm:$0xff]
        %v2067 = vld [vmem:[%s1674 + $0x4a] sm:$0xff]
        %v2068 = vld [vmem:[%s1674 + $0x52] sm:$0xff]
        %v2069 = vld [vmem:[%s1674 + $0x62] sm:$0xff]
        %v2070 = vld [vmem:[%s1674 + $0x6a] sm:$0xff]
        %v2071 = vld [vmem:[%s1674 + $0x7a] sm:$0xff]
        %v2072 = vld [vmem:[%s1674 + $0x82] sm:$0xff]
        %v2073 = vld [vmem:[%s1674 + $0x92] sm:$0xff]
        %v2074 = vld [vmem:[%s1674 + $0x9a] sm:$0xff]
        %v2075 = vld [vmem:[%s1674 + $0xaa] sm:$0xff]
        %v2076 = vld [vmem:[%s1674 + $0xb2] sm:$0xff]
        %v2077 = vld [vmem:[%s1674 + $0xc2] sm:$0xff]
        %v2078 = vld [vmem:[%s1674 + $0xca] sm:$0xff]
        %v2079 = vld [vmem:[%s1674 + $0xda] sm:$0xff]
        %v2080 = vld [vmem:[%s1674 + $0xe2] sm:$0xff]
        %v2081 = vld [vmem:[%s1674 + $0xf2] sm:$0xff]
        %v2082 = vld [vmem:[%s1674 + $0xfa] sm:$0xff]
        %v2083 = vld [vmem:[%s1674 + $0x10a] sm:$0xff]
        %v2084 = vld [vmem:[%s1674 + $0x112] sm:$0xff]
        %v2085 = vld [vmem:[%s1674 + $0x122] sm:$0xff]
        %v2086 = vld [vmem:[%s1674 + $0x12a] sm:$0xff]
        %v2087 = vld [vmem:[%s1674 + $0x13a] sm:$0xff]
        %v2088 = vld [vmem:[%s1674 + $0x142] sm:$0xff]
        %v2089 = vld [vmem:[%s1674 + $0x152] sm:$0xff]
        %v2090 = vld [vmem:[%s1674 + $0x15a] sm:$0xff]
        %v2091 = vld [vmem:[%s1674 + $0x16a] sm:$0xff]
        %v2092 = vld [vmem:[%s1674 + $0x172] sm:$0xff]
        %2125 = vrot.lane.b32.xlu0 %v2061, 64
        %v2126 = vpop.permute.xlu0 %2125
        %2127 = vrot.lane.b32.xlu0 %v2062, 64
        %v2128 = vpop.permute.xlu0 %2127
        %2129 = vrot.lane.b32.xlu0 %v2063, 64
        %v2130 = vpop.permute.xlu0 %2129
        %2131 = vrot.lane.b32.xlu0 %v2064, 64
        %v2132 = vpop.permute.xlu0 %2131
        %2133 = vrot.lane.b32.xlu0 %v2065, 64
        %v2134 = vpop.permute.xlu0 %2133
        %2135 = vrot.lane.b32.xlu0 %v2066, 64
        %v2136 = vpop.permute.xlu0 %2135
        %2137 = vrot.lane.b32.xlu0 %v2067, 64
        %v2138 = vpop.permute.xlu0 %2137
        %2139 = vrot.lane.b32.xlu0 %v2068, 64
        %v2140 = vpop.permute.xlu0 %2139
        %2141 = vrot.lane.b32.xlu0 %v2069, 64
        %v2142 = vpop.permute.xlu0 %2141
        %2143 = vrot.lane.b32.xlu0 %v2070, 64
        %v2144 = vpop.permute.xlu0 %2143
        %2145 = vrot.lane.b32.xlu0 %v2071, 64
        %v2146 = vpop.permute.xlu0 %2145
        %2147 = vrot.lane.b32.xlu0 %v2072, 64
        %v2148 = vpop.permute.xlu0 %2147
        %2149 = vrot.lane.b32.xlu0 %v2073, 64
        %v2150 = vpop.permute.xlu0 %2149
        %2151 = vrot.lane.b32.xlu0 %v2074, 64
        %v2152 = vpop.permute.xlu0 %2151
        %2153 = vrot.lane.b32.xlu0 %v2075, 64
        %v2154 = vpop.permute.xlu0 %2153
        %2155 = vrot.lane.b32.xlu0 %v2076, 64
        %v2156 = vpop.permute.xlu0 %2155
        %2157 = vrot.lane.b32.xlu0 %v2077, 64
        %v2158 = vpop.permute.xlu0 %2157
        %2159 = vrot.lane.b32.xlu0 %v2078, 64
        %v2160 = vpop.permute.xlu0 %2159
        %2161 = vrot.lane.b32.xlu0 %v2079, 64
        %v2162 = vpop.permute.xlu0 %2161
        %2163 = vrot.lane.b32.xlu0 %v2080, 64
        %v2164 = vpop.permute.xlu0 %2163
        %2165 = vrot.lane.b32.xlu0 %v2081, 64
        %v2166 = vpop.permute.xlu0 %2165
        %2167 = vrot.lane.b32.xlu0 %v2082, 64
        %v2168 = vpop.permute.xlu0 %2167
        %2169 = vrot.lane.b32.xlu0 %v2083, 64
        %v2170 = vpop.permute.xlu0 %2169
        %2171 = vrot.lane.b32.xlu0 %v2084, 64
        %v2172 = vpop.permute.xlu0 %2171
        %2173 = vrot.lane.b32.xlu0 %v2085, 64
        %v2174 = vpop.permute.xlu0 %2173
        %2175 = vrot.lane.b32.xlu0 %v2086, 64
        %v2176 = vpop.permute.xlu0 %2175
        %2177 = vrot.lane.b32.xlu0 %v2087, 64
        %v2178 = vpop.permute.xlu0 %2177
        %2179 = vrot.lane.b32.xlu0 %v2088, 64
        %v2180 = vpop.permute.xlu0 %2179
        %2181 = vrot.lane.b32.xlu0 %v2089, 64
        %v2182 = vpop.permute.xlu0 %2181
        %2183 = vrot.lane.b32.xlu0 %v2090, 64
        %v2184 = vpop.permute.xlu0 %2183
        %2185 = vrot.lane.b32.xlu0 %v2091, 64
        %v2186 = vpop.permute.xlu0 %2185
        %2187 = vrot.lane.b32.xlu0 %v2092, 64
        %v2188 = vpop.permute.xlu0 %2187
        %vm2221 = vcmask 589312
        %2222 = vst.msk [vmem:[#allocation3] sm:$0xff] %vm2221, %v2126
        %2223 = vst.msk [vmem:[#allocation3 + $0x10] sm:$0xff] %vm2221, %v2128
        %2224 = vst.msk [vmem:[#allocation3 + $0x20] sm:$0xff] %vm2221, %v2130
        %2225 = vst.msk [vmem:[#allocation3 + $0x30] sm:$0xff] %vm2221, %v2132
        %2226 = vst.msk [vmem:[#allocation3 + $0x40] sm:$0xff] %vm2221, %v2134
        %2227 = vst.msk [vmem:[#allocation3 + $0x50] sm:$0xff] %vm2221, %v2136
        %2228 = vst.msk [vmem:[#allocation3 + $0x60] sm:$0xff] %vm2221, %v2138
        %2229 = vst.msk [vmem:[#allocation3 + $0x70] sm:$0xff] %vm2221, %v2140
        %2230 = vst.msk [vmem:[#allocation3 + $0x80] sm:$0xff] %vm2221, %v2142
        %2231 = vst.msk [vmem:[#allocation3 + $0x90] sm:$0xff] %vm2221, %v2144
        %2232 = vst.msk [vmem:[#allocation3 + $0xa0] sm:$0xff] %vm2221, %v2146
        %2233 = vst.msk [vmem:[#allocation3 + $0xb0] sm:$0xff] %vm2221, %v2148
        %2234 = vst.msk [vmem:[#allocation3 + $0xc0] sm:$0xff] %vm2221, %v2150
        %2235 = vst.msk [vmem:[#allocation3 + $0xd0] sm:$0xff] %vm2221, %v2152
        %2236 = vst.msk [vmem:[#allocation3 + $0xe0] sm:$0xff] %vm2221, %v2154
        %2237 = vst.msk [vmem:[#allocation3 + $0xf0] sm:$0xff] %vm2221, %v2156
        %2238 = vst.msk [vmem:[#allocation3 + $0x100] sm:$0xff] %vm2221, %v2158
        %2239 = vst.msk [vmem:[#allocation3 + $0x110] sm:$0xff] %vm2221, %v2160
        %2240 = vst.msk [vmem:[#allocation3 + $0x120] sm:$0xff] %vm2221, %v2162
        %2241 = vst.msk [vmem:[#allocation3 + $0x130] sm:$0xff] %vm2221, %v2164
        %2242 = vst.msk [vmem:[#allocation3 + $0x140] sm:$0xff] %vm2221, %v2166
        %2243 = vst.msk [vmem:[#allocation3 + $0x150] sm:$0xff] %vm2221, %v2168
        %2244 = vst.msk [vmem:[#allocation3 + $0x160] sm:$0xff] %vm2221, %v2170
        %2245 = vst.msk [vmem:[#allocation3 + $0x170] sm:$0xff] %vm2221, %v2172
        %2246 = vst.msk [vmem:[#allocation3 + $0x180] sm:$0xff] %vm2221, %v2174
        %2247 = vst.msk [vmem:[#allocation3 + $0x190] sm:$0xff] %vm2221, %v2176
        %2248 = vst.msk [vmem:[#allocation3 + $0x1a0] sm:$0xff] %vm2221, %v2178
        %2249 = vst.msk [vmem:[#allocation3 + $0x1b0] sm:$0xff] %vm2221, %v2180
        %2250 = vst.msk [vmem:[#allocation3 + $0x1c0] sm:$0xff] %vm2221, %v2182
        %2251 = vst.msk [vmem:[#allocation3 + $0x1d0] sm:$0xff] %vm2221, %v2184
        %2252 = vst.msk [vmem:[#allocation3 + $0x1e0] sm:$0xff] %vm2221, %v2186
        %2253 = vst.msk [vmem:[#allocation3 + $0x1f0] sm:$0xff] %vm2221, %v2188
        %v2254 = vld [vmem:[#allocation3] sm:$0xff]
        %v2255 = vld [vmem:[#allocation3 + $0x10] sm:$0xff]
        %v2256 = vld [vmem:[#allocation3 + $0x20] sm:$0xff]
        %v2257 = vld [vmem:[#allocation3 + $0x30] sm:$0xff]
        %v2258 = vld [vmem:[#allocation3 + $0x40] sm:$0xff]
        %v2259 = vld [vmem:[#allocation3 + $0x50] sm:$0xff]
        %v2260 = vld [vmem:[#allocation3 + $0x60] sm:$0xff]
        %v2261 = vld [vmem:[#allocation3 + $0x70] sm:$0xff]
        %v2262 = vld [vmem:[#allocation3 + $0x80] sm:$0xff]
        %v2263 = vld [vmem:[#allocation3 + $0x90] sm:$0xff]
        %v2264 = vld [vmem:[#allocation3 + $0xa0] sm:$0xff]
        %v2265 = vld [vmem:[#allocation3 + $0xb0] sm:$0xff]
        %v2266 = vld [vmem:[#allocation3 + $0xc0] sm:$0xff]
        %v2267 = vld [vmem:[#allocation3 + $0xd0] sm:$0xff]
        %v2268 = vld [vmem:[#allocation3 + $0xe0] sm:$0xff]
        %v2269 = vld [vmem:[#allocation3 + $0xf0] sm:$0xff]
        %v2270 = vld [vmem:[#allocation3 + $0x100] sm:$0xff]
        %v2271 = vld [vmem:[#allocation3 + $0x110] sm:$0xff]
        %v2272 = vld [vmem:[#allocation3 + $0x120] sm:$0xff]
        %v2273 = vld [vmem:[#allocation3 + $0x130] sm:$0xff]
        %v2274 = vld [vmem:[#allocation3 + $0x140] sm:$0xff]
        %v2275 = vld [vmem:[#allocation3 + $0x150] sm:$0xff]
        %v2276 = vld [vmem:[#allocation3 + $0x160] sm:$0xff]
        %v2277 = vld [vmem:[#allocation3 + $0x170] sm:$0xff]
        %v2278 = vld [vmem:[#allocation3 + $0x180] sm:$0xff]
        %v2279 = vld [vmem:[#allocation3 + $0x190] sm:$0xff]
        %v2280 = vld [vmem:[#allocation3 + $0x1a0] sm:$0xff]
        %v2281 = vld [vmem:[#allocation3 + $0x1b0] sm:$0xff]
        %v2282 = vld [vmem:[#allocation3 + $0x1c0] sm:$0xff]
        %v2283 = vld [vmem:[#allocation3 + $0x1d0] sm:$0xff]
        %v2284 = vld [vmem:[#allocation3 + $0x1e0] sm:$0xff]
        %v2285 = vld [vmem:[#allocation3 + $0x1f0] sm:$0xff]
        %v2286 = vld [vmem:[#allocation9] sm:$0xff]
        %v2287 = vld [vmem:[#allocation9 + $0x8] sm:$0xff]
        %v2288 = vld [vmem:[#allocation9 + $0x10] sm:$0xff]
        %v2289 = vld [vmem:[#allocation9 + $0x18] sm:$0xff]
        %v2290 = vld [vmem:[#allocation9 + $0x20] sm:$0xff]
        %v2291 = vld [vmem:[#allocation9 + $0x28] sm:$0xff]
        %v2292 = vld [vmem:[#allocation9 + $0x30] sm:$0xff]
        %v2293 = vld [vmem:[#allocation9 + $0x38] sm:$0xff]
        %v2294 = vld [vmem:[#allocation9 + $0x40] sm:$0xff]
        %v2295 = vld [vmem:[#allocation10] sm:$0x1]
        %v2297 = vlaneseq
        %v2298 = vshrl.u32 %v2297, 7
        %v2299 = vsub.s32 0, %v2298
        %v2300 = vrot.slane %v2295, %v2299
        %vm2302 = vcmask 588800
        %v2304 = vsel %vm2302, %v2254, 0
        %v2307 = vsel %vm2302, %v2255, 0
        %v2310 = vsel %vm2302, %v2256, 0
        %v2313 = vsel %vm2302, %v2257, 0
        %v2316 = vsel %vm2302, %v2258, 0
        %v2319 = vsel %vm2302, %v2259, 0
        %v2322 = vsel %vm2302, %v2260, 0
        %v2325 = vsel %vm2302, %v2261, 0
        %v2328 = vsel %vm2302, %v2262, 0
        %v2331 = vsel %vm2302, %v2263, 0
        %v2334 = vsel %vm2302, %v2264, 0
        %v2337 = vsel %vm2302, %v2265, 0
        %v2340 = vsel %vm2302, %v2266, 0
        %v2343 = vsel %vm2302, %v2267, 0
        %v2346 = vsel %vm2302, %v2268, 0
        %v2349 = vsel %vm2302, %v2269, 0
        %v2352 = vsel %vm2302, %v2270, 0
        %v2355 = vsel %vm2302, %v2271, 0
        %v2358 = vsel %vm2302, %v2272, 0
        %v2361 = vsel %vm2302, %v2273, 0
        %v2364 = vsel %vm2302, %v2274, 0
        %v2367 = vsel %vm2302, %v2275, 0
        %v2370 = vsel %vm2302, %v2276, 0
        %v2373 = vsel %vm2302, %v2277, 0
        %v2376 = vsel %vm2302, %v2278, 0
        %v2379 = vsel %vm2302, %v2279, 0
        %v2382 = vsel %vm2302, %v2280, 0
        %v2385 = vsel %vm2302, %v2281, 0
        %v2388 = vsel %vm2302, %v2282, 0
        %v2391 = vsel %vm2302, %v2283, 0
        %v2394 = vsel %vm2302, %v2284, 0
        %v2397 = vsel %vm2302, %v2285, 0
        %2399 = vmatprep.subr.mxu0 0.0
        %2400 = vmatpush1.msra.mxu0 %v2286
        %2401 = vmatprep.subr.mxu0 0.0
        %2402 = vmatpush1.msra.mxu0 %v2287
        %2403 = vmatprep.subr.mxu0 0.0
        %2404 = vmatpush1.msra.mxu0 %v2288
        %2405 = vmatprep.subr.mxu0 0.0
        %2406 = vmatpush1.msra.mxu0 %v2289
        %2407 = vmatprep.subr.mxu0 0.0
        %2408 = vmatpush1.msra.mxu0 %v2290
        %2409 = vmatprep.subr.mxu0 0.0
        %2410 = vmatpush1.msra.mxu0 %v2291
        %2411 = vmatprep.subr.mxu0 0.0
        %2412 = vmatpush1.msra.mxu0 %v2292
        %2413 = vmatprep.subr.mxu0 0.0
        %2414 = vmatpush1.msra.mxu0 %v2293
        %2415 = vmatprep.subr.mxu0 0.0
        %2416 = vmatpush1.msra.mxu0 %v2294
        %2417 = vmatprep.subr.mxu0 0.0
        %2418 = vmatpush1.msra.mxu0 0.0
        %2419 = vmatprep.subr.mxu0 0.0
        %2420 = vmatpush1.msra.mxu0 0.0
        %2421 = vmatprep.subr.mxu0 0.0
        %2422 = vmatpush1.msra.mxu0 0.0
        %2423 = vmatprep.subr.mxu0 0.0
        %2424 = vmatpush1.msra.mxu0 0.0
        %2425 = vmatprep.subr.mxu0 0.0
        %2426 = vmatpush1.msra.mxu0 0.0
        %2427 = vmatprep.subr.mxu0 0.0
        %2428 = vmatpush1.msra.mxu0 0.0
        %2429 = vmatprep.subr.mxu0 0.0
        %2430 = vmatpush1.msra.mxu0 0.0
        %2431 = vmatprep.subr.mxu0 0.0
        %2432 = vmatpush1.msra.mxu0 0.0
        %2433 = vmatprep.subr.mxu0 0.0
        %2434 = vmatpush1.msra.mxu0 0.0
        %2435 = vmatprep.subr.mxu0 0.0
        %2436 = vmatpush1.msra.mxu0 0.0
        %2437 = vmatprep.subr.mxu0 0.0
        %2438 = vmatpush1.msra.mxu0 0.0
        %2439 = vmatprep.subr.mxu0 0.0
        %2440 = vmatpush1.msra.mxu0 0.0
        %2441 = vmatprep.subr.mxu0 0.0
        %2442 = vmatpush1.msra.mxu0 0.0
        %2443 = vmatprep.subr.mxu0 0.0
        %2444 = vmatpush1.msra.mxu0 0.0
        %2445 = vmatprep.subr.mxu0 0.0
        %2446 = vmatpush1.msra.mxu0 0.0
        %2447 = vmatprep.subr.mxu0 0.0
        %2448 = vmatpush1.msra.mxu0 0.0
        %2449 = vmatprep.subr.mxu0 0.0
        %2450 = vmatpush1.msra.mxu0 0.0
        %2451 = vmatprep.subr.mxu0 0.0
        %2452 = vmatpush1.msra.mxu0 0.0
        %2453 = vmatprep.subr.mxu0 0.0
        %2454 = vmatpush1.msra.mxu0 0.0
        %2455 = vmatprep.subr.mxu0 0.0
        %2456 = vmatpush1.msra.mxu0 0.0
        %2457 = vmatprep.subr.mxu0 0.0
        %2458 = vmatpush1.msra.mxu0 0.0
        %2459 = vmatprep.subr.mxu0 0.0
        %2460 = vmatpush1.msra.mxu0 0.0
        %2461 = vmatprep.subr.mxu0 0.0
        %2462 = vmatpush1.msra.mxu0 0.0
        %2463 = vmatprep.mubr.f32.mxu0 0.0
        %2464 = vmatmul.mubr.f32.gmra.mrb[0].mxu0 %v2304
        %v2465 = vpop.f32.mrb[0].mxu0
        %v2466 = vadd.f32 %v2300, %v2465
        %v2467 = vpop.f32.mrb[0].mxu0
        %2468 = vmatprep.mubr.f32.mxu0 0.0
        %2469 = vmatmul.mubr.f32.gmra.mrb[0].mxu0 %v2307
        %v2470 = vpop.f32.mrb[0].mxu0
        %v2471 = vadd.f32 %v2300, %v2470
        %v2472 = vpop.f32.mrb[0].mxu0
        %2473 = vmatprep.mubr.f32.mxu0 0.0
        %2474 = vmatmul.mubr.f32.gmra.mrb[0].mxu0 %v2310
        %v2475 = vpop.f32.mrb[0].mxu0
        %v2476 = vadd.f32 %v2300, %v2475
        %v2477 = vpop.f32.mrb[0].mxu0
        %2478 = vmatprep.mubr.f32.mxu0 0.0
        %2479 = vmatmul.mubr.f32.gmra.mrb[0].mxu0 %v2313
        %v2480 = vpop.f32.mrb[0].mxu0
        %v2481 = vadd.f32 %v2300, %v2480
        %v2482 = vpop.f32.mrb[0].mxu0
        %2483 = vmatprep.mubr.f32.mxu0 0.0
        %2484 = vmatmul.mubr.f32.gmra.mrb[0].mxu0 %v2316
        %v2485 = vpop.f32.mrb[0].mxu0
        %v2486 = vadd.f32 %v2300, %v2485
        %v2487 = vpop.f32.mrb[0].mxu0
        %2488 = vmatprep.mubr.f32.mxu0 0.0
        %2489 = vmatmul.mubr.f32.gmra.mrb[0].mxu0 %v2319
        %v2490 = vpop.f32.mrb[0].mxu0
        %v2491 = vadd.f32 %v2300, %v2490
        %v2492 = vpop.f32.mrb[0].mxu0
        %2493 = vmatprep.mubr.f32.mxu0 0.0
        %2494 = vmatmul.mubr.f32.gmra.mrb[0].mxu0 %v2322
        %v2495 = vpop.f32.mrb[0].mxu0
        %v2496 = vadd.f32 %v2300, %v2495
        %v2497 = vpop.f32.mrb[0].mxu0
        %2498 = vmatprep.mubr.f32.mxu0 0.0
        %2499 = vmatmul.mubr.f32.gmra.mrb[0].mxu0 %v2325
        %v2500 = vpop.f32.mrb[0].mxu0
        %v2501 = vadd.f32 %v2300, %v2500
        %v2502 = vpop.f32.mrb[0].mxu0
        %2503 = vmatprep.mubr.f32.mxu0 0.0
        %2504 = vmatmul.mubr.f32.gmra.mrb[0].mxu0 %v2328
        %v2505 = vpop.f32.mrb[0].mxu0
        %v2506 = vadd.f32 %v2300, %v2505
        %v2507 = vpop.f32.mrb[0].mxu0
        %2508 = vmatprep.mubr.f32.mxu0 0.0
        %2509 = vmatmul.mubr.f32.gmra.mrb[0].mxu0 %v2331
        %v2510 = vpop.f32.mrb[0].mxu0
        %v2511 = vadd.f32 %v2300, %v2510
        %v2512 = vpop.f32.mrb[0].mxu0
        %2513 = vmatprep.mubr.f32.mxu0 0.0
        %2514 = vmatmul.mubr.f32.gmra.mrb[0].mxu0 %v2334
        %v2515 = vpop.f32.mrb[0].mxu0
        %v2516 = vadd.f32 %v2300, %v2515
        %v2517 = vpop.f32.mrb[0].mxu0
        %2518 = vmatprep.mubr.f32.mxu0 0.0
        %2519 = vmatmul.mubr.f32.gmra.mrb[0].mxu0 %v2337
        %v2520 = vpop.f32.mrb[0].mxu0
        %v2521 = vadd.f32 %v2300, %v2520
        %v2522 = vpop.f32.mrb[0].mxu0
        %2523 = vmatprep.mubr.f32.mxu0 0.0
        %2524 = vmatmul.mubr.f32.gmra.mrb[0].mxu0 %v2340
        %v2525 = vpop.f32.mrb[0].mxu0
        %v2526 = vadd.f32 %v2300, %v2525
        %v2527 = vpop.f32.mrb[0].mxu0
        %2528 = vmatprep.mubr.f32.mxu0 0.0
        %2529 = vmatmul.mubr.f32.gmra.mrb[0].mxu0 %v2343
        %v2530 = vpop.f32.mrb[0].mxu0
        %v2531 = vadd.f32 %v2300, %v2530
        %v2532 = vpop.f32.mrb[0].mxu0
        %2533 = vmatprep.mubr.f32.mxu0 0.0
        %2534 = vmatmul.mubr.f32.gmra.mrb[0].mxu0 %v2346
        %v2535 = vpop.f32.mrb[0].mxu0
        %v2536 = vadd.f32 %v2300, %v2535
        %v2537 = vpop.f32.mrb[0].mxu0
        %2538 = vmatprep.mubr.f32.mxu0 0.0
        %2539 = vmatmul.mubr.f32.gmra.mrb[0].mxu0 %v2349
        %v2540 = vpop.f32.mrb[0].mxu0
        %v2541 = vadd.f32 %v2300, %v2540
        %v2542 = vpop.f32.mrb[0].mxu0
        %2543 = vmatprep.mubr.f32.mxu0 0.0
        %2544 = vmatmul.mubr.f32.gmra.mrb[0].mxu0 %v2352
        %v2545 = vpop.f32.mrb[0].mxu0
        %v2546 = vadd.f32 %v2300, %v2545
        %v2547 = vpop.f32.mrb[0].mxu0
        %2548 = vmatprep.mubr.f32.mxu0 0.0
        %2549 = vmatmul.mubr.f32.gmra.mrb[0].mxu0 %v2355
        %v2550 = vpop.f32.mrb[0].mxu0
        %v2551 = vadd.f32 %v2300, %v2550
        %v2552 = vpop.f32.mrb[0].mxu0
        %2553 = vmatprep.mubr.f32.mxu0 0.0
        %2554 = vmatmul.mubr.f32.gmra.mrb[0].mxu0 %v2358
        %v2555 = vpop.f32.mrb[0].mxu0
        %v2556 = vadd.f32 %v2300, %v2555
        %v2557 = vpop.f32.mrb[0].mxu0
        %2558 = vmatprep.mubr.f32.mxu0 0.0
        %2559 = vmatmul.mubr.f32.gmra.mrb[0].mxu0 %v2361
        %v2560 = vpop.f32.mrb[0].mxu0
        %v2561 = vadd.f32 %v2300, %v2560
        %v2562 = vpop.f32.mrb[0].mxu0
        %2563 = vmatprep.mubr.f32.mxu0 0.0
        %2564 = vmatmul.mubr.f32.gmra.mrb[0].mxu0 %v2364
        %v2565 = vpop.f32.mrb[0].mxu0
        %v2566 = vadd.f32 %v2300, %v2565
        %v2567 = vpop.f32.mrb[0].mxu0
        %2568 = vmatprep.mubr.f32.mxu0 0.0
        %2569 = vmatmul.mubr.f32.gmra.mrb[0].mxu0 %v2367
        %v2570 = vpop.f32.mrb[0].mxu0
        %v2571 = vadd.f32 %v2300, %v2570
        %v2572 = vpop.f32.mrb[0].mxu0
        %2573 = vmatprep.mubr.f32.mxu0 0.0
        %2574 = vmatmul.mubr.f32.gmra.mrb[0].mxu0 %v2370
        %v2575 = vpop.f32.mrb[0].mxu0
        %v2576 = vadd.f32 %v2300, %v2575
        %v2577 = vpop.f32.mrb[0].mxu0
        %2578 = vmatprep.mubr.f32.mxu0 0.0
        %2579 = vmatmul.mubr.f32.gmra.mrb[0].mxu0 %v2373
        %v2580 = vpop.f32.mrb[0].mxu0
        %v2581 = vadd.f32 %v2300, %v2580
        %v2582 = vpop.f32.mrb[0].mxu0
        %2583 = vmatprep.mubr.f32.mxu0 0.0
        %2584 = vmatmul.mubr.f32.gmra.mrb[0].mxu0 %v2376
        %v2585 = vpop.f32.mrb[0].mxu0
        %v2586 = vadd.f32 %v2300, %v2585
        %v2587 = vpop.f32.mrb[0].mxu0
        %2588 = vmatprep.mubr.f32.mxu0 0.0
        %2589 = vmatmul.mubr.f32.gmra.mrb[0].mxu0 %v2379
        %v2590 = vpop.f32.mrb[0].mxu0
        %v2591 = vadd.f32 %v2300, %v2590
        %v2592 = vpop.f32.mrb[0].mxu0
        %2593 = vmatprep.mubr.f32.mxu0 0.0
        %2594 = vmatmul.mubr.f32.gmra.mrb[0].mxu0 %v2382
        %v2595 = vpop.f32.mrb[0].mxu0
        %v2596 = vadd.f32 %v2300, %v2595
        %v2597 = vpop.f32.mrb[0].mxu0
        %2598 = vmatprep.mubr.f32.mxu0 0.0
        %2599 = vmatmul.mubr.f32.gmra.mrb[0].mxu0 %v2385
        %v2600 = vpop.f32.mrb[0].mxu0
        %v2601 = vadd.f32 %v2300, %v2600
        %v2602 = vpop.f32.mrb[0].mxu0
        %2603 = vmatprep.mubr.f32.mxu0 0.0
        %2604 = vmatmul.mubr.f32.gmra.mrb[0].mxu0 %v2388
        %v2605 = vpop.f32.mrb[0].mxu0
        %v2606 = vadd.f32 %v2300, %v2605
        %v2607 = vpop.f32.mrb[0].mxu0
        %2608 = vmatprep.mubr.f32.mxu0 0.0
        %2609 = vmatmul.mubr.f32.gmra.mrb[0].mxu0 %v2391
        %v2610 = vpop.f32.mrb[0].mxu0
        %v2611 = vadd.f32 %v2300, %v2610
        %v2612 = vpop.f32.mrb[0].mxu0
        %2613 = vmatprep.mubr.f32.mxu0 0.0
        %2614 = vmatmul.mubr.f32.gmra.mrb[0].mxu0 %v2394
        %v2615 = vpop.f32.mrb[0].mxu0
        %v2616 = vadd.f32 %v2300, %v2615
        %v2617 = vpop.f32.mrb[0].mxu0
        %2618 = vmatprep.mubr.f32.mxu0 0.0
        %2619 = vmatmul.mubr.f32.gmra.mrb[0].mxu0 %v2397
        %v2620 = vpop.f32.mrb[0].mxu0
        %v2621 = vadd.f32 %v2300, %v2620
        %v2622 = vpop.f32.mrb[0].mxu0
        %2623 = vdwg.mxu0
        %v2624 = vmax.f32 %v2466, 0.0
        %v2625 = vmax.f32 %v2471, 0.0
        %v2626 = vmax.f32 %v2476, 0.0
        %v2627 = vmax.f32 %v2481, 0.0
        %v2628 = vmax.f32 %v2486, 0.0
        %v2629 = vmax.f32 %v2491, 0.0
        %v2630 = vmax.f32 %v2496, 0.0
        %v2631 = vmax.f32 %v2501, 0.0
        %v2632 = vmax.f32 %v2506, 0.0
        %v2633 = vmax.f32 %v2511, 0.0
        %v2634 = vmax.f32 %v2516, 0.0
        %v2635 = vmax.f32 %v2521, 0.0
        %v2636 = vmax.f32 %v2526, 0.0
        %v2637 = vmax.f32 %v2531, 0.0
        %v2638 = vmax.f32 %v2536, 0.0
        %v2639 = vmax.f32 %v2541, 0.0
        %v2640 = vmax.f32 %v2546, 0.0
        %v2641 = vmax.f32 %v2551, 0.0
        %v2642 = vmax.f32 %v2556, 0.0
        %v2643 = vmax.f32 %v2561, 0.0
        %v2644 = vmax.f32 %v2566, 0.0
        %v2645 = vmax.f32 %v2571, 0.0
        %v2646 = vmax.f32 %v2576, 0.0
        %v2647 = vmax.f32 %v2581, 0.0
        %v2648 = vmax.f32 %v2586, 0.0
        %v2649 = vmax.f32 %v2591, 0.0
        %v2650 = vmax.f32 %v2596, 0.0
        %v2651 = vmax.f32 %v2601, 0.0
        %v2652 = vmax.f32 %v2606, 0.0
        %v2653 = vmax.f32 %v2611, 0.0
        %v2654 = vmax.f32 %v2616, 0.0
        %v2655 = vmax.f32 %v2621, 0.0
        %v2656 = vld [vmem:[#allocation12] sm:$0xff]
        %v2658 = vsel %vm611, %v2624, 0
        %v2661 = vsel %vm611, %v2625, 0
        %v2664 = vsel %vm611, %v2626, 0
        %v2667 = vsel %vm611, %v2627, 0
        %v2670 = vsel %vm611, %v2628, 0
        %v2673 = vsel %vm611, %v2629, 0
        %v2676 = vsel %vm611, %v2630, 0
        %v2679 = vsel %vm611, %v2631, 0
        %v2682 = vsel %vm611, %v2632, 0
        %v2685 = vsel %vm611, %v2633, 0
        %v2688 = vsel %vm611, %v2634, 0
        %v2691 = vsel %vm611, %v2635, 0
        %v2694 = vsel %vm611, %v2636, 0
        %v2697 = vsel %vm611, %v2637, 0
        %v2700 = vsel %vm611, %v2638, 0
        %v2703 = vsel %vm611, %v2639, 0
        %v2706 = vsel %vm611, %v2640, 0
        %v2709 = vsel %vm611, %v2641, 0
        %v2712 = vsel %vm611, %v2642, 0
        %v2715 = vsel %vm611, %v2643, 0
        %v2718 = vsel %vm611, %v2644, 0
        %v2721 = vsel %vm611, %v2645, 0
        %v2724 = vsel %vm611, %v2646, 0
        %v2727 = vsel %vm611, %v2647, 0
        %v2730 = vsel %vm611, %v2648, 0
        %v2733 = vsel %vm611, %v2649, 0
        %v2736 = vsel %vm611, %v2650, 0
        %v2739 = vsel %vm611, %v2651, 0
        %v2742 = vsel %vm611, %v2652, 0
        %v2745 = vsel %vm611, %v2653, 0
        %v2748 = vsel %vm611, %v2654, 0
        %v2751 = vsel %vm611, %v2655, 0
        %2753 = vmatprep.subr.mxu0 0.0
        %2754 = vmatpush1.msra.mxu0 %v2656
        %2755 = vmatprep.subr.mxu0 0.0
        %2756 = vmatpush1.msra.mxu0 0.0
        %2757 = vmatprep.subr.mxu0 0.0
        %2758 = vmatpush1.msra.mxu0 0.0
        %2759 = vmatprep.subr.mxu0 0.0
        %2760 = vmatpush1.msra.mxu0 0.0
        %2761 = vmatprep.subr.mxu0 0.0
        %2762 = vmatpush1.msra.mxu0 0.0
        %2763 = vmatprep.subr.mxu0 0.0
        %2764 = vmatpush1.msra.mxu0 0.0
        %2765 = vmatprep.subr.mxu0 0.0
        %2766 = vmatpush1.msra.mxu0 0.0
        %2767 = vmatprep.subr.mxu0 0.0
        %2768 = vmatpush1.msra.mxu0 0.0
        %2769 = vmatprep.subr.mxu0 0.0
        %2770 = vmatpush1.msra.mxu0 0.0
        %2771 = vmatprep.subr.mxu0 0.0
        %2772 = vmatpush1.msra.mxu0 0.0
        %2773 = vmatprep.subr.mxu0 0.0
        %2774 = vmatpush1.msra.mxu0 0.0
        %2775 = vmatprep.subr.mxu0 0.0
        %2776 = vmatpush1.msra.mxu0 0.0
        %2777 = vmatprep.subr.mxu0 0.0
        %2778 = vmatpush1.msra.mxu0 0.0
        %2779 = vmatprep.subr.mxu0 0.0
        %2780 = vmatpush1.msra.mxu0 0.0
        %2781 = vmatprep.subr.mxu0 0.0
        %2782 = vmatpush1.msra.mxu0 0.0
        %2783 = vmatprep.subr.mxu0 0.0
        %2784 = vmatpush1.msra.mxu0 0.0
        %2785 = vmatprep.subr.mxu0 0.0
        %2786 = vmatpush1.msra.mxu0 0.0
        %2787 = vmatprep.subr.mxu0 0.0
        %2788 = vmatpush1.msra.mxu0 0.0
        %2789 = vmatprep.subr.mxu0 0.0
        %2790 = vmatpush1.msra.mxu0 0.0
        %2791 = vmatprep.subr.mxu0 0.0
        %2792 = vmatpush1.msra.mxu0 0.0
        %2793 = vmatprep.subr.mxu0 0.0
        %2794 = vmatpush1.msra.mxu0 0.0
        %2795 = vmatprep.subr.mxu0 0.0
        %2796 = vmatpush1.msra.mxu0 0.0
        %2797 = vmatprep.subr.mxu0 0.0
        %2798 = vmatpush1.msra.mxu0 0.0
        %2799 = vmatprep.subr.mxu0 0.0
        %2800 = vmatpush1.msra.mxu0 0.0
        %2801 = vmatprep.subr.mxu0 0.0
        %2802 = vmatpush1.msra.mxu0 0.0
        %2803 = vmatprep.subr.mxu0 0.0
        %2804 = vmatpush1.msra.mxu0 0.0
        %2805 = vmatprep.subr.mxu0 0.0
        %2806 = vmatpush1.msra.mxu0 0.0
        %2807 = vmatprep.subr.mxu0 0.0
        %2808 = vmatpush1.msra.mxu0 0.0
        %2809 = vmatprep.subr.mxu0 0.0
        %2810 = vmatpush1.msra.mxu0 0.0
        %2811 = vmatprep.subr.mxu0 0.0
        %2812 = vmatpush1.msra.mxu0 0.0
        %2813 = vmatprep.subr.mxu0 0.0
        %2814 = vmatpush1.msra.mxu0 0.0
        %2815 = vmatprep.subr.mxu0 0.0
        %2816 = vmatpush1.msra.mxu0 0.0
        %2817 = vmatprep.mubr.f32.mxu0 0.0
        %2818 = vmatmul.mubr.f32.gmra.mrb[0].mxu0 %v2658
        %v2819 = vpop.f32.mrb[0].mxu0
        %v2820 = vadd.f32 0.0, %v2819
        %v2821 = vpop.f32.mrb[0].mxu0
        %2822 = vmatprep.mubr.f32.mxu0 0.0
        %2823 = vmatmul.mubr.f32.gmra.mrb[0].mxu0 %v2661
        %v2824 = vpop.f32.mrb[0].mxu0
        %v2825 = vadd.f32 0.0, %v2824
        %v2826 = vpop.f32.mrb[0].mxu0
        %2827 = vmatprep.mubr.f32.mxu0 0.0
        %2828 = vmatmul.mubr.f32.gmra.mrb[0].mxu0 %v2664
        %v2829 = vpop.f32.mrb[0].mxu0
        %v2830 = vadd.f32 0.0, %v2829
        %v2831 = vpop.f32.mrb[0].mxu0
        %2832 = vmatprep.mubr.f32.mxu0 0.0
        %2833 = vmatmul.mubr.f32.gmra.mrb[0].mxu0 %v2667
        %v2834 = vpop.f32.mrb[0].mxu0
        %v2835 = vadd.f32 0.0, %v2834
        %v2836 = vpop.f32.mrb[0].mxu0
        %2837 = vmatprep.mubr.f32.mxu0 0.0
        %2838 = vmatmul.mubr.f32.gmra.mrb[0].mxu0 %v2670
        %v2839 = vpop.f32.mrb[0].mxu0
        %v2840 = vadd.f32 0.0, %v2839
        %v2841 = vpop.f32.mrb[0].mxu0
        %2842 = vmatprep.mubr.f32.mxu0 0.0
        %2843 = vmatmul.mubr.f32.gmra.mrb[0].mxu0 %v2673
        %v2844 = vpop.f32.mrb[0].mxu0
        %v2845 = vadd.f32 0.0, %v2844
        %v2846 = vpop.f32.mrb[0].mxu0
        %2847 = vmatprep.mubr.f32.mxu0 0.0
        %2848 = vmatmul.mubr.f32.gmra.mrb[0].mxu0 %v2676
        %v2849 = vpop.f32.mrb[0].mxu0
        %v2850 = vadd.f32 0.0, %v2849
        %v2851 = vpop.f32.mrb[0].mxu0
        %2852 = vmatprep.mubr.f32.mxu0 0.0
        %2853 = vmatmul.mubr.f32.gmra.mrb[0].mxu0 %v2679
        %v2854 = vpop.f32.mrb[0].mxu0
        %v2855 = vadd.f32 0.0, %v2854
        %v2856 = vpop.f32.mrb[0].mxu0
        %2857 = vmatprep.mubr.f32.mxu0 0.0
        %2858 = vmatmul.mubr.f32.gmra.mrb[0].mxu0 %v2682
        %v2859 = vpop.f32.mrb[0].mxu0
        %v2860 = vadd.f32 0.0, %v2859
        %v2861 = vpop.f32.mrb[0].mxu0
        %2862 = vmatprep.mubr.f32.mxu0 0.0
        %2863 = vmatmul.mubr.f32.gmra.mrb[0].mxu0 %v2685
        %v2864 = vpop.f32.mrb[0].mxu0
        %v2865 = vadd.f32 0.0, %v2864
        %v2866 = vpop.f32.mrb[0].mxu0
        %2867 = vmatprep.mubr.f32.mxu0 0.0
        %2868 = vmatmul.mubr.f32.gmra.mrb[0].mxu0 %v2688
        %v2869 = vpop.f32.mrb[0].mxu0
        %v2870 = vadd.f32 0.0, %v2869
        %v2871 = vpop.f32.mrb[0].mxu0
        %2872 = vmatprep.mubr.f32.mxu0 0.0
        %2873 = vmatmul.mubr.f32.gmra.mrb[0].mxu0 %v2691
        %v2874 = vpop.f32.mrb[0].mxu0
        %v2875 = vadd.f32 0.0, %v2874
        %v2876 = vpop.f32.mrb[0].mxu0
        %2877 = vmatprep.mubr.f32.mxu0 0.0
        %2878 = vmatmul.mubr.f32.gmra.mrb[0].mxu0 %v2694
        %v2879 = vpop.f32.mrb[0].mxu0
        %v2880 = vadd.f32 0.0, %v2879
        %v2881 = vpop.f32.mrb[0].mxu0
        %2882 = vmatprep.mubr.f32.mxu0 0.0
        %2883 = vmatmul.mubr.f32.gmra.mrb[0].mxu0 %v2697
        %v2884 = vpop.f32.mrb[0].mxu0
        %v2885 = vadd.f32 0.0, %v2884
        %v2886 = vpop.f32.mrb[0].mxu0
        %2887 = vmatprep.mubr.f32.mxu0 0.0
        %2888 = vmatmul.mubr.f32.gmra.mrb[0].mxu0 %v2700
        %v2889 = vpop.f32.mrb[0].mxu0
        %v2890 = vadd.f32 0.0, %v2889
        %v2891 = vpop.f32.mrb[0].mxu0
        %2892 = vmatprep.mubr.f32.mxu0 0.0
        %2893 = vmatmul.mubr.f32.gmra.mrb[0].mxu0 %v2703
        %v2894 = vpop.f32.mrb[0].mxu0
        %v2895 = vadd.f32 0.0, %v2894
        %v2896 = vpop.f32.mrb[0].mxu0
        %2897 = vmatprep.mubr.f32.mxu0 0.0
        %2898 = vmatmul.mubr.f32.gmra.mrb[0].mxu0 %v2706
        %v2899 = vpop.f32.mrb[0].mxu0
        %v2900 = vadd.f32 0.0, %v2899
        %v2901 = vpop.f32.mrb[0].mxu0
        %2902 = vmatprep.mubr.f32.mxu0 0.0
        %2903 = vmatmul.mubr.f32.gmra.mrb[0].mxu0 %v2709
        %v2904 = vpop.f32.mrb[0].mxu0
        %v2905 = vadd.f32 0.0, %v2904
        %v2906 = vpop.f32.mrb[0].mxu0
        %2907 = vmatprep.mubr.f32.mxu0 0.0
        %2908 = vmatmul.mubr.f32.gmra.mrb[0].mxu0 %v2712
        %v2909 = vpop.f32.mrb[0].mxu0
        %v2910 = vadd.f32 0.0, %v2909
        %v2911 = vpop.f32.mrb[0].mxu0
        %2912 = vmatprep.mubr.f32.mxu0 0.0
        %2913 = vmatmul.mubr.f32.gmra.mrb[0].mxu0 %v2715
        %v2914 = vpop.f32.mrb[0].mxu0
        %v2915 = vadd.f32 0.0, %v2914
        %v2916 = vpop.f32.mrb[0].mxu0
        %2917 = vmatprep.mubr.f32.mxu0 0.0
        %2918 = vmatmul.mubr.f32.gmra.mrb[0].mxu0 %v2718
        %v2919 = vpop.f32.mrb[0].mxu0
        %v2920 = vadd.f32 0.0, %v2919
        %v2921 = vpop.f32.mrb[0].mxu0
        %2922 = vmatprep.mubr.f32.mxu0 0.0
        %2923 = vmatmul.mubr.f32.gmra.mrb[0].mxu0 %v2721
        %v2924 = vpop.f32.mrb[0].mxu0
        %v2925 = vadd.f32 0.0, %v2924
        %v2926 = vpop.f32.mrb[0].mxu0
        %2927 = vmatprep.mubr.f32.mxu0 0.0
        %2928 = vmatmul.mubr.f32.gmra.mrb[0].mxu0 %v2724
        %v2929 = vpop.f32.mrb[0].mxu0
        %v2930 = vadd.f32 0.0, %v2929
        %v2931 = vpop.f32.mrb[0].mxu0
        %2932 = vmatprep.mubr.f32.mxu0 0.0
        %2933 = vmatmul.mubr.f32.gmra.mrb[0].mxu0 %v2727
        %v2934 = vpop.f32.mrb[0].mxu0
        %v2935 = vadd.f32 0.0, %v2934
        %v2936 = vpop.f32.mrb[0].mxu0
        %2937 = vmatprep.mubr.f32.mxu0 0.0
        %2938 = vmatmul.mubr.f32.gmra.mrb[0].mxu0 %v2730
        %v2939 = vpop.f32.mrb[0].mxu0
        %v2940 = vadd.f32 0.0, %v2939
        %v2941 = vpop.f32.mrb[0].mxu0
        %2942 = vmatprep.mubr.f32.mxu0 0.0
        %2943 = vmatmul.mubr.f32.gmra.mrb[0].mxu0 %v2733
        %v2944 = vpop.f32.mrb[0].mxu0
        %v2945 = vadd.f32 0.0, %v2944
        %v2946 = vpop.f32.mrb[0].mxu0
        %2947 = vmatprep.mubr.f32.mxu0 0.0
        %2948 = vmatmul.mubr.f32.gmra.mrb[0].mxu0 %v2736
        %v2949 = vpop.f32.mrb[0].mxu0
        %v2950 = vadd.f32 0.0, %v2949
        %v2951 = vpop.f32.mrb[0].mxu0
        %2952 = vmatprep.mubr.f32.mxu0 0.0
        %2953 = vmatmul.mubr.f32.gmra.mrb[0].mxu0 %v2739
        %v2954 = vpop.f32.mrb[0].mxu0
        %v2955 = vadd.f32 0.0, %v2954
        %v2956 = vpop.f32.mrb[0].mxu0
        %2957 = vmatprep.mubr.f32.mxu0 0.0
        %2958 = vmatmul.mubr.f32.gmra.mrb[0].mxu0 %v2742
        %v2959 = vpop.f32.mrb[0].mxu0
        %v2960 = vadd.f32 0.0, %v2959
        %v2961 = vpop.f32.mrb[0].mxu0
        %2962 = vmatprep.mubr.f32.mxu0 0.0
        %2963 = vmatmul.mubr.f32.gmra.mrb[0].mxu0 %v2745
        %v2964 = vpop.f32.mrb[0].mxu0
        %v2965 = vadd.f32 0.0, %v2964
        %v2966 = vpop.f32.mrb[0].mxu0
        %2967 = vmatprep.mubr.f32.mxu0 0.0
        %2968 = vmatmul.mubr.f32.gmra.mrb[0].mxu0 %v2748
        %v2969 = vpop.f32.mrb[0].mxu0
        %v2970 = vadd.f32 0.0, %v2969
        %v2971 = vpop.f32.mrb[0].mxu0
        %2972 = vmatprep.mubr.f32.mxu0 0.0
        %2973 = vmatmul.mubr.f32.gmra.mrb[0].mxu0 %v2751
        %v2974 = vpop.f32.mrb[0].mxu0
        %v2975 = vadd.f32 0.0, %v2974
        %v2976 = vpop.f32.mrb[0].mxu0
        %2977 = vdwg.mxu0
        %v2979 = vsel %vm611, %v579, 0
        %v2982 = vsel %vm611, %v580, 0
        %v2985 = vsel %vm611, %v581, 0
        %v2988 = vsel %vm611, %v582, 0
        %v2991 = vsel %vm611, %v583, 0
        %v2994 = vsel %vm611, %v584, 0
        %v2997 = vsel %vm611, %v585, 0
        %v3000 = vsel %vm611, %v586, 0
        %v3003 = vsel %vm611, %v587, 0
        %v3006 = vsel %vm611, %v588, 0
        %v3009 = vsel %vm611, %v589, 0
        %v3012 = vsel %vm611, %v590, 0
        %v3015 = vsel %vm611, %v591, 0
        %v3018 = vsel %vm611, %v592, 0
        %v3021 = vsel %vm611, %v593, 0
        %v3024 = vsel %vm611, %v594, 0
        %v3027 = vsel %vm611, %v595, 0
        %v3030 = vsel %vm611, %v596, 0
        %v3033 = vsel %vm611, %v597, 0
        %v3036 = vsel %vm611, %v598, 0
        %v3039 = vsel %vm611, %v599, 0
        %v3042 = vsel %vm611, %v600, 0
        %v3045 = vsel %vm611, %v601, 0
        %v3048 = vsel %vm611, %v602, 0
        %v3051 = vsel %vm611, %v603, 0
        %v3054 = vsel %vm611, %v604, 0
        %v3057 = vsel %vm611, %v605, 0
        %v3060 = vsel %vm611, %v606, 0
        %v3063 = vsel %vm611, %v607, 0
        %v3066 = vsel %vm611, %v608, 0
        %v3069 = vsel %vm611, %v609, 0
        %v3072 = vsel %vm611, %v610, 0
        %3074 = vmatprep.subr.mxu0 0.0
        %3075 = vmatpush1.msra.mxu0 %v644
        %3076 = vmatprep.subr.mxu0 0.0
        %3077 = vmatpush1.msra.mxu0 0.0
        %3078 = vmatprep.subr.mxu0 0.0
        %3079 = vmatpush1.msra.mxu0 0.0
        %3080 = vmatprep.subr.mxu0 0.0
        %3081 = vmatpush1.msra.mxu0 0.0
        %3082 = vmatprep.subr.mxu0 0.0
        %3083 = vmatpush1.msra.mxu0 0.0
        %3084 = vmatprep.subr.mxu0 0.0
        %3085 = vmatpush1.msra.mxu0 0.0
        %3086 = vmatprep.subr.mxu0 0.0
        %3087 = vmatpush1.msra.mxu0 0.0
        %3088 = vmatprep.subr.mxu0 0.0
        %3089 = vmatpush1.msra.mxu0 0.0
        %3090 = vmatprep.subr.mxu0 0.0
        %3091 = vmatpush1.msra.mxu0 0.0
        %3092 = vmatprep.subr.mxu0 0.0
        %3093 = vmatpush1.msra.mxu0 0.0
        %3094 = vmatprep.subr.mxu0 0.0
        %3095 = vmatpush1.msra.mxu0 0.0
        %3096 = vmatprep.subr.mxu0 0.0
        %3097 = vmatpush1.msra.mxu0 0.0
        %3098 = vmatprep.subr.mxu0 0.0
        %3099 = vmatpush1.msra.mxu0 0.0
        %3100 = vmatprep.subr.mxu0 0.0
        %3101 = vmatpush1.msra.mxu0 0.0
        %3102 = vmatprep.subr.mxu0 0.0
        %3103 = vmatpush1.msra.mxu0 0.0
        %3104 = vmatprep.subr.mxu0 0.0
        %3105 = vmatpush1.msra.mxu0 0.0
        %3106 = vmatprep.subr.mxu0 0.0
        %3107 = vmatpush1.msra.mxu0 0.0
        %3108 = vmatprep.subr.mxu0 0.0
        %3109 = vmatpush1.msra.mxu0 0.0
        %3110 = vmatprep.subr.mxu0 0.0
        %3111 = vmatpush1.msra.mxu0 0.0
        %3112 = vmatprep.subr.mxu0 0.0
        %3113 = vmatpush1.msra.mxu0 0.0
        %3114 = vmatprep.subr.mxu0 0.0
        %3115 = vmatpush1.msra.mxu0 0.0
        %3116 = vmatprep.subr.mxu0 0.0
        %3117 = vmatpush1.msra.mxu0 0.0
        %3118 = vmatprep.subr.mxu0 0.0
        %3119 = vmatpush1.msra.mxu0 0.0
        %3120 = vmatprep.subr.mxu0 0.0
        %3121 = vmatpush1.msra.mxu0 0.0
        %3122 = vmatprep.subr.mxu0 0.0
        %3123 = vmatpush1.msra.mxu0 0.0
        %3124 = vmatprep.subr.mxu0 0.0
        %3125 = vmatpush1.msra.mxu0 0.0
        %3126 = vmatprep.subr.mxu0 0.0
        %3127 = vmatpush1.msra.mxu0 0.0
        %3128 = vmatprep.subr.mxu0 0.0
        %3129 = vmatpush1.msra.mxu0 0.0
        %3130 = vmatprep.subr.mxu0 0.0
        %3131 = vmatpush1.msra.mxu0 0.0
        %3132 = vmatprep.subr.mxu0 0.0
        %3133 = vmatpush1.msra.mxu0 0.0
        %3134 = vmatprep.subr.mxu0 0.0
        %3135 = vmatpush1.msra.mxu0 0.0
        %3136 = vmatprep.subr.mxu0 0.0
        %3137 = vmatpush1.msra.mxu0 0.0
        %3138 = vmatprep.mubr.f32.mxu0 0.0
        %3139 = vmatmul.mubr.f32.gmra.mrb[0].mxu0 %v2979
        %v3140 = vpop.f32.mrb[0].mxu0
        %v3141 = vadd.f32 %v2820, %v3140
        %v3142 = vpop.f32.mrb[0].mxu0
        %3143 = vmatprep.mubr.f32.mxu0 0.0
        %3144 = vmatmul.mubr.f32.gmra.mrb[0].mxu0 %v2982
        %v3145 = vpop.f32.mrb[0].mxu0
        %v3146 = vadd.f32 %v2825, %v3145
        %v3147 = vpop.f32.mrb[0].mxu0
        %3148 = vmatprep.mubr.f32.mxu0 0.0
        %3149 = vmatmul.mubr.f32.gmra.mrb[0].mxu0 %v2985
        %v3150 = vpop.f32.mrb[0].mxu0
        %v3151 = vadd.f32 %v2830, %v3150
        %v3152 = vpop.f32.mrb[0].mxu0
        %3153 = vmatprep.mubr.f32.mxu0 0.0
        %3154 = vmatmul.mubr.f32.gmra.mrb[0].mxu0 %v2988
        %v3155 = vpop.f32.mrb[0].mxu0
        %v3156 = vadd.f32 %v2835, %v3155
        %v3157 = vpop.f32.mrb[0].mxu0
        %3158 = vmatprep.mubr.f32.mxu0 0.0
        %3159 = vmatmul.mubr.f32.gmra.mrb[0].mxu0 %v2991
        %v3160 = vpop.f32.mrb[0].mxu0
        %v3161 = vadd.f32 %v2840, %v3160
        %v3162 = vpop.f32.mrb[0].mxu0
        %3163 = vmatprep.mubr.f32.mxu0 0.0
        %3164 = vmatmul.mubr.f32.gmra.mrb[0].mxu0 %v2994
        %v3165 = vpop.f32.mrb[0].mxu0
        %v3166 = vadd.f32 %v2845, %v3165
        %v3167 = vpop.f32.mrb[0].mxu0
        %3168 = vmatprep.mubr.f32.mxu0 0.0
        %3169 = vmatmul.mubr.f32.gmra.mrb[0].mxu0 %v2997
        %v3170 = vpop.f32.mrb[0].mxu0
        %v3171 = vadd.f32 %v2850, %v3170
        %v3172 = vpop.f32.mrb[0].mxu0
        %3173 = vmatprep.mubr.f32.mxu0 0.0
        %3174 = vmatmul.mubr.f32.gmra.mrb[0].mxu0 %v3000
        %v3175 = vpop.f32.mrb[0].mxu0
        %v3176 = vadd.f32 %v2855, %v3175
        %v3177 = vpop.f32.mrb[0].mxu0
        %3178 = vmatprep.mubr.f32.mxu0 0.0
        %3179 = vmatmul.mubr.f32.gmra.mrb[0].mxu0 %v3003
        %v3180 = vpop.f32.mrb[0].mxu0
        %v3181 = vadd.f32 %v2860, %v3180
        %v3182 = vpop.f32.mrb[0].mxu0
        %3183 = vmatprep.mubr.f32.mxu0 0.0
        %3184 = vmatmul.mubr.f32.gmra.mrb[0].mxu0 %v3006
        %v3185 = vpop.f32.mrb[0].mxu0
        %v3186 = vadd.f32 %v2865, %v3185
        %v3187 = vpop.f32.mrb[0].mxu0
        %3188 = vmatprep.mubr.f32.mxu0 0.0
        %3189 = vmatmul.mubr.f32.gmra.mrb[0].mxu0 %v3009
        %v3190 = vpop.f32.mrb[0].mxu0
        %v3191 = vadd.f32 %v2870, %v3190
        %v3192 = vpop.f32.mrb[0].mxu0
        %3193 = vmatprep.mubr.f32.mxu0 0.0
        %3194 = vmatmul.mubr.f32.gmra.mrb[0].mxu0 %v3012
        %v3195 = vpop.f32.mrb[0].mxu0
        %v3196 = vadd.f32 %v2875, %v3195
        %v3197 = vpop.f32.mrb[0].mxu0
        %3198 = vmatprep.mubr.f32.mxu0 0.0
        %3199 = vmatmul.mubr.f32.gmra.mrb[0].mxu0 %v3015
        %v3200 = vpop.f32.mrb[0].mxu0
        %v3201 = vadd.f32 %v2880, %v3200
        %v3202 = vpop.f32.mrb[0].mxu0
        %3203 = vmatprep.mubr.f32.mxu0 0.0
        %3204 = vmatmul.mubr.f32.gmra.mrb[0].mxu0 %v3018
        %v3205 = vpop.f32.mrb[0].mxu0
        %v3206 = vadd.f32 %v2885, %v3205
        %v3207 = vpop.f32.mrb[0].mxu0
        %3208 = vmatprep.mubr.f32.mxu0 0.0
        %3209 = vmatmul.mubr.f32.gmra.mrb[0].mxu0 %v3021
        %v3210 = vpop.f32.mrb[0].mxu0
        %v3211 = vadd.f32 %v2890, %v3210
        %v3212 = vpop.f32.mrb[0].mxu0
        %3213 = vmatprep.mubr.f32.mxu0 0.0
        %3214 = vmatmul.mubr.f32.gmra.mrb[0].mxu0 %v3024
        %v3215 = vpop.f32.mrb[0].mxu0
        %v3216 = vadd.f32 %v2895, %v3215
        %v3217 = vpop.f32.mrb[0].mxu0
        %3218 = vmatprep.mubr.f32.mxu0 0.0
        %3219 = vmatmul.mubr.f32.gmra.mrb[0].mxu0 %v3027
        %v3220 = vpop.f32.mrb[0].mxu0
        %v3221 = vadd.f32 %v2900, %v3220
        %v3222 = vpop.f32.mrb[0].mxu0
        %3223 = vmatprep.mubr.f32.mxu0 0.0
        %3224 = vmatmul.mubr.f32.gmra.mrb[0].mxu0 %v3030
        %v3225 = vpop.f32.mrb[0].mxu0
        %v3226 = vadd.f32 %v2905, %v3225
        %v3227 = vpop.f32.mrb[0].mxu0
        %3228 = vmatprep.mubr.f32.mxu0 0.0
        %3229 = vmatmul.mubr.f32.gmra.mrb[0].mxu0 %v3033
        %v3230 = vpop.f32.mrb[0].mxu0
        %v3231 = vadd.f32 %v2910, %v3230
        %v3232 = vpop.f32.mrb[0].mxu0
        %3233 = vmatprep.mubr.f32.mxu0 0.0
        %3234 = vmatmul.mubr.f32.gmra.mrb[0].mxu0 %v3036
        %v3235 = vpop.f32.mrb[0].mxu0
        %v3236 = vadd.f32 %v2915, %v3235
        %v3237 = vpop.f32.mrb[0].mxu0
        %3238 = vmatprep.mubr.f32.mxu0 0.0
        %3239 = vmatmul.mubr.f32.gmra.mrb[0].mxu0 %v3039
        %v3240 = vpop.f32.mrb[0].mxu0
        %v3241 = vadd.f32 %v2920, %v3240
        %v3242 = vpop.f32.mrb[0].mxu0
        %3243 = vmatprep.mubr.f32.mxu0 0.0
        %3244 = vmatmul.mubr.f32.gmra.mrb[0].mxu0 %v3042
        %v3245 = vpop.f32.mrb[0].mxu0
        %v3246 = vadd.f32 %v2925, %v3245
        %v3247 = vpop.f32.mrb[0].mxu0
        %3248 = vmatprep.mubr.f32.mxu0 0.0
        %3249 = vmatmul.mubr.f32.gmra.mrb[0].mxu0 %v3045
        %v3250 = vpop.f32.mrb[0].mxu0
        %v3251 = vadd.f32 %v2930, %v3250
        %v3252 = vpop.f32.mrb[0].mxu0
        %3253 = vmatprep.mubr.f32.mxu0 0.0
        %3254 = vmatmul.mubr.f32.gmra.mrb[0].mxu0 %v3048
        %v3255 = vpop.f32.mrb[0].mxu0
        %v3256 = vadd.f32 %v2935, %v3255
        %v3257 = vpop.f32.mrb[0].mxu0
        %3258 = vmatprep.mubr.f32.mxu0 0.0
        %3259 = vmatmul.mubr.f32.gmra.mrb[0].mxu0 %v3051
        %v3260 = vpop.f32.mrb[0].mxu0
        %v3261 = vadd.f32 %v2940, %v3260
        %v3262 = vpop.f32.mrb[0].mxu0
        %3263 = vmatprep.mubr.f32.mxu0 0.0
        %3264 = vmatmul.mubr.f32.gmra.mrb[0].mxu0 %v3054
        %v3265 = vpop.f32.mrb[0].mxu0
        %v3266 = vadd.f32 %v2945, %v3265
        %v3267 = vpop.f32.mrb[0].mxu0
        %3268 = vmatprep.mubr.f32.mxu0 0.0
        %3269 = vmatmul.mubr.f32.gmra.mrb[0].mxu0 %v3057
        %v3270 = vpop.f32.mrb[0].mxu0
        %v3271 = vadd.f32 %v2950, %v3270
        %v3272 = vpop.f32.mrb[0].mxu0
        %3273 = vmatprep.mubr.f32.mxu0 0.0
        %3274 = vmatmul.mubr.f32.gmra.mrb[0].mxu0 %v3060
        %v3275 = vpop.f32.mrb[0].mxu0
        %v3276 = vadd.f32 %v2955, %v3275
        %v3277 = vpop.f32.mrb[0].mxu0
        %3278 = vmatprep.mubr.f32.mxu0 0.0
        %3279 = vmatmul.mubr.f32.gmra.mrb[0].mxu0 %v3063
        %v3280 = vpop.f32.mrb[0].mxu0
        %v3281 = vadd.f32 %v2960, %v3280
        %v3282 = vpop.f32.mrb[0].mxu0
        %3283 = vmatprep.mubr.f32.mxu0 0.0
        %3284 = vmatmul.mubr.f32.gmra.mrb[0].mxu0 %v3066
        %v3285 = vpop.f32.mrb[0].mxu0
        %v3286 = vadd.f32 %v2965, %v3285
        %v3287 = vpop.f32.mrb[0].mxu0
        %3288 = vmatprep.mubr.f32.mxu0 0.0
        %3289 = vmatmul.mubr.f32.gmra.mrb[0].mxu0 %v3069
        %v3290 = vpop.f32.mrb[0].mxu0
        %v3291 = vadd.f32 %v2970, %v3290
        %v3292 = vpop.f32.mrb[0].mxu0
        %3293 = vmatprep.mubr.f32.mxu0 0.0
        %3294 = vmatmul.mubr.f32.gmra.mrb[0].mxu0 %v3072
        %v3295 = vpop.f32.mrb[0].mxu0
        %v3296 = vadd.f32 %v2975, %v3295
        %v3297 = vpop.f32.mrb[0].mxu0
        %3298 = vdwg.mxu0
        %3299 = vrot.lane.b32.xlu0 %v2624, 8
        %v3300 = vpop.permute.xlu0 %3299
        %3301 = vrot.lane.b32.xlu0 %v2625, 8
        %v3302 = vpop.permute.xlu0 %3301
        %3303 = vrot.lane.b32.xlu0 %v2626, 8
        %v3304 = vpop.permute.xlu0 %3303
        %3305 = vrot.lane.b32.xlu0 %v2627, 8
        %v3306 = vpop.permute.xlu0 %3305
        %3307 = vrot.lane.b32.xlu0 %v2628, 8
        %v3308 = vpop.permute.xlu0 %3307
        %3309 = vrot.lane.b32.xlu0 %v2629, 8
        %v3310 = vpop.permute.xlu0 %3309
        %3311 = vrot.lane.b32.xlu0 %v2630, 8
        %v3312 = vpop.permute.xlu0 %3311
        %3313 = vrot.lane.b32.xlu0 %v2631, 8
        %v3314 = vpop.permute.xlu0 %3313
        %3315 = vrot.lane.b32.xlu0 %v2632, 8
        %v3316 = vpop.permute.xlu0 %3315
        %3317 = vrot.lane.b32.xlu0 %v2633, 8
        %v3318 = vpop.permute.xlu0 %3317
        %3319 = vrot.lane.b32.xlu0 %v2634, 8
        %v3320 = vpop.permute.xlu0 %3319
        %3321 = vrot.lane.b32.xlu0 %v2635, 8
        %v3322 = vpop.permute.xlu0 %3321
        %3323 = vrot.lane.b32.xlu0 %v2636, 8
        %v3324 = vpop.permute.xlu0 %3323
        %3325 = vrot.lane.b32.xlu0 %v2637, 8
        %v3326 = vpop.permute.xlu0 %3325
        %3327 = vrot.lane.b32.xlu0 %v2638, 8
        %v3328 = vpop.permute.xlu0 %3327
        %3329 = vrot.lane.b32.xlu0 %v2639, 8
        %v3330 = vpop.permute.xlu0 %3329
        %3331 = vrot.lane.b32.xlu0 %v2640, 8
        %v3332 = vpop.permute.xlu0 %3331
        %3333 = vrot.lane.b32.xlu0 %v2641, 8
        %v3334 = vpop.permute.xlu0 %3333
        %3335 = vrot.lane.b32.xlu0 %v2642, 8
        %v3336 = vpop.permute.xlu0 %3335
        %3337 = vrot.lane.b32.xlu0 %v2643, 8
        %v3338 = vpop.permute.xlu0 %3337
        %3339 = vrot.lane.b32.xlu0 %v2644, 8
        %v3340 = vpop.permute.xlu0 %3339
        %3341 = vrot.lane.b32.xlu0 %v2645, 8
        %v3342 = vpop.permute.xlu0 %3341
        %3343 = vrot.lane.b32.xlu0 %v2646, 8
        %v3344 = vpop.permute.xlu0 %3343
        %3345 = vrot.lane.b32.xlu0 %v2647, 8
        %v3346 = vpop.permute.xlu0 %3345
        %3347 = vrot.lane.b32.xlu0 %v2648, 8
        %v3348 = vpop.permute.xlu0 %3347
        %3349 = vrot.lane.b32.xlu0 %v2649, 8
        %v3350 = vpop.permute.xlu0 %3349
        %3351 = vrot.lane.b32.xlu0 %v2650, 8
        %v3352 = vpop.permute.xlu0 %3351
        %3353 = vrot.lane.b32.xlu0 %v2651, 8
        %v3354 = vpop.permute.xlu0 %3353
        %3355 = vrot.lane.b32.xlu0 %v2652, 8
        %v3356 = vpop.permute.xlu0 %3355
        %3357 = vrot.lane.b32.xlu0 %v2653, 8
        %v3358 = vpop.permute.xlu0 %3357
        %3359 = vrot.lane.b32.xlu0 %v2654, 8
        %v3360 = vpop.permute.xlu0 %3359
        %3361 = vrot.lane.b32.xlu0 %v2655, 8
        %v3362 = vpop.permute.xlu0 %3361
        %3395 = vst.msk [vmem:[%s545 + $0x1] sm:$0xff] %vm869, %v3300
        %3396 = vst.msk [vmem:[%s545 + $0x9] sm:$0xff] %vm869, %v3302
        %3397 = vst.msk [vmem:[%s545 + $0x19] sm:$0xff] %vm869, %v3304
        %3398 = vst.msk [vmem:[%s545 + $0x21] sm:$0xff] %vm869, %v3306
        %3399 = vst.msk [vmem:[%s545 + $0x31] sm:$0xff] %vm869, %v3308
        %3400 = vst.msk [vmem:[%s545 + $0x39] sm:$0xff] %vm869, %v3310
        %3401 = vst.msk [vmem:[%s545 + $0x49] sm:$0xff] %vm869, %v3312
        %3402 = vst.msk [vmem:[%s545 + $0x51] sm:$0xff] %vm869, %v3314
        %3403 = vst.msk [vmem:[%s545 + $0x61] sm:$0xff] %vm869, %v3316
        %3404 = vst.msk [vmem:[%s545 + $0x69] sm:$0xff] %vm869, %v3318
        %3405 = vst.msk [vmem:[%s545 + $0x79] sm:$0xff] %vm869, %v3320
        %3406 = vst.msk [vmem:[%s545 + $0x81] sm:$0xff] %vm869, %v3322
        %3407 = vst.msk [vmem:[%s545 + $0x91] sm:$0xff] %vm869, %v3324
        %3408 = vst.msk [vmem:[%s545 + $0x99] sm:$0xff] %vm869, %v3326
        %3409 = vst.msk [vmem:[%s545 + $0xa9] sm:$0xff] %vm869, %v3328
        %3410 = vst.msk [vmem:[%s545 + $0xb1] sm:$0xff] %vm869, %v3330
        %3411 = vst.msk [vmem:[%s545 + $0xc1] sm:$0xff] %vm869, %v3332
        %3412 = vst.msk [vmem:[%s545 + $0xc9] sm:$0xff] %vm869, %v3334
        %3413 = vst.msk [vmem:[%s545 + $0xd9] sm:$0xff] %vm869, %v3336
        %3414 = vst.msk [vmem:[%s545 + $0xe1] sm:$0xff] %vm869, %v3338
        %3415 = vst.msk [vmem:[%s545 + $0xf1] sm:$0xff] %vm869, %v3340
        %3416 = vst.msk [vmem:[%s545 + $0xf9] sm:$0xff] %vm869, %v3342
        %3417 = vst.msk [vmem:[%s545 + $0x109] sm:$0xff] %vm869, %v3344
        %3418 = vst.msk [vmem:[%s545 + $0x111] sm:$0xff] %vm869, %v3346
        %3419 = vst.msk [vmem:[%s545 + $0x121] sm:$0xff] %vm869, %v3348
        %3420 = vst.msk [vmem:[%s545 + $0x129] sm:$0xff] %vm869, %v3350
        %3421 = vst.msk [vmem:[%s545 + $0x139] sm:$0xff] %vm869, %v3352
        %3422 = vst.msk [vmem:[%s545 + $0x141] sm:$0xff] %vm869, %v3354
        %3423 = vst.msk [vmem:[%s545 + $0x151] sm:$0xff] %vm869, %v3356
        %3424 = vst.msk [vmem:[%s545 + $0x159] sm:$0xff] %vm869, %v3358
        %3425 = vst.msk [vmem:[%s545 + $0x169] sm:$0xff] %vm869, %v3360
        %3426 = vst.msk [vmem:[%s545 + $0x171] sm:$0xff] %vm869, %v3362
        %v3427 = vld [vmem:[#allocation2] sm:$0xff]
        %v3428 = vld [vmem:[#allocation2 + $0x8] sm:$0xff]
        %v3429 = vld [vmem:[#allocation2 + $0x18] sm:$0xff]
        %v3430 = vld [vmem:[#allocation2 + $0x20] sm:$0xff]
        %v3431 = vld [vmem:[#allocation2 + $0x30] sm:$0xff]
        %v3432 = vld [vmem:[#allocation2 + $0x38] sm:$0xff]
        %v3433 = vld [vmem:[#allocation2 + $0x48] sm:$0xff]
        %v3434 = vld [vmem:[#allocation2 + $0x50] sm:$0xff]
        %v3435 = vld [vmem:[#allocation2 + $0x60] sm:$0xff]
        %v3436 = vld [vmem:[#allocation2 + $0x68] sm:$0xff]
        %v3437 = vld [vmem:[#allocation2 + $0x78] sm:$0xff]
        %v3438 = vld [vmem:[#allocation2 + $0x80] sm:$0xff]
        %v3439 = vld [vmem:[#allocation2 + $0x90] sm:$0xff]
        %v3440 = vld [vmem:[#allocation2 + $0x98] sm:$0xff]
        %v3441 = vld [vmem:[#allocation2 + $0xa8] sm:$0xff]
        %v3442 = vld [vmem:[#allocation2 + $0xb0] sm:$0xff]
        %v3443 = vld [vmem:[#allocation2 + $0xc0] sm:$0xff]
        %v3444 = vld [vmem:[#allocation2 + $0xc8] sm:$0xff]
        %v3445 = vld [vmem:[#allocation2 + $0xd8] sm:$0xff]
        %v3446 = vld [vmem:[#allocation2 + $0xe0] sm:$0xff]
        %v3447 = vld [vmem:[#allocation2 + $0xf0] sm:$0xff]
        %v3448 = vld [vmem:[#allocation2 + $0xf8] sm:$0xff]
        %v3449 = vld [vmem:[#allocation2 + $0x108] sm:$0xff]
        %v3450 = vld [vmem:[#allocation2 + $0x110] sm:$0xff]
        %v3451 = vld [vmem:[#allocation2 + $0x120] sm:$0xff]
        %v3452 = vld [vmem:[#allocation2 + $0x128] sm:$0xff]
        %v3453 = vld [vmem:[#allocation2 + $0x138] sm:$0xff]
        %v3454 = vld [vmem:[#allocation2 + $0x140] sm:$0xff]
        %v3455 = vld [vmem:[#allocation2 + $0x150] sm:$0xff]
        %v3456 = vld [vmem:[#allocation2 + $0x158] sm:$0xff]
        %v3457 = vld [vmem:[#allocation2 + $0x168] sm:$0xff]
        %v3458 = vld [vmem:[#allocation2 + $0x170] sm:$0xff]
        %vm3459 = vcmask 130048
        %3460 = vst.msk [vmem:[#allocation3] sm:$0xff] %vm3459, %v3427
        %3461 = vst.msk [vmem:[#allocation3 + $0x10] sm:$0xff] %vm3459, %v3428
        %3462 = vst.msk [vmem:[#allocation3 + $0x20] sm:$0xff] %vm3459, %v3429
        %3463 = vst.msk [vmem:[#allocation3 + $0x30] sm:$0xff] %vm3459, %v3430
        %3464 = vst.msk [vmem:[#allocation3 + $0x40] sm:$0xff] %vm3459, %v3431
        %3465 = vst.msk [vmem:[#allocation3 + $0x50] sm:$0xff] %vm3459, %v3432
        %3466 = vst.msk [vmem:[#allocation3 + $0x60] sm:$0xff] %vm3459, %v3433
        %3467 = vst.msk [vmem:[#allocation3 + $0x70] sm:$0xff] %vm3459, %v3434
        %3468 = vst.msk [vmem:[#allocation3 + $0x80] sm:$0xff] %vm3459, %v3435
        %3469 = vst.msk [vmem:[#allocation3 + $0x90] sm:$0xff] %vm3459, %v3436
        %3470 = vst.msk [vmem:[#allocation3 + $0xa0] sm:$0xff] %vm3459, %v3437
        %3471 = vst.msk [vmem:[#allocation3 + $0xb0] sm:$0xff] %vm3459, %v3438
        %3472 = vst.msk [vmem:[#allocation3 + $0xc0] sm:$0xff] %vm3459, %v3439
        %3473 = vst.msk [vmem:[#allocation3 + $0xd0] sm:$0xff] %vm3459, %v3440
        %3474 = vst.msk [vmem:[#allocation3 + $0xe0] sm:$0xff] %vm3459, %v3441
        %3475 = vst.msk [vmem:[#allocation3 + $0xf0] sm:$0xff] %vm3459, %v3442
        %3476 = vst.msk [vmem:[#allocation3 + $0x100] sm:$0xff] %vm3459, %v3443
        %3477 = vst.msk [vmem:[#allocation3 + $0x110] sm:$0xff] %vm3459, %v3444
        %3478 = vst.msk [vmem:[#allocation3 + $0x120] sm:$0xff] %vm3459, %v3445
        %3479 = vst.msk [vmem:[#allocation3 + $0x130] sm:$0xff] %vm3459, %v3446
        %3480 = vst.msk [vmem:[#allocation3 + $0x140] sm:$0xff] %vm3459, %v3447
        %3481 = vst.msk [vmem:[#allocation3 + $0x150] sm:$0xff] %vm3459, %v3448
        %3482 = vst.msk [vmem:[#allocation3 + $0x160] sm:$0xff] %vm3459, %v3449
        %3483 = vst.msk [vmem:[#allocation3 + $0x170] sm:$0xff] %vm3459, %v3450
        %3484 = vst.msk [vmem:[#allocation3 + $0x180] sm:$0xff] %vm3459, %v3451
        %3485 = vst.msk [vmem:[#allocation3 + $0x190] sm:$0xff] %vm3459, %v3452
        %3486 = vst.msk [vmem:[#allocation3 + $0x1a0] sm:$0xff] %vm3459, %v3453
        %3487 = vst.msk [vmem:[#allocation3 + $0x1b0] sm:$0xff] %vm3459, %v3454
        %3488 = vst.msk [vmem:[#allocation3 + $0x1c0] sm:$0xff] %vm3459, %v3455
        %3489 = vst.msk [vmem:[#allocation3 + $0x1d0] sm:$0xff] %vm3459, %v3456
        %3490 = vst.msk [vmem:[#allocation3 + $0x1e0] sm:$0xff] %vm3459, %v3457
        %3491 = vst.msk [vmem:[#allocation3 + $0x1f0] sm:$0xff] %vm3459, %v3458
        %v3492 = vld [vmem:[#allocation2 + $0x1] sm:$0xff]
        %v3493 = vld [vmem:[#allocation2 + $0x9] sm:$0xff]
        %v3494 = vld [vmem:[#allocation2 + $0x19] sm:$0xff]
        %v3495 = vld [vmem:[#allocation2 + $0x21] sm:$0xff]
        %v3496 = vld [vmem:[#allocation2 + $0x31] sm:$0xff]
        %v3497 = vld [vmem:[#allocation2 + $0x39] sm:$0xff]
        %v3498 = vld [vmem:[#allocation2 + $0x49] sm:$0xff]
        %v3499 = vld [vmem:[#allocation2 + $0x51] sm:$0xff]
        %v3500 = vld [vmem:[#allocation2 + $0x61] sm:$0xff]
        %v3501 = vld [vmem:[#allocation2 + $0x69] sm:$0xff]
        %v3502 = vld [vmem:[#allocation2 + $0x79] sm:$0xff]
        %v3503 = vld [vmem:[#allocation2 + $0x81] sm:$0xff]
        %v3504 = vld [vmem:[#allocation2 + $0x91] sm:$0xff]
        %v3505 = vld [vmem:[#allocation2 + $0x99] sm:$0xff]
        %v3506 = vld [vmem:[#allocation2 + $0xa9] sm:$0xff]
        %v3507 = vld [vmem:[#allocation2 + $0xb1] sm:$0xff]
        %v3508 = vld [vmem:[#allocation2 + $0xc1] sm:$0xff]
        %v3509 = vld [vmem:[#allocation2 + $0xc9] sm:$0xff]
        %v3510 = vld [vmem:[#allocation2 + $0xd9] sm:$0xff]
        %v3511 = vld [vmem:[#allocation2 + $0xe1] sm:$0xff]
        %v3512 = vld [vmem:[#allocation2 + $0xf1] sm:$0xff]
        %v3513 = vld [vmem:[#allocation2 + $0xf9] sm:$0xff]
        %v3514 = vld [vmem:[#allocation2 + $0x109] sm:$0xff]
        %v3515 = vld [vmem:[#allocation2 + $0x111] sm:$0xff]
        %v3516 = vld [vmem:[#allocation2 + $0x121] sm:$0xff]
        %v3517 = vld [vmem:[#allocation2 + $0x129] sm:$0xff]
        %v3518 = vld [vmem:[#allocation2 + $0x139] sm:$0xff]
        %v3519 = vld [vmem:[#allocation2 + $0x141] sm:$0xff]
        %v3520 = vld [vmem:[#allocation2 + $0x151] sm:$0xff]
        %v3521 = vld [vmem:[#allocation2 + $0x159] sm:$0xff]
        %v3522 = vld [vmem:[#allocation2 + $0x169] sm:$0xff]
        %v3523 = vld [vmem:[#allocation2 + $0x171] sm:$0xff]
        %3556 = vrot.lane.b32.xlu0 %v3492, 16
        %v3557 = vpop.permute.xlu0 %3556
        %3558 = vrot.lane.b32.xlu0 %v3493, 16
        %v3559 = vpop.permute.xlu0 %3558
        %3560 = vrot.lane.b32.xlu0 %v3494, 16
        %v3561 = vpop.permute.xlu0 %3560
        %3562 = vrot.lane.b32.xlu0 %v3495, 16
        %v3563 = vpop.permute.xlu0 %3562
        %3564 = vrot.lane.b32.xlu0 %v3496, 16
        %v3565 = vpop.permute.xlu0 %3564
        %3566 = vrot.lane.b32.xlu0 %v3497, 16
        %v3567 = vpop.permute.xlu0 %3566
        %3568 = vrot.lane.b32.xlu0 %v3498, 16
        %v3569 = vpop.permute.xlu0 %3568
        %3570 = vrot.lane.b32.xlu0 %v3499, 16
        %v3571 = vpop.permute.xlu0 %3570
        %3572 = vrot.lane.b32.xlu0 %v3500, 16
        %v3573 = vpop.permute.xlu0 %3572
        %3574 = vrot.lane.b32.xlu0 %v3501, 16
        %v3575 = vpop.permute.xlu0 %3574
        %3576 = vrot.lane.b32.xlu0 %v3502, 16
        %v3577 = vpop.permute.xlu0 %3576
        %3578 = vrot.lane.b32.xlu0 %v3503, 16
        %v3579 = vpop.permute.xlu0 %3578
        %3580 = vrot.lane.b32.xlu0 %v3504, 16
        %v3581 = vpop.permute.xlu0 %3580
        %3582 = vrot.lane.b32.xlu0 %v3505, 16
        %v3583 = vpop.permute.xlu0 %3582
        %3584 = vrot.lane.b32.xlu0 %v3506, 16
        %v3585 = vpop.permute.xlu0 %3584
        %3586 = vrot.lane.b32.xlu0 %v3507, 16
        %v3587 = vpop.permute.xlu0 %3586
        %3588 = vrot.lane.b32.xlu0 %v3508, 16
        %v3589 = vpop.permute.xlu0 %3588
        %3590 = vrot.lane.b32.xlu0 %v3509, 16
        %v3591 = vpop.permute.xlu0 %3590
        %3592 = vrot.lane.b32.xlu0 %v3510, 16
        %v3593 = vpop.permute.xlu0 %3592
        %3594 = vrot.lane.b32.xlu0 %v3511, 16
        %v3595 = vpop.permute.xlu0 %3594
        %3596 = vrot.lane.b32.xlu0 %v3512, 16
        %v3597 = vpop.permute.xlu0 %3596
        %3598 = vrot.lane.b32.xlu0 %v3513, 16
        %v3599 = vpop.permute.xlu0 %3598
        %3600 = vrot.lane.b32.xlu0 %v3514, 16
        %v3601 = vpop.permute.xlu0 %3600
        %3602 = vrot.lane.b32.xlu0 %v3515, 16
        %v3603 = vpop.permute.xlu0 %3602
        %3604 = vrot.lane.b32.xlu0 %v3516, 16
        %v3605 = vpop.permute.xlu0 %3604
        %3606 = vrot.lane.b32.xlu0 %v3517, 16
        %v3607 = vpop.permute.xlu0 %3606
        %3608 = vrot.lane.b32.xlu0 %v3518, 16
        %v3609 = vpop.permute.xlu0 %3608
        %3610 = vrot.lane.b32.xlu0 %v3519, 16
        %v3611 = vpop.permute.xlu0 %3610
        %3612 = vrot.lane.b32.xlu0 %v3520, 16
        %v3613 = vpop.permute.xlu0 %3612
        %3614 = vrot.lane.b32.xlu0 %v3521, 16
        %v3615 = vpop.permute.xlu0 %3614
        %3616 = vrot.lane.b32.xlu0 %v3522, 16
        %v3617 = vpop.permute.xlu0 %3616
        %3618 = vrot.lane.b32.xlu0 %v3523, 16
        %v3619 = vpop.permute.xlu0 %3618
        %vm3652 = vcmask 261248
        %3653 = vst.msk [vmem:[#allocation3] sm:$0xff] %vm3652, %v3557
        %3654 = vst.msk [vmem:[#allocation3 + $0x10] sm:$0xff] %vm3652, %v3559
        %3655 = vst.msk [vmem:[#allocation3 + $0x20] sm:$0xff] %vm3652, %v3561
        %3656 = vst.msk [vmem:[#allocation3 + $0x30] sm:$0xff] %vm3652, %v3563
        %3657 = vst.msk [vmem:[#allocation3 + $0x40] sm:$0xff] %vm3652, %v3565
        %3658 = vst.msk [vmem:[#allocation3 + $0x50] sm:$0xff] %vm3652, %v3567
        %3659 = vst.msk [vmem:[#allocation3 + $0x60] sm:$0xff] %vm3652, %v3569
        %3660 = vst.msk [vmem:[#allocation3 + $0x70] sm:$0xff] %vm3652, %v3571
        %3661 = vst.msk [vmem:[#allocation3 + $0x80] sm:$0xff] %vm3652, %v3573
        %3662 = vst.msk [vmem:[#allocation3 + $0x90] sm:$0xff] %vm3652, %v3575
        %3663 = vst.msk [vmem:[#allocation3 + $0xa0] sm:$0xff] %vm3652, %v3577
        %3664 = vst.msk [vmem:[#allocation3 + $0xb0] sm:$0xff] %vm3652, %v3579
        %3665 = vst.msk [vmem:[#allocation3 + $0xc0] sm:$0xff] %vm3652, %v3581
        %3666 = vst.msk [vmem:[#allocation3 + $0xd0] sm:$0xff] %vm3652, %v3583
        %3667 = vst.msk [vmem:[#allocation3 + $0xe0] sm:$0xff] %vm3652, %v3585
        %3668 = vst.msk [vmem:[#allocation3 + $0xf0] sm:$0xff] %vm3652, %v3587
        %3669 = vst.msk [vmem:[#allocation3 + $0x100] sm:$0xff] %vm3652, %v3589
        %3670 = vst.msk [vmem:[#allocation3 + $0x110] sm:$0xff] %vm3652, %v3591
        %3671 = vst.msk [vmem:[#allocation3 + $0x120] sm:$0xff] %vm3652, %v3593
        %3672 = vst.msk [vmem:[#allocation3 + $0x130] sm:$0xff] %vm3652, %v3595
        %3673 = vst.msk [vmem:[#allocation3 + $0x140] sm:$0xff] %vm3652, %v3597
        %3674 = vst.msk [vmem:[#allocation3 + $0x150] sm:$0xff] %vm3652, %v3599
        %3675 = vst.msk [vmem:[#allocation3 + $0x160] sm:$0xff] %vm3652, %v3601
        %3676 = vst.msk [vmem:[#allocation3 + $0x170] sm:$0xff] %vm3652, %v3603
        %3677 = vst.msk [vmem:[#allocation3 + $0x180] sm:$0xff] %vm3652, %v3605
        %3678 = vst.msk [vmem:[#allocation3 + $0x190] sm:$0xff] %vm3652, %v3607
        %3679 = vst.msk [vmem:[#allocation3 + $0x1a0] sm:$0xff] %vm3652, %v3609
        %3680 = vst.msk [vmem:[#allocation3 + $0x1b0] sm:$0xff] %vm3652, %v3611
        %3681 = vst.msk [vmem:[#allocation3 + $0x1c0] sm:$0xff] %vm3652, %v3613
        %3682 = vst.msk [vmem:[#allocation3 + $0x1d0] sm:$0xff] %vm3652, %v3615
        %3683 = vst.msk [vmem:[#allocation3 + $0x1e0] sm:$0xff] %vm3652, %v3617
        %3684 = vst.msk [vmem:[#allocation3 + $0x1f0] sm:$0xff] %vm3652, %v3619
        %v3685 = vld [vmem:[#allocation2 + $0x2] sm:$0xff]
        %v3686 = vld [vmem:[#allocation2 + $0xa] sm:$0xff]
        %v3687 = vld [vmem:[#allocation2 + $0x1a] sm:$0xff]
        %v3688 = vld [vmem:[#allocation2 + $0x22] sm:$0xff]
        %v3689 = vld [vmem:[#allocation2 + $0x32] sm:$0xff]
        %v3690 = vld [vmem:[#allocation2 + $0x3a] sm:$0xff]
        %v3691 = vld [vmem:[#allocation2 + $0x4a] sm:$0xff]
        %v3692 = vld [vmem:[#allocation2 + $0x52] sm:$0xff]
        %v3693 = vld [vmem:[#allocation2 + $0x62] sm:$0xff]
        %v3694 = vld [vmem:[#allocation2 + $0x6a] sm:$0xff]
        %v3695 = vld [vmem:[#allocation2 + $0x7a] sm:$0xff]
        %v3696 = vld [vmem:[#allocation2 + $0x82] sm:$0xff]
        %v3697 = vld [vmem:[#allocation2 + $0x92] sm:$0xff]
        %v3698 = vld [vmem:[#allocation2 + $0x9a] sm:$0xff]
        %v3699 = vld [vmem:[#allocation2 + $0xaa] sm:$0xff]
        %v3700 = vld [vmem:[#allocation2 + $0xb2] sm:$0xff]
        %v3701 = vld [vmem:[#allocation2 + $0xc2] sm:$0xff]
        %v3702 = vld [vmem:[#allocation2 + $0xca] sm:$0xff]
        %v3703 = vld [vmem:[#allocation2 + $0xda] sm:$0xff]
        %v3704 = vld [vmem:[#allocation2 + $0xe2] sm:$0xff]
        %v3705 = vld [vmem:[#allocation2 + $0xf2] sm:$0xff]
        %v3706 = vld [vmem:[#allocation2 + $0xfa] sm:$0xff]
        %v3707 = vld [vmem:[#allocation2 + $0x10a] sm:$0xff]
        %v3708 = vld [vmem:[#allocation2 + $0x112] sm:$0xff]
        %v3709 = vld [vmem:[#allocation2 + $0x122] sm:$0xff]
        %v3710 = vld [vmem:[#allocation2 + $0x12a] sm:$0xff]
        %v3711 = vld [vmem:[#allocation2 + $0x13a] sm:$0xff]
        %v3712 = vld [vmem:[#allocation2 + $0x142] sm:$0xff]
        %v3713 = vld [vmem:[#allocation2 + $0x152] sm:$0xff]
        %v3714 = vld [vmem:[#allocation2 + $0x15a] sm:$0xff]
        %v3715 = vld [vmem:[#allocation2 + $0x16a] sm:$0xff]
        %v3716 = vld [vmem:[#allocation2 + $0x172] sm:$0xff]
        %3749 = vrot.lane.b32.xlu0 %v3685, 32
        %v3750 = vpop.permute.xlu0 %3749
        %3751 = vrot.lane.b32.xlu0 %v3686, 32
        %v3752 = vpop.permute.xlu0 %3751
        %3753 = vrot.lane.b32.xlu0 %v3687, 32
        %v3754 = vpop.permute.xlu0 %3753
        %3755 = vrot.lane.b32.xlu0 %v3688, 32
        %v3756 = vpop.permute.xlu0 %3755
        %3757 = vrot.lane.b32.xlu0 %v3689, 32
        %v3758 = vpop.permute.xlu0 %3757
        %3759 = vrot.lane.b32.xlu0 %v3690, 32
        %v3760 = vpop.permute.xlu0 %3759
        %3761 = vrot.lane.b32.xlu0 %v3691, 32
        %v3762 = vpop.permute.xlu0 %3761
        %3763 = vrot.lane.b32.xlu0 %v3692, 32
        %v3764 = vpop.permute.xlu0 %3763
        %3765 = vrot.lane.b32.xlu0 %v3693, 32
        %v3766 = vpop.permute.xlu0 %3765
        %3767 = vrot.lane.b32.xlu0 %v3694, 32
        %v3768 = vpop.permute.xlu0 %3767
        %3769 = vrot.lane.b32.xlu0 %v3695, 32
        %v3770 = vpop.permute.xlu0 %3769
        %3771 = vrot.lane.b32.xlu0 %v3696, 32
        %v3772 = vpop.permute.xlu0 %3771
        %3773 = vrot.lane.b32.xlu0 %v3697, 32
        %v3774 = vpop.permute.xlu0 %3773
        %3775 = vrot.lane.b32.xlu0 %v3698, 32
        %v3776 = vpop.permute.xlu0 %3775
        %3777 = vrot.lane.b32.xlu0 %v3699, 32
        %v3778 = vpop.permute.xlu0 %3777
        %3779 = vrot.lane.b32.xlu0 %v3700, 32
        %v3780 = vpop.permute.xlu0 %3779
        %3781 = vrot.lane.b32.xlu0 %v3701, 32
        %v3782 = vpop.permute.xlu0 %3781
        %3783 = vrot.lane.b32.xlu0 %v3702, 32
        %v3784 = vpop.permute.xlu0 %3783
        %3785 = vrot.lane.b32.xlu0 %v3703, 32
        %v3786 = vpop.permute.xlu0 %3785
        %3787 = vrot.lane.b32.xlu0 %v3704, 32
        %v3788 = vpop.permute.xlu0 %3787
        %3789 = vrot.lane.b32.xlu0 %v3705, 32
        %v3790 = vpop.permute.xlu0 %3789
        %3791 = vrot.lane.b32.xlu0 %v3706, 32
        %v3792 = vpop.permute.xlu0 %3791
        %3793 = vrot.lane.b32.xlu0 %v3707, 32
        %v3794 = vpop.permute.xlu0 %3793
        %3795 = vrot.lane.b32.xlu0 %v3708, 32
        %v3796 = vpop.permute.xlu0 %3795
        %3797 = vrot.lane.b32.xlu0 %v3709, 32
        %v3798 = vpop.permute.xlu0 %3797
        %3799 = vrot.lane.b32.xlu0 %v3710, 32
        %v3800 = vpop.permute.xlu0 %3799
        %3801 = vrot.lane.b32.xlu0 %v3711, 32
        %v3802 = vpop.permute.xlu0 %3801
        %3803 = vrot.lane.b32.xlu0 %v3712, 32
        %v3804 = vpop.permute.xlu0 %3803
        %3805 = vrot.lane.b32.xlu0 %v3713, 32
        %v3806 = vpop.permute.xlu0 %3805
        %3807 = vrot.lane.b32.xlu0 %v3714, 32
        %v3808 = vpop.permute.xlu0 %3807
        %3809 = vrot.lane.b32.xlu0 %v3715, 32
        %v3810 = vpop.permute.xlu0 %3809
        %3811 = vrot.lane.b32.xlu0 %v3716, 32
        %v3812 = vpop.permute.xlu0 %3811
        %vm3845 = vcmask 392448
        %3846 = vst.msk [vmem:[#allocation3] sm:$0xff] %vm3845, %v3750
        %3847 = vst.msk [vmem:[#allocation3 + $0x10] sm:$0xff] %vm3845, %v3752
        %3848 = vst.msk [vmem:[#allocation3 + $0x20] sm:$0xff] %vm3845, %v3754
        %3849 = vst.msk [vmem:[#allocation3 + $0x30] sm:$0xff] %vm3845, %v3756
        %3850 = vst.msk [vmem:[#allocation3 + $0x40] sm:$0xff] %vm3845, %v3758
        %3851 = vst.msk [vmem:[#allocation3 + $0x50] sm:$0xff] %vm3845, %v3760
        %3852 = vst.msk [vmem:[#allocation3 + $0x60] sm:$0xff] %vm3845, %v3762
        %3853 = vst.msk [vmem:[#allocation3 + $0x70] sm:$0xff] %vm3845, %v3764
        %3854 = vst.msk [vmem:[#allocation3 + $0x80] sm:$0xff] %vm3845, %v3766
        %3855 = vst.msk [vmem:[#allocation3 + $0x90] sm:$0xff] %vm3845, %v3768
        %3856 = vst.msk [vmem:[#allocation3 + $0xa0] sm:$0xff] %vm3845, %v3770
        %3857 = vst.msk [vmem:[#allocation3 + $0xb0] sm:$0xff] %vm3845, %v3772
        %3858 = vst.msk [vmem:[#allocation3 + $0xc0] sm:$0xff] %vm3845, %v3774
        %3859 = vst.msk [vmem:[#allocation3 + $0xd0] sm:$0xff] %vm3845, %v3776
        %3860 = vst.msk [vmem:[#allocation3 + $0xe0] sm:$0xff] %vm3845, %v3778
        %3861 = vst.msk [vmem:[#allocation3 + $0xf0] sm:$0xff] %vm3845, %v3780
        %3862 = vst.msk [vmem:[#allocation3 + $0x100] sm:$0xff] %vm3845, %v3782
        %3863 = vst.msk [vmem:[#allocation3 + $0x110] sm:$0xff] %vm3845, %v3784
        %3864 = vst.msk [vmem:[#allocation3 + $0x120] sm:$0xff] %vm3845, %v3786
        %3865 = vst.msk [vmem:[#allocation3 + $0x130] sm:$0xff] %vm3845, %v3788
        %3866 = vst.msk [vmem:[#allocation3 + $0x140] sm:$0xff] %vm3845, %v3790
        %3867 = vst.msk [vmem:[#allocation3 + $0x150] sm:$0xff] %vm3845, %v3792
        %3868 = vst.msk [vmem:[#allocation3 + $0x160] sm:$0xff] %vm3845, %v3794
        %3869 = vst.msk [vmem:[#allocation3 + $0x170] sm:$0xff] %vm3845, %v3796
        %3870 = vst.msk [vmem:[#allocation3 + $0x180] sm:$0xff] %vm3845, %v3798
        %3871 = vst.msk [vmem:[#allocation3 + $0x190] sm:$0xff] %vm3845, %v3800
        %3872 = vst.msk [vmem:[#allocation3 + $0x1a0] sm:$0xff] %vm3845, %v3802
        %3873 = vst.msk [vmem:[#allocation3 + $0x1b0] sm:$0xff] %vm3845, %v3804
        %3874 = vst.msk [vmem:[#allocation3 + $0x1c0] sm:$0xff] %vm3845, %v3806
        %3875 = vst.msk [vmem:[#allocation3 + $0x1d0] sm:$0xff] %vm3845, %v3808
        %3876 = vst.msk [vmem:[#allocation3 + $0x1e0] sm:$0xff] %vm3845, %v3810
        %3877 = vst.msk [vmem:[#allocation3 + $0x1f0] sm:$0xff] %vm3845, %v3812
        %v3878 = vld [vmem:[%s545] sm:$0xff]
        %v3879 = vld [vmem:[%s545 + $0x8] sm:$0xff]
        %v3880 = vld [vmem:[%s545 + $0x18] sm:$0xff]
        %v3881 = vld [vmem:[%s545 + $0x20] sm:$0xff]
        %v3882 = vld [vmem:[%s545 + $0x30] sm:$0xff]
        %v3883 = vld [vmem:[%s545 + $0x38] sm:$0xff]
        %v3884 = vld [vmem:[%s545 + $0x48] sm:$0xff]
        %v3885 = vld [vmem:[%s545 + $0x50] sm:$0xff]
        %v3886 = vld [vmem:[%s545 + $0x60] sm:$0xff]
        %v3887 = vld [vmem:[%s545 + $0x68] sm:$0xff]
        %v3888 = vld [vmem:[%s545 + $0x78] sm:$0xff]
        %v3889 = vld [vmem:[%s545 + $0x80] sm:$0xff]
        %v3890 = vld [vmem:[%s545 + $0x90] sm:$0xff]
        %v3891 = vld [vmem:[%s545 + $0x98] sm:$0xff]
        %v3892 = vld [vmem:[%s545 + $0xa8] sm:$0xff]
        %v3893 = vld [vmem:[%s545 + $0xb0] sm:$0xff]
        %v3894 = vld [vmem:[%s545 + $0xc0] sm:$0xff]
        %v3895 = vld [vmem:[%s545 + $0xc8] sm:$0xff]
        %v3896 = vld [vmem:[%s545 + $0xd8] sm:$0xff]
        %v3897 = vld [vmem:[%s545 + $0xe0] sm:$0xff]
        %v3898 = vld [vmem:[%s545 + $0xf0] sm:$0xff]
        %v3899 = vld [vmem:[%s545 + $0xf8] sm:$0xff]
        %v3900 = vld [vmem:[%s545 + $0x108] sm:$0xff]
        %v3901 = vld [vmem:[%s545 + $0x110] sm:$0xff]
        %v3902 = vld [vmem:[%s545 + $0x120] sm:$0xff]
        %v3903 = vld [vmem:[%s545 + $0x128] sm:$0xff]
        %v3904 = vld [vmem:[%s545 + $0x138] sm:$0xff]
        %v3905 = vld [vmem:[%s545 + $0x140] sm:$0xff]
        %v3906 = vld [vmem:[%s545 + $0x150] sm:$0xff]
        %v3907 = vld [vmem:[%s545 + $0x158] sm:$0xff]
        %v3908 = vld [vmem:[%s545 + $0x168] sm:$0xff]
        %v3909 = vld [vmem:[%s545 + $0x170] sm:$0xff]
        %3942 = vrot.lane.b32.xlu0 %v3878, 48
        %v3943 = vpop.permute.xlu0 %3942
        %3944 = vrot.lane.b32.xlu0 %v3879, 48
        %v3945 = vpop.permute.xlu0 %3944
        %3946 = vrot.lane.b32.xlu0 %v3880, 48
        %v3947 = vpop.permute.xlu0 %3946
        %3948 = vrot.lane.b32.xlu0 %v3881, 48
        %v3949 = vpop.permute.xlu0 %3948
        %3950 = vrot.lane.b32.xlu0 %v3882, 48
        %v3951 = vpop.permute.xlu0 %3950
        %3952 = vrot.lane.b32.xlu0 %v3883, 48
        %v3953 = vpop.permute.xlu0 %3952
        %3954 = vrot.lane.b32.xlu0 %v3884, 48
        %v3955 = vpop.permute.xlu0 %3954
        %3956 = vrot.lane.b32.xlu0 %v3885, 48
        %v3957 = vpop.permute.xlu0 %3956
        %3958 = vrot.lane.b32.xlu0 %v3886, 48
        %v3959 = vpop.permute.xlu0 %3958
        %3960 = vrot.lane.b32.xlu0 %v3887, 48
        %v3961 = vpop.permute.xlu0 %3960
        %3962 = vrot.lane.b32.xlu0 %v3888, 48
        %v3963 = vpop.permute.xlu0 %3962
        %3964 = vrot.lane.b32.xlu0 %v3889, 48
        %v3965 = vpop.permute.xlu0 %3964
        %3966 = vrot.lane.b32.xlu0 %v3890, 48
        %v3967 = vpop.permute.xlu0 %3966
        %3968 = vrot.lane.b32.xlu0 %v3891, 48
        %v3969 = vpop.permute.xlu0 %3968
        %3970 = vrot.lane.b32.xlu0 %v3892, 48
        %v3971 = vpop.permute.xlu0 %3970
        %3972 = vrot.lane.b32.xlu0 %v3893, 48
        %v3973 = vpop.permute.xlu0 %3972
        %3974 = vrot.lane.b32.xlu0 %v3894, 48
        %v3975 = vpop.permute.xlu0 %3974
        %3976 = vrot.lane.b32.xlu0 %v3895, 48
        %v3977 = vpop.permute.xlu0 %3976
        %3978 = vrot.lane.b32.xlu0 %v3896, 48
        %v3979 = vpop.permute.xlu0 %3978
        %3980 = vrot.lane.b32.xlu0 %v3897, 48
        %v3981 = vpop.permute.xlu0 %3980
        %3982 = vrot.lane.b32.xlu0 %v3898, 48
        %v3983 = vpop.permute.xlu0 %3982
        %3984 = vrot.lane.b32.xlu0 %v3899, 48
        %v3985 = vpop.permute.xlu0 %3984
        %3986 = vrot.lane.b32.xlu0 %v3900, 48
        %v3987 = vpop.permute.xlu0 %3986
        %3988 = vrot.lane.b32.xlu0 %v3901, 48
        %v3989 = vpop.permute.xlu0 %3988
        %3990 = vrot.lane.b32.xlu0 %v3902, 48
        %v3991 = vpop.permute.xlu0 %3990
        %3992 = vrot.lane.b32.xlu0 %v3903, 48
        %v3993 = vpop.permute.xlu0 %3992
        %3994 = vrot.lane.b32.xlu0 %v3904, 48
        %v3995 = vpop.permute.xlu0 %3994
        %3996 = vrot.lane.b32.xlu0 %v3905, 48
        %v3997 = vpop.permute.xlu0 %3996
        %3998 = vrot.lane.b32.xlu0 %v3906, 48
        %v3999 = vpop.permute.xlu0 %3998
        %4000 = vrot.lane.b32.xlu0 %v3907, 48
        %v4001 = vpop.permute.xlu0 %4000
        %4002 = vrot.lane.b32.xlu0 %v3908, 48
        %v4003 = vpop.permute.xlu0 %4002
        %4004 = vrot.lane.b32.xlu0 %v3909, 48
        %v4005 = vpop.permute.xlu0 %4004
        %vm4038 = vcmask 523648
        %4039 = vst.msk [vmem:[#allocation3] sm:$0xff] %vm4038, %v3943
        %4040 = vst.msk [vmem:[#allocation3 + $0x10] sm:$0xff] %vm4038, %v3945
        %4041 = vst.msk [vmem:[#allocation3 + $0x20] sm:$0xff] %vm4038, %v3947
        %4042 = vst.msk [vmem:[#allocation3 + $0x30] sm:$0xff] %vm4038, %v3949
        %4043 = vst.msk [vmem:[#allocation3 + $0x40] sm:$0xff] %vm4038, %v3951
        %4044 = vst.msk [vmem:[#allocation3 + $0x50] sm:$0xff] %vm4038, %v3953
        %4045 = vst.msk [vmem:[#allocation3 + $0x60] sm:$0xff] %vm4038, %v3955
        %4046 = vst.msk [vmem:[#allocation3 + $0x70] sm:$0xff] %vm4038, %v3957
        %4047 = vst.msk [vmem:[#allocation3 + $0x80] sm:$0xff] %vm4038, %v3959
        %4048 = vst.msk [vmem:[#allocation3 + $0x90] sm:$0xff] %vm4038, %v3961
        %4049 = vst.msk [vmem:[#allocation3 + $0xa0] sm:$0xff] %vm4038, %v3963
        %4050 = vst.msk [vmem:[#allocation3 + $0xb0] sm:$0xff] %vm4038, %v3965
        %4051 = vst.msk [vmem:[#allocation3 + $0xc0] sm:$0xff] %vm4038, %v3967
        %4052 = vst.msk [vmem:[#allocation3 + $0xd0] sm:$0xff] %vm4038, %v3969
        %4053 = vst.msk [vmem:[#allocation3 + $0xe0] sm:$0xff] %vm4038, %v3971
        %4054 = vst.msk [vmem:[#allocation3 + $0xf0] sm:$0xff] %vm4038, %v3973
        %4055 = vst.msk [vmem:[#allocation3 + $0x100] sm:$0xff] %vm4038, %v3975
        %4056 = vst.msk [vmem:[#allocation3 + $0x110] sm:$0xff] %vm4038, %v3977
        %4057 = vst.msk [vmem:[#allocation3 + $0x120] sm:$0xff] %vm4038, %v3979
        %4058 = vst.msk [vmem:[#allocation3 + $0x130] sm:$0xff] %vm4038, %v3981
        %4059 = vst.msk [vmem:[#allocation3 + $0x140] sm:$0xff] %vm4038, %v3983
        %4060 = vst.msk [vmem:[#allocation3 + $0x150] sm:$0xff] %vm4038, %v3985
        %4061 = vst.msk [vmem:[#allocation3 + $0x160] sm:$0xff] %vm4038, %v3987
        %4062 = vst.msk [vmem:[#allocation3 + $0x170] sm:$0xff] %vm4038, %v3989
        %4063 = vst.msk [vmem:[#allocation3 + $0x180] sm:$0xff] %vm4038, %v3991
        %4064 = vst.msk [vmem:[#allocation3 + $0x190] sm:$0xff] %vm4038, %v3993
        %4065 = vst.msk [vmem:[#allocation3 + $0x1a0] sm:$0xff] %vm4038, %v3995
        %4066 = vst.msk [vmem:[#allocation3 + $0x1b0] sm:$0xff] %vm4038, %v3997
        %4067 = vst.msk [vmem:[#allocation3 + $0x1c0] sm:$0xff] %vm4038, %v3999
        %4068 = vst.msk [vmem:[#allocation3 + $0x1d0] sm:$0xff] %vm4038, %v4001
        %4069 = vst.msk [vmem:[#allocation3 + $0x1e0] sm:$0xff] %vm4038, %v4003
        %4070 = vst.msk [vmem:[#allocation3 + $0x1f0] sm:$0xff] %vm4038, %v4005
        %v4071 = vld [vmem:[%s545 + $0x1] sm:$0xff]
        %v4072 = vld [vmem:[%s545 + $0x9] sm:$0xff]
        %v4073 = vld [vmem:[%s545 + $0x19] sm:$0xff]
        %v4074 = vld [vmem:[%s545 + $0x21] sm:$0xff]
        %v4075 = vld [vmem:[%s545 + $0x31] sm:$0xff]
        %v4076 = vld [vmem:[%s545 + $0x39] sm:$0xff]
        %v4077 = vld [vmem:[%s545 + $0x49] sm:$0xff]
        %v4078 = vld [vmem:[%s545 + $0x51] sm:$0xff]
        %v4079 = vld [vmem:[%s545 + $0x61] sm:$0xff]
        %v4080 = vld [vmem:[%s545 + $0x69] sm:$0xff]
        %v4081 = vld [vmem:[%s545 + $0x79] sm:$0xff]
        %v4082 = vld [vmem:[%s545 + $0x81] sm:$0xff]
        %v4083 = vld [vmem:[%s545 + $0x91] sm:$0xff]
        %v4084 = vld [vmem:[%s545 + $0x99] sm:$0xff]
        %v4085 = vld [vmem:[%s545 + $0xa9] sm:$0xff]
        %v4086 = vld [vmem:[%s545 + $0xb1] sm:$0xff]
        %v4087 = vld [vmem:[%s545 + $0xc1] sm:$0xff]
        %v4088 = vld [vmem:[%s545 + $0xc9] sm:$0xff]
        %v4089 = vld [vmem:[%s545 + $0xd9] sm:$0xff]
        %v4090 = vld [vmem:[%s545 + $0xe1] sm:$0xff]
        %v4091 = vld [vmem:[%s545 + $0xf1] sm:$0xff]
        %v4092 = vld [vmem:[%s545 + $0xf9] sm:$0xff]
        %v4093 = vld [vmem:[%s545 + $0x109] sm:$0xff]
        %v4094 = vld [vmem:[%s545 + $0x111] sm:$0xff]
        %v4095 = vld [vmem:[%s545 + $0x121] sm:$0xff]
        %v4096 = vld [vmem:[%s545 + $0x129] sm:$0xff]
        %v4097 = vld [vmem:[%s545 + $0x139] sm:$0xff]
        %v4098 = vld [vmem:[%s545 + $0x141] sm:$0xff]
        %v4099 = vld [vmem:[%s545 + $0x151] sm:$0xff]
        %v4100 = vld [vmem:[%s545 + $0x159] sm:$0xff]
        %v4101 = vld [vmem:[%s545 + $0x169] sm:$0xff]
        %v4102 = vld [vmem:[%s545 + $0x171] sm:$0xff]
        %4135 = vrot.lane.b32.xlu0 %v4071, 64
        %v4136 = vpop.permute.xlu0 %4135
        %4137 = vrot.lane.b32.xlu0 %v4072, 64
        %v4138 = vpop.permute.xlu0 %4137
        %4139 = vrot.lane.b32.xlu0 %v4073, 64
        %v4140 = vpop.permute.xlu0 %4139
        %4141 = vrot.lane.b32.xlu0 %v4074, 64
        %v4142 = vpop.permute.xlu0 %4141
        %4143 = vrot.lane.b32.xlu0 %v4075, 64
        %v4144 = vpop.permute.xlu0 %4143
        %4145 = vrot.lane.b32.xlu0 %v4076, 64
        %v4146 = vpop.permute.xlu0 %4145
        %4147 = vrot.lane.b32.xlu0 %v4077, 64
        %v4148 = vpop.permute.xlu0 %4147
        %4149 = vrot.lane.b32.xlu0 %v4078, 64
        %v4150 = vpop.permute.xlu0 %4149
        %4151 = vrot.lane.b32.xlu0 %v4079, 64
        %v4152 = vpop.permute.xlu0 %4151
        %4153 = vrot.lane.b32.xlu0 %v4080, 64
        %v4154 = vpop.permute.xlu0 %4153
        %4155 = vrot.lane.b32.xlu0 %v4081, 64
        %v4156 = vpop.permute.xlu0 %4155
        %4157 = vrot.lane.b32.xlu0 %v4082, 64
        %v4158 = vpop.permute.xlu0 %4157
        %4159 = vrot.lane.b32.xlu0 %v4083, 64
        %v4160 = vpop.permute.xlu0 %4159
        %4161 = vrot.lane.b32.xlu0 %v4084, 64
        %v4162 = vpop.permute.xlu0 %4161
        %4163 = vrot.lane.b32.xlu0 %v4085, 64
        %v4164 = vpop.permute.xlu0 %4163
        %4165 = vrot.lane.b32.xlu0 %v4086, 64
        %v4166 = vpop.permute.xlu0 %4165
        %4167 = vrot.lane.b32.xlu0 %v4087, 64
        %v4168 = vpop.permute.xlu0 %4167
        %4169 = vrot.lane.b32.xlu0 %v4088, 64
        %v4170 = vpop.permute.xlu0 %4169
        %4171 = vrot.lane.b32.xlu0 %v4089, 64
        %v4172 = vpop.permute.xlu0 %4171
        %4173 = vrot.lane.b32.xlu0 %v4090, 64
        %v4174 = vpop.permute.xlu0 %4173
        %4175 = vrot.lane.b32.xlu0 %v4091, 64
        %v4176 = vpop.permute.xlu0 %4175
        %4177 = vrot.lane.b32.xlu0 %v4092, 64
        %v4178 = vpop.permute.xlu0 %4177
        %4179 = vrot.lane.b32.xlu0 %v4093, 64
        %v4180 = vpop.permute.xlu0 %4179
        %4181 = vrot.lane.b32.xlu0 %v4094, 64
        %v4182 = vpop.permute.xlu0 %4181
        %4183 = vrot.lane.b32.xlu0 %v4095, 64
        %v4184 = vpop.permute.xlu0 %4183
        %4185 = vrot.lane.b32.xlu0 %v4096, 64
        %v4186 = vpop.permute.xlu0 %4185
        %4187 = vrot.lane.b32.xlu0 %v4097, 64
        %v4188 = vpop.permute.xlu0 %4187
        %4189 = vrot.lane.b32.xlu0 %v4098, 64
        %v4190 = vpop.permute.xlu0 %4189
        %4191 = vrot.lane.b32.xlu0 %v4099, 64
        %v4192 = vpop.permute.xlu0 %4191
        %4193 = vrot.lane.b32.xlu0 %v4100, 64
        %v4194 = vpop.permute.xlu0 %4193
        %4195 = vrot.lane.b32.xlu0 %v4101, 64
        %v4196 = vpop.permute.xlu0 %4195
        %4197 = vrot.lane.b32.xlu0 %v4102, 64
        %v4198 = vpop.permute.xlu0 %4197
        %vm4231 = vcmask 654848
        %4232 = vst.msk [vmem:[#allocation3] sm:$0xff] %vm4231, %v4136
        %4233 = vst.msk [vmem:[#allocation3 + $0x10] sm:$0xff] %vm4231, %v4138
        %4234 = vst.msk [vmem:[#allocation3 + $0x20] sm:$0xff] %vm4231, %v4140
        %4235 = vst.msk [vmem:[#allocation3 + $0x30] sm:$0xff] %vm4231, %v4142
        %4236 = vst.msk [vmem:[#allocation3 + $0x40] sm:$0xff] %vm4231, %v4144
        %4237 = vst.msk [vmem:[#allocation3 + $0x50] sm:$0xff] %vm4231, %v4146
        %4238 = vst.msk [vmem:[#allocation3 + $0x60] sm:$0xff] %vm4231, %v4148
        %4239 = vst.msk [vmem:[#allocation3 + $0x70] sm:$0xff] %vm4231, %v4150
        %4240 = vst.msk [vmem:[#allocation3 + $0x80] sm:$0xff] %vm4231, %v4152
        %4241 = vst.msk [vmem:[#allocation3 + $0x90] sm:$0xff] %vm4231, %v4154
        %4242 = vst.msk [vmem:[#allocation3 + $0xa0] sm:$0xff] %vm4231, %v4156
        %4243 = vst.msk [vmem:[#allocation3 + $0xb0] sm:$0xff] %vm4231, %v4158
        %4244 = vst.msk [vmem:[#allocation3 + $0xc0] sm:$0xff] %vm4231, %v4160
        %4245 = vst.msk [vmem:[#allocation3 + $0xd0] sm:$0xff] %vm4231, %v4162
        %4246 = vst.msk [vmem:[#allocation3 + $0xe0] sm:$0xff] %vm4231, %v4164
        %4247 = vst.msk [vmem:[#allocation3 + $0xf0] sm:$0xff] %vm4231, %v4166
        %4248 = vst.msk [vmem:[#allocation3 + $0x100] sm:$0xff] %vm4231, %v4168
        %4249 = vst.msk [vmem:[#allocation3 + $0x110] sm:$0xff] %vm4231, %v4170
        %4250 = vst.msk [vmem:[#allocation3 + $0x120] sm:$0xff] %vm4231, %v4172
        %4251 = vst.msk [vmem:[#allocation3 + $0x130] sm:$0xff] %vm4231, %v4174
        %4252 = vst.msk [vmem:[#allocation3 + $0x140] sm:$0xff] %vm4231, %v4176
        %4253 = vst.msk [vmem:[#allocation3 + $0x150] sm:$0xff] %vm4231, %v4178
        %4254 = vst.msk [vmem:[#allocation3 + $0x160] sm:$0xff] %vm4231, %v4180
        %4255 = vst.msk [vmem:[#allocation3 + $0x170] sm:$0xff] %vm4231, %v4182
        %4256 = vst.msk [vmem:[#allocation3 + $0x180] sm:$0xff] %vm4231, %v4184
        %4257 = vst.msk [vmem:[#allocation3 + $0x190] sm:$0xff] %vm4231, %v4186
        %4258 = vst.msk [vmem:[#allocation3 + $0x1a0] sm:$0xff] %vm4231, %v4188
        %4259 = vst.msk [vmem:[#allocation3 + $0x1b0] sm:$0xff] %vm4231, %v4190
        %4260 = vst.msk [vmem:[#allocation3 + $0x1c0] sm:$0xff] %vm4231, %v4192
        %4261 = vst.msk [vmem:[#allocation3 + $0x1d0] sm:$0xff] %vm4231, %v4194
        %4262 = vst.msk [vmem:[#allocation3 + $0x1e0] sm:$0xff] %vm4231, %v4196
        %4263 = vst.msk [vmem:[#allocation3 + $0x1f0] sm:$0xff] %vm4231, %v4198
        %v4264 = vld [vmem:[%s545 + $0x2] sm:$0xff]
        %v4265 = vld [vmem:[%s545 + $0xa] sm:$0xff]
        %v4266 = vld [vmem:[%s545 + $0x1a] sm:$0xff]
        %v4267 = vld [vmem:[%s545 + $0x22] sm:$0xff]
        %v4268 = vld [vmem:[%s545 + $0x32] sm:$0xff]
        %v4269 = vld [vmem:[%s545 + $0x3a] sm:$0xff]
        %v4270 = vld [vmem:[%s545 + $0x4a] sm:$0xff]
        %v4271 = vld [vmem:[%s545 + $0x52] sm:$0xff]
        %v4272 = vld [vmem:[%s545 + $0x62] sm:$0xff]
        %v4273 = vld [vmem:[%s545 + $0x6a] sm:$0xff]
        %v4274 = vld [vmem:[%s545 + $0x7a] sm:$0xff]
        %v4275 = vld [vmem:[%s545 + $0x82] sm:$0xff]
        %v4276 = vld [vmem:[%s545 + $0x92] sm:$0xff]
        %v4277 = vld [vmem:[%s545 + $0x9a] sm:$0xff]
        %v4278 = vld [vmem:[%s545 + $0xaa] sm:$0xff]
        %v4279 = vld [vmem:[%s545 + $0xb2] sm:$0xff]
        %v4280 = vld [vmem:[%s545 + $0xc2] sm:$0xff]
        %v4281 = vld [vmem:[%s545 + $0xca] sm:$0xff]
        %v4282 = vld [vmem:[%s545 + $0xda] sm:$0xff]
        %v4283 = vld [vmem:[%s545 + $0xe2] sm:$0xff]
        %v4284 = vld [vmem:[%s545 + $0xf2] sm:$0xff]
        %v4285 = vld [vmem:[%s545 + $0xfa] sm:$0xff]
        %v4286 = vld [vmem:[%s545 + $0x10a] sm:$0xff]
        %v4287 = vld [vmem:[%s545 + $0x112] sm:$0xff]
        %v4288 = vld [vmem:[%s545 + $0x122] sm:$0xff]
        %v4289 = vld [vmem:[%s545 + $0x12a] sm:$0xff]
        %v4290 = vld [vmem:[%s545 + $0x13a] sm:$0xff]
        %v4291 = vld [vmem:[%s545 + $0x142] sm:$0xff]
        %v4292 = vld [vmem:[%s545 + $0x152] sm:$0xff]
        %v4293 = vld [vmem:[%s545 + $0x15a] sm:$0xff]
        %v4294 = vld [vmem:[%s545 + $0x16a] sm:$0xff]
        %v4295 = vld [vmem:[%s545 + $0x172] sm:$0xff]
        %4328 = vrot.lane.b32.xlu0 %v4264, 80
        %v4329 = vpop.permute.xlu0 %4328
        %4330 = vrot.lane.b32.xlu0 %v4265, 80
        %v4331 = vpop.permute.xlu0 %4330
        %4332 = vrot.lane.b32.xlu0 %v4266, 80
        %v4333 = vpop.permute.xlu0 %4332
        %4334 = vrot.lane.b32.xlu0 %v4267, 80
        %v4335 = vpop.permute.xlu0 %4334
        %4336 = vrot.lane.b32.xlu0 %v4268, 80
        %v4337 = vpop.permute.xlu0 %4336
        %4338 = vrot.lane.b32.xlu0 %v4269, 80
        %v4339 = vpop.permute.xlu0 %4338
        %4340 = vrot.lane.b32.xlu0 %v4270, 80
        %v4341 = vpop.permute.xlu0 %4340
        %4342 = vrot.lane.b32.xlu0 %v4271, 80
        %v4343 = vpop.permute.xlu0 %4342
        %4344 = vrot.lane.b32.xlu0 %v4272, 80
        %v4345 = vpop.permute.xlu0 %4344
        %4346 = vrot.lane.b32.xlu0 %v4273, 80
        %v4347 = vpop.permute.xlu0 %4346
        %4348 = vrot.lane.b32.xlu0 %v4274, 80
        %v4349 = vpop.permute.xlu0 %4348
        %4350 = vrot.lane.b32.xlu0 %v4275, 80
        %v4351 = vpop.permute.xlu0 %4350
        %4352 = vrot.lane.b32.xlu0 %v4276, 80
        %v4353 = vpop.permute.xlu0 %4352
        %4354 = vrot.lane.b32.xlu0 %v4277, 80
        %v4355 = vpop.permute.xlu0 %4354
        %4356 = vrot.lane.b32.xlu0 %v4278, 80
        %v4357 = vpop.permute.xlu0 %4356
        %4358 = vrot.lane.b32.xlu0 %v4279, 80
        %v4359 = vpop.permute.xlu0 %4358
        %4360 = vrot.lane.b32.xlu0 %v4280, 80
        %v4361 = vpop.permute.xlu0 %4360
        %4362 = vrot.lane.b32.xlu0 %v4281, 80
        %v4363 = vpop.permute.xlu0 %4362
        %4364 = vrot.lane.b32.xlu0 %v4282, 80
        %v4365 = vpop.permute.xlu0 %4364
        %4366 = vrot.lane.b32.xlu0 %v4283, 80
        %v4367 = vpop.permute.xlu0 %4366
        %4368 = vrot.lane.b32.xlu0 %v4284, 80
        %v4369 = vpop.permute.xlu0 %4368
        %4370 = vrot.lane.b32.xlu0 %v4285, 80
        %v4371 = vpop.permute.xlu0 %4370
        %4372 = vrot.lane.b32.xlu0 %v4286, 80
        %v4373 = vpop.permute.xlu0 %4372
        %4374 = vrot.lane.b32.xlu0 %v4287, 80
        %v4375 = vpop.permute.xlu0 %4374
        %4376 = vrot.lane.b32.xlu0 %v4288, 80
        %v4377 = vpop.permute.xlu0 %4376
        %4378 = vrot.lane.b32.xlu0 %v4289, 80
        %v4379 = vpop.permute.xlu0 %4378
        %4380 = vrot.lane.b32.xlu0 %v4290, 80
        %v4381 = vpop.permute.xlu0 %4380
        %4382 = vrot.lane.b32.xlu0 %v4291, 80
        %v4383 = vpop.permute.xlu0 %4382
        %4384 = vrot.lane.b32.xlu0 %v4292, 80
        %v4385 = vpop.permute.xlu0 %4384
        %4386 = vrot.lane.b32.xlu0 %v4293, 80
        %v4387 = vpop.permute.xlu0 %4386
        %4388 = vrot.lane.b32.xlu0 %v4294, 80
        %v4389 = vpop.permute.xlu0 %4388
        %4390 = vrot.lane.b32.xlu0 %v4295, 80
        %v4391 = vpop.permute.xlu0 %4390
        %vm4424 = vcmask 786048
        %4425 = vst.msk [vmem:[#allocation3] sm:$0xff] %vm4424, %v4329
        %4426 = vst.msk [vmem:[#allocation3 + $0x10] sm:$0xff] %vm4424, %v4331
        %4427 = vst.msk [vmem:[#allocation3 + $0x20] sm:$0xff] %vm4424, %v4333
        %4428 = vst.msk [vmem:[#allocation3 + $0x30] sm:$0xff] %vm4424, %v4335
        %4429 = vst.msk [vmem:[#allocation3 + $0x40] sm:$0xff] %vm4424, %v4337
        %4430 = vst.msk [vmem:[#allocation3 + $0x50] sm:$0xff] %vm4424, %v4339
        %4431 = vst.msk [vmem:[#allocation3 + $0x60] sm:$0xff] %vm4424, %v4341
        %4432 = vst.msk [vmem:[#allocation3 + $0x70] sm:$0xff] %vm4424, %v4343
        %4433 = vst.msk [vmem:[#allocation3 + $0x80] sm:$0xff] %vm4424, %v4345
        %4434 = vst.msk [vmem:[#allocation3 + $0x90] sm:$0xff] %vm4424, %v4347
        %4435 = vst.msk [vmem:[#allocation3 + $0xa0] sm:$0xff] %vm4424, %v4349
        %4436 = vst.msk [vmem:[#allocation3 + $0xb0] sm:$0xff] %vm4424, %v4351
        %4437 = vst.msk [vmem:[#allocation3 + $0xc0] sm:$0xff] %vm4424, %v4353
        %4438 = vst.msk [vmem:[#allocation3 + $0xd0] sm:$0xff] %vm4424, %v4355
        %4439 = vst.msk [vmem:[#allocation3 + $0xe0] sm:$0xff] %vm4424, %v4357
        %4440 = vst.msk [vmem:[#allocation3 + $0xf0] sm:$0xff] %vm4424, %v4359
        %4441 = vst.msk [vmem:[#allocation3 + $0x100] sm:$0xff] %vm4424, %v4361
        %4442 = vst.msk [vmem:[#allocation3 + $0x110] sm:$0xff] %vm4424, %v4363
        %4443 = vst.msk [vmem:[#allocation3 + $0x120] sm:$0xff] %vm4424, %v4365
        %4444 = vst.msk [vmem:[#allocation3 + $0x130] sm:$0xff] %vm4424, %v4367
        %4445 = vst.msk [vmem:[#allocation3 + $0x140] sm:$0xff] %vm4424, %v4369
        %4446 = vst.msk [vmem:[#allocation3 + $0x150] sm:$0xff] %vm4424, %v4371
        %4447 = vst.msk [vmem:[#allocation3 + $0x160] sm:$0xff] %vm4424, %v4373
        %4448 = vst.msk [vmem:[#allocation3 + $0x170] sm:$0xff] %vm4424, %v4375
        %4449 = vst.msk [vmem:[#allocation3 + $0x180] sm:$0xff] %vm4424, %v4377
        %4450 = vst.msk [vmem:[#allocation3 + $0x190] sm:$0xff] %vm4424, %v4379
        %4451 = vst.msk [vmem:[#allocation3 + $0x1a0] sm:$0xff] %vm4424, %v4381
        %4452 = vst.msk [vmem:[#allocation3 + $0x1b0] sm:$0xff] %vm4424, %v4383
        %4453 = vst.msk [vmem:[#allocation3 + $0x1c0] sm:$0xff] %vm4424, %v4385
        %4454 = vst.msk [vmem:[#allocation3 + $0x1d0] sm:$0xff] %vm4424, %v4387
        %4455 = vst.msk [vmem:[#allocation3 + $0x1e0] sm:$0xff] %vm4424, %v4389
        %4456 = vst.msk [vmem:[#allocation3 + $0x1f0] sm:$0xff] %vm4424, %v4391
        %v4457 = vld [vmem:[%s1674] sm:$0xff]
        %v4458 = vld [vmem:[%s1674 + $0x8] sm:$0xff]
        %v4459 = vld [vmem:[%s1674 + $0x18] sm:$0xff]
        %v4460 = vld [vmem:[%s1674 + $0x20] sm:$0xff]
        %v4461 = vld [vmem:[%s1674 + $0x30] sm:$0xff]
        %v4462 = vld [vmem:[%s1674 + $0x38] sm:$0xff]
        %v4463 = vld [vmem:[%s1674 + $0x48] sm:$0xff]
        %v4464 = vld [vmem:[%s1674 + $0x50] sm:$0xff]
        %v4465 = vld [vmem:[%s1674 + $0x60] sm:$0xff]
        %v4466 = vld [vmem:[%s1674 + $0x68] sm:$0xff]
        %v4467 = vld [vmem:[%s1674 + $0x78] sm:$0xff]
        %v4468 = vld [vmem:[%s1674 + $0x80] sm:$0xff]
        %v4469 = vld [vmem:[%s1674 + $0x90] sm:$0xff]
        %v4470 = vld [vmem:[%s1674 + $0x98] sm:$0xff]
        %v4471 = vld [vmem:[%s1674 + $0xa8] sm:$0xff]
        %v4472 = vld [vmem:[%s1674 + $0xb0] sm:$0xff]
        %v4473 = vld [vmem:[%s1674 + $0xc0] sm:$0xff]
        %v4474 = vld [vmem:[%s1674 + $0xc8] sm:$0xff]
        %v4475 = vld [vmem:[%s1674 + $0xd8] sm:$0xff]
        %v4476 = vld [vmem:[%s1674 + $0xe0] sm:$0xff]
        %v4477 = vld [vmem:[%s1674 + $0xf0] sm:$0xff]
        %v4478 = vld [vmem:[%s1674 + $0xf8] sm:$0xff]
        %v4479 = vld [vmem:[%s1674 + $0x108] sm:$0xff]
        %v4480 = vld [vmem:[%s1674 + $0x110] sm:$0xff]
        %v4481 = vld [vmem:[%s1674 + $0x120] sm:$0xff]
        %v4482 = vld [vmem:[%s1674 + $0x128] sm:$0xff]
        %v4483 = vld [vmem:[%s1674 + $0x138] sm:$0xff]
        %v4484 = vld [vmem:[%s1674 + $0x140] sm:$0xff]
        %v4485 = vld [vmem:[%s1674 + $0x150] sm:$0xff]
        %v4486 = vld [vmem:[%s1674 + $0x158] sm:$0xff]
        %v4487 = vld [vmem:[%s1674 + $0x168] sm:$0xff]
        %v4488 = vld [vmem:[%s1674 + $0x170] sm:$0xff]
        %4521 = vrot.lane.b32.xlu0 %v4457, 96
        %v4522 = vpop.permute.xlu0 %4521
        %4523 = vrot.lane.b32.xlu0 %v4458, 96
        %v4524 = vpop.permute.xlu0 %4523
        %4525 = vrot.lane.b32.xlu0 %v4459, 96
        %v4526 = vpop.permute.xlu0 %4525
        %4527 = vrot.lane.b32.xlu0 %v4460, 96
        %v4528 = vpop.permute.xlu0 %4527
        %4529 = vrot.lane.b32.xlu0 %v4461, 96
        %v4530 = vpop.permute.xlu0 %4529
        %4531 = vrot.lane.b32.xlu0 %v4462, 96
        %v4532 = vpop.permute.xlu0 %4531
        %4533 = vrot.lane.b32.xlu0 %v4463, 96
        %v4534 = vpop.permute.xlu0 %4533
        %4535 = vrot.lane.b32.xlu0 %v4464, 96
        %v4536 = vpop.permute.xlu0 %4535
        %4537 = vrot.lane.b32.xlu0 %v4465, 96
        %v4538 = vpop.permute.xlu0 %4537
        %4539 = vrot.lane.b32.xlu0 %v4466, 96
        %v4540 = vpop.permute.xlu0 %4539
        %4541 = vrot.lane.b32.xlu0 %v4467, 96
        %v4542 = vpop.permute.xlu0 %4541
        %4543 = vrot.lane.b32.xlu0 %v4468, 96
        %v4544 = vpop.permute.xlu0 %4543
        %4545 = vrot.lane.b32.xlu0 %v4469, 96
        %v4546 = vpop.permute.xlu0 %4545
        %4547 = vrot.lane.b32.xlu0 %v4470, 96
        %v4548 = vpop.permute.xlu0 %4547
        %4549 = vrot.lane.b32.xlu0 %v4471, 96
        %v4550 = vpop.permute.xlu0 %4549
        %4551 = vrot.lane.b32.xlu0 %v4472, 96
        %v4552 = vpop.permute.xlu0 %4551
        %4553 = vrot.lane.b32.xlu0 %v4473, 96
        %v4554 = vpop.permute.xlu0 %4553
        %4555 = vrot.lane.b32.xlu0 %v4474, 96
        %v4556 = vpop.permute.xlu0 %4555
        %4557 = vrot.lane.b32.xlu0 %v4475, 96
        %v4558 = vpop.permute.xlu0 %4557
        %4559 = vrot.lane.b32.xlu0 %v4476, 96
        %v4560 = vpop.permute.xlu0 %4559
        %4561 = vrot.lane.b32.xlu0 %v4477, 96
        %v4562 = vpop.permute.xlu0 %4561
        %4563 = vrot.lane.b32.xlu0 %v4478, 96
        %v4564 = vpop.permute.xlu0 %4563
        %4565 = vrot.lane.b32.xlu0 %v4479, 96
        %v4566 = vpop.permute.xlu0 %4565
        %4567 = vrot.lane.b32.xlu0 %v4480, 96
        %v4568 = vpop.permute.xlu0 %4567
        %4569 = vrot.lane.b32.xlu0 %v4481, 96
        %v4570 = vpop.permute.xlu0 %4569
        %4571 = vrot.lane.b32.xlu0 %v4482, 96
        %v4572 = vpop.permute.xlu0 %4571
        %4573 = vrot.lane.b32.xlu0 %v4483, 96
        %v4574 = vpop.permute.xlu0 %4573
        %4575 = vrot.lane.b32.xlu0 %v4484, 96
        %v4576 = vpop.permute.xlu0 %4575
        %4577 = vrot.lane.b32.xlu0 %v4485, 96
        %v4578 = vpop.permute.xlu0 %4577
        %4579 = vrot.lane.b32.xlu0 %v4486, 96
        %v4580 = vpop.permute.xlu0 %4579
        %4581 = vrot.lane.b32.xlu0 %v4487, 96
        %v4582 = vpop.permute.xlu0 %4581
        %4583 = vrot.lane.b32.xlu0 %v4488, 96
        %v4584 = vpop.permute.xlu0 %4583
        %vm4617 = vcmask 917248
        %4618 = vst.msk [vmem:[#allocation3] sm:$0xff] %vm4617, %v4522
        %4619 = vst.msk [vmem:[#allocation3 + $0x10] sm:$0xff] %vm4617, %v4524
        %4620 = vst.msk [vmem:[#allocation3 + $0x20] sm:$0xff] %vm4617, %v4526
        %4621 = vst.msk [vmem:[#allocation3 + $0x30] sm:$0xff] %vm4617, %v4528
        %4622 = vst.msk [vmem:[#allocation3 + $0x40] sm:$0xff] %vm4617, %v4530
        %4623 = vst.msk [vmem:[#allocation3 + $0x50] sm:$0xff] %vm4617, %v4532
        %4624 = vst.msk [vmem:[#allocation3 + $0x60] sm:$0xff] %vm4617, %v4534
        %4625 = vst.msk [vmem:[#allocation3 + $0x70] sm:$0xff] %vm4617, %v4536
        %4626 = vst.msk [vmem:[#allocation3 + $0x80] sm:$0xff] %vm4617, %v4538
        %4627 = vst.msk [vmem:[#allocation3 + $0x90] sm:$0xff] %vm4617, %v4540
        %4628 = vst.msk [vmem:[#allocation3 + $0xa0] sm:$0xff] %vm4617, %v4542
        %4629 = vst.msk [vmem:[#allocation3 + $0xb0] sm:$0xff] %vm4617, %v4544
        %4630 = vst.msk [vmem:[#allocation3 + $0xc0] sm:$0xff] %vm4617, %v4546
        %4631 = vst.msk [vmem:[#allocation3 + $0xd0] sm:$0xff] %vm4617, %v4548
        %4632 = vst.msk [vmem:[#allocation3 + $0xe0] sm:$0xff] %vm4617, %v4550
        %4633 = vst.msk [vmem:[#allocation3 + $0xf0] sm:$0xff] %vm4617, %v4552
        %4634 = vst.msk [vmem:[#allocation3 + $0x100] sm:$0xff] %vm4617, %v4554
        %4635 = vst.msk [vmem:[#allocation3 + $0x110] sm:$0xff] %vm4617, %v4556
        %4636 = vst.msk [vmem:[#allocation3 + $0x120] sm:$0xff] %vm4617, %v4558
        %4637 = vst.msk [vmem:[#allocation3 + $0x130] sm:$0xff] %vm4617, %v4560
        %4638 = vst.msk [vmem:[#allocation3 + $0x140] sm:$0xff] %vm4617, %v4562
        %4639 = vst.msk [vmem:[#allocation3 + $0x150] sm:$0xff] %vm4617, %v4564
        %4640 = vst.msk [vmem:[#allocation3 + $0x160] sm:$0xff] %vm4617, %v4566
        %4641 = vst.msk [vmem:[#allocation3 + $0x170] sm:$0xff] %vm4617, %v4568
        %4642 = vst.msk [vmem:[#allocation3 + $0x180] sm:$0xff] %vm4617, %v4570
        %4643 = vst.msk [vmem:[#allocation3 + $0x190] sm:$0xff] %vm4617, %v4572
        %4644 = vst.msk [vmem:[#allocation3 + $0x1a0] sm:$0xff] %vm4617, %v4574
        %4645 = vst.msk [vmem:[#allocation3 + $0x1b0] sm:$0xff] %vm4617, %v4576
        %4646 = vst.msk [vmem:[#allocation3 + $0x1c0] sm:$0xff] %vm4617, %v4578
        %4647 = vst.msk [vmem:[#allocation3 + $0x1d0] sm:$0xff] %vm4617, %v4580
        %4648 = vst.msk [vmem:[#allocation3 + $0x1e0] sm:$0xff] %vm4617, %v4582
        %4649 = vst.msk [vmem:[#allocation3 + $0x1f0] sm:$0xff] %vm4617, %v4584
        %v4650 = vld [vmem:[%s1674 + $0x1] sm:$0xff]
        %v4651 = vld [vmem:[%s1674 + $0x9] sm:$0xff]
        %v4652 = vld [vmem:[%s1674 + $0x19] sm:$0xff]
        %v4653 = vld [vmem:[%s1674 + $0x21] sm:$0xff]
        %v4654 = vld [vmem:[%s1674 + $0x31] sm:$0xff]
        %v4655 = vld [vmem:[%s1674 + $0x39] sm:$0xff]
        %v4656 = vld [vmem:[%s1674 + $0x49] sm:$0xff]
        %v4657 = vld [vmem:[%s1674 + $0x51] sm:$0xff]
        %v4658 = vld [vmem:[%s1674 + $0x61] sm:$0xff]
        %v4659 = vld [vmem:[%s1674 + $0x69] sm:$0xff]
        %v4660 = vld [vmem:[%s1674 + $0x79] sm:$0xff]
        %v4661 = vld [vmem:[%s1674 + $0x81] sm:$0xff]
        %v4662 = vld [vmem:[%s1674 + $0x91] sm:$0xff]
        %v4663 = vld [vmem:[%s1674 + $0x99] sm:$0xff]
        %v4664 = vld [vmem:[%s1674 + $0xa9] sm:$0xff]
        %v4665 = vld [vmem:[%s1674 + $0xb1] sm:$0xff]
        %v4666 = vld [vmem:[%s1674 + $0xc1] sm:$0xff]
        %v4667 = vld [vmem:[%s1674 + $0xc9] sm:$0xff]
        %v4668 = vld [vmem:[%s1674 + $0xd9] sm:$0xff]
        %v4669 = vld [vmem:[%s1674 + $0xe1] sm:$0xff]
        %v4670 = vld [vmem:[%s1674 + $0xf1] sm:$0xff]
        %v4671 = vld [vmem:[%s1674 + $0xf9] sm:$0xff]
        %v4672 = vld [vmem:[%s1674 + $0x109] sm:$0xff]
        %v4673 = vld [vmem:[%s1674 + $0x111] sm:$0xff]
        %v4674 = vld [vmem:[%s1674 + $0x121] sm:$0xff]
        %v4675 = vld [vmem:[%s1674 + $0x129] sm:$0xff]
        %v4676 = vld [vmem:[%s1674 + $0x139] sm:$0xff]
        %v4677 = vld [vmem:[%s1674 + $0x141] sm:$0xff]
        %v4678 = vld [vmem:[%s1674 + $0x151] sm:$0xff]
        %v4679 = vld [vmem:[%s1674 + $0x159] sm:$0xff]
        %v4680 = vld [vmem:[%s1674 + $0x169] sm:$0xff]
        %v4681 = vld [vmem:[%s1674 + $0x171] sm:$0xff]
        %4714 = vrot.lane.b32.xlu0 %v4650, 112
        %v4715 = vpop.permute.xlu0 %4714
        %4716 = vrot.lane.b32.xlu0 %v4651, 112
        %v4717 = vpop.permute.xlu0 %4716
        %4718 = vrot.lane.b32.xlu0 %v4652, 112
        %v4719 = vpop.permute.xlu0 %4718
        %4720 = vrot.lane.b32.xlu0 %v4653, 112
        %v4721 = vpop.permute.xlu0 %4720
        %4722 = vrot.lane.b32.xlu0 %v4654, 112
        %v4723 = vpop.permute.xlu0 %4722
        %4724 = vrot.lane.b32.xlu0 %v4655, 112
        %v4725 = vpop.permute.xlu0 %4724
        %4726 = vrot.lane.b32.xlu0 %v4656, 112
        %v4727 = vpop.permute.xlu0 %4726
        %4728 = vrot.lane.b32.xlu0 %v4657, 112
        %v4729 = vpop.permute.xlu0 %4728
        %4730 = vrot.lane.b32.xlu0 %v4658, 112
        %v4731 = vpop.permute.xlu0 %4730
        %4732 = vrot.lane.b32.xlu0 %v4659, 112
        %v4733 = vpop.permute.xlu0 %4732
        %4734 = vrot.lane.b32.xlu0 %v4660, 112
        %v4735 = vpop.permute.xlu0 %4734
        %4736 = vrot.lane.b32.xlu0 %v4661, 112
        %v4737 = vpop.permute.xlu0 %4736
        %4738 = vrot.lane.b32.xlu0 %v4662, 112
        %v4739 = vpop.permute.xlu0 %4738
        %4740 = vrot.lane.b32.xlu0 %v4663, 112
        %v4741 = vpop.permute.xlu0 %4740
        %4742 = vrot.lane.b32.xlu0 %v4664, 112
        %v4743 = vpop.permute.xlu0 %4742
        %4744 = vrot.lane.b32.xlu0 %v4665, 112
        %v4745 = vpop.permute.xlu0 %4744
        %4746 = vrot.lane.b32.xlu0 %v4666, 112
        %v4747 = vpop.permute.xlu0 %4746
        %4748 = vrot.lane.b32.xlu0 %v4667, 112
        %v4749 = vpop.permute.xlu0 %4748
        %4750 = vrot.lane.b32.xlu0 %v4668, 112
        %v4751 = vpop.permute.xlu0 %4750
        %4752 = vrot.lane.b32.xlu0 %v4669, 112
        %v4753 = vpop.permute.xlu0 %4752
        %4754 = vrot.lane.b32.xlu0 %v4670, 112
        %v4755 = vpop.permute.xlu0 %4754
        %4756 = vrot.lane.b32.xlu0 %v4671, 112
        %v4757 = vpop.permute.xlu0 %4756
        %4758 = vrot.lane.b32.xlu0 %v4672, 112
        %v4759 = vpop.permute.xlu0 %4758
        %4760 = vrot.lane.b32.xlu0 %v4673, 112
        %v4761 = vpop.permute.xlu0 %4760
        %4762 = vrot.lane.b32.xlu0 %v4674, 112
        %v4763 = vpop.permute.xlu0 %4762
        %4764 = vrot.lane.b32.xlu0 %v4675, 112
        %v4765 = vpop.permute.xlu0 %4764
        %4766 = vrot.lane.b32.xlu0 %v4676, 112
        %v4767 = vpop.permute.xlu0 %4766
        %4768 = vrot.lane.b32.xlu0 %v4677, 112
        %v4769 = vpop.permute.xlu0 %4768
        %4770 = vrot.lane.b32.xlu0 %v4678, 112
        %v4771 = vpop.permute.xlu0 %4770
        %4772 = vrot.lane.b32.xlu0 %v4679, 112
        %v4773 = vpop.permute.xlu0 %4772
        %4774 = vrot.lane.b32.xlu0 %v4680, 112
        %v4775 = vpop.permute.xlu0 %4774
        %4776 = vrot.lane.b32.xlu0 %v4681, 112
        %v4777 = vpop.permute.xlu0 %4776
        %vm4810 = vcmask 1048448
        %4811 = vst.msk [vmem:[#allocation3] sm:$0xff] %vm4810, %v4715
        %4812 = vst.msk [vmem:[#allocation3 + $0x10] sm:$0xff] %vm4810, %v4717
        %4813 = vst.msk [vmem:[#allocation3 + $0x20] sm:$0xff] %vm4810, %v4719
        %4814 = vst.msk [vmem:[#allocation3 + $0x30] sm:$0xff] %vm4810, %v4721
        %4815 = vst.msk [vmem:[#allocation3 + $0x40] sm:$0xff] %vm4810, %v4723
        %4816 = vst.msk [vmem:[#allocation3 + $0x50] sm:$0xff] %vm4810, %v4725
        %4817 = vst.msk [vmem:[#allocation3 + $0x60] sm:$0xff] %vm4810, %v4727
        %4818 = vst.msk [vmem:[#allocation3 + $0x70] sm:$0xff] %vm4810, %v4729
        %4819 = vst.msk [vmem:[#allocation3 + $0x80] sm:$0xff] %vm4810, %v4731
        %4820 = vst.msk [vmem:[#allocation3 + $0x90] sm:$0xff] %vm4810, %v4733
        %4821 = vst.msk [vmem:[#allocation3 + $0xa0] sm:$0xff] %vm4810, %v4735
        %4822 = vst.msk [vmem:[#allocation3 + $0xb0] sm:$0xff] %vm4810, %v4737
        %4823 = vst.msk [vmem:[#allocation3 + $0xc0] sm:$0xff] %vm4810, %v4739
        %4824 = vst.msk [vmem:[#allocation3 + $0xd0] sm:$0xff] %vm4810, %v4741
        %4825 = vst.msk [vmem:[#allocation3 + $0xe0] sm:$0xff] %vm4810, %v4743
        %4826 = vst.msk [vmem:[#allocation3 + $0xf0] sm:$0xff] %vm4810, %v4745
        %4827 = vst.msk [vmem:[#allocation3 + $0x100] sm:$0xff] %vm4810, %v4747
        %4828 = vst.msk [vmem:[#allocation3 + $0x110] sm:$0xff] %vm4810, %v4749
        %4829 = vst.msk [vmem:[#allocation3 + $0x120] sm:$0xff] %vm4810, %v4751
        %4830 = vst.msk [vmem:[#allocation3 + $0x130] sm:$0xff] %vm4810, %v4753
        %4831 = vst.msk [vmem:[#allocation3 + $0x140] sm:$0xff] %vm4810, %v4755
        %4832 = vst.msk [vmem:[#allocation3 + $0x150] sm:$0xff] %vm4810, %v4757
        %4833 = vst.msk [vmem:[#allocation3 + $0x160] sm:$0xff] %vm4810, %v4759
        %4834 = vst.msk [vmem:[#allocation3 + $0x170] sm:$0xff] %vm4810, %v4761
        %4835 = vst.msk [vmem:[#allocation3 + $0x180] sm:$0xff] %vm4810, %v4763
        %4836 = vst.msk [vmem:[#allocation3 + $0x190] sm:$0xff] %vm4810, %v4765
        %4837 = vst.msk [vmem:[#allocation3 + $0x1a0] sm:$0xff] %vm4810, %v4767
        %4838 = vst.msk [vmem:[#allocation3 + $0x1b0] sm:$0xff] %vm4810, %v4769
        %4839 = vst.msk [vmem:[#allocation3 + $0x1c0] sm:$0xff] %vm4810, %v4771
        %4840 = vst.msk [vmem:[#allocation3 + $0x1d0] sm:$0xff] %vm4810, %v4773
        %4841 = vst.msk [vmem:[#allocation3 + $0x1e0] sm:$0xff] %vm4810, %v4775
        %4842 = vst.msk [vmem:[#allocation3 + $0x1f0] sm:$0xff] %vm4810, %v4777
        %v4843 = vld [vmem:[%s1674 + $0x2] sm:$0xff]
        %v4844 = vld [vmem:[%s1674 + $0xa] sm:$0xff]
        %v4845 = vld [vmem:[%s1674 + $0x1a] sm:$0xff]
        %v4846 = vld [vmem:[%s1674 + $0x22] sm:$0xff]
        %v4847 = vld [vmem:[%s1674 + $0x32] sm:$0xff]
        %v4848 = vld [vmem:[%s1674 + $0x3a] sm:$0xff]
        %v4849 = vld [vmem:[%s1674 + $0x4a] sm:$0xff]
        %v4850 = vld [vmem:[%s1674 + $0x52] sm:$0xff]
        %v4851 = vld [vmem:[%s1674 + $0x62] sm:$0xff]
        %v4852 = vld [vmem:[%s1674 + $0x6a] sm:$0xff]
        %v4853 = vld [vmem:[%s1674 + $0x7a] sm:$0xff]
        %v4854 = vld [vmem:[%s1674 + $0x82] sm:$0xff]
        %v4855 = vld [vmem:[%s1674 + $0x92] sm:$0xff]
        %v4856 = vld [vmem:[%s1674 + $0x9a] sm:$0xff]
        %v4857 = vld [vmem:[%s1674 + $0xaa] sm:$0xff]
        %v4858 = vld [vmem:[%s1674 + $0xb2] sm:$0xff]
        %v4859 = vld [vmem:[%s1674 + $0xc2] sm:$0xff]
        %v4860 = vld [vmem:[%s1674 + $0xca] sm:$0xff]
        %v4861 = vld [vmem:[%s1674 + $0xda] sm:$0xff]
        %v4862 = vld [vmem:[%s1674 + $0xe2] sm:$0xff]
        %v4863 = vld [vmem:[%s1674 + $0xf2] sm:$0xff]
        %v4864 = vld [vmem:[%s1674 + $0xfa] sm:$0xff]
        %v4865 = vld [vmem:[%s1674 + $0x10a] sm:$0xff]
        %v4866 = vld [vmem:[%s1674 + $0x112] sm:$0xff]
        %v4867 = vld [vmem:[%s1674 + $0x122] sm:$0xff]
        %v4868 = vld [vmem:[%s1674 + $0x12a] sm:$0xff]
        %v4869 = vld [vmem:[%s1674 + $0x13a] sm:$0xff]
        %v4870 = vld [vmem:[%s1674 + $0x142] sm:$0xff]
        %v4871 = vld [vmem:[%s1674 + $0x152] sm:$0xff]
        %v4872 = vld [vmem:[%s1674 + $0x15a] sm:$0xff]
        %v4873 = vld [vmem:[%s1674 + $0x16a] sm:$0xff]
        %v4874 = vld [vmem:[%s1674 + $0x172] sm:$0xff]
        %4875 = vst.msk [vmem:[#allocation3 + $0x8] sm:$0xff] %vm3459, %v4843
        %4876 = vst.msk [vmem:[#allocation3 + $0x18] sm:$0xff] %vm3459, %v4844
        %4877 = vst.msk [vmem:[#allocation3 + $0x28] sm:$0xff] %vm3459, %v4845
        %4878 = vst.msk [vmem:[#allocation3 + $0x38] sm:$0xff] %vm3459, %v4846
        %4879 = vst.msk [vmem:[#allocation3 + $0x48] sm:$0xff] %vm3459, %v4847
        %4880 = vst.msk [vmem:[#allocation3 + $0x58] sm:$0xff] %vm3459, %v4848
        %4881 = vst.msk [vmem:[#allocation3 + $0x68] sm:$0xff] %vm3459, %v4849
        %4882 = vst.msk [vmem:[#allocation3 + $0x78] sm:$0xff] %vm3459, %v4850
        %4883 = vst.msk [vmem:[#allocation3 + $0x88] sm:$0xff] %vm3459, %v4851
        %4884 = vst.msk [vmem:[#allocation3 + $0x98] sm:$0xff] %vm3459, %v4852
        %4885 = vst.msk [vmem:[#allocation3 + $0xa8] sm:$0xff] %vm3459, %v4853
        %4886 = vst.msk [vmem:[#allocation3 + $0xb8] sm:$0xff] %vm3459, %v4854
        %4887 = vst.msk [vmem:[#allocation3 + $0xc8] sm:$0xff] %vm3459, %v4855
        %4888 = vst.msk [vmem:[#allocation3 + $0xd8] sm:$0xff] %vm3459, %v4856
        %4889 = vst.msk [vmem:[#allocation3 + $0xe8] sm:$0xff] %vm3459, %v4857
        %4890 = vst.msk [vmem:[#allocation3 + $0xf8] sm:$0xff] %vm3459, %v4858
        %4891 = vst.msk [vmem:[#allocation3 + $0x108] sm:$0xff] %vm3459, %v4859
        %4892 = vst.msk [vmem:[#allocation3 + $0x118] sm:$0xff] %vm3459, %v4860
        %4893 = vst.msk [vmem:[#allocation3 + $0x128] sm:$0xff] %vm3459, %v4861
        %4894 = vst.msk [vmem:[#allocation3 + $0x138] sm:$0xff] %vm3459, %v4862
        %4895 = vst.msk [vmem:[#allocation3 + $0x148] sm:$0xff] %vm3459, %v4863
        %4896 = vst.msk [vmem:[#allocation3 + $0x158] sm:$0xff] %vm3459, %v4864
        %4897 = vst.msk [vmem:[#allocation3 + $0x168] sm:$0xff] %vm3459, %v4865
        %4898 = vst.msk [vmem:[#allocation3 + $0x178] sm:$0xff] %vm3459, %v4866
        %4899 = vst.msk [vmem:[#allocation3 + $0x188] sm:$0xff] %vm3459, %v4867
        %4900 = vst.msk [vmem:[#allocation3 + $0x198] sm:$0xff] %vm3459, %v4868
        %4901 = vst.msk [vmem:[#allocation3 + $0x1a8] sm:$0xff] %vm3459, %v4869
        %4902 = vst.msk [vmem:[#allocation3 + $0x1b8] sm:$0xff] %vm3459, %v4870
        %4903 = vst.msk [vmem:[#allocation3 + $0x1c8] sm:$0xff] %vm3459, %v4871
        %4904 = vst.msk [vmem:[#allocation3 + $0x1d8] sm:$0xff] %vm3459, %v4872
        %4905 = vst.msk [vmem:[#allocation3 + $0x1e8] sm:$0xff] %vm3459, %v4873
        %4906 = vst.msk [vmem:[#allocation3 + $0x1f8] sm:$0xff] %vm3459, %v4874
        %v4907 = vld [vmem:[#allocation3] sm:$0xff]
        %v4908 = vld [vmem:[#allocation3 + $0x8] sm:$0xff]
        %v4909 = vld [vmem:[#allocation3 + $0x10] sm:$0xff]
        %v4910 = vld [vmem:[#allocation3 + $0x18] sm:$0xff]
        %v4911 = vld [vmem:[#allocation3 + $0x20] sm:$0xff]
        %v4912 = vld [vmem:[#allocation3 + $0x28] sm:$0xff]
        %v4913 = vld [vmem:[#allocation3 + $0x30] sm:$0xff]
        %v4914 = vld [vmem:[#allocation3 + $0x38] sm:$0xff]
        %v4915 = vld [vmem:[#allocation3 + $0x40] sm:$0xff]
        %v4916 = vld [vmem:[#allocation3 + $0x48] sm:$0xff]
        %v4917 = vld [vmem:[#allocation3 + $0x50] sm:$0xff]
        %v4918 = vld [vmem:[#allocation3 + $0x58] sm:$0xff]
        %v4919 = vld [vmem:[#allocation3 + $0x60] sm:$0xff]
        %v4920 = vld [vmem:[#allocation3 + $0x68] sm:$0xff]
        %v4921 = vld [vmem:[#allocation3 + $0x70] sm:$0xff]
        %v4922 = vld [vmem:[#allocation3 + $0x78] sm:$0xff]
        %v4923 = vld [vmem:[#allocation3 + $0x80] sm:$0xff]
        %v4924 = vld [vmem:[#allocation3 + $0x88] sm:$0xff]
        %v4925 = vld [vmem:[#allocation3 + $0x90] sm:$0xff]
        %v4926 = vld [vmem:[#allocation3 + $0x98] sm:$0xff]
        %v4927 = vld [vmem:[#allocation3 + $0xa0] sm:$0xff]
        %v4928 = vld [vmem:[#allocation3 + $0xa8] sm:$0xff]
        %v4929 = vld [vmem:[#allocation3 + $0xb0] sm:$0xff]
        %v4930 = vld [vmem:[#allocation3 + $0xb8] sm:$0xff]
        %v4931 = vld [vmem:[#allocation3 + $0xc0] sm:$0xff]
        %v4932 = vld [vmem:[#allocation3 + $0xc8] sm:$0xff]
        %v4933 = vld [vmem:[#allocation3 + $0xd0] sm:$0xff]
        %v4934 = vld [vmem:[#allocation3 + $0xd8] sm:$0xff]
        %v4935 = vld [vmem:[#allocation3 + $0xe0] sm:$0xff]
        %v4936 = vld [vmem:[#allocation3 + $0xe8] sm:$0xff]
        %v4937 = vld [vmem:[#allocation3 + $0xf0] sm:$0xff]
        %v4938 = vld [vmem:[#allocation3 + $0xf8] sm:$0xff]
        %v4939 = vld [vmem:[#allocation3 + $0x100] sm:$0xff]
        %v4940 = vld [vmem:[#allocation3 + $0x108] sm:$0xff]
        %v4941 = vld [vmem:[#allocation3 + $0x110] sm:$0xff]
        %v4942 = vld [vmem:[#allocation3 + $0x118] sm:$0xff]
        %v4943 = vld [vmem:[#allocation3 + $0x120] sm:$0xff]
        %v4944 = vld [vmem:[#allocation3 + $0x128] sm:$0xff]
        %v4945 = vld [vmem:[#allocation3 + $0x130] sm:$0xff]
        %v4946 = vld [vmem:[#allocation3 + $0x138] sm:$0xff]
        %v4947 = vld [vmem:[#allocation3 + $0x140] sm:$0xff]
        %v4948 = vld [vmem:[#allocation3 + $0x148] sm:$0xff]
        %v4949 = vld [vmem:[#allocation3 + $0x150] sm:$0xff]
        %v4950 = vld [vmem:[#allocation3 + $0x158] sm:$0xff]
        %v4951 = vld [vmem:[#allocation3 + $0x160] sm:$0xff]
        %v4952 = vld [vmem:[#allocation3 + $0x168] sm:$0xff]
        %v4953 = vld [vmem:[#allocation3 + $0x170] sm:$0xff]
        %v4954 = vld [vmem:[#allocation3 + $0x178] sm:$0xff]
        %v4955 = vld [vmem:[#allocation3 + $0x180] sm:$0xff]
        %v4956 = vld [vmem:[#allocation3 + $0x188] sm:$0xff]
        %v4957 = vld [vmem:[#allocation3 + $0x190] sm:$0xff]
        %v4958 = vld [vmem:[#allocation3 + $0x198] sm:$0xff]
        %v4959 = vld [vmem:[#allocation3 + $0x1a0] sm:$0xff]
        %v4960 = vld [vmem:[#allocation3 + $0x1a8] sm:$0xff]
        %v4961 = vld [vmem:[#allocation3 + $0x1b0] sm:$0xff]
        %v4962 = vld [vmem:[#allocation3 + $0x1b8] sm:$0xff]
        %v4963 = vld [vmem:[#allocation3 + $0x1c0] sm:$0xff]
        %v4964 = vld [vmem:[#allocation3 + $0x1c8] sm:$0xff]
        %v4965 = vld [vmem:[#allocation3 + $0x1d0] sm:$0xff]
        %v4966 = vld [vmem:[#allocation3 + $0x1d8] sm:$0xff]
        %v4967 = vld [vmem:[#allocation3 + $0x1e0] sm:$0xff]
        %v4968 = vld [vmem:[#allocation3 + $0x1e8] sm:$0xff]
        %v4969 = vld [vmem:[#allocation3 + $0x1f0] sm:$0xff]
        %v4970 = vld [vmem:[#allocation3 + $0x1f8] sm:$0xff]
        %v4971 = vld [vmem:[#allocation13] sm:$0xff]
        %v4972 = vld [vmem:[#allocation13 + $0x8] sm:$0xff]
        %v4973 = vld [vmem:[#allocation13 + $0x10] sm:$0xff]
        %v4974 = vld [vmem:[#allocation13 + $0x18] sm:$0xff]
        %v4975 = vld [vmem:[#allocation13 + $0x20] sm:$0xff]
        %v4976 = vld [vmem:[#allocation13 + $0x28] sm:$0xff]
        %v4977 = vld [vmem:[#allocation13 + $0x30] sm:$0xff]
        %v4978 = vld [vmem:[#allocation13 + $0x38] sm:$0xff]
        %v4979 = vld [vmem:[#allocation13 + $0x40] sm:$0xff]
        %v4980 = vld [vmem:[#allocation13 + $0x48] sm:$0xff]
        %v4981 = vld [vmem:[#allocation13 + $0x50] sm:$0xff]
        %v4982 = vld [vmem:[#allocation13 + $0x58] sm:$0xff]
        %v4983 = vld [vmem:[#allocation13 + $0x60] sm:$0xff]
        %v4984 = vld [vmem:[#allocation13 + $0x68] sm:$0xff]
        %v4985 = vld [vmem:[#allocation13 + $0x70] sm:$0xff]
        %v4986 = vld [vmem:[#allocation13 + $0x78] sm:$0xff]
        %v4987 = vld [vmem:[#allocation13 + $0x80] sm:$0xff]
        %v4988 = vld [vmem:[#allocation13 + $0x88] sm:$0xff]
        %v4989 = vld [vmem:[#allocation15] sm:$0x1]
        %v4991 = vlaneseq
        %v4992 = vshrl.u32 %v4991, 7
        %v4993 = vsub.s32 0, %v4992
        %v4994 = vrot.slane %v4989, %v4993
        %v4997 = vsel %vm3459, %v4908, 0
        %v5000 = vsel %vm3459, %v4910, 0
        %v5003 = vsel %vm3459, %v4912, 0
        %v5006 = vsel %vm3459, %v4914, 0
        %v5009 = vsel %vm3459, %v4916, 0
        %v5012 = vsel %vm3459, %v4918, 0
        %v5015 = vsel %vm3459, %v4920, 0
        %v5018 = vsel %vm3459, %v4922, 0
        %v5021 = vsel %vm3459, %v4924, 0
        %v5024 = vsel %vm3459, %v4926, 0
        %v5027 = vsel %vm3459, %v4928, 0
        %v5030 = vsel %vm3459, %v4930, 0
        %v5033 = vsel %vm3459, %v4932, 0
        %v5036 = vsel %vm3459, %v4934, 0
        %v5039 = vsel %vm3459, %v4936, 0
        %v5042 = vsel %vm3459, %v4938, 0
        %v5045 = vsel %vm3459, %v4940, 0
        %v5048 = vsel %vm3459, %v4942, 0
        %v5051 = vsel %vm3459, %v4944, 0
        %v5054 = vsel %vm3459, %v4946, 0
        %v5057 = vsel %vm3459, %v4948, 0
        %v5060 = vsel %vm3459, %v4950, 0
        %v5063 = vsel %vm3459, %v4952, 0
        %v5066 = vsel %vm3459, %v4954, 0
        %v5069 = vsel %vm3459, %v4956, 0
        %v5072 = vsel %vm3459, %v4958, 0
        %v5075 = vsel %vm3459, %v4960, 0
        %v5078 = vsel %vm3459, %v4962, 0
        %v5081 = vsel %vm3459, %v4964, 0
        %v5084 = vsel %vm3459, %v4966, 0
        %v5087 = vsel %vm3459, %v4968, 0
        %v5090 = vsel %vm3459, %v4970, 0
        %5092 = vmatprep.subr.mxu0 0.0
        %5093 = vmatpush1.msra.mxu0 %v4971
        %5094 = vmatprep.subr.mxu0 0.0
        %5095 = vmatpush1.msra.mxu0 %v4972
        %5096 = vmatprep.subr.mxu0 0.0
        %5097 = vmatpush1.msra.mxu0 %v4973
        %5098 = vmatprep.subr.mxu0 0.0
        %5099 = vmatpush1.msra.mxu0 %v4974
        %5100 = vmatprep.subr.mxu0 0.0
        %5101 = vmatpush1.msra.mxu0 %v4975
        %5102 = vmatprep.subr.mxu0 0.0
        %5103 = vmatpush1.msra.mxu0 %v4976
        %5104 = vmatprep.subr.mxu0 0.0
        %5105 = vmatpush1.msra.mxu0 %v4977
        %5106 = vmatprep.subr.mxu0 0.0
        %5107 = vmatpush1.msra.mxu0 %v4978
        %5108 = vmatprep.subr.mxu0 0.0
        %5109 = vmatpush1.msra.mxu0 %v4979
        %5110 = vmatprep.subr.mxu0 0.0
        %5111 = vmatpush1.msra.mxu0 %v4980
        %5112 = vmatprep.subr.mxu0 0.0
        %5113 = vmatpush1.msra.mxu0 %v4981
        %5114 = vmatprep.subr.mxu0 0.0
        %5115 = vmatpush1.msra.mxu0 %v4982
        %5116 = vmatprep.subr.mxu0 0.0
        %5117 = vmatpush1.msra.mxu0 %v4983
        %5118 = vmatprep.subr.mxu0 0.0
        %5119 = vmatpush1.msra.mxu0 %v4984
        %5120 = vmatprep.subr.mxu0 0.0
        %5121 = vmatpush1.msra.mxu0 %v4985
        %5122 = vmatprep.subr.mxu0 0.0
        %5123 = vmatpush1.msra.mxu0 %v4986
        %5124 = vmatprep.subr.mxu0 0.0
        %5125 = vmatpush1.msra.mxu0 %v4987
        %5126 = vmatprep.subr.mxu0 0.0
        %5127 = vmatpush1.msra.mxu0 %v4988
        %5128 = vmatprep.subr.mxu0 0.0
        %5129 = vmatpush1.msra.mxu0 0.0
        %5130 = vmatprep.subr.mxu0 0.0
        %5131 = vmatpush1.msra.mxu0 0.0
        %5132 = vmatprep.subr.mxu0 0.0
        %5133 = vmatpush1.msra.mxu0 0.0
        %5134 = vmatprep.subr.mxu0 0.0
        %5135 = vmatpush1.msra.mxu0 0.0
        %5136 = vmatprep.subr.mxu0 0.0
        %5137 = vmatpush1.msra.mxu0 0.0
        %5138 = vmatprep.subr.mxu0 0.0
        %5139 = vmatpush1.msra.mxu0 0.0
        %5140 = vmatprep.subr.mxu0 0.0
        %5141 = vmatpush1.msra.mxu0 0.0
        %5142 = vmatprep.subr.mxu0 0.0
        %5143 = vmatpush1.msra.mxu0 0.0
        %5144 = vmatprep.subr.mxu0 0.0
        %5145 = vmatpush1.msra.mxu0 0.0
        %5146 = vmatprep.subr.mxu0 0.0
        %5147 = vmatpush1.msra.mxu0 0.0
        %5148 = vmatprep.subr.mxu0 0.0
        %5149 = vmatpush1.msra.mxu0 0.0
        %5150 = vmatprep.subr.mxu0 0.0
        %5151 = vmatpush1.msra.mxu0 0.0
        %5152 = vmatprep.subr.mxu0 0.0
        %5153 = vmatpush1.msra.mxu0 0.0
        %5154 = vmatprep.subr.mxu0 0.0
        %5155 = vmatpush1.msra.mxu0 0.0
        %5156 = vmatprep.mubr.f32.mxu0 %v4997
        %5157 = vmatmul.mubr.f32.gmra.mrb[0].mxu0 %v4907
        %v5158 = vpop.f32.mrb[0].mxu0
        %v5159 = vadd.f32 %v4994, %v5158
        %v5160 = vpop.f32.mrb[0].mxu0
        %5161 = vmatprep.mubr.f32.mxu0 %v5000
        %5162 = vmatmul.mubr.f32.gmra.mrb[0].mxu0 %v4909
        %v5163 = vpop.f32.mrb[0].mxu0
        %v5164 = vadd.f32 %v4994, %v5163
        %v5165 = vpop.f32.mrb[0].mxu0
        %5166 = vmatprep.mubr.f32.mxu0 %v5003
        %5167 = vmatmul.mubr.f32.gmra.mrb[0].mxu0 %v4911
        %v5168 = vpop.f32.mrb[0].mxu0
        %v5169 = vadd.f32 %v4994, %v5168
        %v5170 = vpop.f32.mrb[0].mxu0
        %5171 = vmatprep.mubr.f32.mxu0 %v5006
        %5172 = vmatmul.mubr.f32.gmra.mrb[0].mxu0 %v4913
        %v5173 = vpop.f32.mrb[0].mxu0
        %v5174 = vadd.f32 %v4994, %v5173
        %v5175 = vpop.f32.mrb[0].mxu0
        %5176 = vmatprep.mubr.f32.mxu0 %v5009
        %5177 = vmatmul.mubr.f32.gmra.mrb[0].mxu0 %v4915
        %v5178 = vpop.f32.mrb[0].mxu0
        %v5179 = vadd.f32 %v4994, %v5178
        %v5180 = vpop.f32.mrb[0].mxu0
        %5181 = vmatprep.mubr.f32.mxu0 %v5012
        %5182 = vmatmul.mubr.f32.gmra.mrb[0].mxu0 %v4917
        %v5183 = vpop.f32.mrb[0].mxu0
        %v5184 = vadd.f32 %v4994, %v5183
        %v5185 = vpop.f32.mrb[0].mxu0
        %5186 = vmatprep.mubr.f32.mxu0 %v5015
        %5187 = vmatmul.mubr.f32.gmra.mrb[0].mxu0 %v4919
        %v5188 = vpop.f32.mrb[0].mxu0
        %v5189 = vadd.f32 %v4994, %v5188
        %v5190 = vpop.f32.mrb[0].mxu0
        %5191 = vmatprep.mubr.f32.mxu0 %v5018
        %5192 = vmatmul.mubr.f32.gmra.mrb[0].mxu0 %v4921
        %v5193 = vpop.f32.mrb[0].mxu0
        %v5194 = vadd.f32 %v4994, %v5193
        %v5195 = vpop.f32.mrb[0].mxu0
        %5196 = vmatprep.mubr.f32.mxu0 %v5021
        %5197 = vmatmul.mubr.f32.gmra.mrb[0].mxu0 %v4923
        %v5198 = vpop.f32.mrb[0].mxu0
        %v5199 = vadd.f32 %v4994, %v5198
        %v5200 = vpop.f32.mrb[0].mxu0
        %5201 = vmatprep.mubr.f32.mxu0 %v5024
        %5202 = vmatmul.mubr.f32.gmra.mrb[0].mxu0 %v4925
        %v5203 = vpop.f32.mrb[0].mxu0
        %v5204 = vadd.f32 %v4994, %v5203
        %v5205 = vpop.f32.mrb[0].mxu0
        %5206 = vmatprep.mubr.f32.mxu0 %v5027
        %5207 = vmatmul.mubr.f32.gmra.mrb[0].mxu0 %v4927
        %v5208 = vpop.f32.mrb[0].mxu0
        %v5209 = vadd.f32 %v4994, %v5208
        %v5210 = vpop.f32.mrb[0].mxu0
        %5211 = vmatprep.mubr.f32.mxu0 %v5030
        %5212 = vmatmul.mubr.f32.gmra.mrb[0].mxu0 %v4929
        %v5213 = vpop.f32.mrb[0].mxu0
        %v5214 = vadd.f32 %v4994, %v5213
        %v5215 = vpop.f32.mrb[0].mxu0
        %5216 = vmatprep.mubr.f32.mxu0 %v5033
        %5217 = vmatmul.mubr.f32.gmra.mrb[0].mxu0 %v4931
        %v5218 = vpop.f32.mrb[0].mxu0
        %v5219 = vadd.f32 %v4994, %v5218
        %v5220 = vpop.f32.mrb[0].mxu0
        %5221 = vmatprep.mubr.f32.mxu0 %v5036
        %5222 = vmatmul.mubr.f32.gmra.mrb[0].mxu0 %v4933
        %v5223 = vpop.f32.mrb[0].mxu0
        %v5224 = vadd.f32 %v4994, %v5223
        %v5225 = vpop.f32.mrb[0].mxu0
        %5226 = vmatprep.mubr.f32.mxu0 %v5039
        %5227 = vmatmul.mubr.f32.gmra.mrb[0].mxu0 %v4935
        %v5228 = vpop.f32.mrb[0].mxu0
        %v5229 = vadd.f32 %v4994, %v5228
        %v5230 = vpop.f32.mrb[0].mxu0
        %5231 = vmatprep.mubr.f32.mxu0 %v5042
        %5232 = vmatmul.mubr.f32.gmra.mrb[0].mxu0 %v4937
        %v5233 = vpop.f32.mrb[0].mxu0
        %v5234 = vadd.f32 %v4994, %v5233
        %v5235 = vpop.f32.mrb[0].mxu0
        %5236 = vmatprep.mubr.f32.mxu0 %v5045
        %5237 = vmatmul.mubr.f32.gmra.mrb[0].mxu0 %v4939
        %v5238 = vpop.f32.mrb[0].mxu0
        %v5239 = vadd.f32 %v4994, %v5238
        %v5240 = vpop.f32.mrb[0].mxu0
        %5241 = vmatprep.mubr.f32.mxu0 %v5048
        %5242 = vmatmul.mubr.f32.gmra.mrb[0].mxu0 %v4941
        %v5243 = vpop.f32.mrb[0].mxu0
        %v5244 = vadd.f32 %v4994, %v5243
        %v5245 = vpop.f32.mrb[0].mxu0
        %5246 = vmatprep.mubr.f32.mxu0 %v5051
        %5247 = vmatmul.mubr.f32.gmra.mrb[0].mxu0 %v4943
        %v5248 = vpop.f32.mrb[0].mxu0
        %v5249 = vadd.f32 %v4994, %v5248
        %v5250 = vpop.f32.mrb[0].mxu0
        %5251 = vmatprep.mubr.f32.mxu0 %v5054
        %5252 = vmatmul.mubr.f32.gmra.mrb[0].mxu0 %v4945
        %v5253 = vpop.f32.mrb[0].mxu0
        %v5254 = vadd.f32 %v4994, %v5253
        %v5255 = vpop.f32.mrb[0].mxu0
        %5256 = vmatprep.mubr.f32.mxu0 %v5057
        %5257 = vmatmul.mubr.f32.gmra.mrb[0].mxu0 %v4947
        %v5258 = vpop.f32.mrb[0].mxu0
        %v5259 = vadd.f32 %v4994, %v5258
        %v5260 = vpop.f32.mrb[0].mxu0
        %5261 = vmatprep.mubr.f32.mxu0 %v5060
        %5262 = vmatmul.mubr.f32.gmra.mrb[0].mxu0 %v4949
        %v5263 = vpop.f32.mrb[0].mxu0
        %v5264 = vadd.f32 %v4994, %v5263
        %v5265 = vpop.f32.mrb[0].mxu0
        %5266 = vmatprep.mubr.f32.mxu0 %v5063
        %5267 = vmatmul.mubr.f32.gmra.mrb[0].mxu0 %v4951
        %v5268 = vpop.f32.mrb[0].mxu0
        %v5269 = vadd.f32 %v4994, %v5268
        %v5270 = vpop.f32.mrb[0].mxu0
        %5271 = vmatprep.mubr.f32.mxu0 %v5066
        %5272 = vmatmul.mubr.f32.gmra.mrb[0].mxu0 %v4953
        %v5273 = vpop.f32.mrb[0].mxu0
        %v5274 = vadd.f32 %v4994, %v5273
        %v5275 = vpop.f32.mrb[0].mxu0
        %5276 = vmatprep.mubr.f32.mxu0 %v5069
        %5277 = vmatmul.mubr.f32.gmra.mrb[0].mxu0 %v4955
        %v5278 = vpop.f32.mrb[0].mxu0
        %v5279 = vadd.f32 %v4994, %v5278
        %v5280 = vpop.f32.mrb[0].mxu0
        %5281 = vmatprep.mubr.f32.mxu0 %v5072
        %5282 = vmatmul.mubr.f32.gmra.mrb[0].mxu0 %v4957
        %v5283 = vpop.f32.mrb[0].mxu0
        %v5284 = vadd.f32 %v4994, %v5283
        %v5285 = vpop.f32.mrb[0].mxu0
        %5286 = vmatprep.mubr.f32.mxu0 %v5075
        %5287 = vmatmul.mubr.f32.gmra.mrb[0].mxu0 %v4959
        %v5288 = vpop.f32.mrb[0].mxu0
        %v5289 = vadd.f32 %v4994, %v5288
        %v5290 = vpop.f32.mrb[0].mxu0
        %5291 = vmatprep.mubr.f32.mxu0 %v5078
        %5292 = vmatmul.mubr.f32.gmra.mrb[0].mxu0 %v4961
        %v5293 = vpop.f32.mrb[0].mxu0
        %v5294 = vadd.f32 %v4994, %v5293
        %v5295 = vpop.f32.mrb[0].mxu0
        %5296 = vmatprep.mubr.f32.mxu0 %v5081
        %5297 = vmatmul.mubr.f32.gmra.mrb[0].mxu0 %v4963
        %v5298 = vpop.f32.mrb[0].mxu0
        %v5299 = vadd.f32 %v4994, %v5298
        %v5300 = vpop.f32.mrb[0].mxu0
        %5301 = vmatprep.mubr.f32.mxu0 %v5084
        %5302 = vmatmul.mubr.f32.gmra.mrb[0].mxu0 %v4965
        %v5303 = vpop.f32.mrb[0].mxu0
        %v5304 = vadd.f32 %v4994, %v5303
        %v5305 = vpop.f32.mrb[0].mxu0
        %5306 = vmatprep.mubr.f32.mxu0 %v5087
        %5307 = vmatmul.mubr.f32.gmra.mrb[0].mxu0 %v4967
        %v5308 = vpop.f32.mrb[0].mxu0
        %v5309 = vadd.f32 %v4994, %v5308
        %v5310 = vpop.f32.mrb[0].mxu0
        %5311 = vmatprep.mubr.f32.mxu0 %v5090
        %5312 = vmatmul.mubr.f32.gmra.mrb[0].mxu0 %v4969
        %v5313 = vpop.f32.mrb[0].mxu0
        %v5314 = vadd.f32 %v4994, %v5313
        %v5315 = vpop.f32.mrb[0].mxu0
        %5316 = vdwg.mxu0
        %v5317 = vmax.f32 %v5159, 0.0
        %v5318 = vmax.f32 %v5164, 0.0
        %v5319 = vmax.f32 %v5169, 0.0
        %v5320 = vmax.f32 %v5174, 0.0
        %v5321 = vmax.f32 %v5179, 0.0
        %v5322 = vmax.f32 %v5184, 0.0
        %v5323 = vmax.f32 %v5189, 0.0
        %v5324 = vmax.f32 %v5194, 0.0
        %v5325 = vmax.f32 %v5199, 0.0
        %v5326 = vmax.f32 %v5204, 0.0
        %v5327 = vmax.f32 %v5209, 0.0
        %v5328 = vmax.f32 %v5214, 0.0
        %v5329 = vmax.f32 %v5219, 0.0
        %v5330 = vmax.f32 %v5224, 0.0
        %v5331 = vmax.f32 %v5229, 0.0
        %v5332 = vmax.f32 %v5234, 0.0
        %v5333 = vmax.f32 %v5239, 0.0
        %v5334 = vmax.f32 %v5244, 0.0
        %v5335 = vmax.f32 %v5249, 0.0
        %v5336 = vmax.f32 %v5254, 0.0
        %v5337 = vmax.f32 %v5259, 0.0
        %v5338 = vmax.f32 %v5264, 0.0
        %v5339 = vmax.f32 %v5269, 0.0
        %v5340 = vmax.f32 %v5274, 0.0
        %v5341 = vmax.f32 %v5279, 0.0
        %v5342 = vmax.f32 %v5284, 0.0
        %v5343 = vmax.f32 %v5289, 0.0
        %v5344 = vmax.f32 %v5294, 0.0
        %v5345 = vmax.f32 %v5299, 0.0
        %v5346 = vmax.f32 %v5304, 0.0
        %v5347 = vmax.f32 %v5309, 0.0
        %v5348 = vmax.f32 %v5314, 0.0
        %v5349 = vld [vmem:[#allocation16] sm:$0xff]
        %v5351 = vsel %vm611, %v5317, 0
        %v5354 = vsel %vm611, %v5318, 0
        %v5357 = vsel %vm611, %v5319, 0
        %v5360 = vsel %vm611, %v5320, 0
        %v5363 = vsel %vm611, %v5321, 0
        %v5366 = vsel %vm611, %v5322, 0
        %v5369 = vsel %vm611, %v5323, 0
        %v5372 = vsel %vm611, %v5324, 0
        %v5375 = vsel %vm611, %v5325, 0
        %v5378 = vsel %vm611, %v5326, 0
        %v5381 = vsel %vm611, %v5327, 0
        %v5384 = vsel %vm611, %v5328, 0
        %v5387 = vsel %vm611, %v5329, 0
        %v5390 = vsel %vm611, %v5330, 0
        %v5393 = vsel %vm611, %v5331, 0
        %v5396 = vsel %vm611, %v5332, 0
        %v5399 = vsel %vm611, %v5333, 0
        %v5402 = vsel %vm611, %v5334, 0
        %v5405 = vsel %vm611, %v5335, 0
        %v5408 = vsel %vm611, %v5336, 0
        %v5411 = vsel %vm611, %v5337, 0
        %v5414 = vsel %vm611, %v5338, 0
        %v5417 = vsel %vm611, %v5339, 0
        %v5420 = vsel %vm611, %v5340, 0
        %v5423 = vsel %vm611, %v5341, 0
        %v5426 = vsel %vm611, %v5342, 0
        %v5429 = vsel %vm611, %v5343, 0
        %v5432 = vsel %vm611, %v5344, 0
        %v5435 = vsel %vm611, %v5345, 0
        %v5438 = vsel %vm611, %v5346, 0
        %v5441 = vsel %vm611, %v5347, 0
        %v5444 = vsel %vm611, %v5348, 0
        %5446 = vmatprep.subr.mxu0 0.0
        %5447 = vmatpush1.msra.mxu0 %v5349
        %5448 = vmatprep.subr.mxu0 0.0
        %5449 = vmatpush1.msra.mxu0 0.0
        %5450 = vmatprep.subr.mxu0 0.0
        %5451 = vmatpush1.msra.mxu0 0.0
        %5452 = vmatprep.subr.mxu0 0.0
        %5453 = vmatpush1.msra.mxu0 0.0
        %5454 = vmatprep.subr.mxu0 0.0
        %5455 = vmatpush1.msra.mxu0 0.0
        %5456 = vmatprep.subr.mxu0 0.0
        %5457 = vmatpush1.msra.mxu0 0.0
        %5458 = vmatprep.subr.mxu0 0.0
        %5459 = vmatpush1.msra.mxu0 0.0
        %5460 = vmatprep.subr.mxu0 0.0
        %5461 = vmatpush1.msra.mxu0 0.0
        %5462 = vmatprep.subr.mxu0 0.0
        %5463 = vmatpush1.msra.mxu0 0.0
        %5464 = vmatprep.subr.mxu0 0.0
        %5465 = vmatpush1.msra.mxu0 0.0
        %5466 = vmatprep.subr.mxu0 0.0
        %5467 = vmatpush1.msra.mxu0 0.0
        %5468 = vmatprep.subr.mxu0 0.0
        %5469 = vmatpush1.msra.mxu0 0.0
        %5470 = vmatprep.subr.mxu0 0.0
        %5471 = vmatpush1.msra.mxu0 0.0
        %5472 = vmatprep.subr.mxu0 0.0
        %5473 = vmatpush1.msra.mxu0 0.0
        %5474 = vmatprep.subr.mxu0 0.0
        %5475 = vmatpush1.msra.mxu0 0.0
        %5476 = vmatprep.subr.mxu0 0.0
        %5477 = vmatpush1.msra.mxu0 0.0
        %5478 = vmatprep.subr.mxu0 0.0
        %5479 = vmatpush1.msra.mxu0 0.0
        %5480 = vmatprep.subr.mxu0 0.0
        %5481 = vmatpush1.msra.mxu0 0.0
        %5482 = vmatprep.subr.mxu0 0.0
        %5483 = vmatpush1.msra.mxu0 0.0
        %5484 = vmatprep.subr.mxu0 0.0
        %5485 = vmatpush1.msra.mxu0 0.0
        %5486 = vmatprep.subr.mxu0 0.0
        %5487 = vmatpush1.msra.mxu0 0.0
        %5488 = vmatprep.subr.mxu0 0.0
        %5489 = vmatpush1.msra.mxu0 0.0
        %5490 = vmatprep.subr.mxu0 0.0
        %5491 = vmatpush1.msra.mxu0 0.0
        %5492 = vmatprep.subr.mxu0 0.0
        %5493 = vmatpush1.msra.mxu0 0.0
        %5494 = vmatprep.subr.mxu0 0.0
        %5495 = vmatpush1.msra.mxu0 0.0
        %5496 = vmatprep.subr.mxu0 0.0
        %5497 = vmatpush1.msra.mxu0 0.0
        %5498 = vmatprep.subr.mxu0 0.0
        %5499 = vmatpush1.msra.mxu0 0.0
        %5500 = vmatprep.subr.mxu0 0.0
        %5501 = vmatpush1.msra.mxu0 0.0
        %5502 = vmatprep.subr.mxu0 0.0
        %5503 = vmatpush1.msra.mxu0 0.0
        %5504 = vmatprep.subr.mxu0 0.0
        %5505 = vmatpush1.msra.mxu0 0.0
        %5506 = vmatprep.subr.mxu0 0.0
        %5507 = vmatpush1.msra.mxu0 0.0
        %5508 = vmatprep.subr.mxu0 0.0
        %5509 = vmatpush1.msra.mxu0 0.0
        %5510 = vmatprep.mubr.f32.mxu0 0.0
        %5511 = vmatmul.mubr.f32.gmra.mrb[0].mxu0 %v5351
        %v5512 = vpop.f32.mrb[0].mxu0
        %v5513 = vadd.f32 0.0, %v5512
        %v5514 = vpop.f32.mrb[0].mxu0
        %5515 = vmatprep.mubr.f32.mxu0 0.0
        %5516 = vmatmul.mubr.f32.gmra.mrb[0].mxu0 %v5354
        %v5517 = vpop.f32.mrb[0].mxu0
        %v5518 = vadd.f32 0.0, %v5517
        %v5519 = vpop.f32.mrb[0].mxu0
        %5520 = vmatprep.mubr.f32.mxu0 0.0
        %5521 = vmatmul.mubr.f32.gmra.mrb[0].mxu0 %v5357
        %v5522 = vpop.f32.mrb[0].mxu0
        %v5523 = vadd.f32 0.0, %v5522
        %v5524 = vpop.f32.mrb[0].mxu0
        %5525 = vmatprep.mubr.f32.mxu0 0.0
        %5526 = vmatmul.mubr.f32.gmra.mrb[0].mxu0 %v5360
        %v5527 = vpop.f32.mrb[0].mxu0
        %v5528 = vadd.f32 0.0, %v5527
        %v5529 = vpop.f32.mrb[0].mxu0
        %5530 = vmatprep.mubr.f32.mxu0 0.0
        %5531 = vmatmul.mubr.f32.gmra.mrb[0].mxu0 %v5363
        %v5532 = vpop.f32.mrb[0].mxu0
        %v5533 = vadd.f32 0.0, %v5532
        %v5534 = vpop.f32.mrb[0].mxu0
        %5535 = vmatprep.mubr.f32.mxu0 0.0
        %5536 = vmatmul.mubr.f32.gmra.mrb[0].mxu0 %v5366
        %v5537 = vpop.f32.mrb[0].mxu0
        %v5538 = vadd.f32 0.0, %v5537
        %v5539 = vpop.f32.mrb[0].mxu0
        %5540 = vmatprep.mubr.f32.mxu0 0.0
        %5541 = vmatmul.mubr.f32.gmra.mrb[0].mxu0 %v5369
        %v5542 = vpop.f32.mrb[0].mxu0
        %v5543 = vadd.f32 0.0, %v5542
        %v5544 = vpop.f32.mrb[0].mxu0
        %5545 = vmatprep.mubr.f32.mxu0 0.0
        %5546 = vmatmul.mubr.f32.gmra.mrb[0].mxu0 %v5372
        %v5547 = vpop.f32.mrb[0].mxu0
        %v5548 = vadd.f32 0.0, %v5547
        %v5549 = vpop.f32.mrb[0].mxu0
        %5550 = vmatprep.mubr.f32.mxu0 0.0
        %5551 = vmatmul.mubr.f32.gmra.mrb[0].mxu0 %v5375
        %v5552 = vpop.f32.mrb[0].mxu0
        %v5553 = vadd.f32 0.0, %v5552
        %v5554 = vpop.f32.mrb[0].mxu0
        %5555 = vmatprep.mubr.f32.mxu0 0.0
        %5556 = vmatmul.mubr.f32.gmra.mrb[0].mxu0 %v5378
        %v5557 = vpop.f32.mrb[0].mxu0
        %v5558 = vadd.f32 0.0, %v5557
        %v5559 = vpop.f32.mrb[0].mxu0
        %5560 = vmatprep.mubr.f32.mxu0 0.0
        %5561 = vmatmul.mubr.f32.gmra.mrb[0].mxu0 %v5381
        %v5562 = vpop.f32.mrb[0].mxu0
        %v5563 = vadd.f32 0.0, %v5562
        %v5564 = vpop.f32.mrb[0].mxu0
        %5565 = vmatprep.mubr.f32.mxu0 0.0
        %5566 = vmatmul.mubr.f32.gmra.mrb[0].mxu0 %v5384
        %v5567 = vpop.f32.mrb[0].mxu0
        %v5568 = vadd.f32 0.0, %v5567
        %v5569 = vpop.f32.mrb[0].mxu0
        %5570 = vmatprep.mubr.f32.mxu0 0.0
        %5571 = vmatmul.mubr.f32.gmra.mrb[0].mxu0 %v5387
        %v5572 = vpop.f32.mrb[0].mxu0
        %v5573 = vadd.f32 0.0, %v5572
        %v5574 = vpop.f32.mrb[0].mxu0
        %5575 = vmatprep.mubr.f32.mxu0 0.0
        %5576 = vmatmul.mubr.f32.gmra.mrb[0].mxu0 %v5390
        %v5577 = vpop.f32.mrb[0].mxu0
        %v5578 = vadd.f32 0.0, %v5577
        %v5579 = vpop.f32.mrb[0].mxu0
        %5580 = vmatprep.mubr.f32.mxu0 0.0
        %5581 = vmatmul.mubr.f32.gmra.mrb[0].mxu0 %v5393
        %v5582 = vpop.f32.mrb[0].mxu0
        %v5583 = vadd.f32 0.0, %v5582
        %v5584 = vpop.f32.mrb[0].mxu0
        %5585 = vmatprep.mubr.f32.mxu0 0.0
        %5586 = vmatmul.mubr.f32.gmra.mrb[0].mxu0 %v5396
        %v5587 = vpop.f32.mrb[0].mxu0
        %v5588 = vadd.f32 0.0, %v5587
        %v5589 = vpop.f32.mrb[0].mxu0
        %5590 = vmatprep.mubr.f32.mxu0 0.0
        %5591 = vmatmul.mubr.f32.gmra.mrb[0].mxu0 %v5399
        %v5592 = vpop.f32.mrb[0].mxu0
        %v5593 = vadd.f32 0.0, %v5592
        %v5594 = vpop.f32.mrb[0].mxu0
        %5595 = vmatprep.mubr.f32.mxu0 0.0
        %5596 = vmatmul.mubr.f32.gmra.mrb[0].mxu0 %v5402
        %v5597 = vpop.f32.mrb[0].mxu0
        %v5598 = vadd.f32 0.0, %v5597
        %v5599 = vpop.f32.mrb[0].mxu0
        %5600 = vmatprep.mubr.f32.mxu0 0.0
        %5601 = vmatmul.mubr.f32.gmra.mrb[0].mxu0 %v5405
        %v5602 = vpop.f32.mrb[0].mxu0
        %v5603 = vadd.f32 0.0, %v5602
        %v5604 = vpop.f32.mrb[0].mxu0
        %5605 = vmatprep.mubr.f32.mxu0 0.0
        %5606 = vmatmul.mubr.f32.gmra.mrb[0].mxu0 %v5408
        %v5607 = vpop.f32.mrb[0].mxu0
        %v5608 = vadd.f32 0.0, %v5607
        %v5609 = vpop.f32.mrb[0].mxu0
        %5610 = vmatprep.mubr.f32.mxu0 0.0
        %5611 = vmatmul.mubr.f32.gmra.mrb[0].mxu0 %v5411
        %v5612 = vpop.f32.mrb[0].mxu0
        %v5613 = vadd.f32 0.0, %v5612
        %v5614 = vpop.f32.mrb[0].mxu0
        %5615 = vmatprep.mubr.f32.mxu0 0.0
        %5616 = vmatmul.mubr.f32.gmra.mrb[0].mxu0 %v5414
        %v5617 = vpop.f32.mrb[0].mxu0
        %v5618 = vadd.f32 0.0, %v5617
        %v5619 = vpop.f32.mrb[0].mxu0
        %5620 = vmatprep.mubr.f32.mxu0 0.0
        %5621 = vmatmul.mubr.f32.gmra.mrb[0].mxu0 %v5417
        %v5622 = vpop.f32.mrb[0].mxu0
        %v5623 = vadd.f32 0.0, %v5622
        %v5624 = vpop.f32.mrb[0].mxu0
        %5625 = vmatprep.mubr.f32.mxu0 0.0
        %5626 = vmatmul.mubr.f32.gmra.mrb[0].mxu0 %v5420
        %v5627 = vpop.f32.mrb[0].mxu0
        %v5628 = vadd.f32 0.0, %v5627
        %v5629 = vpop.f32.mrb[0].mxu0
        %5630 = vmatprep.mubr.f32.mxu0 0.0
        %5631 = vmatmul.mubr.f32.gmra.mrb[0].mxu0 %v5423
        %v5632 = vpop.f32.mrb[0].mxu0
        %v5633 = vadd.f32 0.0, %v5632
        %v5634 = vpop.f32.mrb[0].mxu0
        %5635 = vmatprep.mubr.f32.mxu0 0.0
        %5636 = vmatmul.mubr.f32.gmra.mrb[0].mxu0 %v5426
        %v5637 = vpop.f32.mrb[0].mxu0
        %v5638 = vadd.f32 0.0, %v5637
        %v5639 = vpop.f32.mrb[0].mxu0
        %5640 = vmatprep.mubr.f32.mxu0 0.0
        %5641 = vmatmul.mubr.f32.gmra.mrb[0].mxu0 %v5429
        %v5642 = vpop.f32.mrb[0].mxu0
        %v5643 = vadd.f32 0.0, %v5642
        %v5644 = vpop.f32.mrb[0].mxu0
        %5645 = vmatprep.mubr.f32.mxu0 0.0
        %5646 = vmatmul.mubr.f32.gmra.mrb[0].mxu0 %v5432
        %v5647 = vpop.f32.mrb[0].mxu0
        %v5648 = vadd.f32 0.0, %v5647
        %v5649 = vpop.f32.mrb[0].mxu0
        %5650 = vmatprep.mubr.f32.mxu0 0.0
        %5651 = vmatmul.mubr.f32.gmra.mrb[0].mxu0 %v5435
        %v5652 = vpop.f32.mrb[0].mxu0
        %v5653 = vadd.f32 0.0, %v5652
        %v5654 = vpop.f32.mrb[0].mxu0
        %5655 = vmatprep.mubr.f32.mxu0 0.0
        %5656 = vmatmul.mubr.f32.gmra.mrb[0].mxu0 %v5438
        %v5657 = vpop.f32.mrb[0].mxu0
        %v5658 = vadd.f32 0.0, %v5657
        %v5659 = vpop.f32.mrb[0].mxu0
        %5660 = vmatprep.mubr.f32.mxu0 0.0
        %5661 = vmatmul.mubr.f32.gmra.mrb[0].mxu0 %v5441
        %v5662 = vpop.f32.mrb[0].mxu0
        %v5663 = vadd.f32 0.0, %v5662
        %v5664 = vpop.f32.mrb[0].mxu0
        %5665 = vmatprep.mubr.f32.mxu0 0.0
        %5666 = vmatmul.mubr.f32.gmra.mrb[0].mxu0 %v5444
        %v5667 = vpop.f32.mrb[0].mxu0
        %v5668 = vadd.f32 0.0, %v5667
        %v5669 = vpop.f32.mrb[0].mxu0
        %5670 = vdwg.mxu0
        %v5671 = vadd.f32 %v3141, %v5513
        %v5672 = vadd.f32 %v3146, %v5518
        %v5673 = vadd.f32 %v3151, %v5523
        %v5674 = vadd.f32 %v3156, %v5528
        %v5675 = vadd.f32 %v3161, %v5533
        %v5676 = vadd.f32 %v3166, %v5538
        %v5677 = vadd.f32 %v3171, %v5543
        %v5678 = vadd.f32 %v3176, %v5548
        %v5679 = vadd.f32 %v3181, %v5553
        %v5680 = vadd.f32 %v3186, %v5558
        %v5681 = vadd.f32 %v3191, %v5563
        %v5682 = vadd.f32 %v3196, %v5568
        %v5683 = vadd.f32 %v3201, %v5573
        %v5684 = vadd.f32 %v3206, %v5578
        %v5685 = vadd.f32 %v3211, %v5583
        %v5686 = vadd.f32 %v3216, %v5588
        %v5687 = vadd.f32 %v3221, %v5593
        %v5688 = vadd.f32 %v3226, %v5598
        %v5689 = vadd.f32 %v3231, %v5603
        %v5690 = vadd.f32 %v3236, %v5608
        %v5691 = vadd.f32 %v3241, %v5613
        %v5692 = vadd.f32 %v3246, %v5618
        %v5693 = vadd.f32 %v3251, %v5623
        %v5694 = vadd.f32 %v3256, %v5628
        %v5695 = vadd.f32 %v3261, %v5633
        %v5696 = vadd.f32 %v3266, %v5638
        %v5697 = vadd.f32 %v3271, %v5643
        %v5698 = vadd.f32 %v3276, %v5648
        %v5699 = vadd.f32 %v3281, %v5653
        %v5700 = vadd.f32 %v3286, %v5658
        %v5701 = vadd.f32 %v3291, %v5663
        %v5702 = vadd.f32 %v3296, %v5668
        %5703 = vrot.lane.b32.xlu0 %v5317, 16
        %v5704 = vpop.permute.xlu0 %5703
        %5705 = vrot.lane.b32.xlu0 %v5318, 16
        %v5706 = vpop.permute.xlu0 %5705
        %5707 = vrot.lane.b32.xlu0 %v5319, 16
        %v5708 = vpop.permute.xlu0 %5707
        %5709 = vrot.lane.b32.xlu0 %v5320, 16
        %v5710 = vpop.permute.xlu0 %5709
        %5711 = vrot.lane.b32.xlu0 %v5321, 16
        %v5712 = vpop.permute.xlu0 %5711
        %5713 = vrot.lane.b32.xlu0 %v5322, 16
        %v5714 = vpop.permute.xlu0 %5713
        %5715 = vrot.lane.b32.xlu0 %v5323, 16
        %v5716 = vpop.permute.xlu0 %5715
        %5717 = vrot.lane.b32.xlu0 %v5324, 16
        %v5718 = vpop.permute.xlu0 %5717
        %5719 = vrot.lane.b32.xlu0 %v5325, 16
        %v5720 = vpop.permute.xlu0 %5719
        %5721 = vrot.lane.b32.xlu0 %v5326, 16
        %v5722 = vpop.permute.xlu0 %5721
        %5723 = vrot.lane.b32.xlu0 %v5327, 16
        %v5724 = vpop.permute.xlu0 %5723
        %5725 = vrot.lane.b32.xlu0 %v5328, 16
        %v5726 = vpop.permute.xlu0 %5725
        %5727 = vrot.lane.b32.xlu0 %v5329, 16
        %v5728 = vpop.permute.xlu0 %5727
        %5729 = vrot.lane.b32.xlu0 %v5330, 16
        %v5730 = vpop.permute.xlu0 %5729
        %5731 = vrot.lane.b32.xlu0 %v5331, 16
        %v5732 = vpop.permute.xlu0 %5731
        %5733 = vrot.lane.b32.xlu0 %v5332, 16
        %v5734 = vpop.permute.xlu0 %5733
        %5735 = vrot.lane.b32.xlu0 %v5333, 16
        %v5736 = vpop.permute.xlu0 %5735
        %5737 = vrot.lane.b32.xlu0 %v5334, 16
        %v5738 = vpop.permute.xlu0 %5737
        %5739 = vrot.lane.b32.xlu0 %v5335, 16
        %v5740 = vpop.permute.xlu0 %5739
        %5741 = vrot.lane.b32.xlu0 %v5336, 16
        %v5742 = vpop.permute.xlu0 %5741
        %5743 = vrot.lane.b32.xlu0 %v5337, 16
        %v5744 = vpop.permute.xlu0 %5743
        %5745 = vrot.lane.b32.xlu0 %v5338, 16
        %v5746 = vpop.permute.xlu0 %5745
        %5747 = vrot.lane.b32.xlu0 %v5339, 16
        %v5748 = vpop.permute.xlu0 %5747
        %5749 = vrot.lane.b32.xlu0 %v5340, 16
        %v5750 = vpop.permute.xlu0 %5749
        %5751 = vrot.lane.b32.xlu0 %v5341, 16
        %v5752 = vpop.permute.xlu0 %5751
        %5753 = vrot.lane.b32.xlu0 %v5342, 16
        %v5754 = vpop.permute.xlu0 %5753
        %5755 = vrot.lane.b32.xlu0 %v5343, 16
        %v5756 = vpop.permute.xlu0 %5755
        %5757 = vrot.lane.b32.xlu0 %v5344, 16
        %v5758 = vpop.permute.xlu0 %5757
        %5759 = vrot.lane.b32.xlu0 %v5345, 16
        %v5760 = vpop.permute.xlu0 %5759
        %5761 = vrot.lane.b32.xlu0 %v5346, 16
        %v5762 = vpop.permute.xlu0 %5761
        %5763 = vrot.lane.b32.xlu0 %v5347, 16
        %v5764 = vpop.permute.xlu0 %5763
        %5765 = vrot.lane.b32.xlu0 %v5348, 16
        %v5766 = vpop.permute.xlu0 %5765
        %5799 = vst.msk [vmem:[%s545 + $0x1] sm:$0xff] %vm1062, %v5704
        %5800 = vst.msk [vmem:[%s545 + $0x9] sm:$0xff] %vm1062, %v5706
        %5801 = vst.msk [vmem:[%s545 + $0x19] sm:$0xff] %vm1062, %v5708
        %5802 = vst.msk [vmem:[%s545 + $0x21] sm:$0xff] %vm1062, %v5710
        %5803 = vst.msk [vmem:[%s545 + $0x31] sm:$0xff] %vm1062, %v5712
        %5804 = vst.msk [vmem:[%s545 + $0x39] sm:$0xff] %vm1062, %v5714
        %5805 = vst.msk [vmem:[%s545 + $0x49] sm:$0xff] %vm1062, %v5716
        %5806 = vst.msk [vmem:[%s545 + $0x51] sm:$0xff] %vm1062, %v5718
        %5807 = vst.msk [vmem:[%s545 + $0x61] sm:$0xff] %vm1062, %v5720
        %5808 = vst.msk [vmem:[%s545 + $0x69] sm:$0xff] %vm1062, %v5722
        %5809 = vst.msk [vmem:[%s545 + $0x79] sm:$0xff] %vm1062, %v5724
        %5810 = vst.msk [vmem:[%s545 + $0x81] sm:$0xff] %vm1062, %v5726
        %5811 = vst.msk [vmem:[%s545 + $0x91] sm:$0xff] %vm1062, %v5728
        %5812 = vst.msk [vmem:[%s545 + $0x99] sm:$0xff] %vm1062, %v5730
        %5813 = vst.msk [vmem:[%s545 + $0xa9] sm:$0xff] %vm1062, %v5732
        %5814 = vst.msk [vmem:[%s545 + $0xb1] sm:$0xff] %vm1062, %v5734
        %5815 = vst.msk [vmem:[%s545 + $0xc1] sm:$0xff] %vm1062, %v5736
        %5816 = vst.msk [vmem:[%s545 + $0xc9] sm:$0xff] %vm1062, %v5738
        %5817 = vst.msk [vmem:[%s545 + $0xd9] sm:$0xff] %vm1062, %v5740
        %5818 = vst.msk [vmem:[%s545 + $0xe1] sm:$0xff] %vm1062, %v5742
        %5819 = vst.msk [vmem:[%s545 + $0xf1] sm:$0xff] %vm1062, %v5744
        %5820 = vst.msk [vmem:[%s545 + $0xf9] sm:$0xff] %vm1062, %v5746
        %5821 = vst.msk [vmem:[%s545 + $0x109] sm:$0xff] %vm1062, %v5748
        %5822 = vst.msk [vmem:[%s545 + $0x111] sm:$0xff] %vm1062, %v5750
        %5823 = vst.msk [vmem:[%s545 + $0x121] sm:$0xff] %vm1062, %v5752
        %5824 = vst.msk [vmem:[%s545 + $0x129] sm:$0xff] %vm1062, %v5754
        %5825 = vst.msk [vmem:[%s545 + $0x139] sm:$0xff] %vm1062, %v5756
        %5826 = vst.msk [vmem:[%s545 + $0x141] sm:$0xff] %vm1062, %v5758
        %5827 = vst.msk [vmem:[%s545 + $0x151] sm:$0xff] %vm1062, %v5760
        %5828 = vst.msk [vmem:[%s545 + $0x159] sm:$0xff] %vm1062, %v5762
        %5829 = vst.msk [vmem:[%s545 + $0x169] sm:$0xff] %vm1062, %v5764
        %5830 = vst.msk [vmem:[%s545 + $0x171] sm:$0xff] %vm1062, %v5766
        %v5831 = vld [vmem:[#allocation2] sm:$0xff]
        %v5832 = vld [vmem:[#allocation2 + $0x8] sm:$0xff]
        %v5833 = vld [vmem:[#allocation2 + $0x18] sm:$0xff]
        %v5834 = vld [vmem:[#allocation2 + $0x20] sm:$0xff]
        %v5835 = vld [vmem:[#allocation2 + $0x30] sm:$0xff]
        %v5836 = vld [vmem:[#allocation2 + $0x38] sm:$0xff]
        %v5837 = vld [vmem:[#allocation2 + $0x48] sm:$0xff]
        %v5838 = vld [vmem:[#allocation2 + $0x50] sm:$0xff]
        %v5839 = vld [vmem:[#allocation2 + $0x60] sm:$0xff]
        %v5840 = vld [vmem:[#allocation2 + $0x68] sm:$0xff]
        %v5841 = vld [vmem:[#allocation2 + $0x78] sm:$0xff]
        %v5842 = vld [vmem:[#allocation2 + $0x80] sm:$0xff]
        %v5843 = vld [vmem:[#allocation2 + $0x90] sm:$0xff]
        %v5844 = vld [vmem:[#allocation2 + $0x98] sm:$0xff]
        %v5845 = vld [vmem:[#allocation2 + $0xa8] sm:$0xff]
        %v5846 = vld [vmem:[#allocation2 + $0xb0] sm:$0xff]
        %v5847 = vld [vmem:[#allocation2 + $0xc0] sm:$0xff]
        %v5848 = vld [vmem:[#allocation2 + $0xc8] sm:$0xff]
        %v5849 = vld [vmem:[#allocation2 + $0xd8] sm:$0xff]
        %v5850 = vld [vmem:[#allocation2 + $0xe0] sm:$0xff]
        %v5851 = vld [vmem:[#allocation2 + $0xf0] sm:$0xff]
        %v5852 = vld [vmem:[#allocation2 + $0xf8] sm:$0xff]
        %v5853 = vld [vmem:[#allocation2 + $0x108] sm:$0xff]
        %v5854 = vld [vmem:[#allocation2 + $0x110] sm:$0xff]
        %v5855 = vld [vmem:[#allocation2 + $0x120] sm:$0xff]
        %v5856 = vld [vmem:[#allocation2 + $0x128] sm:$0xff]
        %v5857 = vld [vmem:[#allocation2 + $0x138] sm:$0xff]
        %v5858 = vld [vmem:[#allocation2 + $0x140] sm:$0xff]
        %v5859 = vld [vmem:[#allocation2 + $0x150] sm:$0xff]
        %v5860 = vld [vmem:[#allocation2 + $0x158] sm:$0xff]
        %v5861 = vld [vmem:[#allocation2 + $0x168] sm:$0xff]
        %v5862 = vld [vmem:[#allocation2 + $0x170] sm:$0xff]
        %5863 = vst.msk [vmem:[#allocation3] sm:$0xff] %vm536, %v5831
        %5864 = vst.msk [vmem:[#allocation3 + $0x10] sm:$0xff] %vm536, %v5832
        %5865 = vst.msk [vmem:[#allocation3 + $0x20] sm:$0xff] %vm536, %v5833
        %5866 = vst.msk [vmem:[#allocation3 + $0x30] sm:$0xff] %vm536, %v5834
        %5867 = vst.msk [vmem:[#allocation3 + $0x40] sm:$0xff] %vm536, %v5835
        %5868 = vst.msk [vmem:[#allocation3 + $0x50] sm:$0xff] %vm536, %v5836
        %5869 = vst.msk [vmem:[#allocation3 + $0x60] sm:$0xff] %vm536, %v5837
        %5870 = vst.msk [vmem:[#allocation3 + $0x70] sm:$0xff] %vm536, %v5838
        %5871 = vst.msk [vmem:[#allocation3 + $0x80] sm:$0xff] %vm536, %v5839
        %5872 = vst.msk [vmem:[#allocation3 + $0x90] sm:$0xff] %vm536, %v5840
        %5873 = vst.msk [vmem:[#allocation3 + $0xa0] sm:$0xff] %vm536, %v5841
        %5874 = vst.msk [vmem:[#allocation3 + $0xb0] sm:$0xff] %vm536, %v5842
        %5875 = vst.msk [vmem:[#allocation3 + $0xc0] sm:$0xff] %vm536, %v5843
        %5876 = vst.msk [vmem:[#allocation3 + $0xd0] sm:$0xff] %vm536, %v5844
        %5877 = vst.msk [vmem:[#allocation3 + $0xe0] sm:$0xff] %vm536, %v5845
        %5878 = vst.msk [vmem:[#allocation3 + $0xf0] sm:$0xff] %vm536, %v5846
        %5879 = vst.msk [vmem:[#allocation3 + $0x100] sm:$0xff] %vm536, %v5847
        %5880 = vst.msk [vmem:[#allocation3 + $0x110] sm:$0xff] %vm536, %v5848
        %5881 = vst.msk [vmem:[#allocation3 + $0x120] sm:$0xff] %vm536, %v5849
        %5882 = vst.msk [vmem:[#allocation3 + $0x130] sm:$0xff] %vm536, %v5850
        %5883 = vst.msk [vmem:[#allocation3 + $0x140] sm:$0xff] %vm536, %v5851
        %5884 = vst.msk [vmem:[#allocation3 + $0x150] sm:$0xff] %vm536, %v5852
        %5885 = vst.msk [vmem:[#allocation3 + $0x160] sm:$0xff] %vm536, %v5853
        %5886 = vst.msk [vmem:[#allocation3 + $0x170] sm:$0xff] %vm536, %v5854
        %5887 = vst.msk [vmem:[#allocation3 + $0x180] sm:$0xff] %vm536, %v5855
        %5888 = vst.msk [vmem:[#allocation3 + $0x190] sm:$0xff] %vm536, %v5856
        %5889 = vst.msk [vmem:[#allocation3 + $0x1a0] sm:$0xff] %vm536, %v5857
        %5890 = vst.msk [vmem:[#allocation3 + $0x1b0] sm:$0xff] %vm536, %v5858
        %5891 = vst.msk [vmem:[#allocation3 + $0x1c0] sm:$0xff] %vm536, %v5859
        %5892 = vst.msk [vmem:[#allocation3 + $0x1d0] sm:$0xff] %vm536, %v5860
        %5893 = vst.msk [vmem:[#allocation3 + $0x1e0] sm:$0xff] %vm536, %v5861
        %5894 = vst.msk [vmem:[#allocation3 + $0x1f0] sm:$0xff] %vm536, %v5862
        %v5895 = vld [vmem:[#allocation2 + $0x1] sm:$0xff]
        %v5896 = vld [vmem:[#allocation2 + $0x9] sm:$0xff]
        %v5897 = vld [vmem:[#allocation2 + $0x19] sm:$0xff]
        %v5898 = vld [vmem:[#allocation2 + $0x21] sm:$0xff]
        %v5899 = vld [vmem:[#allocation2 + $0x31] sm:$0xff]
        %v5900 = vld [vmem:[#allocation2 + $0x39] sm:$0xff]
        %v5901 = vld [vmem:[#allocation2 + $0x49] sm:$0xff]
        %v5902 = vld [vmem:[#allocation2 + $0x51] sm:$0xff]
        %v5903 = vld [vmem:[#allocation2 + $0x61] sm:$0xff]
        %v5904 = vld [vmem:[#allocation2 + $0x69] sm:$0xff]
        %v5905 = vld [vmem:[#allocation2 + $0x79] sm:$0xff]
        %v5906 = vld [vmem:[#allocation2 + $0x81] sm:$0xff]
        %v5907 = vld [vmem:[#allocation2 + $0x91] sm:$0xff]
        %v5908 = vld [vmem:[#allocation2 + $0x99] sm:$0xff]
        %v5909 = vld [vmem:[#allocation2 + $0xa9] sm:$0xff]
        %v5910 = vld [vmem:[#allocation2 + $0xb1] sm:$0xff]
        %v5911 = vld [vmem:[#allocation2 + $0xc1] sm:$0xff]
        %v5912 = vld [vmem:[#allocation2 + $0xc9] sm:$0xff]
        %v5913 = vld [vmem:[#allocation2 + $0xd9] sm:$0xff]
        %v5914 = vld [vmem:[#allocation2 + $0xe1] sm:$0xff]
        %v5915 = vld [vmem:[#allocation2 + $0xf1] sm:$0xff]
        %v5916 = vld [vmem:[#allocation2 + $0xf9] sm:$0xff]
        %v5917 = vld [vmem:[#allocation2 + $0x109] sm:$0xff]
        %v5918 = vld [vmem:[#allocation2 + $0x111] sm:$0xff]
        %v5919 = vld [vmem:[#allocation2 + $0x121] sm:$0xff]
        %v5920 = vld [vmem:[#allocation2 + $0x129] sm:$0xff]
        %v5921 = vld [vmem:[#allocation2 + $0x139] sm:$0xff]
        %v5922 = vld [vmem:[#allocation2 + $0x141] sm:$0xff]
        %v5923 = vld [vmem:[#allocation2 + $0x151] sm:$0xff]
        %v5924 = vld [vmem:[#allocation2 + $0x159] sm:$0xff]
        %v5925 = vld [vmem:[#allocation2 + $0x169] sm:$0xff]
        %v5926 = vld [vmem:[#allocation2 + $0x171] sm:$0xff]
        %5959 = vrot.lane.b32.xlu0 %v5895, 24
        %v5960 = vpop.permute.xlu0 %5959
        %5961 = vrot.lane.b32.xlu0 %v5896, 24
        %v5962 = vpop.permute.xlu0 %5961
        %5963 = vrot.lane.b32.xlu0 %v5897, 24
        %v5964 = vpop.permute.xlu0 %5963
        %5965 = vrot.lane.b32.xlu0 %v5898, 24
        %v5966 = vpop.permute.xlu0 %5965
        %5967 = vrot.lane.b32.xlu0 %v5899, 24
        %v5968 = vpop.permute.xlu0 %5967
        %5969 = vrot.lane.b32.xlu0 %v5900, 24
        %v5970 = vpop.permute.xlu0 %5969
        %5971 = vrot.lane.b32.xlu0 %v5901, 24
        %v5972 = vpop.permute.xlu0 %5971
        %5973 = vrot.lane.b32.xlu0 %v5902, 24
        %v5974 = vpop.permute.xlu0 %5973
        %5975 = vrot.lane.b32.xlu0 %v5903, 24
        %v5976 = vpop.permute.xlu0 %5975
        %5977 = vrot.lane.b32.xlu0 %v5904, 24
        %v5978 = vpop.permute.xlu0 %5977
        %5979 = vrot.lane.b32.xlu0 %v5905, 24
        %v5980 = vpop.permute.xlu0 %5979
        %5981 = vrot.lane.b32.xlu0 %v5906, 24
        %v5982 = vpop.permute.xlu0 %5981
        %5983 = vrot.lane.b32.xlu0 %v5907, 24
        %v5984 = vpop.permute.xlu0 %5983
        %5985 = vrot.lane.b32.xlu0 %v5908, 24
        %v5986 = vpop.permute.xlu0 %5985
        %5987 = vrot.lane.b32.xlu0 %v5909, 24
        %v5988 = vpop.permute.xlu0 %5987
        %5989 = vrot.lane.b32.xlu0 %v5910, 24
        %v5990 = vpop.permute.xlu0 %5989
        %5991 = vrot.lane.b32.xlu0 %v5911, 24
        %v5992 = vpop.permute.xlu0 %5991
        %5993 = vrot.lane.b32.xlu0 %v5912, 24
        %v5994 = vpop.permute.xlu0 %5993
        %5995 = vrot.lane.b32.xlu0 %v5913, 24
        %v5996 = vpop.permute.xlu0 %5995
        %5997 = vrot.lane.b32.xlu0 %v5914, 24
        %v5998 = vpop.permute.xlu0 %5997
        %5999 = vrot.lane.b32.xlu0 %v5915, 24
        %v6000 = vpop.permute.xlu0 %5999
        %6001 = vrot.lane.b32.xlu0 %v5916, 24
        %v6002 = vpop.permute.xlu0 %6001
        %6003 = vrot.lane.b32.xlu0 %v5917, 24
        %v6004 = vpop.permute.xlu0 %6003
        %6005 = vrot.lane.b32.xlu0 %v5918, 24
        %v6006 = vpop.permute.xlu0 %6005
        %6007 = vrot.lane.b32.xlu0 %v5919, 24
        %v6008 = vpop.permute.xlu0 %6007
        %6009 = vrot.lane.b32.xlu0 %v5920, 24
        %v6010 = vpop.permute.xlu0 %6009
        %6011 = vrot.lane.b32.xlu0 %v5921, 24
        %v6012 = vpop.permute.xlu0 %6011
        %6013 = vrot.lane.b32.xlu0 %v5922, 24
        %v6014 = vpop.permute.xlu0 %6013
        %6015 = vrot.lane.b32.xlu0 %v5923, 24
        %v6016 = vpop.permute.xlu0 %6015
        %6017 = vrot.lane.b32.xlu0 %v5924, 24
        %v6018 = vpop.permute.xlu0 %6017
        %6019 = vrot.lane.b32.xlu0 %v5925, 24
        %v6020 = vpop.permute.xlu0 %6019
        %6021 = vrot.lane.b32.xlu0 %v5926, 24
        %v6022 = vpop.permute.xlu0 %6021
        %vm6055 = vcmask 392384
        %6056 = vst.msk [vmem:[#allocation3] sm:$0xff] %vm6055, %v5960
        %6057 = vst.msk [vmem:[#allocation3 + $0x10] sm:$0xff] %vm6055, %v5962
        %6058 = vst.msk [vmem:[#allocation3 + $0x20] sm:$0xff] %vm6055, %v5964
        %6059 = vst.msk [vmem:[#allocation3 + $0x30] sm:$0xff] %vm6055, %v5966
        %6060 = vst.msk [vmem:[#allocation3 + $0x40] sm:$0xff] %vm6055, %v5968
        %6061 = vst.msk [vmem:[#allocation3 + $0x50] sm:$0xff] %vm6055, %v5970
        %6062 = vst.msk [vmem:[#allocation3 + $0x60] sm:$0xff] %vm6055, %v5972
        %6063 = vst.msk [vmem:[#allocation3 + $0x70] sm:$0xff] %vm6055, %v5974
        %6064 = vst.msk [vmem:[#allocation3 + $0x80] sm:$0xff] %vm6055, %v5976
        %6065 = vst.msk [vmem:[#allocation3 + $0x90] sm:$0xff] %vm6055, %v5978
        %6066 = vst.msk [vmem:[#allocation3 + $0xa0] sm:$0xff] %vm6055, %v5980
        %6067 = vst.msk [vmem:[#allocation3 + $0xb0] sm:$0xff] %vm6055, %v5982
        %6068 = vst.msk [vmem:[#allocation3 + $0xc0] sm:$0xff] %vm6055, %v5984
        %6069 = vst.msk [vmem:[#allocation3 + $0xd0] sm:$0xff] %vm6055, %v5986
        %6070 = vst.msk [vmem:[#allocation3 + $0xe0] sm:$0xff] %vm6055, %v5988
        %6071 = vst.msk [vmem:[#allocation3 + $0xf0] sm:$0xff] %vm6055, %v5990
        %6072 = vst.msk [vmem:[#allocation3 + $0x100] sm:$0xff] %vm6055, %v5992
        %6073 = vst.msk [vmem:[#allocation3 + $0x110] sm:$0xff] %vm6055, %v5994
        %6074 = vst.msk [vmem:[#allocation3 + $0x120] sm:$0xff] %vm6055, %v5996
        %6075 = vst.msk [vmem:[#allocation3 + $0x130] sm:$0xff] %vm6055, %v5998
        %6076 = vst.msk [vmem:[#allocation3 + $0x140] sm:$0xff] %vm6055, %v6000
        %6077 = vst.msk [vmem:[#allocation3 + $0x150] sm:$0xff] %vm6055, %v6002
        %6078 = vst.msk [vmem:[#allocation3 + $0x160] sm:$0xff] %vm6055, %v6004
        %6079 = vst.msk [vmem:[#allocation3 + $0x170] sm:$0xff] %vm6055, %v6006
        %6080 = vst.msk [vmem:[#allocation3 + $0x180] sm:$0xff] %vm6055, %v6008
        %6081 = vst.msk [vmem:[#allocation3 + $0x190] sm:$0xff] %vm6055, %v6010
        %6082 = vst.msk [vmem:[#allocation3 + $0x1a0] sm:$0xff] %vm6055, %v6012
        %6083 = vst.msk [vmem:[#allocation3 + $0x1b0] sm:$0xff] %vm6055, %v6014
        %6084 = vst.msk [vmem:[#allocation3 + $0x1c0] sm:$0xff] %vm6055, %v6016
        %6085 = vst.msk [vmem:[#allocation3 + $0x1d0] sm:$0xff] %vm6055, %v6018
        %6086 = vst.msk [vmem:[#allocation3 + $0x1e0] sm:$0xff] %vm6055, %v6020
        %6087 = vst.msk [vmem:[#allocation3 + $0x1f0] sm:$0xff] %vm6055, %v6022
        %v6088 = vld [vmem:[#allocation2 + $0x2] sm:$0xff]
        %v6089 = vld [vmem:[#allocation2 + $0xa] sm:$0xff]
        %v6090 = vld [vmem:[#allocation2 + $0x1a] sm:$0xff]
        %v6091 = vld [vmem:[#allocation2 + $0x22] sm:$0xff]
        %v6092 = vld [vmem:[#allocation2 + $0x32] sm:$0xff]
        %v6093 = vld [vmem:[#allocation2 + $0x3a] sm:$0xff]
        %v6094 = vld [vmem:[#allocation2 + $0x4a] sm:$0xff]
        %v6095 = vld [vmem:[#allocation2 + $0x52] sm:$0xff]
        %v6096 = vld [vmem:[#allocation2 + $0x62] sm:$0xff]
        %v6097 = vld [vmem:[#allocation2 + $0x6a] sm:$0xff]
        %v6098 = vld [vmem:[#allocation2 + $0x7a] sm:$0xff]
        %v6099 = vld [vmem:[#allocation2 + $0x82] sm:$0xff]
        %v6100 = vld [vmem:[#allocation2 + $0x92] sm:$0xff]
        %v6101 = vld [vmem:[#allocation2 + $0x9a] sm:$0xff]
        %v6102 = vld [vmem:[#allocation2 + $0xaa] sm:$0xff]
        %v6103 = vld [vmem:[#allocation2 + $0xb2] sm:$0xff]
        %v6104 = vld [vmem:[#allocation2 + $0xc2] sm:$0xff]
        %v6105 = vld [vmem:[#allocation2 + $0xca] sm:$0xff]
        %v6106 = vld [vmem:[#allocation2 + $0xda] sm:$0xff]
        %v6107 = vld [vmem:[#allocation2 + $0xe2] sm:$0xff]
        %v6108 = vld [vmem:[#allocation2 + $0xf2] sm:$0xff]
        %v6109 = vld [vmem:[#allocation2 + $0xfa] sm:$0xff]
        %v6110 = vld [vmem:[#allocation2 + $0x10a] sm:$0xff]
        %v6111 = vld [vmem:[#allocation2 + $0x112] sm:$0xff]
        %v6112 = vld [vmem:[#allocation2 + $0x122] sm:$0xff]
        %v6113 = vld [vmem:[#allocation2 + $0x12a] sm:$0xff]
        %v6114 = vld [vmem:[#allocation2 + $0x13a] sm:$0xff]
        %v6115 = vld [vmem:[#allocation2 + $0x142] sm:$0xff]
        %v6116 = vld [vmem:[#allocation2 + $0x152] sm:$0xff]
        %v6117 = vld [vmem:[#allocation2 + $0x15a] sm:$0xff]
        %v6118 = vld [vmem:[#allocation2 + $0x16a] sm:$0xff]
        %v6119 = vld [vmem:[#allocation2 + $0x172] sm:$0xff]
        %6152 = vrot.lane.b32.xlu0 %v6088, 48
        %v6153 = vpop.permute.xlu0 %6152
        %6154 = vrot.lane.b32.xlu0 %v6089, 48
        %v6155 = vpop.permute.xlu0 %6154
        %6156 = vrot.lane.b32.xlu0 %v6090, 48
        %v6157 = vpop.permute.xlu0 %6156
        %6158 = vrot.lane.b32.xlu0 %v6091, 48
        %v6159 = vpop.permute.xlu0 %6158
        %6160 = vrot.lane.b32.xlu0 %v6092, 48
        %v6161 = vpop.permute.xlu0 %6160
        %6162 = vrot.lane.b32.xlu0 %v6093, 48
        %v6163 = vpop.permute.xlu0 %6162
        %6164 = vrot.lane.b32.xlu0 %v6094, 48
        %v6165 = vpop.permute.xlu0 %6164
        %6166 = vrot.lane.b32.xlu0 %v6095, 48
        %v6167 = vpop.permute.xlu0 %6166
        %6168 = vrot.lane.b32.xlu0 %v6096, 48
        %v6169 = vpop.permute.xlu0 %6168
        %6170 = vrot.lane.b32.xlu0 %v6097, 48
        %v6171 = vpop.permute.xlu0 %6170
        %6172 = vrot.lane.b32.xlu0 %v6098, 48
        %v6173 = vpop.permute.xlu0 %6172
        %6174 = vrot.lane.b32.xlu0 %v6099, 48
        %v6175 = vpop.permute.xlu0 %6174
        %6176 = vrot.lane.b32.xlu0 %v6100, 48
        %v6177 = vpop.permute.xlu0 %6176
        %6178 = vrot.lane.b32.xlu0 %v6101, 48
        %v6179 = vpop.permute.xlu0 %6178
        %6180 = vrot.lane.b32.xlu0 %v6102, 48
        %v6181 = vpop.permute.xlu0 %6180
        %6182 = vrot.lane.b32.xlu0 %v6103, 48
        %v6183 = vpop.permute.xlu0 %6182
        %6184 = vrot.lane.b32.xlu0 %v6104, 48
        %v6185 = vpop.permute.xlu0 %6184
        %6186 = vrot.lane.b32.xlu0 %v6105, 48
        %v6187 = vpop.permute.xlu0 %6186
        %6188 = vrot.lane.b32.xlu0 %v6106, 48
        %v6189 = vpop.permute.xlu0 %6188
        %6190 = vrot.lane.b32.xlu0 %v6107, 48
        %v6191 = vpop.permute.xlu0 %6190
        %6192 = vrot.lane.b32.xlu0 %v6108, 48
        %v6193 = vpop.permute.xlu0 %6192
        %6194 = vrot.lane.b32.xlu0 %v6109, 48
        %v6195 = vpop.permute.xlu0 %6194
        %6196 = vrot.lane.b32.xlu0 %v6110, 48
        %v6197 = vpop.permute.xlu0 %6196
        %6198 = vrot.lane.b32.xlu0 %v6111, 48
        %v6199 = vpop.permute.xlu0 %6198
        %6200 = vrot.lane.b32.xlu0 %v6112, 48
        %v6201 = vpop.permute.xlu0 %6200
        %6202 = vrot.lane.b32.xlu0 %v6113, 48
        %v6203 = vpop.permute.xlu0 %6202
        %6204 = vrot.lane.b32.xlu0 %v6114, 48
        %v6205 = vpop.permute.xlu0 %6204
        %6206 = vrot.lane.b32.xlu0 %v6115, 48
        %v6207 = vpop.permute.xlu0 %6206
        %6208 = vrot.lane.b32.xlu0 %v6116, 48
        %v6209 = vpop.permute.xlu0 %6208
        %6210 = vrot.lane.b32.xlu0 %v6117, 48
        %v6211 = vpop.permute.xlu0 %6210
        %6212 = vrot.lane.b32.xlu0 %v6118, 48
        %v6213 = vpop.permute.xlu0 %6212
        %6214 = vrot.lane.b32.xlu0 %v6119, 48
        %v6215 = vpop.permute.xlu0 %6214
        %vm6248 = vcmask 589184
        %6249 = vst.msk [vmem:[#allocation3] sm:$0xff] %vm6248, %v6153
        %6250 = vst.msk [vmem:[#allocation3 + $0x10] sm:$0xff] %vm6248, %v6155
        %6251 = vst.msk [vmem:[#allocation3 + $0x20] sm:$0xff] %vm6248, %v6157
        %6252 = vst.msk [vmem:[#allocation3 + $0x30] sm:$0xff] %vm6248, %v6159
        %6253 = vst.msk [vmem:[#allocation3 + $0x40] sm:$0xff] %vm6248, %v6161
        %6254 = vst.msk [vmem:[#allocation3 + $0x50] sm:$0xff] %vm6248, %v6163
        %6255 = vst.msk [vmem:[#allocation3 + $0x60] sm:$0xff] %vm6248, %v6165
        %6256 = vst.msk [vmem:[#allocation3 + $0x70] sm:$0xff] %vm6248, %v6167
        %6257 = vst.msk [vmem:[#allocation3 + $0x80] sm:$0xff] %vm6248, %v6169
        %6258 = vst.msk [vmem:[#allocation3 + $0x90] sm:$0xff] %vm6248, %v6171
        %6259 = vst.msk [vmem:[#allocation3 + $0xa0] sm:$0xff] %vm6248, %v6173
        %6260 = vst.msk [vmem:[#allocation3 + $0xb0] sm:$0xff] %vm6248, %v6175
        %6261 = vst.msk [vmem:[#allocation3 + $0xc0] sm:$0xff] %vm6248, %v6177
        %6262 = vst.msk [vmem:[#allocation3 + $0xd0] sm:$0xff] %vm6248, %v6179
        %6263 = vst.msk [vmem:[#allocation3 + $0xe0] sm:$0xff] %vm6248, %v6181
        %6264 = vst.msk [vmem:[#allocation3 + $0xf0] sm:$0xff] %vm6248, %v6183
        %6265 = vst.msk [vmem:[#allocation3 + $0x100] sm:$0xff] %vm6248, %v6185
        %6266 = vst.msk [vmem:[#allocation3 + $0x110] sm:$0xff] %vm6248, %v6187
        %6267 = vst.msk [vmem:[#allocation3 + $0x120] sm:$0xff] %vm6248, %v6189
        %6268 = vst.msk [vmem:[#allocation3 + $0x130] sm:$0xff] %vm6248, %v6191
        %6269 = vst.msk [vmem:[#allocation3 + $0x140] sm:$0xff] %vm6248, %v6193
        %6270 = vst.msk [vmem:[#allocation3 + $0x150] sm:$0xff] %vm6248, %v6195
        %6271 = vst.msk [vmem:[#allocation3 + $0x160] sm:$0xff] %vm6248, %v6197
        %6272 = vst.msk [vmem:[#allocation3 + $0x170] sm:$0xff] %vm6248, %v6199
        %6273 = vst.msk [vmem:[#allocation3 + $0x180] sm:$0xff] %vm6248, %v6201
        %6274 = vst.msk [vmem:[#allocation3 + $0x190] sm:$0xff] %vm6248, %v6203
        %6275 = vst.msk [vmem:[#allocation3 + $0x1a0] sm:$0xff] %vm6248, %v6205
        %6276 = vst.msk [vmem:[#allocation3 + $0x1b0] sm:$0xff] %vm6248, %v6207
        %6277 = vst.msk [vmem:[#allocation3 + $0x1c0] sm:$0xff] %vm6248, %v6209
        %6278 = vst.msk [vmem:[#allocation3 + $0x1d0] sm:$0xff] %vm6248, %v6211
        %6279 = vst.msk [vmem:[#allocation3 + $0x1e0] sm:$0xff] %vm6248, %v6213
        %6280 = vst.msk [vmem:[#allocation3 + $0x1f0] sm:$0xff] %vm6248, %v6215
        %v6281 = vld [vmem:[%s545] sm:$0xff]
        %v6282 = vld [vmem:[%s545 + $0x8] sm:$0xff]
        %v6283 = vld [vmem:[%s545 + $0x18] sm:$0xff]
        %v6284 = vld [vmem:[%s545 + $0x20] sm:$0xff]
        %v6285 = vld [vmem:[%s545 + $0x30] sm:$0xff]
        %v6286 = vld [vmem:[%s545 + $0x38] sm:$0xff]
        %v6287 = vld [vmem:[%s545 + $0x48] sm:$0xff]
        %v6288 = vld [vmem:[%s545 + $0x50] sm:$0xff]
        %v6289 = vld [vmem:[%s545 + $0x60] sm:$0xff]
        %v6290 = vld [vmem:[%s545 + $0x68] sm:$0xff]
        %v6291 = vld [vmem:[%s545 + $0x78] sm:$0xff]
        %v6292 = vld [vmem:[%s545 + $0x80] sm:$0xff]
        %v6293 = vld [vmem:[%s545 + $0x90] sm:$0xff]
        %v6294 = vld [vmem:[%s545 + $0x98] sm:$0xff]
        %v6295 = vld [vmem:[%s545 + $0xa8] sm:$0xff]
        %v6296 = vld [vmem:[%s545 + $0xb0] sm:$0xff]
        %v6297 = vld [vmem:[%s545 + $0xc0] sm:$0xff]
        %v6298 = vld [vmem:[%s545 + $0xc8] sm:$0xff]
        %v6299 = vld [vmem:[%s545 + $0xd8] sm:$0xff]
        %v6300 = vld [vmem:[%s545 + $0xe0] sm:$0xff]
        %v6301 = vld [vmem:[%s545 + $0xf0] sm:$0xff]
        %v6302 = vld [vmem:[%s545 + $0xf8] sm:$0xff]
        %v6303 = vld [vmem:[%s545 + $0x108] sm:$0xff]
        %v6304 = vld [vmem:[%s545 + $0x110] sm:$0xff]
        %v6305 = vld [vmem:[%s545 + $0x120] sm:$0xff]
        %v6306 = vld [vmem:[%s545 + $0x128] sm:$0xff]
        %v6307 = vld [vmem:[%s545 + $0x138] sm:$0xff]
        %v6308 = vld [vmem:[%s545 + $0x140] sm:$0xff]
        %v6309 = vld [vmem:[%s545 + $0x150] sm:$0xff]
        %v6310 = vld [vmem:[%s545 + $0x158] sm:$0xff]
        %v6311 = vld [vmem:[%s545 + $0x168] sm:$0xff]
        %v6312 = vld [vmem:[%s545 + $0x170] sm:$0xff]
        %6345 = vrot.lane.b32.xlu0 %v6281, 72
        %v6346 = vpop.permute.xlu0 %6345
        %6347 = vrot.lane.b32.xlu0 %v6282, 72
        %v6348 = vpop.permute.xlu0 %6347
        %6349 = vrot.lane.b32.xlu0 %v6283, 72
        %v6350 = vpop.permute.xlu0 %6349
        %6351 = vrot.lane.b32.xlu0 %v6284, 72
        %v6352 = vpop.permute.xlu0 %6351
        %6353 = vrot.lane.b32.xlu0 %v6285, 72
        %v6354 = vpop.permute.xlu0 %6353
        %6355 = vrot.lane.b32.xlu0 %v6286, 72
        %v6356 = vpop.permute.xlu0 %6355
        %6357 = vrot.lane.b32.xlu0 %v6287, 72
        %v6358 = vpop.permute.xlu0 %6357
        %6359 = vrot.lane.b32.xlu0 %v6288, 72
        %v6360 = vpop.permute.xlu0 %6359
        %6361 = vrot.lane.b32.xlu0 %v6289, 72
        %v6362 = vpop.permute.xlu0 %6361
        %6363 = vrot.lane.b32.xlu0 %v6290, 72
        %v6364 = vpop.permute.xlu0 %6363
        %6365 = vrot.lane.b32.xlu0 %v6291, 72
        %v6366 = vpop.permute.xlu0 %6365
        %6367 = vrot.lane.b32.xlu0 %v6292, 72
        %v6368 = vpop.permute.xlu0 %6367
        %6369 = vrot.lane.b32.xlu0 %v6293, 72
        %v6370 = vpop.permute.xlu0 %6369
        %6371 = vrot.lane.b32.xlu0 %v6294, 72
        %v6372 = vpop.permute.xlu0 %6371
        %6373 = vrot.lane.b32.xlu0 %v6295, 72
        %v6374 = vpop.permute.xlu0 %6373
        %6375 = vrot.lane.b32.xlu0 %v6296, 72
        %v6376 = vpop.permute.xlu0 %6375
        %6377 = vrot.lane.b32.xlu0 %v6297, 72
        %v6378 = vpop.permute.xlu0 %6377
        %6379 = vrot.lane.b32.xlu0 %v6298, 72
        %v6380 = vpop.permute.xlu0 %6379
        %6381 = vrot.lane.b32.xlu0 %v6299, 72
        %v6382 = vpop.permute.xlu0 %6381
        %6383 = vrot.lane.b32.xlu0 %v6300, 72
        %v6384 = vpop.permute.xlu0 %6383
        %6385 = vrot.lane.b32.xlu0 %v6301, 72
        %v6386 = vpop.permute.xlu0 %6385
        %6387 = vrot.lane.b32.xlu0 %v6302, 72
        %v6388 = vpop.permute.xlu0 %6387
        %6389 = vrot.lane.b32.xlu0 %v6303, 72
        %v6390 = vpop.permute.xlu0 %6389
        %6391 = vrot.lane.b32.xlu0 %v6304, 72
        %v6392 = vpop.permute.xlu0 %6391
        %6393 = vrot.lane.b32.xlu0 %v6305, 72
        %v6394 = vpop.permute.xlu0 %6393
        %6395 = vrot.lane.b32.xlu0 %v6306, 72
        %v6396 = vpop.permute.xlu0 %6395
        %6397 = vrot.lane.b32.xlu0 %v6307, 72
        %v6398 = vpop.permute.xlu0 %6397
        %6399 = vrot.lane.b32.xlu0 %v6308, 72
        %v6400 = vpop.permute.xlu0 %6399
        %6401 = vrot.lane.b32.xlu0 %v6309, 72
        %v6402 = vpop.permute.xlu0 %6401
        %6403 = vrot.lane.b32.xlu0 %v6310, 72
        %v6404 = vpop.permute.xlu0 %6403
        %6405 = vrot.lane.b32.xlu0 %v6311, 72
        %v6406 = vpop.permute.xlu0 %6405
        %6407 = vrot.lane.b32.xlu0 %v6312, 72
        %v6408 = vpop.permute.xlu0 %6407
        %vm6441 = vcmask 785984
        %6442 = vst.msk [vmem:[#allocation3] sm:$0xff] %vm6441, %v6346
        %6443 = vst.msk [vmem:[#allocation3 + $0x10] sm:$0xff] %vm6441, %v6348
        %6444 = vst.msk [vmem:[#allocation3 + $0x20] sm:$0xff] %vm6441, %v6350
        %6445 = vst.msk [vmem:[#allocation3 + $0x30] sm:$0xff] %vm6441, %v6352
        %6446 = vst.msk [vmem:[#allocation3 + $0x40] sm:$0xff] %vm6441, %v6354
        %6447 = vst.msk [vmem:[#allocation3 + $0x50] sm:$0xff] %vm6441, %v6356
        %6448 = vst.msk [vmem:[#allocation3 + $0x60] sm:$0xff] %vm6441, %v6358
        %6449 = vst.msk [vmem:[#allocation3 + $0x70] sm:$0xff] %vm6441, %v6360
        %6450 = vst.msk [vmem:[#allocation3 + $0x80] sm:$0xff] %vm6441, %v6362
        %6451 = vst.msk [vmem:[#allocation3 + $0x90] sm:$0xff] %vm6441, %v6364
        %6452 = vst.msk [vmem:[#allocation3 + $0xa0] sm:$0xff] %vm6441, %v6366
        %6453 = vst.msk [vmem:[#allocation3 + $0xb0] sm:$0xff] %vm6441, %v6368
        %6454 = vst.msk [vmem:[#allocation3 + $0xc0] sm:$0xff] %vm6441, %v6370
        %6455 = vst.msk [vmem:[#allocation3 + $0xd0] sm:$0xff] %vm6441, %v6372
        %6456 = vst.msk [vmem:[#allocation3 + $0xe0] sm:$0xff] %vm6441, %v6374
        %6457 = vst.msk [vmem:[#allocation3 + $0xf0] sm:$0xff] %vm6441, %v6376
        %6458 = vst.msk [vmem:[#allocation3 + $0x100] sm:$0xff] %vm6441, %v6378
        %6459 = vst.msk [vmem:[#allocation3 + $0x110] sm:$0xff] %vm6441, %v6380
        %6460 = vst.msk [vmem:[#allocation3 + $0x120] sm:$0xff] %vm6441, %v6382
        %6461 = vst.msk [vmem:[#allocation3 + $0x130] sm:$0xff] %vm6441, %v6384
        %6462 = vst.msk [vmem:[#allocation3 + $0x140] sm:$0xff] %vm6441, %v6386
        %6463 = vst.msk [vmem:[#allocation3 + $0x150] sm:$0xff] %vm6441, %v6388
        %6464 = vst.msk [vmem:[#allocation3 + $0x160] sm:$0xff] %vm6441, %v6390
        %6465 = vst.msk [vmem:[#allocation3 + $0x170] sm:$0xff] %vm6441, %v6392
        %6466 = vst.msk [vmem:[#allocation3 + $0x180] sm:$0xff] %vm6441, %v6394
        %6467 = vst.msk [vmem:[#allocation3 + $0x190] sm:$0xff] %vm6441, %v6396
        %6468 = vst.msk [vmem:[#allocation3 + $0x1a0] sm:$0xff] %vm6441, %v6398
        %6469 = vst.msk [vmem:[#allocation3 + $0x1b0] sm:$0xff] %vm6441, %v6400
        %6470 = vst.msk [vmem:[#allocation3 + $0x1c0] sm:$0xff] %vm6441, %v6402
        %6471 = vst.msk [vmem:[#allocation3 + $0x1d0] sm:$0xff] %vm6441, %v6404
        %6472 = vst.msk [vmem:[#allocation3 + $0x1e0] sm:$0xff] %vm6441, %v6406
        %6473 = vst.msk [vmem:[#allocation3 + $0x1f0] sm:$0xff] %vm6441, %v6408
        %v6474 = vld [vmem:[%s545 + $0x1] sm:$0xff]
        %v6475 = vld [vmem:[%s545 + $0x9] sm:$0xff]
        %v6476 = vld [vmem:[%s545 + $0x19] sm:$0xff]
        %v6477 = vld [vmem:[%s545 + $0x21] sm:$0xff]
        %v6478 = vld [vmem:[%s545 + $0x31] sm:$0xff]
        %v6479 = vld [vmem:[%s545 + $0x39] sm:$0xff]
        %v6480 = vld [vmem:[%s545 + $0x49] sm:$0xff]
        %v6481 = vld [vmem:[%s545 + $0x51] sm:$0xff]
        %v6482 = vld [vmem:[%s545 + $0x61] sm:$0xff]
        %v6483 = vld [vmem:[%s545 + $0x69] sm:$0xff]
        %v6484 = vld [vmem:[%s545 + $0x79] sm:$0xff]
        %v6485 = vld [vmem:[%s545 + $0x81] sm:$0xff]
        %v6486 = vld [vmem:[%s545 + $0x91] sm:$0xff]
        %v6487 = vld [vmem:[%s545 + $0x99] sm:$0xff]
        %v6488 = vld [vmem:[%s545 + $0xa9] sm:$0xff]
        %v6489 = vld [vmem:[%s545 + $0xb1] sm:$0xff]
        %v6490 = vld [vmem:[%s545 + $0xc1] sm:$0xff]
        %v6491 = vld [vmem:[%s545 + $0xc9] sm:$0xff]
        %v6492 = vld [vmem:[%s545 + $0xd9] sm:$0xff]
        %v6493 = vld [vmem:[%s545 + $0xe1] sm:$0xff]
        %v6494 = vld [vmem:[%s545 + $0xf1] sm:$0xff]
        %v6495 = vld [vmem:[%s545 + $0xf9] sm:$0xff]
        %v6496 = vld [vmem:[%s545 + $0x109] sm:$0xff]
        %v6497 = vld [vmem:[%s545 + $0x111] sm:$0xff]
        %v6498 = vld [vmem:[%s545 + $0x121] sm:$0xff]
        %v6499 = vld [vmem:[%s545 + $0x129] sm:$0xff]
        %v6500 = vld [vmem:[%s545 + $0x139] sm:$0xff]
        %v6501 = vld [vmem:[%s545 + $0x141] sm:$0xff]
        %v6502 = vld [vmem:[%s545 + $0x151] sm:$0xff]
        %v6503 = vld [vmem:[%s545 + $0x159] sm:$0xff]
        %v6504 = vld [vmem:[%s545 + $0x169] sm:$0xff]
        %v6505 = vld [vmem:[%s545 + $0x171] sm:$0xff]
        %6538 = vrot.lane.b32.xlu0 %v6474, 96
        %v6539 = vpop.permute.xlu0 %6538
        %6540 = vrot.lane.b32.xlu0 %v6475, 96
        %v6541 = vpop.permute.xlu0 %6540
        %6542 = vrot.lane.b32.xlu0 %v6476, 96
        %v6543 = vpop.permute.xlu0 %6542
        %6544 = vrot.lane.b32.xlu0 %v6477, 96
        %v6545 = vpop.permute.xlu0 %6544
        %6546 = vrot.lane.b32.xlu0 %v6478, 96
        %v6547 = vpop.permute.xlu0 %6546
        %6548 = vrot.lane.b32.xlu0 %v6479, 96
        %v6549 = vpop.permute.xlu0 %6548
        %6550 = vrot.lane.b32.xlu0 %v6480, 96
        %v6551 = vpop.permute.xlu0 %6550
        %6552 = vrot.lane.b32.xlu0 %v6481, 96
        %v6553 = vpop.permute.xlu0 %6552
        %6554 = vrot.lane.b32.xlu0 %v6482, 96
        %v6555 = vpop.permute.xlu0 %6554
        %6556 = vrot.lane.b32.xlu0 %v6483, 96
        %v6557 = vpop.permute.xlu0 %6556
        %6558 = vrot.lane.b32.xlu0 %v6484, 96
        %v6559 = vpop.permute.xlu0 %6558
        %6560 = vrot.lane.b32.xlu0 %v6485, 96
        %v6561 = vpop.permute.xlu0 %6560
        %6562 = vrot.lane.b32.xlu0 %v6486, 96
        %v6563 = vpop.permute.xlu0 %6562
        %6564 = vrot.lane.b32.xlu0 %v6487, 96
        %v6565 = vpop.permute.xlu0 %6564
        %6566 = vrot.lane.b32.xlu0 %v6488, 96
        %v6567 = vpop.permute.xlu0 %6566
        %6568 = vrot.lane.b32.xlu0 %v6489, 96
        %v6569 = vpop.permute.xlu0 %6568
        %6570 = vrot.lane.b32.xlu0 %v6490, 96
        %v6571 = vpop.permute.xlu0 %6570
        %6572 = vrot.lane.b32.xlu0 %v6491, 96
        %v6573 = vpop.permute.xlu0 %6572
        %6574 = vrot.lane.b32.xlu0 %v6492, 96
        %v6575 = vpop.permute.xlu0 %6574
        %6576 = vrot.lane.b32.xlu0 %v6493, 96
        %v6577 = vpop.permute.xlu0 %6576
        %6578 = vrot.lane.b32.xlu0 %v6494, 96
        %v6579 = vpop.permute.xlu0 %6578
        %6580 = vrot.lane.b32.xlu0 %v6495, 96
        %v6581 = vpop.permute.xlu0 %6580
        %6582 = vrot.lane.b32.xlu0 %v6496, 96
        %v6583 = vpop.permute.xlu0 %6582
        %6584 = vrot.lane.b32.xlu0 %v6497, 96
        %v6585 = vpop.permute.xlu0 %6584
        %6586 = vrot.lane.b32.xlu0 %v6498, 96
        %v6587 = vpop.permute.xlu0 %6586
        %6588 = vrot.lane.b32.xlu0 %v6499, 96
        %v6589 = vpop.permute.xlu0 %6588
        %6590 = vrot.lane.b32.xlu0 %v6500, 96
        %v6591 = vpop.permute.xlu0 %6590
        %6592 = vrot.lane.b32.xlu0 %v6501, 96
        %v6593 = vpop.permute.xlu0 %6592
        %6594 = vrot.lane.b32.xlu0 %v6502, 96
        %v6595 = vpop.permute.xlu0 %6594
        %6596 = vrot.lane.b32.xlu0 %v6503, 96
        %v6597 = vpop.permute.xlu0 %6596
        %6598 = vrot.lane.b32.xlu0 %v6504, 96
        %v6599 = vpop.permute.xlu0 %6598
        %6600 = vrot.lane.b32.xlu0 %v6505, 96
        %v6601 = vpop.permute.xlu0 %6600
        %vm6634 = vcmask 982784
        %6635 = vst.msk [vmem:[#allocation3] sm:$0xff] %vm6634, %v6539
        %6636 = vst.msk [vmem:[#allocation3 + $0x10] sm:$0xff] %vm6634, %v6541
        %6637 = vst.msk [vmem:[#allocation3 + $0x20] sm:$0xff] %vm6634, %v6543
        %6638 = vst.msk [vmem:[#allocation3 + $0x30] sm:$0xff] %vm6634, %v6545
        %6639 = vst.msk [vmem:[#allocation3 + $0x40] sm:$0xff] %vm6634, %v6547
        %6640 = vst.msk [vmem:[#allocation3 + $0x50] sm:$0xff] %vm6634, %v6549
        %6641 = vst.msk [vmem:[#allocation3 + $0x60] sm:$0xff] %vm6634, %v6551
        %6642 = vst.msk [vmem:[#allocation3 + $0x70] sm:$0xff] %vm6634, %v6553
        %6643 = vst.msk [vmem:[#allocation3 + $0x80] sm:$0xff] %vm6634, %v6555
        %6644 = vst.msk [vmem:[#allocation3 + $0x90] sm:$0xff] %vm6634, %v6557
        %6645 = vst.msk [vmem:[#allocation3 + $0xa0] sm:$0xff] %vm6634, %v6559
        %6646 = vst.msk [vmem:[#allocation3 + $0xb0] sm:$0xff] %vm6634, %v6561
        %6647 = vst.msk [vmem:[#allocation3 + $0xc0] sm:$0xff] %vm6634, %v6563
        %6648 = vst.msk [vmem:[#allocation3 + $0xd0] sm:$0xff] %vm6634, %v6565
        %6649 = vst.msk [vmem:[#allocation3 + $0xe0] sm:$0xff] %vm6634, %v6567
        %6650 = vst.msk [vmem:[#allocation3 + $0xf0] sm:$0xff] %vm6634, %v6569
        %6651 = vst.msk [vmem:[#allocation3 + $0x100] sm:$0xff] %vm6634, %v6571
        %6652 = vst.msk [vmem:[#allocation3 + $0x110] sm:$0xff] %vm6634, %v6573
        %6653 = vst.msk [vmem:[#allocation3 + $0x120] sm:$0xff] %vm6634, %v6575
        %6654 = vst.msk [vmem:[#allocation3 + $0x130] sm:$0xff] %vm6634, %v6577
        %6655 = vst.msk [vmem:[#allocation3 + $0x140] sm:$0xff] %vm6634, %v6579
        %6656 = vst.msk [vmem:[#allocation3 + $0x150] sm:$0xff] %vm6634, %v6581
        %6657 = vst.msk [vmem:[#allocation3 + $0x160] sm:$0xff] %vm6634, %v6583
        %6658 = vst.msk [vmem:[#allocation3 + $0x170] sm:$0xff] %vm6634, %v6585
        %6659 = vst.msk [vmem:[#allocation3 + $0x180] sm:$0xff] %vm6634, %v6587
        %6660 = vst.msk [vmem:[#allocation3 + $0x190] sm:$0xff] %vm6634, %v6589
        %6661 = vst.msk [vmem:[#allocation3 + $0x1a0] sm:$0xff] %vm6634, %v6591
        %6662 = vst.msk [vmem:[#allocation3 + $0x1b0] sm:$0xff] %vm6634, %v6593
        %6663 = vst.msk [vmem:[#allocation3 + $0x1c0] sm:$0xff] %vm6634, %v6595
        %6664 = vst.msk [vmem:[#allocation3 + $0x1d0] sm:$0xff] %vm6634, %v6597
        %6665 = vst.msk [vmem:[#allocation3 + $0x1e0] sm:$0xff] %vm6634, %v6599
        %6666 = vst.msk [vmem:[#allocation3 + $0x1f0] sm:$0xff] %vm6634, %v6601
        %v6667 = vld [vmem:[%s545 + $0x2] sm:$0xff]
        %v6668 = vld [vmem:[%s545 + $0xa] sm:$0xff]
        %v6669 = vld [vmem:[%s545 + $0x1a] sm:$0xff]
        %v6670 = vld [vmem:[%s545 + $0x22] sm:$0xff]
        %v6671 = vld [vmem:[%s545 + $0x32] sm:$0xff]
        %v6672 = vld [vmem:[%s545 + $0x3a] sm:$0xff]
        %v6673 = vld [vmem:[%s545 + $0x4a] sm:$0xff]
        %v6674 = vld [vmem:[%s545 + $0x52] sm:$0xff]
        %v6675 = vld [vmem:[%s545 + $0x62] sm:$0xff]
        %v6676 = vld [vmem:[%s545 + $0x6a] sm:$0xff]
        %v6677 = vld [vmem:[%s545 + $0x7a] sm:$0xff]
        %v6678 = vld [vmem:[%s545 + $0x82] sm:$0xff]
        %v6679 = vld [vmem:[%s545 + $0x92] sm:$0xff]
        %v6680 = vld [vmem:[%s545 + $0x9a] sm:$0xff]
        %v6681 = vld [vmem:[%s545 + $0xaa] sm:$0xff]
        %v6682 = vld [vmem:[%s545 + $0xb2] sm:$0xff]
        %v6683 = vld [vmem:[%s545 + $0xc2] sm:$0xff]
        %v6684 = vld [vmem:[%s545 + $0xca] sm:$0xff]
        %v6685 = vld [vmem:[%s545 + $0xda] sm:$0xff]
        %v6686 = vld [vmem:[%s545 + $0xe2] sm:$0xff]
        %v6687 = vld [vmem:[%s545 + $0xf2] sm:$0xff]
        %v6688 = vld [vmem:[%s545 + $0xfa] sm:$0xff]
        %v6689 = vld [vmem:[%s545 + $0x10a] sm:$0xff]
        %v6690 = vld [vmem:[%s545 + $0x112] sm:$0xff]
        %v6691 = vld [vmem:[%s545 + $0x122] sm:$0xff]
        %v6692 = vld [vmem:[%s545 + $0x12a] sm:$0xff]
        %v6693 = vld [vmem:[%s545 + $0x13a] sm:$0xff]
        %v6694 = vld [vmem:[%s545 + $0x142] sm:$0xff]
        %v6695 = vld [vmem:[%s545 + $0x152] sm:$0xff]
        %v6696 = vld [vmem:[%s545 + $0x15a] sm:$0xff]
        %v6697 = vld [vmem:[%s545 + $0x16a] sm:$0xff]
        %v6698 = vld [vmem:[%s545 + $0x172] sm:$0xff]
        %6731 = vrot.lane.b32.xlu0 %v6667, 120
        %v6732 = vpop.permute.xlu0 %6731
        %6733 = vrot.lane.b32.xlu0 %v6668, 120
        %v6734 = vpop.permute.xlu0 %6733
        %6735 = vrot.lane.b32.xlu0 %v6669, 120
        %v6736 = vpop.permute.xlu0 %6735
        %6737 = vrot.lane.b32.xlu0 %v6670, 120
        %v6738 = vpop.permute.xlu0 %6737
        %6739 = vrot.lane.b32.xlu0 %v6671, 120
        %v6740 = vpop.permute.xlu0 %6739
        %6741 = vrot.lane.b32.xlu0 %v6672, 120
        %v6742 = vpop.permute.xlu0 %6741
        %6743 = vrot.lane.b32.xlu0 %v6673, 120
        %v6744 = vpop.permute.xlu0 %6743
        %6745 = vrot.lane.b32.xlu0 %v6674, 120
        %v6746 = vpop.permute.xlu0 %6745
        %6747 = vrot.lane.b32.xlu0 %v6675, 120
        %v6748 = vpop.permute.xlu0 %6747
        %6749 = vrot.lane.b32.xlu0 %v6676, 120
        %v6750 = vpop.permute.xlu0 %6749
        %6751 = vrot.lane.b32.xlu0 %v6677, 120
        %v6752 = vpop.permute.xlu0 %6751
        %6753 = vrot.lane.b32.xlu0 %v6678, 120
        %v6754 = vpop.permute.xlu0 %6753
        %6755 = vrot.lane.b32.xlu0 %v6679, 120
        %v6756 = vpop.permute.xlu0 %6755
        %6757 = vrot.lane.b32.xlu0 %v6680, 120
        %v6758 = vpop.permute.xlu0 %6757
        %6759 = vrot.lane.b32.xlu0 %v6681, 120
        %v6760 = vpop.permute.xlu0 %6759
        %6761 = vrot.lane.b32.xlu0 %v6682, 120
        %v6762 = vpop.permute.xlu0 %6761
        %6763 = vrot.lane.b32.xlu0 %v6683, 120
        %v6764 = vpop.permute.xlu0 %6763
        %6765 = vrot.lane.b32.xlu0 %v6684, 120
        %v6766 = vpop.permute.xlu0 %6765
        %6767 = vrot.lane.b32.xlu0 %v6685, 120
        %v6768 = vpop.permute.xlu0 %6767
        %6769 = vrot.lane.b32.xlu0 %v6686, 120
        %v6770 = vpop.permute.xlu0 %6769
        %6771 = vrot.lane.b32.xlu0 %v6687, 120
        %v6772 = vpop.permute.xlu0 %6771
        %6773 = vrot.lane.b32.xlu0 %v6688, 120
        %v6774 = vpop.permute.xlu0 %6773
        %6775 = vrot.lane.b32.xlu0 %v6689, 120
        %v6776 = vpop.permute.xlu0 %6775
        %6777 = vrot.lane.b32.xlu0 %v6690, 120
        %v6778 = vpop.permute.xlu0 %6777
        %6779 = vrot.lane.b32.xlu0 %v6691, 120
        %v6780 = vpop.permute.xlu0 %6779
        %6781 = vrot.lane.b32.xlu0 %v6692, 120
        %v6782 = vpop.permute.xlu0 %6781
        %6783 = vrot.lane.b32.xlu0 %v6693, 120
        %v6784 = vpop.permute.xlu0 %6783
        %6785 = vrot.lane.b32.xlu0 %v6694, 120
        %v6786 = vpop.permute.xlu0 %6785
        %6787 = vrot.lane.b32.xlu0 %v6695, 120
        %v6788 = vpop.permute.xlu0 %6787
        %6789 = vrot.lane.b32.xlu0 %v6696, 120
        %v6790 = vpop.permute.xlu0 %6789
        %6791 = vrot.lane.b32.xlu0 %v6697, 120
        %v6792 = vpop.permute.xlu0 %6791
        %6793 = vrot.lane.b32.xlu0 %v6698, 120
        %v6794 = vpop.permute.xlu0 %6793
        %vm6827 = vcmask 1048512
        %6828 = vst.msk [vmem:[#allocation3] sm:$0xff] %vm6827, %v6732
        %6829 = vst.msk [vmem:[#allocation3 + $0x8] sm:$0xff] %vm3459, %v6732
        %6830 = vst.msk [vmem:[#allocation3 + $0x10] sm:$0xff] %vm6827, %v6734
        %6831 = vst.msk [vmem:[#allocation3 + $0x18] sm:$0xff] %vm3459, %v6734
        %6832 = vst.msk [vmem:[#allocation3 + $0x20] sm:$0xff] %vm6827, %v6736
        %6833 = vst.msk [vmem:[#allocation3 + $0x28] sm:$0xff] %vm3459, %v6736
        %6834 = vst.msk [vmem:[#allocation3 + $0x30] sm:$0xff] %vm6827, %v6738
        %6835 = vst.msk [vmem:[#allocation3 + $0x38] sm:$0xff] %vm3459, %v6738
        %6836 = vst.msk [vmem:[#allocation3 + $0x40] sm:$0xff] %vm6827, %v6740
        %6837 = vst.msk [vmem:[#allocation3 + $0x48] sm:$0xff] %vm3459, %v6740
        %6838 = vst.msk [vmem:[#allocation3 + $0x50] sm:$0xff] %vm6827, %v6742
        %6839 = vst.msk [vmem:[#allocation3 + $0x58] sm:$0xff] %vm3459, %v6742
        %6840 = vst.msk [vmem:[#allocation3 + $0x60] sm:$0xff] %vm6827, %v6744
        %6841 = vst.msk [vmem:[#allocation3 + $0x68] sm:$0xff] %vm3459, %v6744
        %6842 = vst.msk [vmem:[#allocation3 + $0x70] sm:$0xff] %vm6827, %v6746
        %6843 = vst.msk [vmem:[#allocation3 + $0x78] sm:$0xff] %vm3459, %v6746
        %6844 = vst.msk [vmem:[#allocation3 + $0x80] sm:$0xff] %vm6827, %v6748
        %6845 = vst.msk [vmem:[#allocation3 + $0x88] sm:$0xff] %vm3459, %v6748
        %6846 = vst.msk [vmem:[#allocation3 + $0x90] sm:$0xff] %vm6827, %v6750
        %6847 = vst.msk [vmem:[#allocation3 + $0x98] sm:$0xff] %vm3459, %v6750
        %6848 = vst.msk [vmem:[#allocation3 + $0xa0] sm:$0xff] %vm6827, %v6752
        %6849 = vst.msk [vmem:[#allocation3 + $0xa8] sm:$0xff] %vm3459, %v6752
        %6850 = vst.msk [vmem:[#allocation3 + $0xb0] sm:$0xff] %vm6827, %v6754
        %6851 = vst.msk [vmem:[#allocation3 + $0xb8] sm:$0xff] %vm3459, %v6754
        %6852 = vst.msk [vmem:[#allocation3 + $0xc0] sm:$0xff] %vm6827, %v6756
        %6853 = vst.msk [vmem:[#allocation3 + $0xc8] sm:$0xff] %vm3459, %v6756
        %6854 = vst.msk [vmem:[#allocation3 + $0xd0] sm:$0xff] %vm6827, %v6758
        %6855 = vst.msk [vmem:[#allocation3 + $0xd8] sm:$0xff] %vm3459, %v6758
        %6856 = vst.msk [vmem:[#allocation3 + $0xe0] sm:$0xff] %vm6827, %v6760
        %6857 = vst.msk [vmem:[#allocation3 + $0xe8] sm:$0xff] %vm3459, %v6760
        %6858 = vst.msk [vmem:[#allocation3 + $0xf0] sm:$0xff] %vm6827, %v6762
        %6859 = vst.msk [vmem:[#allocation3 + $0xf8] sm:$0xff] %vm3459, %v6762
        %6860 = vst.msk [vmem:[#allocation3 + $0x100] sm:$0xff] %vm6827, %v6764
        %6861 = vst.msk [vmem:[#allocation3 + $0x108] sm:$0xff] %vm3459, %v6764
        %6862 = vst.msk [vmem:[#allocation3 + $0x110] sm:$0xff] %vm6827, %v6766
        %6863 = vst.msk [vmem:[#allocation3 + $0x118] sm:$0xff] %vm3459, %v6766
        %6864 = vst.msk [vmem:[#allocation3 + $0x120] sm:$0xff] %vm6827, %v6768
        %6865 = vst.msk [vmem:[#allocation3 + $0x128] sm:$0xff] %vm3459, %v6768
        %6866 = vst.msk [vmem:[#allocation3 + $0x130] sm:$0xff] %vm6827, %v6770
        %6867 = vst.msk [vmem:[#allocation3 + $0x138] sm:$0xff] %vm3459, %v6770
        %6868 = vst.msk [vmem:[#allocation3 + $0x140] sm:$0xff] %vm6827, %v6772
        %6869 = vst.msk [vmem:[#allocation3 + $0x148] sm:$0xff] %vm3459, %v6772
        %6870 = vst.msk [vmem:[#allocation3 + $0x150] sm:$0xff] %vm6827, %v6774
        %6871 = vst.msk [vmem:[#allocation3 + $0x158] sm:$0xff] %vm3459, %v6774
        %6872 = vst.msk [vmem:[#allocation3 + $0x160] sm:$0xff] %vm6827, %v6776
        %6873 = vst.msk [vmem:[#allocation3 + $0x168] sm:$0xff] %vm3459, %v6776
        %6874 = vst.msk [vmem:[#allocation3 + $0x170] sm:$0xff] %vm6827, %v6778
        %6875 = vst.msk [vmem:[#allocation3 + $0x178] sm:$0xff] %vm3459, %v6778
        %6876 = vst.msk [vmem:[#allocation3 + $0x180] sm:$0xff] %vm6827, %v6780
        %6877 = vst.msk [vmem:[#allocation3 + $0x188] sm:$0xff] %vm3459, %v6780
        %6878 = vst.msk [vmem:[#allocation3 + $0x190] sm:$0xff] %vm6827, %v6782
        %6879 = vst.msk [vmem:[#allocation3 + $0x198] sm:$0xff] %vm3459, %v6782
        %6880 = vst.msk [vmem:[#allocation3 + $0x1a0] sm:$0xff] %vm6827, %v6784
        %6881 = vst.msk [vmem:[#allocation3 + $0x1a8] sm:$0xff] %vm3459, %v6784
        %6882 = vst.msk [vmem:[#allocation3 + $0x1b0] sm:$0xff] %vm6827, %v6786
        %6883 = vst.msk [vmem:[#allocation3 + $0x1b8] sm:$0xff] %vm3459, %v6786
        %6884 = vst.msk [vmem:[#allocation3 + $0x1c0] sm:$0xff] %vm6827, %v6788
        %6885 = vst.msk [vmem:[#allocation3 + $0x1c8] sm:$0xff] %vm3459, %v6788
        %6886 = vst.msk [vmem:[#allocation3 + $0x1d0] sm:$0xff] %vm6827, %v6790
        %6887 = vst.msk [vmem:[#allocation3 + $0x1d8] sm:$0xff] %vm3459, %v6790
        %6888 = vst.msk [vmem:[#allocation3 + $0x1e0] sm:$0xff] %vm6827, %v6792
        %6889 = vst.msk [vmem:[#allocation3 + $0x1e8] sm:$0xff] %vm3459, %v6792
        %6890 = vst.msk [vmem:[#allocation3 + $0x1f0] sm:$0xff] %vm6827, %v6794
        %6891 = vst.msk [vmem:[#allocation3 + $0x1f8] sm:$0xff] %vm3459, %v6794
        %v6892 = vld [vmem:[%s1674] sm:$0xff]
        %v6893 = vld [vmem:[%s1674 + $0x8] sm:$0xff]
        %v6894 = vld [vmem:[%s1674 + $0x18] sm:$0xff]
        %v6895 = vld [vmem:[%s1674 + $0x20] sm:$0xff]
        %v6896 = vld [vmem:[%s1674 + $0x30] sm:$0xff]
        %v6897 = vld [vmem:[%s1674 + $0x38] sm:$0xff]
        %v6898 = vld [vmem:[%s1674 + $0x48] sm:$0xff]
        %v6899 = vld [vmem:[%s1674 + $0x50] sm:$0xff]
        %v6900 = vld [vmem:[%s1674 + $0x60] sm:$0xff]
        %v6901 = vld [vmem:[%s1674 + $0x68] sm:$0xff]
        %v6902 = vld [vmem:[%s1674 + $0x78] sm:$0xff]
        %v6903 = vld [vmem:[%s1674 + $0x80] sm:$0xff]
        %v6904 = vld [vmem:[%s1674 + $0x90] sm:$0xff]
        %v6905 = vld [vmem:[%s1674 + $0x98] sm:$0xff]
        %v6906 = vld [vmem:[%s1674 + $0xa8] sm:$0xff]
        %v6907 = vld [vmem:[%s1674 + $0xb0] sm:$0xff]
        %v6908 = vld [vmem:[%s1674 + $0xc0] sm:$0xff]
        %v6909 = vld [vmem:[%s1674 + $0xc8] sm:$0xff]
        %v6910 = vld [vmem:[%s1674 + $0xd8] sm:$0xff]
        %v6911 = vld [vmem:[%s1674 + $0xe0] sm:$0xff]
        %v6912 = vld [vmem:[%s1674 + $0xf0] sm:$0xff]
        %v6913 = vld [vmem:[%s1674 + $0xf8] sm:$0xff]
        %v6914 = vld [vmem:[%s1674 + $0x108] sm:$0xff]
        %v6915 = vld [vmem:[%s1674 + $0x110] sm:$0xff]
        %v6916 = vld [vmem:[%s1674 + $0x120] sm:$0xff]
        %v6917 = vld [vmem:[%s1674 + $0x128] sm:$0xff]
        %v6918 = vld [vmem:[%s1674 + $0x138] sm:$0xff]
        %v6919 = vld [vmem:[%s1674 + $0x140] sm:$0xff]
        %v6920 = vld [vmem:[%s1674 + $0x150] sm:$0xff]
        %v6921 = vld [vmem:[%s1674 + $0x158] sm:$0xff]
        %v6922 = vld [vmem:[%s1674 + $0x168] sm:$0xff]
        %v6923 = vld [vmem:[%s1674 + $0x170] sm:$0xff]
        %6956 = vrot.lane.b32.xlu0 %v6892, 16
        %v6957 = vpop.permute.xlu0 %6956
        %6958 = vrot.lane.b32.xlu0 %v6893, 16
        %v6959 = vpop.permute.xlu0 %6958
        %6960 = vrot.lane.b32.xlu0 %v6894, 16
        %v6961 = vpop.permute.xlu0 %6960
        %6962 = vrot.lane.b32.xlu0 %v6895, 16
        %v6963 = vpop.permute.xlu0 %6962
        %6964 = vrot.lane.b32.xlu0 %v6896, 16
        %v6965 = vpop.permute.xlu0 %6964
        %6966 = vrot.lane.b32.xlu0 %v6897, 16
        %v6967 = vpop.permute.xlu0 %6966
        %6968 = vrot.lane.b32.xlu0 %v6898, 16
        %v6969 = vpop.permute.xlu0 %6968
        %6970 = vrot.lane.b32.xlu0 %v6899, 16
        %v6971 = vpop.permute.xlu0 %6970
        %6972 = vrot.lane.b32.xlu0 %v6900, 16
        %v6973 = vpop.permute.xlu0 %6972
        %6974 = vrot.lane.b32.xlu0 %v6901, 16
        %v6975 = vpop.permute.xlu0 %6974
        %6976 = vrot.lane.b32.xlu0 %v6902, 16
        %v6977 = vpop.permute.xlu0 %6976
        %6978 = vrot.lane.b32.xlu0 %v6903, 16
        %v6979 = vpop.permute.xlu0 %6978
        %6980 = vrot.lane.b32.xlu0 %v6904, 16
        %v6981 = vpop.permute.xlu0 %6980
        %6982 = vrot.lane.b32.xlu0 %v6905, 16
        %v6983 = vpop.permute.xlu0 %6982
        %6984 = vrot.lane.b32.xlu0 %v6906, 16
        %v6985 = vpop.permute.xlu0 %6984
        %6986 = vrot.lane.b32.xlu0 %v6907, 16
        %v6987 = vpop.permute.xlu0 %6986
        %6988 = vrot.lane.b32.xlu0 %v6908, 16
        %v6989 = vpop.permute.xlu0 %6988
        %6990 = vrot.lane.b32.xlu0 %v6909, 16
        %v6991 = vpop.permute.xlu0 %6990
        %6992 = vrot.lane.b32.xlu0 %v6910, 16
        %v6993 = vpop.permute.xlu0 %6992
        %6994 = vrot.lane.b32.xlu0 %v6911, 16
        %v6995 = vpop.permute.xlu0 %6994
        %6996 = vrot.lane.b32.xlu0 %v6912, 16
        %v6997 = vpop.permute.xlu0 %6996
        %6998 = vrot.lane.b32.xlu0 %v6913, 16
        %v6999 = vpop.permute.xlu0 %6998
        %7000 = vrot.lane.b32.xlu0 %v6914, 16
        %v7001 = vpop.permute.xlu0 %7000
        %7002 = vrot.lane.b32.xlu0 %v6915, 16
        %v7003 = vpop.permute.xlu0 %7002
        %7004 = vrot.lane.b32.xlu0 %v6916, 16
        %v7005 = vpop.permute.xlu0 %7004
        %7006 = vrot.lane.b32.xlu0 %v6917, 16
        %v7007 = vpop.permute.xlu0 %7006
        %7008 = vrot.lane.b32.xlu0 %v6918, 16
        %v7009 = vpop.permute.xlu0 %7008
        %7010 = vrot.lane.b32.xlu0 %v6919, 16
        %v7011 = vpop.permute.xlu0 %7010
        %7012 = vrot.lane.b32.xlu0 %v6920, 16
        %v7013 = vpop.permute.xlu0 %7012
        %7014 = vrot.lane.b32.xlu0 %v6921, 16
        %v7015 = vpop.permute.xlu0 %7014
        %7016 = vrot.lane.b32.xlu0 %v6922, 16
        %v7017 = vpop.permute.xlu0 %7016
        %7018 = vrot.lane.b32.xlu0 %v6923, 16
        %v7019 = vpop.permute.xlu0 %7018
        %vm7052 = vcmask 326784
        %7053 = vst.msk [vmem:[#allocation3 + $0x8] sm:$0xff] %vm7052, %v6957
        %7054 = vst.msk [vmem:[#allocation3 + $0x18] sm:$0xff] %vm7052, %v6959
        %7055 = vst.msk [vmem:[#allocation3 + $0x28] sm:$0xff] %vm7052, %v6961
        %7056 = vst.msk [vmem:[#allocation3 + $0x38] sm:$0xff] %vm7052, %v6963
        %7057 = vst.msk [vmem:[#allocation3 + $0x48] sm:$0xff] %vm7052, %v6965
        %7058 = vst.msk [vmem:[#allocation3 + $0x58] sm:$0xff] %vm7052, %v6967
        %7059 = vst.msk [vmem:[#allocation3 + $0x68] sm:$0xff] %vm7052, %v6969
        %7060 = vst.msk [vmem:[#allocation3 + $0x78] sm:$0xff] %vm7052, %v6971
        %7061 = vst.msk [vmem:[#allocation3 + $0x88] sm:$0xff] %vm7052, %v6973
        %7062 = vst.msk [vmem:[#allocation3 + $0x98] sm:$0xff] %vm7052, %v6975
        %7063 = vst.msk [vmem:[#allocation3 + $0xa8] sm:$0xff] %vm7052, %v6977
        %7064 = vst.msk [vmem:[#allocation3 + $0xb8] sm:$0xff] %vm7052, %v6979
        %7065 = vst.msk [vmem:[#allocation3 + $0xc8] sm:$0xff] %vm7052, %v6981
        %7066 = vst.msk [vmem:[#allocation3 + $0xd8] sm:$0xff] %vm7052, %v6983
        %7067 = vst.msk [vmem:[#allocation3 + $0xe8] sm:$0xff] %vm7052, %v6985
        %7068 = vst.msk [vmem:[#allocation3 + $0xf8] sm:$0xff] %vm7052, %v6987
        %7069 = vst.msk [vmem:[#allocation3 + $0x108] sm:$0xff] %vm7052, %v6989
        %7070 = vst.msk [vmem:[#allocation3 + $0x118] sm:$0xff] %vm7052, %v6991
        %7071 = vst.msk [vmem:[#allocation3 + $0x128] sm:$0xff] %vm7052, %v6993
        %7072 = vst.msk [vmem:[#allocation3 + $0x138] sm:$0xff] %vm7052, %v6995
        %7073 = vst.msk [vmem:[#allocation3 + $0x148] sm:$0xff] %vm7052, %v6997
        %7074 = vst.msk [vmem:[#allocation3 + $0x158] sm:$0xff] %vm7052, %v6999
        %7075 = vst.msk [vmem:[#allocation3 + $0x168] sm:$0xff] %vm7052, %v7001
        %7076 = vst.msk [vmem:[#allocation3 + $0x178] sm:$0xff] %vm7052, %v7003
        %7077 = vst.msk [vmem:[#allocation3 + $0x188] sm:$0xff] %vm7052, %v7005
        %7078 = vst.msk [vmem:[#allocation3 + $0x198] sm:$0xff] %vm7052, %v7007
        %7079 = vst.msk [vmem:[#allocation3 + $0x1a8] sm:$0xff] %vm7052, %v7009
        %7080 = vst.msk [vmem:[#allocation3 + $0x1b8] sm:$0xff] %vm7052, %v7011
        %7081 = vst.msk [vmem:[#allocation3 + $0x1c8] sm:$0xff] %vm7052, %v7013
        %7082 = vst.msk [vmem:[#allocation3 + $0x1d8] sm:$0xff] %vm7052, %v7015
        %7083 = vst.msk [vmem:[#allocation3 + $0x1e8] sm:$0xff] %vm7052, %v7017
        %7084 = vst.msk [vmem:[#allocation3 + $0x1f8] sm:$0xff] %vm7052, %v7019
        %v7085 = vld [vmem:[%s1674 + $0x1] sm:$0xff]
        %v7086 = vld [vmem:[%s1674 + $0x9] sm:$0xff]
        %v7087 = vld [vmem:[%s1674 + $0x19] sm:$0xff]
        %v7088 = vld [vmem:[%s1674 + $0x21] sm:$0xff]
        %v7089 = vld [vmem:[%s1674 + $0x31] sm:$0xff]
        %v7090 = vld [vmem:[%s1674 + $0x39] sm:$0xff]
        %v7091 = vld [vmem:[%s1674 + $0x49] sm:$0xff]
        %v7092 = vld [vmem:[%s1674 + $0x51] sm:$0xff]
        %v7093 = vld [vmem:[%s1674 + $0x61] sm:$0xff]
        %v7094 = vld [vmem:[%s1674 + $0x69] sm:$0xff]
        %v7095 = vld [vmem:[%s1674 + $0x79] sm:$0xff]
        %v7096 = vld [vmem:[%s1674 + $0x81] sm:$0xff]
        %v7097 = vld [vmem:[%s1674 + $0x91] sm:$0xff]
        %v7098 = vld [vmem:[%s1674 + $0x99] sm:$0xff]
        %v7099 = vld [vmem:[%s1674 + $0xa9] sm:$0xff]
        %v7100 = vld [vmem:[%s1674 + $0xb1] sm:$0xff]
        %v7101 = vld [vmem:[%s1674 + $0xc1] sm:$0xff]
        %v7102 = vld [vmem:[%s1674 + $0xc9] sm:$0xff]
        %v7103 = vld [vmem:[%s1674 + $0xd9] sm:$0xff]
        %v7104 = vld [vmem:[%s1674 + $0xe1] sm:$0xff]
        %v7105 = vld [vmem:[%s1674 + $0xf1] sm:$0xff]
        %v7106 = vld [vmem:[%s1674 + $0xf9] sm:$0xff]
        %v7107 = vld [vmem:[%s1674 + $0x109] sm:$0xff]
        %v7108 = vld [vmem:[%s1674 + $0x111] sm:$0xff]
        %v7109 = vld [vmem:[%s1674 + $0x121] sm:$0xff]
        %v7110 = vld [vmem:[%s1674 + $0x129] sm:$0xff]
        %v7111 = vld [vmem:[%s1674 + $0x139] sm:$0xff]
        %v7112 = vld [vmem:[%s1674 + $0x141] sm:$0xff]
        %v7113 = vld [vmem:[%s1674 + $0x151] sm:$0xff]
        %v7114 = vld [vmem:[%s1674 + $0x159] sm:$0xff]
        %v7115 = vld [vmem:[%s1674 + $0x169] sm:$0xff]
        %v7116 = vld [vmem:[%s1674 + $0x171] sm:$0xff]
        %7149 = vrot.lane.b32.xlu0 %v7085, 40
        %v7150 = vpop.permute.xlu0 %7149
        %7151 = vrot.lane.b32.xlu0 %v7086, 40
        %v7152 = vpop.permute.xlu0 %7151
        %7153 = vrot.lane.b32.xlu0 %v7087, 40
        %v7154 = vpop.permute.xlu0 %7153
        %7155 = vrot.lane.b32.xlu0 %v7088, 40
        %v7156 = vpop.permute.xlu0 %7155
        %7157 = vrot.lane.b32.xlu0 %v7089, 40
        %v7158 = vpop.permute.xlu0 %7157
        %7159 = vrot.lane.b32.xlu0 %v7090, 40
        %v7160 = vpop.permute.xlu0 %7159
        %7161 = vrot.lane.b32.xlu0 %v7091, 40
        %v7162 = vpop.permute.xlu0 %7161
        %7163 = vrot.lane.b32.xlu0 %v7092, 40
        %v7164 = vpop.permute.xlu0 %7163
        %7165 = vrot.lane.b32.xlu0 %v7093, 40
        %v7166 = vpop.permute.xlu0 %7165
        %7167 = vrot.lane.b32.xlu0 %v7094, 40
        %v7168 = vpop.permute.xlu0 %7167
        %7169 = vrot.lane.b32.xlu0 %v7095, 40
        %v7170 = vpop.permute.xlu0 %7169
        %7171 = vrot.lane.b32.xlu0 %v7096, 40
        %v7172 = vpop.permute.xlu0 %7171
        %7173 = vrot.lane.b32.xlu0 %v7097, 40
        %v7174 = vpop.permute.xlu0 %7173
        %7175 = vrot.lane.b32.xlu0 %v7098, 40
        %v7176 = vpop.permute.xlu0 %7175
        %7177 = vrot.lane.b32.xlu0 %v7099, 40
        %v7178 = vpop.permute.xlu0 %7177
        %7179 = vrot.lane.b32.xlu0 %v7100, 40
        %v7180 = vpop.permute.xlu0 %7179
        %7181 = vrot.lane.b32.xlu0 %v7101, 40
        %v7182 = vpop.permute.xlu0 %7181
        %7183 = vrot.lane.b32.xlu0 %v7102, 40
        %v7184 = vpop.permute.xlu0 %7183
        %7185 = vrot.lane.b32.xlu0 %v7103, 40
        %v7186 = vpop.permute.xlu0 %7185
        %7187 = vrot.lane.b32.xlu0 %v7104, 40
        %v7188 = vpop.permute.xlu0 %7187
        %7189 = vrot.lane.b32.xlu0 %v7105, 40
        %v7190 = vpop.permute.xlu0 %7189
        %7191 = vrot.lane.b32.xlu0 %v7106, 40
        %v7192 = vpop.permute.xlu0 %7191
        %7193 = vrot.lane.b32.xlu0 %v7107, 40
        %v7194 = vpop.permute.xlu0 %7193
        %7195 = vrot.lane.b32.xlu0 %v7108, 40
        %v7196 = vpop.permute.xlu0 %7195
        %7197 = vrot.lane.b32.xlu0 %v7109, 40
        %v7198 = vpop.permute.xlu0 %7197
        %7199 = vrot.lane.b32.xlu0 %v7110, 40
        %v7200 = vpop.permute.xlu0 %7199
        %7201 = vrot.lane.b32.xlu0 %v7111, 40
        %v7202 = vpop.permute.xlu0 %7201
        %7203 = vrot.lane.b32.xlu0 %v7112, 40
        %v7204 = vpop.permute.xlu0 %7203
        %7205 = vrot.lane.b32.xlu0 %v7113, 40
        %v7206 = vpop.permute.xlu0 %7205
        %7207 = vrot.lane.b32.xlu0 %v7114, 40
        %v7208 = vpop.permute.xlu0 %7207
        %7209 = vrot.lane.b32.xlu0 %v7115, 40
        %v7210 = vpop.permute.xlu0 %7209
        %7211 = vrot.lane.b32.xlu0 %v7116, 40
        %v7212 = vpop.permute.xlu0 %7211
        %vm7245 = vcmask 523584
        %7246 = vst.msk [vmem:[#allocation3 + $0x8] sm:$0xff] %vm7245, %v7150
        %7247 = vst.msk [vmem:[#allocation3 + $0x18] sm:$0xff] %vm7245, %v7152
        %7248 = vst.msk [vmem:[#allocation3 + $0x28] sm:$0xff] %vm7245, %v7154
        %7249 = vst.msk [vmem:[#allocation3 + $0x38] sm:$0xff] %vm7245, %v7156
        %7250 = vst.msk [vmem:[#allocation3 + $0x48] sm:$0xff] %vm7245, %v7158
        %7251 = vst.msk [vmem:[#allocation3 + $0x58] sm:$0xff] %vm7245, %v7160
        %7252 = vst.msk [vmem:[#allocation3 + $0x68] sm:$0xff] %vm7245, %v7162
        %7253 = vst.msk [vmem:[#allocation3 + $0x78] sm:$0xff] %vm7245, %v7164
        %7254 = vst.msk [vmem:[#allocation3 + $0x88] sm:$0xff] %vm7245, %v7166
        %7255 = vst.msk [vmem:[#allocation3 + $0x98] sm:$0xff] %vm7245, %v7168
        %7256 = vst.msk [vmem:[#allocation3 + $0xa8] sm:$0xff] %vm7245, %v7170
        %7257 = vst.msk [vmem:[#allocation3 + $0xb8] sm:$0xff] %vm7245, %v7172
        %7258 = vst.msk [vmem:[#allocation3 + $0xc8] sm:$0xff] %vm7245, %v7174
        %7259 = vst.msk [vmem:[#allocation3 + $0xd8] sm:$0xff] %vm7245, %v7176
        %7260 = vst.msk [vmem:[#allocation3 + $0xe8] sm:$0xff] %vm7245, %v7178
        %7261 = vst.msk [vmem:[#allocation3 + $0xf8] sm:$0xff] %vm7245, %v7180
        %7262 = vst.msk [vmem:[#allocation3 + $0x108] sm:$0xff] %vm7245, %v7182
        %7263 = vst.msk [vmem:[#allocation3 + $0x118] sm:$0xff] %vm7245, %v7184
        %7264 = vst.msk [vmem:[#allocation3 + $0x128] sm:$0xff] %vm7245, %v7186
        %7265 = vst.msk [vmem:[#allocation3 + $0x138] sm:$0xff] %vm7245, %v7188
        %7266 = vst.msk [vmem:[#allocation3 + $0x148] sm:$0xff] %vm7245, %v7190
        %7267 = vst.msk [vmem:[#allocation3 + $0x158] sm:$0xff] %vm7245, %v7192
        %7268 = vst.msk [vmem:[#allocation3 + $0x168] sm:$0xff] %vm7245, %v7194
        %7269 = vst.msk [vmem:[#allocation3 + $0x178] sm:$0xff] %vm7245, %v7196
        %7270 = vst.msk [vmem:[#allocation3 + $0x188] sm:$0xff] %vm7245, %v7198
        %7271 = vst.msk [vmem:[#allocation3 + $0x198] sm:$0xff] %vm7245, %v7200
        %7272 = vst.msk [vmem:[#allocation3 + $0x1a8] sm:$0xff] %vm7245, %v7202
        %7273 = vst.msk [vmem:[#allocation3 + $0x1b8] sm:$0xff] %vm7245, %v7204
        %7274 = vst.msk [vmem:[#allocation3 + $0x1c8] sm:$0xff] %vm7245, %v7206
        %7275 = vst.msk [vmem:[#allocation3 + $0x1d8] sm:$0xff] %vm7245, %v7208
        %7276 = vst.msk [vmem:[#allocation3 + $0x1e8] sm:$0xff] %vm7245, %v7210
        %7277 = vst.msk [vmem:[#allocation3 + $0x1f8] sm:$0xff] %vm7245, %v7212
        %v7278 = vld [vmem:[%s1674 + $0x2] sm:$0xff]
        %v7279 = vld [vmem:[%s1674 + $0xa] sm:$0xff]
        %v7280 = vld [vmem:[%s1674 + $0x1a] sm:$0xff]
        %v7281 = vld [vmem:[%s1674 + $0x22] sm:$0xff]
        %v7282 = vld [vmem:[%s1674 + $0x32] sm:$0xff]
        %v7283 = vld [vmem:[%s1674 + $0x3a] sm:$0xff]
        %v7284 = vld [vmem:[%s1674 + $0x4a] sm:$0xff]
        %v7285 = vld [vmem:[%s1674 + $0x52] sm:$0xff]
        %v7286 = vld [vmem:[%s1674 + $0x62] sm:$0xff]
        %v7287 = vld [vmem:[%s1674 + $0x6a] sm:$0xff]
        %v7288 = vld [vmem:[%s1674 + $0x7a] sm:$0xff]
        %v7289 = vld [vmem:[%s1674 + $0x82] sm:$0xff]
        %v7290 = vld [vmem:[%s1674 + $0x92] sm:$0xff]
        %v7291 = vld [vmem:[%s1674 + $0x9a] sm:$0xff]
        %v7292 = vld [vmem:[%s1674 + $0xaa] sm:$0xff]
        %v7293 = vld [vmem:[%s1674 + $0xb2] sm:$0xff]
        %v7294 = vld [vmem:[%s1674 + $0xc2] sm:$0xff]
        %v7295 = vld [vmem:[%s1674 + $0xca] sm:$0xff]
        %v7296 = vld [vmem:[%s1674 + $0xda] sm:$0xff]
        %v7297 = vld [vmem:[%s1674 + $0xe2] sm:$0xff]
        %v7298 = vld [vmem:[%s1674 + $0xf2] sm:$0xff]
        %v7299 = vld [vmem:[%s1674 + $0xfa] sm:$0xff]
        %v7300 = vld [vmem:[%s1674 + $0x10a] sm:$0xff]
        %v7301 = vld [vmem:[%s1674 + $0x112] sm:$0xff]
        %v7302 = vld [vmem:[%s1674 + $0x122] sm:$0xff]
        %v7303 = vld [vmem:[%s1674 + $0x12a] sm:$0xff]
        %v7304 = vld [vmem:[%s1674 + $0x13a] sm:$0xff]
        %v7305 = vld [vmem:[%s1674 + $0x142] sm:$0xff]
        %v7306 = vld [vmem:[%s1674 + $0x152] sm:$0xff]
        %v7307 = vld [vmem:[%s1674 + $0x15a] sm:$0xff]
        %v7308 = vld [vmem:[%s1674 + $0x16a] sm:$0xff]
        %v7309 = vld [vmem:[%s1674 + $0x172] sm:$0xff]
        %7342 = vrot.lane.b32.xlu0 %v7278, 64
        %v7343 = vpop.permute.xlu0 %7342
        %7344 = vrot.lane.b32.xlu0 %v7279, 64
        %v7345 = vpop.permute.xlu0 %7344
        %7346 = vrot.lane.b32.xlu0 %v7280, 64
        %v7347 = vpop.permute.xlu0 %7346
        %7348 = vrot.lane.b32.xlu0 %v7281, 64
        %v7349 = vpop.permute.xlu0 %7348
        %7350 = vrot.lane.b32.xlu0 %v7282, 64
        %v7351 = vpop.permute.xlu0 %7350
        %7352 = vrot.lane.b32.xlu0 %v7283, 64
        %v7353 = vpop.permute.xlu0 %7352
        %7354 = vrot.lane.b32.xlu0 %v7284, 64
        %v7355 = vpop.permute.xlu0 %7354
        %7356 = vrot.lane.b32.xlu0 %v7285, 64
        %v7357 = vpop.permute.xlu0 %7356
        %7358 = vrot.lane.b32.xlu0 %v7286, 64
        %v7359 = vpop.permute.xlu0 %7358
        %7360 = vrot.lane.b32.xlu0 %v7287, 64
        %v7361 = vpop.permute.xlu0 %7360
        %7362 = vrot.lane.b32.xlu0 %v7288, 64
        %v7363 = vpop.permute.xlu0 %7362
        %7364 = vrot.lane.b32.xlu0 %v7289, 64
        %v7365 = vpop.permute.xlu0 %7364
        %7366 = vrot.lane.b32.xlu0 %v7290, 64
        %v7367 = vpop.permute.xlu0 %7366
        %7368 = vrot.lane.b32.xlu0 %v7291, 64
        %v7369 = vpop.permute.xlu0 %7368
        %7370 = vrot.lane.b32.xlu0 %v7292, 64
        %v7371 = vpop.permute.xlu0 %7370
        %7372 = vrot.lane.b32.xlu0 %v7293, 64
        %v7373 = vpop.permute.xlu0 %7372
        %7374 = vrot.lane.b32.xlu0 %v7294, 64
        %v7375 = vpop.permute.xlu0 %7374
        %7376 = vrot.lane.b32.xlu0 %v7295, 64
        %v7377 = vpop.permute.xlu0 %7376
        %7378 = vrot.lane.b32.xlu0 %v7296, 64
        %v7379 = vpop.permute.xlu0 %7378
        %7380 = vrot.lane.b32.xlu0 %v7297, 64
        %v7381 = vpop.permute.xlu0 %7380
        %7382 = vrot.lane.b32.xlu0 %v7298, 64
        %v7383 = vpop.permute.xlu0 %7382
        %7384 = vrot.lane.b32.xlu0 %v7299, 64
        %v7385 = vpop.permute.xlu0 %7384
        %7386 = vrot.lane.b32.xlu0 %v7300, 64
        %v7387 = vpop.permute.xlu0 %7386
        %7388 = vrot.lane.b32.xlu0 %v7301, 64
        %v7389 = vpop.permute.xlu0 %7388
        %7390 = vrot.lane.b32.xlu0 %v7302, 64
        %v7391 = vpop.permute.xlu0 %7390
        %7392 = vrot.lane.b32.xlu0 %v7303, 64
        %v7393 = vpop.permute.xlu0 %7392
        %7394 = vrot.lane.b32.xlu0 %v7304, 64
        %v7395 = vpop.permute.xlu0 %7394
        %7396 = vrot.lane.b32.xlu0 %v7305, 64
        %v7397 = vpop.permute.xlu0 %7396
        %7398 = vrot.lane.b32.xlu0 %v7306, 64
        %v7399 = vpop.permute.xlu0 %7398
        %7400 = vrot.lane.b32.xlu0 %v7307, 64
        %v7401 = vpop.permute.xlu0 %7400
        %7402 = vrot.lane.b32.xlu0 %v7308, 64
        %v7403 = vpop.permute.xlu0 %7402
        %7404 = vrot.lane.b32.xlu0 %v7309, 64
        %v7405 = vpop.permute.xlu0 %7404
        %vm7438 = vcmask 720384
        %7439 = vst.msk [vmem:[#allocation3 + $0x8] sm:$0xff] %vm7438, %v7343
        %7440 = vst.msk [vmem:[#allocation3 + $0x18] sm:$0xff] %vm7438, %v7345
        %7441 = vst.msk [vmem:[#allocation3 + $0x28] sm:$0xff] %vm7438, %v7347
        %7442 = vst.msk [vmem:[#allocation3 + $0x38] sm:$0xff] %vm7438, %v7349
        %7443 = vst.msk [vmem:[#allocation3 + $0x48] sm:$0xff] %vm7438, %v7351
        %7444 = vst.msk [vmem:[#allocation3 + $0x58] sm:$0xff] %vm7438, %v7353
        %7445 = vst.msk [vmem:[#allocation3 + $0x68] sm:$0xff] %vm7438, %v7355
        %7446 = vst.msk [vmem:[#allocation3 + $0x78] sm:$0xff] %vm7438, %v7357
        %7447 = vst.msk [vmem:[#allocation3 + $0x88] sm:$0xff] %vm7438, %v7359
        %7448 = vst.msk [vmem:[#allocation3 + $0x98] sm:$0xff] %vm7438, %v7361
        %7449 = vst.msk [vmem:[#allocation3 + $0xa8] sm:$0xff] %vm7438, %v7363
        %7450 = vst.msk [vmem:[#allocation3 + $0xb8] sm:$0xff] %vm7438, %v7365
        %7451 = vst.msk [vmem:[#allocation3 + $0xc8] sm:$0xff] %vm7438, %v7367
        %7452 = vst.msk [vmem:[#allocation3 + $0xd8] sm:$0xff] %vm7438, %v7369
        %7453 = vst.msk [vmem:[#allocation3 + $0xe8] sm:$0xff] %vm7438, %v7371
        %7454 = vst.msk [vmem:[#allocation3 + $0xf8] sm:$0xff] %vm7438, %v7373
        %7455 = vst.msk [vmem:[#allocation3 + $0x108] sm:$0xff] %vm7438, %v7375
        %7456 = vst.msk [vmem:[#allocation3 + $0x118] sm:$0xff] %vm7438, %v7377
        %7457 = vst.msk [vmem:[#allocation3 + $0x128] sm:$0xff] %vm7438, %v7379
        %7458 = vst.msk [vmem:[#allocation3 + $0x138] sm:$0xff] %vm7438, %v7381
        %7459 = vst.msk [vmem:[#allocation3 + $0x148] sm:$0xff] %vm7438, %v7383
        %7460 = vst.msk [vmem:[#allocation3 + $0x158] sm:$0xff] %vm7438, %v7385
        %7461 = vst.msk [vmem:[#allocation3 + $0x168] sm:$0xff] %vm7438, %v7387
        %7462 = vst.msk [vmem:[#allocation3 + $0x178] sm:$0xff] %vm7438, %v7389
        %7463 = vst.msk [vmem:[#allocation3 + $0x188] sm:$0xff] %vm7438, %v7391
        %7464 = vst.msk [vmem:[#allocation3 + $0x198] sm:$0xff] %vm7438, %v7393
        %7465 = vst.msk [vmem:[#allocation3 + $0x1a8] sm:$0xff] %vm7438, %v7395
        %7466 = vst.msk [vmem:[#allocation3 + $0x1b8] sm:$0xff] %vm7438, %v7397
        %7467 = vst.msk [vmem:[#allocation3 + $0x1c8] sm:$0xff] %vm7438, %v7399
        %7468 = vst.msk [vmem:[#allocation3 + $0x1d8] sm:$0xff] %vm7438, %v7401
        %7469 = vst.msk [vmem:[#allocation3 + $0x1e8] sm:$0xff] %vm7438, %v7403
        %7470 = vst.msk [vmem:[#allocation3 + $0x1f8] sm:$0xff] %vm7438, %v7405
        %v7471 = vld [vmem:[#allocation3] sm:$0xff]
        %v7472 = vld [vmem:[#allocation3 + $0x8] sm:$0xff]
        %v7473 = vld [vmem:[#allocation3 + $0x10] sm:$0xff]
        %v7474 = vld [vmem:[#allocation3 + $0x18] sm:$0xff]
        %v7475 = vld [vmem:[#allocation3 + $0x20] sm:$0xff]
        %v7476 = vld [vmem:[#allocation3 + $0x28] sm:$0xff]
        %v7477 = vld [vmem:[#allocation3 + $0x30] sm:$0xff]
        %v7478 = vld [vmem:[#allocation3 + $0x38] sm:$0xff]
        %v7479 = vld [vmem:[#allocation3 + $0x40] sm:$0xff]
        %v7480 = vld [vmem:[#allocation3 + $0x48] sm:$0xff]
        %v7481 = vld [vmem:[#allocation3 + $0x50] sm:$0xff]
        %v7482 = vld [vmem:[#allocation3 + $0x58] sm:$0xff]
        %v7483 = vld [vmem:[#allocation3 + $0x60] sm:$0xff]
        %v7484 = vld [vmem:[#allocation3 + $0x68] sm:$0xff]
        %v7485 = vld [vmem:[#allocation3 + $0x70] sm:$0xff]
        %v7486 = vld [vmem:[#allocation3 + $0x78] sm:$0xff]
        %v7487 = vld [vmem:[#allocation3 + $0x80] sm:$0xff]
        %v7488 = vld [vmem:[#allocation3 + $0x88] sm:$0xff]
        %v7489 = vld [vmem:[#allocation3 + $0x90] sm:$0xff]
        %v7490 = vld [vmem:[#allocation3 + $0x98] sm:$0xff]
        %v7491 = vld [vmem:[#allocation3 + $0xa0] sm:$0xff]
        %v7492 = vld [vmem:[#allocation3 + $0xa8] sm:$0xff]
        %v7493 = vld [vmem:[#allocation3 + $0xb0] sm:$0xff]
        %v7494 = vld [vmem:[#allocation3 + $0xb8] sm:$0xff]
        %v7495 = vld [vmem:[#allocation3 + $0xc0] sm:$0xff]
        %v7496 = vld [vmem:[#allocation3 + $0xc8] sm:$0xff]
        %v7497 = vld [vmem:[#allocation3 + $0xd0] sm:$0xff]
        %v7498 = vld [vmem:[#allocation3 + $0xd8] sm:$0xff]
        %v7499 = vld [vmem:[#allocation3 + $0xe0] sm:$0xff]
        %v7500 = vld [vmem:[#allocation3 + $0xe8] sm:$0xff]
        %v7501 = vld [vmem:[#allocation3 + $0xf0] sm:$0xff]
        %v7502 = vld [vmem:[#allocation3 + $0xf8] sm:$0xff]
        %v7503 = vld [vmem:[#allocation3 + $0x100] sm:$0xff]
        %v7504 = vld [vmem:[#allocation3 + $0x108] sm:$0xff]
        %v7505 = vld [vmem:[#allocation3 + $0x110] sm:$0xff]
        %v7506 = vld [vmem:[#allocation3 + $0x118] sm:$0xff]
        %v7507 = vld [vmem:[#allocation3 + $0x120] sm:$0xff]
        %v7508 = vld [vmem:[#allocation3 + $0x128] sm:$0xff]
        %v7509 = vld [vmem:[#allocation3 + $0x130] sm:$0xff]
        %v7510 = vld [vmem:[#allocation3 + $0x138] sm:$0xff]
        %v7511 = vld [vmem:[#allocation3 + $0x140] sm:$0xff]
        %v7512 = vld [vmem:[#allocation3 + $0x148] sm:$0xff]
        %v7513 = vld [vmem:[#allocation3 + $0x150] sm:$0xff]
        %v7514 = vld [vmem:[#allocation3 + $0x158] sm:$0xff]
        %v7515 = vld [vmem:[#allocation3 + $0x160] sm:$0xff]
        %v7516 = vld [vmem:[#allocation3 + $0x168] sm:$0xff]
        %v7517 = vld [vmem:[#allocation3 + $0x170] sm:$0xff]
        %v7518 = vld [vmem:[#allocation3 + $0x178] sm:$0xff]
        %v7519 = vld [vmem:[#allocation3 + $0x180] sm:$0xff]
        %v7520 = vld [vmem:[#allocation3 + $0x188] sm:$0xff]
        %v7521 = vld [vmem:[#allocation3 + $0x190] sm:$0xff]
        %v7522 = vld [vmem:[#allocation3 + $0x198] sm:$0xff]
        %v7523 = vld [vmem:[#allocation3 + $0x1a0] sm:$0xff]
        %v7524 = vld [vmem:[#allocation3 + $0x1a8] sm:$0xff]
        %v7525 = vld [vmem:[#allocation3 + $0x1b0] sm:$0xff]
        %v7526 = vld [vmem:[#allocation3 + $0x1b8] sm:$0xff]
        %v7527 = vld [vmem:[#allocation3 + $0x1c0] sm:$0xff]
        %v7528 = vld [vmem:[#allocation3 + $0x1c8] sm:$0xff]
        %v7529 = vld [vmem:[#allocation3 + $0x1d0] sm:$0xff]
        %v7530 = vld [vmem:[#allocation3 + $0x1d8] sm:$0xff]
        %v7531 = vld [vmem:[#allocation3 + $0x1e0] sm:$0xff]
        %v7532 = vld [vmem:[#allocation3 + $0x1e8] sm:$0xff]
        %v7533 = vld [vmem:[#allocation3 + $0x1f0] sm:$0xff]
        %v7534 = vld [vmem:[#allocation3 + $0x1f8] sm:$0xff]
        %v7535 = vld [vmem:[#allocation18] sm:$0xff]
        %v7536 = vld [vmem:[#allocation18 + $0x8] sm:$0xff]
        %v7537 = vld [vmem:[#allocation18 + $0x10] sm:$0xff]
        %v7538 = vld [vmem:[#allocation18 + $0x18] sm:$0xff]
        %v7539 = vld [vmem:[#allocation18 + $0x20] sm:$0xff]
        %v7540 = vld [vmem:[#allocation18 + $0x28] sm:$0xff]
        %v7541 = vld [vmem:[#allocation18 + $0x30] sm:$0xff]
        %v7542 = vld [vmem:[#allocation18 + $0x38] sm:$0xff]
        %v7543 = vld [vmem:[#allocation18 + $0x40] sm:$0xff]
        %v7544 = vld [vmem:[#allocation18 + $0x48] sm:$0xff]
        %v7545 = vld [vmem:[#allocation18 + $0x50] sm:$0xff]
        %v7546 = vld [vmem:[#allocation18 + $0x58] sm:$0xff]
        %v7547 = vld [vmem:[#allocation18 + $0x60] sm:$0xff]
        %v7548 = vld [vmem:[#allocation18 + $0x68] sm:$0xff]
        %v7549 = vld [vmem:[#allocation18 + $0x70] sm:$0xff]
        %v7550 = vld [vmem:[#allocation18 + $0x78] sm:$0xff]
        %v7551 = vld [vmem:[#allocation18 + $0x80] sm:$0xff]
        %v7552 = vld [vmem:[#allocation18 + $0x88] sm:$0xff]
        %v7553 = vld [vmem:[#allocation18 + $0x90] sm:$0xff]
        %v7554 = vld [vmem:[#allocation18 + $0x98] sm:$0xff]
        %v7555 = vld [vmem:[#allocation18 + $0xa0] sm:$0xff]
        %v7556 = vld [vmem:[#allocation18 + $0xa8] sm:$0xff]
        %v7557 = vld [vmem:[#allocation18 + $0xb0] sm:$0xff]
        %v7558 = vld [vmem:[#allocation18 + $0xb8] sm:$0xff]
        %v7559 = vld [vmem:[#allocation18 + $0xc0] sm:$0xff]
        %v7560 = vld [vmem:[#allocation18 + $0xc8] sm:$0xff]
        %v7561 = vld [vmem:[#allocation18 + $0xd0] sm:$0xff]
        %v7562 = vld [vmem:[#allocation19] sm:$0x1]
        %v7564 = vlaneseq
        %v7565 = vshrl.u32 %v7564, 7
        %v7566 = vsub.s32 0, %v7565
        %v7567 = vrot.slane %v7562, %v7566
        %vm7569 = vcmask 719872
        %v7571 = vsel %vm7569, %v7472, 0
        %v7574 = vsel %vm7569, %v7474, 0
        %v7577 = vsel %vm7569, %v7476, 0
        %v7580 = vsel %vm7569, %v7478, 0
        %v7583 = vsel %vm7569, %v7480, 0
        %v7586 = vsel %vm7569, %v7482, 0
        %v7589 = vsel %vm7569, %v7484, 0
        %v7592 = vsel %vm7569, %v7486, 0
        %v7595 = vsel %vm7569, %v7488, 0
        %v7598 = vsel %vm7569, %v7490, 0
        %v7601 = vsel %vm7569, %v7492, 0
        %v7604 = vsel %vm7569, %v7494, 0
        %v7607 = vsel %vm7569, %v7496, 0
        %v7610 = vsel %vm7569, %v7498, 0
        %v7613 = vsel %vm7569, %v7500, 0
        %v7616 = vsel %vm7569, %v7502, 0
        %v7619 = vsel %vm7569, %v7504, 0
        %v7622 = vsel %vm7569, %v7506, 0
        %v7625 = vsel %vm7569, %v7508, 0
        %v7628 = vsel %vm7569, %v7510, 0
        %v7631 = vsel %vm7569, %v7512, 0
        %v7634 = vsel %vm7569, %v7514, 0
        %v7637 = vsel %vm7569, %v7516, 0
        %v7640 = vsel %vm7569, %v7518, 0
        %v7643 = vsel %vm7569, %v7520, 0
        %v7646 = vsel %vm7569, %v7522, 0
        %v7649 = vsel %vm7569, %v7524, 0
        %v7652 = vsel %vm7569, %v7526, 0
        %v7655 = vsel %vm7569, %v7528, 0
        %v7658 = vsel %vm7569, %v7530, 0
        %v7661 = vsel %vm7569, %v7532, 0
        %v7664 = vsel %vm7569, %v7534, 0
        %7666 = vmatprep.subr.mxu0 0.0
        %7667 = vmatpush1.msra.mxu0 %v7535
        %7668 = vmatprep.subr.mxu0 0.0
        %7669 = vmatpush1.msra.mxu0 %v7536
        %7670 = vmatprep.subr.mxu0 0.0
        %7671 = vmatpush1.msra.mxu0 %v7537
        %7672 = vmatprep.subr.mxu0 0.0
        %7673 = vmatpush1.msra.mxu0 %v7538
        %7674 = vmatprep.subr.mxu0 0.0
        %7675 = vmatpush1.msra.mxu0 %v7539
        %7676 = vmatprep.subr.mxu0 0.0
        %7677 = vmatpush1.msra.mxu0 %v7540
        %7678 = vmatprep.subr.mxu0 0.0
        %7679 = vmatpush1.msra.mxu0 %v7541
        %7680 = vmatprep.subr.mxu0 0.0
        %7681 = vmatpush1.msra.mxu0 %v7542
        %7682 = vmatprep.subr.mxu0 0.0
        %7683 = vmatpush1.msra.mxu0 %v7543
        %7684 = vmatprep.subr.mxu0 0.0
        %7685 = vmatpush1.msra.mxu0 %v7544
        %7686 = vmatprep.subr.mxu0 0.0
        %7687 = vmatpush1.msra.mxu0 %v7545
        %7688 = vmatprep.subr.mxu0 0.0
        %7689 = vmatpush1.msra.mxu0 %v7546
        %7690 = vmatprep.subr.mxu0 0.0
        %7691 = vmatpush1.msra.mxu0 %v7547
        %7692 = vmatprep.subr.mxu0 0.0
        %7693 = vmatpush1.msra.mxu0 %v7548
        %7694 = vmatprep.subr.mxu0 0.0
        %7695 = vmatpush1.msra.mxu0 %v7549
        %7696 = vmatprep.subr.mxu0 0.0
        %7697 = vmatpush1.msra.mxu0 %v7550
        %7698 = vmatprep.subr.mxu0 0.0
        %7699 = vmatpush1.msra.mxu0 %v7551
        %7700 = vmatprep.subr.mxu0 0.0
        %7701 = vmatpush1.msra.mxu0 %v7552
        %7702 = vmatprep.subr.mxu0 0.0
        %7703 = vmatpush1.msra.mxu0 %v7553
        %7704 = vmatprep.subr.mxu0 0.0
        %7705 = vmatpush1.msra.mxu0 %v7554
        %7706 = vmatprep.subr.mxu0 0.0
        %7707 = vmatpush1.msra.mxu0 %v7555
        %7708 = vmatprep.subr.mxu0 0.0
        %7709 = vmatpush1.msra.mxu0 %v7556
        %7710 = vmatprep.subr.mxu0 0.0
        %7711 = vmatpush1.msra.mxu0 %v7557
        %7712 = vmatprep.subr.mxu0 0.0
        %7713 = vmatpush1.msra.mxu0 %v7558
        %7714 = vmatprep.subr.mxu0 0.0
        %7715 = vmatpush1.msra.mxu0 %v7559
        %7716 = vmatprep.subr.mxu0 0.0
        %7717 = vmatpush1.msra.mxu0 %v7560
        %7718 = vmatprep.subr.mxu0 0.0
        %7719 = vmatpush1.msra.mxu0 %v7561
        %7720 = vmatprep.subr.mxu0 0.0
        %7721 = vmatpush1.msra.mxu0 0.0
        %7722 = vmatprep.subr.mxu0 0.0
        %7723 = vmatpush1.msra.mxu0 0.0
        %7724 = vmatprep.subr.mxu0 0.0
        %7725 = vmatpush1.msra.mxu0 0.0
        %7726 = vmatprep.subr.mxu0 0.0
        %7727 = vmatpush1.msra.mxu0 0.0
        %7728 = vmatprep.subr.mxu0 0.0
        %7729 = vmatpush1.msra.mxu0 0.0
        %7730 = vmatprep.mubr.f32.mxu0 %v7571
        %7731 = vmatmul.mubr.f32.gmra.mrb[0].mxu0 %v7471
        %v7732 = vpop.f32.mrb[0].mxu0
        %v7733 = vadd.f32 %v7567, %v7732
        %v7734 = vpop.f32.mrb[0].mxu0
        %7735 = vmatprep.mubr.f32.mxu0 %v7574
        %7736 = vmatmul.mubr.f32.gmra.mrb[0].mxu0 %v7473
        %v7737 = vpop.f32.mrb[0].mxu0
        %v7738 = vadd.f32 %v7567, %v7737
        %v7739 = vpop.f32.mrb[0].mxu0
        %7740 = vmatprep.mubr.f32.mxu0 %v7577
        %7741 = vmatmul.mubr.f32.gmra.mrb[0].mxu0 %v7475
        %v7742 = vpop.f32.mrb[0].mxu0
        %v7743 = vadd.f32 %v7567, %v7742
        %v7744 = vpop.f32.mrb[0].mxu0
        %7745 = vmatprep.mubr.f32.mxu0 %v7580
        %7746 = vmatmul.mubr.f32.gmra.mrb[0].mxu0 %v7477
        %v7747 = vpop.f32.mrb[0].mxu0
        %v7748 = vadd.f32 %v7567, %v7747
        %v7749 = vpop.f32.mrb[0].mxu0
        %7750 = vmatprep.mubr.f32.mxu0 %v7583
        %7751 = vmatmul.mubr.f32.gmra.mrb[0].mxu0 %v7479
        %v7752 = vpop.f32.mrb[0].mxu0
        %v7753 = vadd.f32 %v7567, %v7752
        %v7754 = vpop.f32.mrb[0].mxu0
        %7755 = vmatprep.mubr.f32.mxu0 %v7586
        %7756 = vmatmul.mubr.f32.gmra.mrb[0].mxu0 %v7481
        %v7757 = vpop.f32.mrb[0].mxu0
        %v7758 = vadd.f32 %v7567, %v7757
        %v7759 = vpop.f32.mrb[0].mxu0
        %7760 = vmatprep.mubr.f32.mxu0 %v7589
        %7761 = vmatmul.mubr.f32.gmra.mrb[0].mxu0 %v7483
        %v7762 = vpop.f32.mrb[0].mxu0
        %v7763 = vadd.f32 %v7567, %v7762
        %v7764 = vpop.f32.mrb[0].mxu0
        %7765 = vmatprep.mubr.f32.mxu0 %v7592
        %7766 = vmatmul.mubr.f32.gmra.mrb[0].mxu0 %v7485
        %v7767 = vpop.f32.mrb[0].mxu0
        %v7768 = vadd.f32 %v7567, %v7767
        %v7769 = vpop.f32.mrb[0].mxu0
        %7770 = vmatprep.mubr.f32.mxu0 %v7595
        %7771 = vmatmul.mubr.f32.gmra.mrb[0].mxu0 %v7487
        %v7772 = vpop.f32.mrb[0].mxu0
        %v7773 = vadd.f32 %v7567, %v7772
        %v7774 = vpop.f32.mrb[0].mxu0
        %7775 = vmatprep.mubr.f32.mxu0 %v7598
        %7776 = vmatmul.mubr.f32.gmra.mrb[0].mxu0 %v7489
        %v7777 = vpop.f32.mrb[0].mxu0
        %v7778 = vadd.f32 %v7567, %v7777
        %v7779 = vpop.f32.mrb[0].mxu0
        %7780 = vmatprep.mubr.f32.mxu0 %v7601
        %7781 = vmatmul.mubr.f32.gmra.mrb[0].mxu0 %v7491
        %v7782 = vpop.f32.mrb[0].mxu0
        %v7783 = vadd.f32 %v7567, %v7782
        %v7784 = vpop.f32.mrb[0].mxu0
        %7785 = vmatprep.mubr.f32.mxu0 %v7604
        %7786 = vmatmul.mubr.f32.gmra.mrb[0].mxu0 %v7493
        %v7787 = vpop.f32.mrb[0].mxu0
        %v7788 = vadd.f32 %v7567, %v7787
        %v7789 = vpop.f32.mrb[0].mxu0
        %7790 = vmatprep.mubr.f32.mxu0 %v7607
        %7791 = vmatmul.mubr.f32.gmra.mrb[0].mxu0 %v7495
        %v7792 = vpop.f32.mrb[0].mxu0
        %v7793 = vadd.f32 %v7567, %v7792
        %v7794 = vpop.f32.mrb[0].mxu0
        %7795 = vmatprep.mubr.f32.mxu0 %v7610
        %7796 = vmatmul.mubr.f32.gmra.mrb[0].mxu0 %v7497
        %v7797 = vpop.f32.mrb[0].mxu0
        %v7798 = vadd.f32 %v7567, %v7797
        %v7799 = vpop.f32.mrb[0].mxu0
        %7800 = vmatprep.mubr.f32.mxu0 %v7613
        %7801 = vmatmul.mubr.f32.gmra.mrb[0].mxu0 %v7499
        %v7802 = vpop.f32.mrb[0].mxu0
        %v7803 = vadd.f32 %v7567, %v7802
        %v7804 = vpop.f32.mrb[0].mxu0
        %7805 = vmatprep.mubr.f32.mxu0 %v7616
        %7806 = vmatmul.mubr.f32.gmra.mrb[0].mxu0 %v7501
        %v7807 = vpop.f32.mrb[0].mxu0
        %v7808 = vadd.f32 %v7567, %v7807
        %v7809 = vpop.f32.mrb[0].mxu0
        %7810 = vmatprep.mubr.f32.mxu0 %v7619
        %7811 = vmatmul.mubr.f32.gmra.mrb[0].mxu0 %v7503
        %v7812 = vpop.f32.mrb[0].mxu0
        %v7813 = vadd.f32 %v7567, %v7812
        %v7814 = vpop.f32.mrb[0].mxu0
        %7815 = vmatprep.mubr.f32.mxu0 %v7622
        %7816 = vmatmul.mubr.f32.gmra.mrb[0].mxu0 %v7505
        %v7817 = vpop.f32.mrb[0].mxu0
        %v7818 = vadd.f32 %v7567, %v7817
        %v7819 = vpop.f32.mrb[0].mxu0
        %7820 = vmatprep.mubr.f32.mxu0 %v7625
        %7821 = vmatmul.mubr.f32.gmra.mrb[0].mxu0 %v7507
        %v7822 = vpop.f32.mrb[0].mxu0
        %v7823 = vadd.f32 %v7567, %v7822
        %v7824 = vpop.f32.mrb[0].mxu0
        %7825 = vmatprep.mubr.f32.mxu0 %v7628
        %7826 = vmatmul.mubr.f32.gmra.mrb[0].mxu0 %v7509
        %v7827 = vpop.f32.mrb[0].mxu0
        %v7828 = vadd.f32 %v7567, %v7827
        %v7829 = vpop.f32.mrb[0].mxu0
        %7830 = vmatprep.mubr.f32.mxu0 %v7631
        %7831 = vmatmul.mubr.f32.gmra.mrb[0].mxu0 %v7511
        %v7832 = vpop.f32.mrb[0].mxu0
        %v7833 = vadd.f32 %v7567, %v7832
        %v7834 = vpop.f32.mrb[0].mxu0
        %7835 = vmatprep.mubr.f32.mxu0 %v7634
        %7836 = vmatmul.mubr.f32.gmra.mrb[0].mxu0 %v7513
        %v7837 = vpop.f32.mrb[0].mxu0
        %v7838 = vadd.f32 %v7567, %v7837
        %v7839 = vpop.f32.mrb[0].mxu0
        %7840 = vmatprep.mubr.f32.mxu0 %v7637
        %7841 = vmatmul.mubr.f32.gmra.mrb[0].mxu0 %v7515
        %v7842 = vpop.f32.mrb[0].mxu0
        %v7843 = vadd.f32 %v7567, %v7842
        %v7844 = vpop.f32.mrb[0].mxu0
        %7845 = vmatprep.mubr.f32.mxu0 %v7640
        %7846 = vmatmul.mubr.f32.gmra.mrb[0].mxu0 %v7517
        %v7847 = vpop.f32.mrb[0].mxu0
        %v7848 = vadd.f32 %v7567, %v7847
        %v7849 = vpop.f32.mrb[0].mxu0
        %7850 = vmatprep.mubr.f32.mxu0 %v7643
        %7851 = vmatmul.mubr.f32.gmra.mrb[0].mxu0 %v7519
        %v7852 = vpop.f32.mrb[0].mxu0
        %v7853 = vadd.f32 %v7567, %v7852
        %v7854 = vpop.f32.mrb[0].mxu0
        %7855 = vmatprep.mubr.f32.mxu0 %v7646
        %7856 = vmatmul.mubr.f32.gmra.mrb[0].mxu0 %v7521
        %v7857 = vpop.f32.mrb[0].mxu0
        %v7858 = vadd.f32 %v7567, %v7857
        %v7859 = vpop.f32.mrb[0].mxu0
        %7860 = vmatprep.mubr.f32.mxu0 %v7649
        %7861 = vmatmul.mubr.f32.gmra.mrb[0].mxu0 %v7523
        %v7862 = vpop.f32.mrb[0].mxu0
        %v7863 = vadd.f32 %v7567, %v7862
        %v7864 = vpop.f32.mrb[0].mxu0
        %7865 = vmatprep.mubr.f32.mxu0 %v7652
        %7866 = vmatmul.mubr.f32.gmra.mrb[0].mxu0 %v7525
        %v7867 = vpop.f32.mrb[0].mxu0
        %v7868 = vadd.f32 %v7567, %v7867
        %v7869 = vpop.f32.mrb[0].mxu0
        %7870 = vmatprep.mubr.f32.mxu0 %v7655
        %7871 = vmatmul.mubr.f32.gmra.mrb[0].mxu0 %v7527
        %v7872 = vpop.f32.mrb[0].mxu0
        %v7873 = vadd.f32 %v7567, %v7872
        %v7874 = vpop.f32.mrb[0].mxu0
        %7875 = vmatprep.mubr.f32.mxu0 %v7658
        %7876 = vmatmul.mubr.f32.gmra.mrb[0].mxu0 %v7529
        %v7877 = vpop.f32.mrb[0].mxu0
        %v7878 = vadd.f32 %v7567, %v7877
        %v7879 = vpop.f32.mrb[0].mxu0
        %7880 = vmatprep.mubr.f32.mxu0 %v7661
        %7881 = vmatmul.mubr.f32.gmra.mrb[0].mxu0 %v7531
        %v7882 = vpop.f32.mrb[0].mxu0
        %v7883 = vadd.f32 %v7567, %v7882
        %v7884 = vpop.f32.mrb[0].mxu0
        %7885 = vmatprep.mubr.f32.mxu0 %v7664
        %7886 = vmatmul.mubr.f32.gmra.mrb[0].mxu0 %v7533
        %v7887 = vpop.f32.mrb[0].mxu0
        %v7888 = vadd.f32 %v7567, %v7887
        %v7889 = vpop.f32.mrb[0].mxu0
        %7890 = vdwg.mxu0
        %v7891 = vmax.f32 %v7733, 0.0
        %v7892 = vmax.f32 %v7738, 0.0
        %v7893 = vmax.f32 %v7743, 0.0
        %v7894 = vmax.f32 %v7748, 0.0
        %v7895 = vmax.f32 %v7753, 0.0
        %v7896 = vmax.f32 %v7758, 0.0
        %v7897 = vmax.f32 %v7763, 0.0
        %v7898 = vmax.f32 %v7768, 0.0
        %v7899 = vmax.f32 %v7773, 0.0
        %v7900 = vmax.f32 %v7778, 0.0
        %v7901 = vmax.f32 %v7783, 0.0
        %v7902 = vmax.f32 %v7788, 0.0
        %v7903 = vmax.f32 %v7793, 0.0
        %v7904 = vmax.f32 %v7798, 0.0
        %v7905 = vmax.f32 %v7803, 0.0
        %v7906 = vmax.f32 %v7808, 0.0
        %v7907 = vmax.f32 %v7813, 0.0
        %v7908 = vmax.f32 %v7818, 0.0
        %v7909 = vmax.f32 %v7823, 0.0
        %v7910 = vmax.f32 %v7828, 0.0
        %v7911 = vmax.f32 %v7833, 0.0
        %v7912 = vmax.f32 %v7838, 0.0
        %v7913 = vmax.f32 %v7843, 0.0
        %v7914 = vmax.f32 %v7848, 0.0
        %v7915 = vmax.f32 %v7853, 0.0
        %v7916 = vmax.f32 %v7858, 0.0
        %v7917 = vmax.f32 %v7863, 0.0
        %v7918 = vmax.f32 %v7868, 0.0
        %v7919 = vmax.f32 %v7873, 0.0
        %v7920 = vmax.f32 %v7878, 0.0
        %v7921 = vmax.f32 %v7883, 0.0
        %v7922 = vmax.f32 %v7888, 0.0
        %v7923 = vld [vmem:[#allocation21] sm:$0xff]
        %v7925 = vsel %vm611, %v7891, 0
        %v7928 = vsel %vm611, %v7892, 0
        %v7931 = vsel %vm611, %v7893, 0
        %v7934 = vsel %vm611, %v7894, 0
        %v7937 = vsel %vm611, %v7895, 0
        %v7940 = vsel %vm611, %v7896, 0
        %v7943 = vsel %vm611, %v7897, 0
        %v7946 = vsel %vm611, %v7898, 0
        %v7949 = vsel %vm611, %v7899, 0
        %v7952 = vsel %vm611, %v7900, 0
        %v7955 = vsel %vm611, %v7901, 0
        %v7958 = vsel %vm611, %v7902, 0
        %v7961 = vsel %vm611, %v7903, 0
        %v7964 = vsel %vm611, %v7904, 0
        %v7967 = vsel %vm611, %v7905, 0
        %v7970 = vsel %vm611, %v7906, 0
        %v7973 = vsel %vm611, %v7907, 0
        %v7976 = vsel %vm611, %v7908, 0
        %v7979 = vsel %vm611, %v7909, 0
        %v7982 = vsel %vm611, %v7910, 0
        %v7985 = vsel %vm611, %v7911, 0
        %v7988 = vsel %vm611, %v7912, 0
        %v7991 = vsel %vm611, %v7913, 0
        %v7994 = vsel %vm611, %v7914, 0
        %v7997 = vsel %vm611, %v7915, 0
        %v8000 = vsel %vm611, %v7916, 0
        %v8003 = vsel %vm611, %v7917, 0
        %v8006 = vsel %vm611, %v7918, 0
        %v8009 = vsel %vm611, %v7919, 0
        %v8012 = vsel %vm611, %v7920, 0
        %v8015 = vsel %vm611, %v7921, 0
        %v8018 = vsel %vm611, %v7922, 0
        %8020 = vmatprep.subr.mxu0 0.0
        %8021 = vmatpush1.msra.mxu0 %v7923
        %8022 = vmatprep.subr.mxu0 0.0
        %8023 = vmatpush1.msra.mxu0 0.0
        %8024 = vmatprep.subr.mxu0 0.0
        %8025 = vmatpush1.msra.mxu0 0.0
        %8026 = vmatprep.subr.mxu0 0.0
        %8027 = vmatpush1.msra.mxu0 0.0
        %8028 = vmatprep.subr.mxu0 0.0
        %8029 = vmatpush1.msra.mxu0 0.0
        %8030 = vmatprep.subr.mxu0 0.0
        %8031 = vmatpush1.msra.mxu0 0.0
        %8032 = vmatprep.subr.mxu0 0.0
        %8033 = vmatpush1.msra.mxu0 0.0
        %8034 = vmatprep.subr.mxu0 0.0
        %8035 = vmatpush1.msra.mxu0 0.0
        %8036 = vmatprep.subr.mxu0 0.0
        %8037 = vmatpush1.msra.mxu0 0.0
        %8038 = vmatprep.subr.mxu0 0.0
        %8039 = vmatpush1.msra.mxu0 0.0
        %8040 = vmatprep.subr.mxu0 0.0
        %8041 = vmatpush1.msra.mxu0 0.0
        %8042 = vmatprep.subr.mxu0 0.0
        %8043 = vmatpush1.msra.mxu0 0.0
        %8044 = vmatprep.subr.mxu0 0.0
        %8045 = vmatpush1.msra.mxu0 0.0
        %8046 = vmatprep.subr.mxu0 0.0
        %8047 = vmatpush1.msra.mxu0 0.0
        %8048 = vmatprep.subr.mxu0 0.0
        %8049 = vmatpush1.msra.mxu0 0.0
        %8050 = vmatprep.subr.mxu0 0.0
        %8051 = vmatpush1.msra.mxu0 0.0
        %8052 = vmatprep.subr.mxu0 0.0
        %8053 = vmatpush1.msra.mxu0 0.0
        %8054 = vmatprep.subr.mxu0 0.0
        %8055 = vmatpush1.msra.mxu0 0.0
        %8056 = vmatprep.subr.mxu0 0.0
        %8057 = vmatpush1.msra.mxu0 0.0
        %8058 = vmatprep.subr.mxu0 0.0
        %8059 = vmatpush1.msra.mxu0 0.0
        %8060 = vmatprep.subr.mxu0 0.0
        %8061 = vmatpush1.msra.mxu0 0.0
        %8062 = vmatprep.subr.mxu0 0.0
        %8063 = vmatpush1.msra.mxu0 0.0
        %8064 = vmatprep.subr.mxu0 0.0
        %8065 = vmatpush1.msra.mxu0 0.0
        %8066 = vmatprep.subr.mxu0 0.0
        %8067 = vmatpush1.msra.mxu0 0.0
        %8068 = vmatprep.subr.mxu0 0.0
        %8069 = vmatpush1.msra.mxu0 0.0
        %8070 = vmatprep.subr.mxu0 0.0
        %8071 = vmatpush1.msra.mxu0 0.0
        %8072 = vmatprep.subr.mxu0 0.0
        %8073 = vmatpush1.msra.mxu0 0.0
        %8074 = vmatprep.subr.mxu0 0.0
        %8075 = vmatpush1.msra.mxu0 0.0
        %8076 = vmatprep.subr.mxu0 0.0
        %8077 = vmatpush1.msra.mxu0 0.0
        %8078 = vmatprep.subr.mxu0 0.0
        %8079 = vmatpush1.msra.mxu0 0.0
        %8080 = vmatprep.subr.mxu0 0.0
        %8081 = vmatpush1.msra.mxu0 0.0
        %8082 = vmatprep.subr.mxu0 0.0
        %8083 = vmatpush1.msra.mxu0 0.0
        %8084 = vmatprep.mubr.f32.mxu0 0.0
        %8085 = vmatmul.mubr.f32.gmra.mrb[0].mxu0 %v7925
        %v8086 = vpop.f32.mrb[0].mxu0
        %v8087 = vadd.f32 0.0, %v8086
        %v8088 = vpop.f32.mrb[0].mxu0
        %8089 = vmatprep.mubr.f32.mxu0 0.0
        %8090 = vmatmul.mubr.f32.gmra.mrb[0].mxu0 %v7928
        %v8091 = vpop.f32.mrb[0].mxu0
        %v8092 = vadd.f32 0.0, %v8091
        %v8093 = vpop.f32.mrb[0].mxu0
        %8094 = vmatprep.mubr.f32.mxu0 0.0
        %8095 = vmatmul.mubr.f32.gmra.mrb[0].mxu0 %v7931
        %v8096 = vpop.f32.mrb[0].mxu0
        %v8097 = vadd.f32 0.0, %v8096
        %v8098 = vpop.f32.mrb[0].mxu0
        %8099 = vmatprep.mubr.f32.mxu0 0.0
        %8100 = vmatmul.mubr.f32.gmra.mrb[0].mxu0 %v7934
        %v8101 = vpop.f32.mrb[0].mxu0
        %v8102 = vadd.f32 0.0, %v8101
        %v8103 = vpop.f32.mrb[0].mxu0
        %8104 = vmatprep.mubr.f32.mxu0 0.0
        %8105 = vmatmul.mubr.f32.gmra.mrb[0].mxu0 %v7937
        %v8106 = vpop.f32.mrb[0].mxu0
        %v8107 = vadd.f32 0.0, %v8106
        %v8108 = vpop.f32.mrb[0].mxu0
        %8109 = vmatprep.mubr.f32.mxu0 0.0
        %8110 = vmatmul.mubr.f32.gmra.mrb[0].mxu0 %v7940
        %v8111 = vpop.f32.mrb[0].mxu0
        %v8112 = vadd.f32 0.0, %v8111
        %v8113 = vpop.f32.mrb[0].mxu0
        %8114 = vmatprep.mubr.f32.mxu0 0.0
        %8115 = vmatmul.mubr.f32.gmra.mrb[0].mxu0 %v7943
        %v8116 = vpop.f32.mrb[0].mxu0
        %v8117 = vadd.f32 0.0, %v8116
        %v8118 = vpop.f32.mrb[0].mxu0
        %8119 = vmatprep.mubr.f32.mxu0 0.0
        %8120 = vmatmul.mubr.f32.gmra.mrb[0].mxu0 %v7946
        %v8121 = vpop.f32.mrb[0].mxu0
        %v8122 = vadd.f32 0.0, %v8121
        %v8123 = vpop.f32.mrb[0].mxu0
        %8124 = vmatprep.mubr.f32.mxu0 0.0
        %8125 = vmatmul.mubr.f32.gmra.mrb[0].mxu0 %v7949
        %v8126 = vpop.f32.mrb[0].mxu0
        %v8127 = vadd.f32 0.0, %v8126
        %v8128 = vpop.f32.mrb[0].mxu0
        %8129 = vmatprep.mubr.f32.mxu0 0.0
        %8130 = vmatmul.mubr.f32.gmra.mrb[0].mxu0 %v7952
        %v8131 = vpop.f32.mrb[0].mxu0
        %v8132 = vadd.f32 0.0, %v8131
        %v8133 = vpop.f32.mrb[0].mxu0
        %8134 = vmatprep.mubr.f32.mxu0 0.0
        %8135 = vmatmul.mubr.f32.gmra.mrb[0].mxu0 %v7955
        %v8136 = vpop.f32.mrb[0].mxu0
        %v8137 = vadd.f32 0.0, %v8136
        %v8138 = vpop.f32.mrb[0].mxu0
        %8139 = vmatprep.mubr.f32.mxu0 0.0
        %8140 = vmatmul.mubr.f32.gmra.mrb[0].mxu0 %v7958
        %v8141 = vpop.f32.mrb[0].mxu0
        %v8142 = vadd.f32 0.0, %v8141
        %v8143 = vpop.f32.mrb[0].mxu0
        %8144 = vmatprep.mubr.f32.mxu0 0.0
        %8145 = vmatmul.mubr.f32.gmra.mrb[0].mxu0 %v7961
        %v8146 = vpop.f32.mrb[0].mxu0
        %v8147 = vadd.f32 0.0, %v8146
        %v8148 = vpop.f32.mrb[0].mxu0
        %8149 = vmatprep.mubr.f32.mxu0 0.0
        %8150 = vmatmul.mubr.f32.gmra.mrb[0].mxu0 %v7964
        %v8151 = vpop.f32.mrb[0].mxu0
        %v8152 = vadd.f32 0.0, %v8151
        %v8153 = vpop.f32.mrb[0].mxu0
        %8154 = vmatprep.mubr.f32.mxu0 0.0
        %8155 = vmatmul.mubr.f32.gmra.mrb[0].mxu0 %v7967
        %v8156 = vpop.f32.mrb[0].mxu0
        %v8157 = vadd.f32 0.0, %v8156
        %v8158 = vpop.f32.mrb[0].mxu0
        %8159 = vmatprep.mubr.f32.mxu0 0.0
        %8160 = vmatmul.mubr.f32.gmra.mrb[0].mxu0 %v7970
        %v8161 = vpop.f32.mrb[0].mxu0
        %v8162 = vadd.f32 0.0, %v8161
        %v8163 = vpop.f32.mrb[0].mxu0
        %8164 = vmatprep.mubr.f32.mxu0 0.0
        %8165 = vmatmul.mubr.f32.gmra.mrb[0].mxu0 %v7973
        %v8166 = vpop.f32.mrb[0].mxu0
        %v8167 = vadd.f32 0.0, %v8166
        %v8168 = vpop.f32.mrb[0].mxu0
        %8169 = vmatprep.mubr.f32.mxu0 0.0
        %8170 = vmatmul.mubr.f32.gmra.mrb[0].mxu0 %v7976
        %v8171 = vpop.f32.mrb[0].mxu0
        %v8172 = vadd.f32 0.0, %v8171
        %v8173 = vpop.f32.mrb[0].mxu0
        %8174 = vmatprep.mubr.f32.mxu0 0.0
        %8175 = vmatmul.mubr.f32.gmra.mrb[0].mxu0 %v7979
        %v8176 = vpop.f32.mrb[0].mxu0
        %v8177 = vadd.f32 0.0, %v8176
        %v8178 = vpop.f32.mrb[0].mxu0
        %8179 = vmatprep.mubr.f32.mxu0 0.0
        %8180 = vmatmul.mubr.f32.gmra.mrb[0].mxu0 %v7982
        %v8181 = vpop.f32.mrb[0].mxu0
        %v8182 = vadd.f32 0.0, %v8181
        %v8183 = vpop.f32.mrb[0].mxu0
        %8184 = vmatprep.mubr.f32.mxu0 0.0
        %8185 = vmatmul.mubr.f32.gmra.mrb[0].mxu0 %v7985
        %v8186 = vpop.f32.mrb[0].mxu0
        %v8187 = vadd.f32 0.0, %v8186
        %v8188 = vpop.f32.mrb[0].mxu0
        %8189 = vmatprep.mubr.f32.mxu0 0.0
        %8190 = vmatmul.mubr.f32.gmra.mrb[0].mxu0 %v7988
        %v8191 = vpop.f32.mrb[0].mxu0
        %v8192 = vadd.f32 0.0, %v8191
        %v8193 = vpop.f32.mrb[0].mxu0
        %8194 = vmatprep.mubr.f32.mxu0 0.0
        %8195 = vmatmul.mubr.f32.gmra.mrb[0].mxu0 %v7991
        %v8196 = vpop.f32.mrb[0].mxu0
        %v8197 = vadd.f32 0.0, %v8196
        %v8198 = vpop.f32.mrb[0].mxu0
        %8199 = vmatprep.mubr.f32.mxu0 0.0
        %8200 = vmatmul.mubr.f32.gmra.mrb[0].mxu0 %v7994
        %v8201 = vpop.f32.mrb[0].mxu0
        %v8202 = vadd.f32 0.0, %v8201
        %v8203 = vpop.f32.mrb[0].mxu0
        %8204 = vmatprep.mubr.f32.mxu0 0.0
        %8205 = vmatmul.mubr.f32.gmra.mrb[0].mxu0 %v7997
        %v8206 = vpop.f32.mrb[0].mxu0
        %v8207 = vadd.f32 0.0, %v8206
        %v8208 = vpop.f32.mrb[0].mxu0
        %8209 = vmatprep.mubr.f32.mxu0 0.0
        %8210 = vmatmul.mubr.f32.gmra.mrb[0].mxu0 %v8000
        %v8211 = vpop.f32.mrb[0].mxu0
        %v8212 = vadd.f32 0.0, %v8211
        %v8213 = vpop.f32.mrb[0].mxu0
        %8214 = vmatprep.mubr.f32.mxu0 0.0
        %8215 = vmatmul.mubr.f32.gmra.mrb[0].mxu0 %v8003
        %v8216 = vpop.f32.mrb[0].mxu0
        %v8217 = vadd.f32 0.0, %v8216
        %v8218 = vpop.f32.mrb[0].mxu0
        %8219 = vmatprep.mubr.f32.mxu0 0.0
        %8220 = vmatmul.mubr.f32.gmra.mrb[0].mxu0 %v8006
        %v8221 = vpop.f32.mrb[0].mxu0
        %v8222 = vadd.f32 0.0, %v8221
        %v8223 = vpop.f32.mrb[0].mxu0
        %8224 = vmatprep.mubr.f32.mxu0 0.0
        %8225 = vmatmul.mubr.f32.gmra.mrb[0].mxu0 %v8009
        %v8226 = vpop.f32.mrb[0].mxu0
        %v8227 = vadd.f32 0.0, %v8226
        %v8228 = vpop.f32.mrb[0].mxu0
        %8229 = vmatprep.mubr.f32.mxu0 0.0
        %8230 = vmatmul.mubr.f32.gmra.mrb[0].mxu0 %v8012
        %v8231 = vpop.f32.mrb[0].mxu0
        %v8232 = vadd.f32 0.0, %v8231
        %v8233 = vpop.f32.mrb[0].mxu0
        %8234 = vmatprep.mubr.f32.mxu0 0.0
        %8235 = vmatmul.mubr.f32.gmra.mrb[0].mxu0 %v8015
        %v8236 = vpop.f32.mrb[0].mxu0
        %v8237 = vadd.f32 0.0, %v8236
        %v8238 = vpop.f32.mrb[0].mxu0
        %8239 = vmatprep.mubr.f32.mxu0 0.0
        %8240 = vmatmul.mubr.f32.gmra.mrb[0].mxu0 %v8018
        %v8241 = vpop.f32.mrb[0].mxu0
        %v8242 = vadd.f32 0.0, %v8241
        %v8243 = vpop.f32.mrb[0].mxu0
        %8244 = vdwg.mxu0
        %v8245 = vadd.f32 %v5671, %v8087
        %v8246 = vadd.f32 %v5672, %v8092
        %v8247 = vadd.f32 %v5673, %v8097
        %v8248 = vadd.f32 %v5674, %v8102
        %v8249 = vadd.f32 %v5675, %v8107
        %v8250 = vadd.f32 %v5676, %v8112
        %v8251 = vadd.f32 %v5677, %v8117
        %v8252 = vadd.f32 %v5678, %v8122
        %v8253 = vadd.f32 %v5679, %v8127
        %v8254 = vadd.f32 %v5680, %v8132
        %v8255 = vadd.f32 %v5681, %v8137
        %v8256 = vadd.f32 %v5682, %v8142
        %v8257 = vadd.f32 %v5683, %v8147
        %v8258 = vadd.f32 %v5684, %v8152
        %v8259 = vadd.f32 %v5685, %v8157
        %v8260 = vadd.f32 %v5686, %v8162
        %v8261 = vadd.f32 %v5687, %v8167
        %v8262 = vadd.f32 %v5688, %v8172
        %v8263 = vadd.f32 %v5689, %v8177
        %v8264 = vadd.f32 %v5690, %v8182
        %v8265 = vadd.f32 %v5691, %v8187
        %v8266 = vadd.f32 %v5692, %v8192
        %v8267 = vadd.f32 %v5693, %v8197
        %v8268 = vadd.f32 %v5694, %v8202
        %v8269 = vadd.f32 %v5695, %v8207
        %v8270 = vadd.f32 %v5696, %v8212
        %v8271 = vadd.f32 %v5697, %v8217
        %v8272 = vadd.f32 %v5698, %v8222
        %v8273 = vadd.f32 %v5699, %v8227
        %v8274 = vadd.f32 %v5700, %v8232
        %v8275 = vadd.f32 %v5701, %v8237
        %v8276 = vadd.f32 %v5702, %v8242
        %v8277 = vadd.f32 %v8245, %v579
        %v8278 = vadd.f32 %v8246, %v580
        %v8279 = vadd.f32 %v8247, %v581
        %v8280 = vadd.f32 %v8248, %v582
        %v8281 = vadd.f32 %v8249, %v583
        %v8282 = vadd.f32 %v8250, %v584
        %v8283 = vadd.f32 %v8251, %v585
        %v8284 = vadd.f32 %v8252, %v586
        %v8285 = vadd.f32 %v8253, %v587
        %v8286 = vadd.f32 %v8254, %v588
        %v8287 = vadd.f32 %v8255, %v589
        %v8288 = vadd.f32 %v8256, %v590
        %v8289 = vadd.f32 %v8257, %v591
        %v8290 = vadd.f32 %v8258, %v592
        %v8291 = vadd.f32 %v8259, %v593
        %v8292 = vadd.f32 %v8260, %v594
        %v8293 = vadd.f32 %v8261, %v595
        %v8294 = vadd.f32 %v8262, %v596
        %v8295 = vadd.f32 %v8263, %v597
        %v8296 = vadd.f32 %v8264, %v598
        %v8297 = vadd.f32 %v8265, %v599
        %v8298 = vadd.f32 %v8266, %v600
        %v8299 = vadd.f32 %v8267, %v601
        %v8300 = vadd.f32 %v8268, %v602
        %v8301 = vadd.f32 %v8269, %v603
        %v8302 = vadd.f32 %v8270, %v604
        %v8303 = vadd.f32 %v8271, %v605
        %v8304 = vadd.f32 %v8272, %v606
        %v8305 = vadd.f32 %v8273, %v607
        %v8306 = vadd.f32 %v8274, %v608
        %v8307 = vadd.f32 %v8275, %v609
        %v8308 = vadd.f32 %v8276, %v610
        %8309 = vst.msk [vmem:[%s535] sm:$0xff] %vm611, %v8277
        %8310 = vst.msk [vmem:[%s535 + $0x8] sm:$0xff] %vm611, %v8278
        %8311 = vst.msk [vmem:[%s535 + $0x10] sm:$0xff] %vm611, %v8279
        %8312 = vst.msk [vmem:[%s535 + $0x18] sm:$0xff] %vm611, %v8280
        %8313 = vst.msk [vmem:[%s535 + $0x20] sm:$0xff] %vm611, %v8281
        %8314 = vst.msk [vmem:[%s535 + $0x28] sm:$0xff] %vm611, %v8282
        %8315 = vst.msk [vmem:[%s535 + $0x30] sm:$0xff] %vm611, %v8283
        %8316 = vst.msk [vmem:[%s535 + $0x38] sm:$0xff] %vm611, %v8284
        %8317 = vst.msk [vmem:[%s535 + $0x40] sm:$0xff] %vm611, %v8285
        %8318 = vst.msk [vmem:[%s535 + $0x48] sm:$0xff] %vm611, %v8286
        %8319 = vst.msk [vmem:[%s535 + $0x50] sm:$0xff] %vm611, %v8287
        %8320 = vst.msk [vmem:[%s535 + $0x58] sm:$0xff] %vm611, %v8288
        %8321 = vst.msk [vmem:[%s535 + $0x60] sm:$0xff] %vm611, %v8289
        %8322 = vst.msk [vmem:[%s535 + $0x68] sm:$0xff] %vm611, %v8290
        %8323 = vst.msk [vmem:[%s535 + $0x70] sm:$0xff] %vm611, %v8291
        %8324 = vst.msk [vmem:[%s535 + $0x78] sm:$0xff] %vm611, %v8292
        %8325 = vst.msk [vmem:[%s535 + $0x80] sm:$0xff] %vm611, %v8293
        %8326 = vst.msk [vmem:[%s535 + $0x88] sm:$0xff] %vm611, %v8294
        %8327 = vst.msk [vmem:[%s535 + $0x90] sm:$0xff] %vm611, %v8295
        %8328 = vst.msk [vmem:[%s535 + $0x98] sm:$0xff] %vm611, %v8296
        %8329 = vst.msk [vmem:[%s535 + $0xa0] sm:$0xff] %vm611, %v8297
        %8330 = vst.msk [vmem:[%s535 + $0xa8] sm:$0xff] %vm611, %v8298
        %8331 = vst.msk [vmem:[%s535 + $0xb0] sm:$0xff] %vm611, %v8299
        %8332 = vst.msk [vmem:[%s535 + $0xb8] sm:$0xff] %vm611, %v8300
        %8333 = vst.msk [vmem:[%s535 + $0xc0] sm:$0xff] %vm611, %v8301
        %8334 = vst.msk [vmem:[%s535 + $0xc8] sm:$0xff] %vm611, %v8302
        %8335 = vst.msk [vmem:[%s535 + $0xd0] sm:$0xff] %vm611, %v8303
        %8336 = vst.msk [vmem:[%s535 + $0xd8] sm:$0xff] %vm611, %v8304
        %8337 = vst.msk [vmem:[%s535 + $0xe0] sm:$0xff] %vm611, %v8305
        %8338 = vst.msk [vmem:[%s535 + $0xe8] sm:$0xff] %vm611, %v8306
        %8339 = vst.msk [vmem:[%s535 + $0xf0] sm:$0xff] %vm611, %v8307
        %8340 = vst.msk [vmem:[%s535 + $0xf8] sm:$0xff] %vm611, %v8308
        %s8341 = sand.u32 %s277, 1
        %s8342 = scalar_lea.sflag [#allocation6], %s8341
        %s8343 = sand.u32 %s277, 1
        %s8344 = smul.addr %s8343, 256
        %s8345 = scalar_lea.vmem [#allocation22], %s8344
        // Predicated region
        $region109: #{tpu_custom_call.1} parent=63 // pred_check
          %p8346 = pneg %p287
        $region110: #{tpu_custom_call.1} parent=63 // pred_check_branch
          %8348 = sbr.rel (%p8346) target = $region112
        $region111: #{tpu_custom_call.1} parent=63 // pred_region
          %s8350 = ssub.s32 4096, 4096
          %8351 = vsyncadd %s8342, %s8350
          %s8352 = smul.addr %s33, 32
          %s8353 = smul.addr %s8352, 128
          %s8354 = scalar_lea.hbm %s11, %s8353
          %s8355 = sshll.u32 %s8345, 4
          %s8356 = int_to_ptr.vmem [resolvable:$true] %s8355
          %8361 = dma.vmem_to_hbm [thread:$0]  %s8356, 4096, %s8354, %s8342, 128, 128, 8
        $region112: #{tpu_custom_call.1} parent=63 // pred_fallthru
          _
      $region64: #{tpu_custom_call.1} parent=5 // pred_fallthru
        _
      %p8362 = scmp.le.s32.totalorder 2, %s28
      // Predicated region
      $region113: #{tpu_custom_call.1} parent=5 // pred_check
        %p8363 = pneg %p8362
      $region114: #{tpu_custom_call.1} parent=5 // pred_check_branch
        %8365 = sbr.rel (%p8363) target = $region116
      $region115: #{tpu_custom_call.1} parent=5 // pred_region
        %s8366 = ssub.s32 %s28, 2
        // Predicated region
        $region117: #{tpu_custom_call.1} parent=115 // pred_check
          %p8367 = pneg %p293
        $region118: #{tpu_custom_call.1} parent=115 // pred_check_branch
          %8369 = sbr.rel (%p8367) target = $region120
        $region119: #{tpu_custom_call.1} parent=115 // pred_region
          %s8370 = sand.u32 %s278, 1
          %s8371 = scalar_lea.sflag [#allocation6], %s8370
          %s8372 = sand.u32 %s278, 1
          %s8373 = smul.addr %s8372, 256
          %s8374 = scalar_lea.vmem [#allocation22], %s8373
          %8375 = dma.done %s8371, 4096
        $region120: #{tpu_custom_call.1} parent=115 // pred_fallthru
          _
      $region116: #{tpu_custom_call.1} parent=5 // pred_fallthru
        _
    $region6: #{tpu_custom_call.1} parent=1 // loop_footer
      %s32 = sadd.s32 1, %s28
    $region7: #{tpu_custom_call.1} parent=1 // loop_footer_branch
      %27 = sbr.rel target = $region3
    $region8: #{tpu_custom_call.1} parent=1 // loop_exit
      _
    %8376 = vsyncpa [#allocation5], 1
    %s8377 = scalar_lea.sflag [#allocation5], 1
    %8378 = vsyncpa %s8377, 1
    %8379 = vsyncpa [#allocation8], 1
    %8380 = vsyncpa [#allocation11], 1
    %8381 = vsyncpa [#allocation14], 1
    %8382 = vsyncpa [#allocation17], 1
    %8383 = vsyncpa [#allocation20], 1
    %8384 = vsyncpa [#allocation6], 1
    %s8385 = scalar_lea.sflag [#allocation6], 1
    %8386 = vsyncpa %s8385, 1

</llo_original>
